<compile_context>
chip_gen: v5e
topology: v5e:2x2
jax: 0.10.0
libtpu: 0.0.40
codegen_flags: <defaults>
</compile_context>

<pallas_src>
import math
from functools import partial

import numpy as np
import jax
import jax.numpy as jnp
from jax import lax
from jax.experimental import pallas as pl
from jax.experimental.pallas import tpu as pltpu

# -------------------------- small synthetic config --------------------------
CVAE = 8
V = 64
V_PAD = 128                 # lane-dense logits store, sliced to V on host
DEPTH = 2
C = 32                      # embed_dim == cond_dim
NUM_HEADS = 4
HEAD_DIM = C // NUM_HEADS   # 8 (divisible by 4, needed by 2D rope)
MLP_RATIO = 4.0
# TODO(synk): exact SwiGLU hidden size rule of the original repo unknown; use C*mlp_ratio.
FFN_HIDDEN = int(C * MLP_RATIO)            # 128
PATCH_NUMS = (1, 2, 3)
L = sum(pn * pn for pn in PATCH_NUMS)      # 14
L_PAD = ((L + 7) // 8) * 8                 # 16 (8-sublane aligned)
FIRST_L = PATCH_NUMS[0] ** 2               # 1
POOLED = 1280
CONTEXT_DIM = 1280 + 768                   # 2048
CTX_LEN = 8
NORM_EPS = 1e-6
ROPE_THETA = 10000.0
ROPE_SIZE = 128.0
INIT_STD = math.sqrt(1.0 / C / 3.0)
NEG_INF = -1e30   # finite "−inf": identical softmax result, no NaN on masked rows

# -------------------------- static buffers (numpy) ---------------------------
_lvl_np = np.concatenate([np.full((pn * pn,), i, dtype=np.int32)
                          for i, pn in enumerate(PATCH_NUMS)])
LVL_IDS = jnp.asarray(_lvl_np)

# self-attn bias (use_ar=False -> block-diagonal same-scale mask); pad rows get a
# distinct "level" so real queries never see them.
_lvl_pad = np.concatenate([_lvl_np,
                           np.full((L_PAD - L,), len(PATCH_NUMS) + 7, np.int32)])
SA_BIAS_PAD = jnp.asarray(
    np.where(_lvl_pad[:, None] == _lvl_pad[None, :], 0.0, NEG_INF).astype(np.float32))


def _compute_axial_angles(dim, end_x, end_y, theta, norm_coeff):
    # TODO(synk): compute_axial_cis source not provided; standard 2D axial RoPE
    # with per-scale coordinate normalization (t * rope_size / (pn-1)).
    freqs = 1.0 / (theta ** (np.arange(0, dim, 4)[: dim // 4].astype(np.float64) / dim))
    t = np.arange(end_x * end_y)
    tx = (t % end_x).astype(np.float64) * norm_coeff
    ty = (t // end_x).astype(np.float64) * norm_coeff
    fx = np.outer(tx, freqs)
    fy = np.outer(ty, freqs)
    return np.concatenate([fx, fy], axis=-1)          # (pn*pn, dim//2)


_angles = []
for _pn in PATCH_NUMS:
    _pn_m1 = _pn - 1 if _pn > 1 else 1
    _angles.append(_compute_axial_angles(HEAD_DIM, _pn, _pn, ROPE_THETA,
                                         ROPE_SIZE / _pn_m1))
_angles = np.concatenate(_angles, axis=0)             # (L, HEAD_DIM//2)

# Full-lane (packed-head) RoPE constants, interleaved-pair form:
#   out = x * COS + pair_swap(x) * SIN_SIGNED
_cos_h = np.repeat(np.cos(_angles), 2, axis=1)                       # (L, hd)
_sin_h = np.repeat(np.sin(_angles), 2, axis=1)
_sign = np.tile(np.array([-1.0, 1.0]), HEAD_DIM // 2)                # even: -sin, odd: +sin
_sin_h = _sin_h * _sign[None, :]
_cos_full = np.tile(_cos_h, (1, NUM_HEADS))                          # (L, C)
_sin_full = np.tile(_sin_h, (1, NUM_HEADS))
ROPE_COS_PAD = jnp.asarray(np.concatenate(
    [_cos_full, np.ones((L_PAD - L, C))], axis=0).astype(np.float32))
ROPE_SIN_PAD = jnp.asarray(np.concatenate(
    [_sin_full, np.zeros((L_PAD - L, C))], axis=0).astype(np.float32))

# (C, C) pair-swap permutation (swaps lanes (2p, 2p+1)) — RoPE rotation helper.
_swap = np.zeros((C, C), np.float32)
for _i in range(0, C, 2):
    _swap[_i, _i + 1] = 1.0
    _swap[_i + 1, _i] = 1.0
SWAP_MAT = jnp.asarray(_swap)

# (C, C) block-diagonal ones: (x*x) @ HEADSUM -> per-head sum of squares, packed.
_hs = np.zeros((C, C), np.float32)
for _h in range(NUM_HEADS):
    _hs[_h * HEAD_DIM:(_h + 1) * HEAD_DIM, _h * HEAD_DIM:(_h + 1) * HEAD_DIM] = 1.0
HEADSUM_MAT = jnp.asarray(_hs)


# --------------------------- BlockSpec helpers --------------------------------
def _const_spec(shape):
    n = len(shape)
    return pl.BlockSpec(shape, lambda *args, _n=n: (0,) * _n)


def _batch_spec(shape):
    n = len(shape)
    return pl.BlockSpec(shape, lambda b, _n=n: (b,) + (0,) * (_n - 1))


# ------------------------------ Pallas kernels -------------------------------
def _prologue_kernel(pooled_ref, tp_w_ref, tp_b_ref,
                     xw_ref, we_w_ref, we_b_ref,
                     pos_ref, lvl_ref,
                     crope_ref, cp_w_ref, cp_b_ref,
                     x_ref, cond_ref, crop_ref,
                     *, batch, l_pad, l_real, first_l):
    f32, bf16 = jnp.float32, jnp.bfloat16
    cond = jnp.dot(pooled_ref[...].astype(bf16), tp_w_ref[...],
                   preferred_element_type=f32) + tp_b_ref[...]          # (B, C)
    word = jnp.dot(xw_ref[...].astype(bf16), we_w_ref[...],
                   preferred_element_type=f32) + we_b_ref[...]          # (B*(L-1), C)
    crop = jnp.dot(crope_ref[...].astype(bf16), cp_w_ref[...],
                   preferred_element_type=f32) + cp_b_ref[...]          # (B, C)
    lvl = lvl_ref[...]                                                  # (L_pad, C)
    n_wo = l_real - first_l
    n_pad = l_pad - l_real
    Cc = lvl.shape[-1]
    for b in range(batch):
        sos = cond[b:b + 1] + pos_ref[...]                              # (first_l, C)
        pieces = [sos, word[b * n_wo:(b + 1) * n_wo]]
        if n_pad > 0:
            pieces.append(jnp.zeros((n_pad, Cc), f32))
        # single (L_pad, C) slab store per batch element (lvl pad rows are zero)
        x_ref[b] = jnp.concatenate(pieces, axis=0) + lvl
        cond_ref[b] = jax.nn.silu(cond[b:b + 1])
        crop_ref[b] = crop[b:b + 1]


def _ctx_kv_kernel(ctx_ref, w_ref, o_ref, *, depth, two_c):
    # Single K=2048 contraction shared by all blocks (lane-dense 128-wide output).
    res = jnp.dot(ctx_ref[...].astype(jnp.bfloat16), w_ref[...],
                  preferred_element_type=jnp.float32)     # (B*ctx, depth*2C)
    for d in range(depth):
        o_ref[d] = res[:, d * two_c:(d + 1) * two_c]


def _block_kernel(x_ref, cond_ref, crop_ref, kv_ref, cbias_ref,
                  sab_ref, cos_ref, sin_ref, swap_ref, hsum_ref,
                  sa_qs_ref, ca_qs_ref,
                  ada_w_ref, ada_b_ref, crop_sc_ref,
                  qkv_w_ref, qkv_b_ref, aproj_w_ref, aproj_b_ref,
                  ca_qw_ref, ca_qb_ref, ca_pw_ref, ca_pb_ref,
                  w12_ref, b12_ref, w3_ref, b3_ref,
                  o_ref, *, num_heads, head_dim, eps):
    f32, bf16 = jnp.float32, jnp.bfloat16
    x = x_ref[0]                                 # (L_pad, C) f32
    Cc = x.shape[-1]
    cond = cond_ref[0]                           # (1, C) = silu(cond_BD)
    crop = crop_ref[0]                           # (1, C)
    cosf, sinf = cos_ref[...], sin_ref[...]
    swap, hsum = swap_ref[...], hsum_ref[...]

    # adaLN(6C) conditioning; crop-cond fused via learned per-block scale.
    # TODO(synk): AdaLNSelfCrossAttn crop-cond fusion rule reconstructed.
    cond6 = jnp.dot(cond.astype(bf16), ada_w_ref[...],
                    preferred_element_type=f32) + ada_b_ref[...]
    crop_sc = crop_sc_ref[...]

    def cpart(i):
        return cond6[:, i * Cc:(i + 1) * Cc] + crop_sc[:, i * Cc:(i + 1) * Cc] * crop

    gamma1, gamma2 = cpart(0), cpart(1)
    scale1, scale2 = cpart(2), cpart(3)
    shift1, shift2 = cpart(4), cpart(5)

    def ln_mod(v, sc, sh):                       # LayerNorm (no affine) + adaLN
        mu = jnp.mean(v, axis=-1, keepdims=True)
        cen = v - mu
        var = jnp.mean(cen * cen, axis=-1, keepdims=True)
        return (cen * lax.rsqrt(var + eps)) * (sc + 1.0) + sh

    def l2n(v):                                  # per-head L2 norm, packed layout
        ss = jnp.dot(v * v, hsum, preferred_element_type=f32)
        return v * lax.rsqrt(ss + 1e-12)

    def rope(v):                                 # interleaved-pair 2D RoPE, packed
        return v * cosf + jnp.dot(v, swap, preferred_element_type=f32) * sinf

    def mha(q, k, v, bias, pw, pb):              # multi-head attn + fused out-proj
        acc = None
        for h in range(num_heads):
            sl = slice(h * head_dim, (h + 1) * head_dim)
            s = jnp.dot(q[:, sl].astype(bf16), k[:, sl].T.astype(bf16),
                        preferred_element_type=f32) + bias
            m = jnp.max(s, axis=-1, keepdims=True)
            p = jnp.exp(s - m)
            inv = pl.reciprocal(jnp.sum(p, axis=-1, keepdims=True), approx=True)
            o_h = jnp.dot((p * inv).astype(bf16), v[:, sl].astype(bf16),
                          preferred_element_type=f32)
            contrib = jnp.dot(o_h.astype(bf16), pw[sl, :],
                              preferred_element_type=f32)
            acc = contrib if acc is None else acc + contrib
        return acc + pb

    # ---- self-attention (QK L2-norm + RoPE, block-diagonal same-scale mask) ----
    h1 = ln_mod(x, scale1, shift1)
    qkv = jnp.dot(h1.astype(bf16), qkv_w_ref[...],
                  preferred_element_type=f32) + qkv_b_ref[...]
    q = rope(l2n(qkv[:, :Cc]) * sa_qs_ref[...])
    k = rope(l2n(qkv[:, Cc:2 * Cc]))
    v = qkv[:, 2 * Cc:]
    sa = mha(q, k, v, sab_ref[...], aproj_w_ref[...], aproj_b_ref[...])
    x = x + gamma1 * sa

    # ---- cross-attention to text context (K/V precomputed once per forward) ----
    qc = jnp.dot(x.astype(bf16), ca_qw_ref[...],
                 preferred_element_type=f32) + ca_qb_ref[...]
    kv = kv_ref[0]                               # (ctx, 2C) f32
    kc = l2n(kv[:, :Cc])
    vc = kv[:, Cc:]
    qc = l2n(qc) * ca_qs_ref[...]
    ca = mha(qc, kc, vc, cbias_ref[0], ca_pw_ref[...], ca_pb_ref[...])
    x = x + ca

    # ---- SwiGLU FFN (w1/w2 fused into one 256-lane matmul) ----
    h2 = ln_mod(x, scale2, shift2)
    h12 = jnp.dot(h2.astype(bf16), w12_ref[...],
                  preferred_element_type=f32) + b12_ref[...]
    Hf = w3_ref.shape[0]
    a = h12[:, :Hf]
    ffn = jnp.dot(((a * jax.nn.sigmoid(a)) * h12[:, Hf:]).astype(bf16),
                  w3_ref[...], preferred_element_type=f32) + b3_ref[...]
    o_ref[0] = x + gamma2 * ffn


def _head_kernel(x_ref, cond_ref, nm_w_ref, nm_b_ref, hw_ref, hb_ref, o_ref, *, eps):
    # AdaLNBeforeHead + head linear, fused.  Head weight/bias are zero-padded to
    # V_PAD=128 lanes so the output store is unmasked full-lane `vst`.
    f32, bf16 = jnp.float32, jnp.bfloat16
    x = x_ref[0]                                 # (L_pad, C)
    Cc = x.shape[-1]
    ss = jnp.dot(cond_ref[0].astype(bf16), nm_w_ref[...],
                 preferred_element_type=f32) + nm_b_ref[...]           # (1, 2C)
    scale, shift = ss[:, :Cc], ss[:, Cc:]
    mu = jnp.mean(x, axis=-1, keepdims=True)
    cen = x - mu
    var = jnp.mean(cen * cen, axis=-1, keepdims=True)
    h = (cen * lax.rsqrt(var + eps)) * (scale + 1.0) + shift
    o_ref[0] = jnp.dot(h.astype(bf16), hw_ref[...],
                       preferred_element_type=f32) + hb_ref[...]


# ------------------------------ kernel wrappers --------------------------------
def prologue_call(pooled, xw_flat, crop_embed, pp):
    B = pooled.shape[0]
    rows = xw_flat.shape[0]
    kernel = partial(_prologue_kernel, batch=B, l_pad=L_PAD, l_real=L, first_l=FIRST_L)
    out_shape = (jax.ShapeDtypeStruct((B, L_PAD, C), jnp.float32),
                 jax.ShapeDtypeStruct((B, 1, C), jnp.float32),
                 jax.ShapeDtypeStruct((B, 1, C), jnp.float32))
    in_specs = [_const_spec((B, POOLED)),
                _const_spec((POOLED, C)), _const_spec((1, C)),
                _const_spec((rows, CVAE)),
                _const_spec((CVAE, C)), _const_spec((1, C)),
                _const_spec((FIRST_L, C)),
                _const_spec((L_PAD, C)),
                _const_spec((B, C)),
                _const_spec((C, C)), _const_spec((1, C))]
    out_specs = (_const_spec((B, L_PAD, C)),
                 _const_spec((B, 1, C)),
                 _const_spec((B, 1, C)))
    return pl.pallas_call(
        kernel, out_shape=out_shape, grid=(1,),
        in_specs=in_specs, out_specs=out_specs,
    )(pooled, pp["tp_w"], pp["tp_b"], xw_flat, pp["we_w"], pp["we_b"],
      pp["pos_start"], pp["lvl_full"], crop_embed, pp["cp_w"], pp["cp_b"])


def ctx_kv_call(ctx_flat, w_all):
    rows = ctx_flat.shape[0]
    return pl.pallas_call(
        partial(_ctx_kv_kernel, depth=DEPTH, two_c=2 * C),
        out_shape=jax.ShapeDtypeStruct((DEPTH, rows, 2 * C), jnp.float32),
        grid=(1,),
        in_specs=[_const_spec((rows, CONTEXT_DIM)),
                  _const_spec((CONTEXT_DIM, DEPTH * 2 * C))],
        out_specs=_const_spec((DEPTH, rows, 2 * C)),
    )(ctx_flat, w_all)


def block_call(x, cond_act, crop_cond, kv_all, ctx_bias, blk, d):
    B = x.shape[0]
    kernel = partial(_block_kernel, num_heads=NUM_HEADS, head_dim=HEAD_DIM, eps=NORM_EPS)
    in_specs = [
        _batch_spec((1, L_PAD, C)),                                      # x
        _batch_spec((1, 1, C)),                                          # silu(cond)
        _batch_spec((1, 1, C)),                                          # crop_cond
        pl.BlockSpec((1, CTX_LEN, 2 * C), lambda b, _d=d: (_d, b, 0)),   # this block's KV
        _batch_spec((1, 1, CTX_LEN)),                                    # ctx bias row
        _const_spec((L_PAD, L_PAD)),                                     # self-attn bias
        _const_spec((L_PAD, C)), _const_spec((L_PAD, C)),                # rope cos/sin
        _const_spec((C, C)), _const_spec((C, C)),                        # swap / headsum
        _const_spec((1, C)), _const_spec((1, C)),                        # q-scales
        _const_spec((C, 6 * C)), _const_spec((1, 6 * C)), _const_spec((1, 6 * C)),
        _const_spec((C, 3 * C)), _const_spec((1, 3 * C)),
        _const_spec((C, C)), _const_spec((1, C)),
        _const_spec((C, C)), _const_spec((1, C)),
        _const_spec((C, C)), _const_spec((1, C)),
        _const_spec((C, 2 * FFN_HIDDEN)), _const_spec((1, 2 * FFN_HIDDEN)),
        _const_spec((FFN_HIDDEN, C)), _const_spec((1, C)),
    ]
    return pl.pallas_call(
        kernel,
        out_shape=jax.ShapeDtypeStruct((B, L_PAD, C), jnp.float32),
        grid=(B,),
        in_specs=in_specs,
        out_specs=_batch_spec((1, L_PAD, C)),
        compiler_params=pltpu.CompilerParams(dimension_semantics=("parallel",)),
    )(x, cond_act, crop_cond, kv_all, ctx_bias,
      SA_BIAS_PAD, ROPE_COS_PAD, ROPE_SIN_PAD, SWAP_MAT, HEADSUM_MAT,
      blk["sa_qscale"], blk["ca_qscale"],
      blk["ada_w"], blk["ada_b"], blk["crop_scale"],
      blk["qkv_w"], blk["qkv_b"], blk["aproj_w"], blk["aproj_b"],
      blk["ca_qw"], blk["ca_qb"], blk["ca_pw"], blk["ca_pb"],
      blk["w12"], blk["b12"], blk["w3"], blk["b3"])


def head_call(x, cond_act, pp):
    B = x.shape[0]
    return pl.pallas_call(
        partial(_head_kernel, eps=NORM_EPS),
        out_shape=jax.ShapeDtypeStruct((B, L_PAD, V_PAD), jnp.float32),
        grid=(B,),
        in_specs=[_batch_spec((1, L_PAD, C)),
                  _batch_spec((1, 1, C)),
                  _const_spec((C, 2 * C)), _const_spec((1, 2 * C)),
                  _const_spec((C, V_PAD)), _const_spec((1, V_PAD))],
        out_specs=_batch_spec((1, L_PAD, V_PAD)),
        compiler_params=pltpu.CompilerParams(dimension_semantics=("parallel",)),
    )(x, cond_act, pp["nm_w"], pp["nm_b"], pp["head_w"], pp["head_b"])


# ------------------------------ host-side helpers ------------------------------
def get_crop_condition(heights, widths, base_size=512):
    h = np.asarray([int(v) for v in heights], dtype=np.int64)[:, None]
    w = np.asarray([int(v) for v in widths], dtype=np.int64)[:, None]
    hw = np.concatenate([h, w], axis=1)
    ratio = base_size / hw.min(axis=-1)
    orig_size = (hw * ratio[:, None]).astype(np.int64)
    crop_coords = np.maximum((orig_size - base_size) // 2, 0)
    return np.concatenate([orig_size, crop_coords], axis=1).astype(np.int32)  # (B, 4)


def prepare_params(params):
    """One-time weight layout prep: bf16 casts, weight fusion/stacking, bias rows."""
    bf16, f32 = jnp.bfloat16, jnp.float32
    w = lambda a: a.astype(bf16)
    brow = lambda a: a.reshape(1, -1).astype(f32)
    # zero-pad head weight/bias to V_PAD lanes for lane-dense logits store
    head_w_pad = jnp.zeros((C, V_PAD), f32).at[:, :V].set(params["head_w"])
    head_b_pad = jnp.zeros((V_PAD,), f32).at[:V].set(params["head_b"])
    pp = {
        "tp_w": w(params["text_pooler_w"]), "tp_b": brow(params["text_pooler_b"]),
        "we_w": w(params["word_embed_w"]), "we_b": brow(params["word_embed_b"]),
        "pos_start": params["pos_start"].reshape(FIRST_L, C).astype(f32),
        "lvl_full": jnp.concatenate(
            [params["lvl_embed"][LVL_IDS],
             jnp.zeros((L_PAD - L, C), f32)], axis=0),
        "crop_fourier_w": params["crop_fourier_w"].astype(f32),
        "cp_w": w(params["crop_proj_w"]), "cp_b": brow(params["crop_proj_b"]),
        "nm_w": w(params["head_nm_w"]), "nm_b": brow(params["head_nm_b"]),
        "head_w": w(head_w_pad), "head_b": brow(head_b_pad),
        "ca_kv_w_all": w(jnp.concatenate([b["ca_kv_w"] for b in params["blocks"]],
                                         axis=1)),            # (2048, DEPTH*2C)
        "blocks": [],
    }
    log100 = math.log(100.0)
    for blk in params["blocks"]:
        qkv_b = jnp.concatenate([blk["q_bias"], jnp.zeros((C,), f32), blk["v_bias"]])
        sa_qs = jnp.repeat(jnp.exp(jnp.minimum(blk["scale_mul"], log100)), HEAD_DIM)
        ca_qs = jnp.repeat(jnp.exp(jnp.minimum(blk["ca_scale_mul"], log100)), HEAD_DIM)
        pp["blocks"].append({
            "ada_w": w(blk["ada_w"]), "ada_b": brow(blk["ada_b"]),
            "crop_scale": blk["crop_scale"].reshape(1, 6 * C).astype(f32),
            "qkv_w": w(blk["qkv_w"]), "qkv_b": qkv_b.reshape(1, 3 * C).astype(f32),
            "aproj_w": w(blk["attn_proj_w"]), "aproj_b": brow(blk["attn_proj_b"]),
            "ca_qw": w(blk["ca_q_w"]), "ca_qb": brow(blk["ca_q_b"]),
            "ca_pw": w(blk["ca_proj_w"]), "ca_pb": brow(blk["ca_proj_b"]),
            "w12": w(jnp.concatenate([blk["ffn_w1"], blk["ffn_w2"]], axis=1)),
            "b12": jnp.concatenate([blk["ffn_b1"], blk["ffn_b2"]]).reshape(
                1, 2 * FFN_HIDDEN).astype(f32),
            "w3": w(blk["ffn_w3"]), "b3": brow(blk["ffn_b3"]),
            "sa_qscale": sa_qs.reshape(1, C).astype(f32),
            "ca_qscale": ca_qs.reshape(1, C).astype(f32),
        })
    return pp


# ------------------------------ forward pass -----------------------------------
def switti_forward(pp, x_BLCv_wo_first_l, prompt_embeds, pooled_prompt_embeds,
                   prompt_attn_bias, crop_coords):
    B = x_BLCv_wo_first_l.shape[0]

    # crop conditioning: Gaussian-Fourier embedding (tiny params-only math).
    # TODO(synk): GaussianFourierProjection reconstructed (sin|cos of x*W*2pi).
    flat = crop_coords.reshape(-1).astype(jnp.float32)
    xp = flat[:, None] * pp["crop_fourier_w"][None, :] * (2.0 * math.pi)
    crop_embed = jnp.concatenate([jnp.sin(xp), jnp.cos(xp)], axis=-1).reshape(B, C)

    # cross-attn mask as a single additive bias row (never broadcast to (B,1,L,ctx)).
    ctx_bias = jnp.where(prompt_attn_bias, 0.0, NEG_INF)[:, None, :].astype(jnp.float32)

    # prologue: text pooler + sos + word embed + level embed + crop proj (1 kernel)
    x, cond_act, crop_cond = prologue_call(
        pooled_prompt_embeds.astype(jnp.float32),
        x_BLCv_wo_first_l.reshape(B * (L - FIRST_L), CVAE).astype(jnp.float32),
        crop_embed, pp)

    # cross-attn K/V for ALL blocks in one K=2048 matmul (lane-dense 128 output)
    kv_all = ctx_kv_call(
        prompt_embeds.reshape(B * CTX_LEN, CONTEXT_DIM).astype(jnp.float32),
        pp["ca_kv_w_all"])

    # one fused Pallas kernel per transformer block
    for d, blk in enumerate(pp["blocks"]):
        x = block_call(x, cond_act, crop_cond, kv_all, ctx_bias, blk, d)

    # AdaLNBeforeHead + head (1 kernel), then drop the padded rows / lanes
    logits = head_call(x, cond_act, pp)
    return logits[:, :L, :V]


# ------------------------------ parameter init --------------------------------
def init_params(key):
    keys = iter(jax.random.split(key, 256))

    def nrm(shape, std=0.02):
        return jax.random.normal(next(keys), shape, jnp.float32) * std

    params = {
        "word_embed_w": nrm((CVAE, C)), "word_embed_b": jnp.zeros((C,), jnp.float32),
        "text_pooler_w": nrm((POOLED, C)), "text_pooler_b": jnp.zeros((C,), jnp.float32),
        "pos_start": nrm((1, FIRST_L, C), std=INIT_STD),
        "lvl_embed": nrm((len(PATCH_NUMS), C), std=INIT_STD),
        "crop_fourier_w": jax.random.normal(next(keys), (C // 8,), jnp.float32),
        "crop_proj_w": nrm((C, C)), "crop_proj_b": jnp.zeros((C,), jnp.float32),
        "head_nm_w": nrm((C, 2 * C)), "head_nm_b": jnp.zeros((2 * C,), jnp.float32),
        "head_w": nrm((C, V)), "head_b": jnp.zeros((V,), jnp.float32),
        "blocks": [],
    }
    for _ in range(DEPTH):
        blk = {
            "ada_w": nrm((C, 6 * C)), "ada_b": jnp.zeros((6 * C,), jnp.float32),
            "crop_scale": nrm((1, 6 * C)),
            "qkv_w": nrm((C, 3 * C)),
            "q_bias": jnp.zeros((C,), jnp.float32),
            "v_bias": jnp.zeros((C,), jnp.float32),
            "scale_mul": jnp.full((NUM_HEADS,), math.log(4.0), jnp.float32),
            "attn_proj_w": nrm((C, C)), "attn_proj_b": jnp.zeros((C,), jnp.float32),
            "ca_q_w": nrm((C, C)), "ca_q_b": jnp.zeros((C,), jnp.float32),
            "ca_kv_w": nrm((CONTEXT_DIM, 2 * C)),
            "ca_scale_mul": jnp.full((NUM_HEADS,), math.log(4.0), jnp.float32),
            "ca_proj_w": nrm((C, C)), "ca_proj_b": jnp.zeros((C,), jnp.float32),
            "ffn_w1": nrm((C, FFN_HIDDEN)), "ffn_b1": jnp.zeros((FFN_HIDDEN,), jnp.float32),
            "ffn_w2": nrm((C, FFN_HIDDEN)), "ffn_b2": jnp.zeros((FFN_HIDDEN,), jnp.float32),
            "ffn_w3": nrm((FFN_HIDDEN, C)), "ffn_b3": jnp.zeros((C,), jnp.float32),
        }
        params["blocks"].append(blk)
    return params


# ----------------------------------- main --------------------------------------
if __name__ == "__main__":
    key = jax.random.PRNGKey(0)
    kp, k1, k2, k3 = jax.random.split(key, 4)
    params = init_params(kp)
    pp = prepare_params(params)

    B = 2
    x_BLCv_wo_first_l = jax.random.normal(k1, (B, L - FIRST_L, CVAE), jnp.float32)
    prompt_embeds = jax.random.normal(k2, (B, CTX_LEN, CONTEXT_DIM), jnp.float32)
    pooled_prompt_embeds = jax.random.normal(k3, (B, POOLED), jnp.float32)
    prompt_attn_bias = jnp.asarray(
        [[True] * CTX_LEN,
         [True] * 5 + [False] * (CTX_LEN - 5)], dtype=bool)
    batch_height = [512, 768]
    batch_width = [512, 512]
    crop_coords = jnp.asarray(get_crop_condition(batch_height, batch_width),
                              jnp.float32)

    fwd = jax.jit(switti_forward)
    logits = fwd(pp, x_BLCv_wo_first_l, prompt_embeds, pooled_prompt_embeds,
                 prompt_attn_bias, crop_coords)
    logits = jax.block_until_ready(logits)

    assert logits.shape == (B, L, V), logits.shape
    assert bool(jnp.all(jnp.isfinite(logits)))
    print("KERNEL_OK")
</pallas_src>

<mosaic_0001>
module attributes {stable_mosaic.version = 11 : i64} {
  func.func @_ctx_kv_kernel(%arg0: i32, %arg1: memref<16x2048xf32, #tpu.memory_space<vmem>>, %arg2: memref<2048x128xbf16, #tpu.memory_space<vmem>>, %arg3: memref<2x16x64xf32, #tpu.memory_space<vmem>>) attributes {dimension_semantics = [#tpu.dimension_semantics<arbitrary>], iteration_bounds = array<i64: 1>, scalar_prefetch = 0 : i64, scratch_operands = 0 : i64, tpu.core_type = #tpu.core_type<tc>, window_params = [{pipeline_mode = #tpu.pipeline_mode<synchronous>, transform_indices = @transform_0, window_bounds = array<i64: 16, 2048>}, {pipeline_mode = #tpu.pipeline_mode<synchronous>, transform_indices = @transform_1, window_bounds = array<i64: 2048, 128>}, {pipeline_mode = #tpu.pipeline_mode<synchronous>, transform_indices = @transform_2, window_bounds = array<i64: 2, 16, 64>}]} {
    %c0 = arith.constant 0 : index
    %c0_0 = arith.constant 0 : index
    %0 = vector.load %arg1[%c0, %c0_0] : memref<16x2048xf32, #tpu.memory_space<vmem>>, vector<16x2048xf32>
    %1 = arith.truncf %0 : vector<16x2048xf32> to vector<16x2048xbf16>
    %c0_1 = arith.constant 0 : index
    %c0_2 = arith.constant 0 : index
    %2 = vector.load %arg2[%c0_1, %c0_2] : memref<2048x128xbf16, #tpu.memory_space<vmem>>, vector<2048x128xbf16>
    %cst = arith.constant dense<0.000000e+00> : vector<16x128xf32>
    %3 = tpu.matmul %1, %2, %cst {dimension_numbers = #tpu.dot_dimension_numbers<[1], [0], [0], [1], [0, 0, 1, 1], [], []>} : vector<16x2048xbf16>, vector<2048x128xbf16>, vector<16x128xf32> -> vector<16x128xf32>
    %4 = vector.extract_strided_slice %3 {offsets = [0, 0], sizes = [16, 64], strides = [1, 1]} : vector<16x128xf32> to vector<16x64xf32>
    %c0_3 = arith.constant 0 : index
    %c0_4 = arith.constant 0 : index
    %c0_5 = arith.constant 0 : index
    %5 = vector.load %arg3[%c0_3, %c0_4, %c0_5] : memref<2x16x64xf32, #tpu.memory_space<vmem>>, vector<1x16x64xf32>
    %6 = vector.shape_cast %5 : vector<1x16x64xf32> to vector<16x64xf32>
    %7 = vector.shape_cast %4 : vector<16x64xf32> to vector<1x16x64xf32>
    tpu.vector_store %arg3[%c0_3, %c0_4, %c0_5], %7 {strides = array<i32>} : memref<2x16x64xf32, #tpu.memory_space<vmem>>, vector<1x16x64xf32>,
    %8 = vector.extract_strided_slice %3 {offsets = [0, 64], sizes = [16, 64], strides = [1, 1]} : vector<16x128xf32> to vector<16x64xf32>
    %c1 = arith.constant 1 : index
    %c0_6 = arith.constant 0 : index
    %c0_7 = arith.constant 0 : index
    %9 = vector.load %arg3[%c1, %c0_6, %c0_7] : memref<2x16x64xf32, #tpu.memory_space<vmem>>, vector<1x16x64xf32>
    %10 = vector.shape_cast %9 : vector<1x16x64xf32> to vector<16x64xf32>
    %11 = vector.shape_cast %8 : vector<16x64xf32> to vector<1x16x64xf32>
    tpu.vector_store %arg3[%c1, %c0_6, %c0_7], %11 {strides = array<i32>} : memref<2x16x64xf32, #tpu.memory_space<vmem>>, vector<1x16x64xf32>,
    return
  }
  func.func @transform_0(%arg0: i32) -> (i32, i32) {
    %c0_i32 = arith.constant 0 : i32
    %c0_i32_0 = arith.constant 0 : i32
    %c0_i32_1 = arith.constant 0 : i32
    return %c0_i32, %c0_i32_0 : i32, i32
  }
  func.func @transform_1(%arg0: i32) -> (i32, i32) {
    %c0_i32 = arith.constant 0 : i32
    %c0_i32_0 = arith.constant 0 : i32
    %c0_i32_1 = arith.constant 0 : i32
    return %c0_i32, %c0_i32_0 : i32, i32
  }
  func.func @transform_2(%arg0: i32) -> (i32, i32, i32) {
    %c0_i32 = arith.constant 0 : i32
    %c0_i32_0 = arith.constant 0 : i32
    %c0_i32_1 = arith.constant 0 : i32
    %c0_i32_2 = arith.constant 0 : i32
    return %c0_i32, %c0_i32_0, %c0_i32_1 : i32, i32, i32
  }
}

module attributes {stable_mosaic.version = 11 : i64} {
  func.func @_prologue_kernel(%arg0: i32, %arg1: memref<2x1280xf32, #tpu.memory_space<vmem>>, %arg2: memref<1280x32xbf16, #tpu.memory_space<vmem>>, %arg3: memref<1x32xf32, #tpu.memory_space<vmem>>, %arg4: memref<26x8xf32, #tpu.memory_space<vmem>>, %arg5: memref<8x32xbf16, #tpu.memory_space<vmem>>, %arg6: memref<1x32xf32, #tpu.memory_space<vmem>>, %arg7: memref<1x32xf32, #tpu.memory_space<vmem>>, %arg8: memref<16x32xf32, #tpu.memory_space<vmem>>, %arg9: memref<2x32xf32, #tpu.memory_space<vmem>>, %arg10: memref<32x32xbf16, #tpu.memory_space<vmem>>, %arg11: memref<1x32xf32, #tpu.memory_space<vmem>>, %arg12: memref<2x16x32xf32, #tpu.memory_space<vmem>>, %arg13: memref<2x1x32xf32, #tpu.memory_space<vmem>>, %arg14: memref<2x1x32xf32, #tpu.memory_space<vmem>>) attributes {dimension_semantics = [#tpu.dimension_semantics<arbitrary>], iteration_bounds = array<i64: 1>, scalar_prefetch = 0 : i64, scratch_operands = 0 : i64, tpu.core_type = #tpu.core_type<tc>, window_params = [{pipeline_mode = #tpu.pipeline_mode<synchronous>, transform_indices = @transform_0, window_bounds = array<i64: 2, 1280>}, {pipeline_mode = #tpu.pipeline_mode<synchronous>, transform_indices = @transform_1, window_bounds = array<i64: 1280, 32>}, {pipeline_mode = #tpu.pipeline_mode<synchronous>, transform_indices = @transform_2, window_bounds = array<i64: 1, 32>}, {pipeline_mode = #tpu.pipeline_mode<synchronous>, transform_indices = @transform_3, window_bounds = array<i64: 26, 8>}, {pipeline_mode = #tpu.pipeline_mode<synchronous>, transform_indices = @transform_4, window_bounds = array<i64: 8, 32>}, {pipeline_mode = #tpu.pipeline_mode<synchronous>, transform_indices = @transform_5, window_bounds = array<i64: 1, 32>}, {pipeline_mode = #tpu.pipeline_mode<synchronous>, transform_indices = @transform_6, window_bounds = array<i64: 1, 32>}, {pipeline_mode = #tpu.pipeline_mode<synchronous>, transform_indices = @transform_7, window_bounds = array<i64: 16, 32>}, {pipeline_mode = #tpu.pipeline_mode<synchronous>, transform_indices = @transform_8, window_bounds = array<i64: 2, 32>}, {pipeline_mode = #tpu.pipeline_mode<synchronous>, transform_indices = @transform_9, window_bounds = array<i64: 32, 32>}, {pipeline_mode = #tpu.pipeline_mode<synchronous>, transform_indices = @transform_10, window_bounds = array<i64: 1, 32>}, {pipeline_mode = #tpu.pipeline_mode<synchronous>, transform_indices = @transform_11, window_bounds = array<i64: 2, 16, 32>}, {pipeline_mode = #tpu.pipeline_mode<synchronous>, transform_indices = @transform_12, window_bounds = array<i64: 2, 1, 32>}, {pipeline_mode = #tpu.pipeline_mode<synchronous>, transform_indices = @transform_13, window_bounds = array<i64: 2, 1, 32>}]} {
    %c0 = arith.constant 0 : index
    %c0_0 = arith.constant 0 : index
    %0 = vector.load %arg1[%c0, %c0_0] : memref<2x1280xf32, #tpu.memory_space<vmem>>, vector<2x1280xf32>
    %1 = arith.truncf %0 : vector<2x1280xf32> to vector<2x1280xbf16>
    %c0_1 = arith.constant 0 : index
    %c0_2 = arith.constant 0 : index
    %2 = vector.load %arg2[%c0_1, %c0_2] : memref<1280x32xbf16, #tpu.memory_space<vmem>>, vector<1280x32xbf16>
    %cst = arith.constant dense<0.000000e+00> : vector<2x32xf32>
    %3 = tpu.matmul %1, %2, %cst {dimension_numbers = #tpu.dot_dimension_numbers<[1], [0], [0], [1], [0, 0, 1, 1], [], []>} : vector<2x1280xbf16>, vector<1280x32xbf16>, vector<2x32xf32> -> vector<2x32xf32>
    %c0_3 = arith.constant 0 : index
    %c0_4 = arith.constant 0 : index
    %4 = vector.load %arg3[%c0_3, %c0_4] : memref<1x32xf32, #tpu.memory_space<vmem>>, vector<1x32xf32>
    %5 = vector.broadcast %4 : vector<1x32xf32> to vector<2x32xf32>
    %6 = arith.addf %3, %5 : vector<2x32xf32>
    %c0_5 = arith.constant 0 : index
    %c0_6 = arith.constant 0 : index
    %7 = vector.load %arg4[%c0_5, %c0_6] : memref<26x8xf32, #tpu.memory_space<vmem>>, vector<26x8xf32>
    %8 = arith.truncf %7 : vector<26x8xf32> to vector<26x8xbf16>
    %c0_7 = arith.constant 0 : index
    %c0_8 = arith.constant 0 : index
    %9 = vector.load %arg5[%c0_7, %c0_8] : memref<8x32xbf16, #tpu.memory_space<vmem>>, vector<8x32xbf16>
    %cst_9 = arith.constant dense<0.000000e+00> : vector<26x32xf32>
    %10 = tpu.matmul %8, %9, %cst_9 {dimension_numbers = #tpu.dot_dimension_numbers<[1], [0], [0], [1], [0, 0, 1, 1], [], []>} : vector<26x8xbf16>, vector<8x32xbf16>, vector<26x32xf32> -> vector<26x32xf32>
    %c0_10 = arith.constant 0 : index
    %c0_11 = arith.constant 0 : index
    %11 = vector.load %arg6[%c0_10, %c0_11] : memref<1x32xf32, #tpu.memory_space<vmem>>, vector<1x32xf32>
    %12 = vector.broadcast %11 : vector<1x32xf32> to vector<26x32xf32>
    %13 = arith.addf %10, %12 : vector<26x32xf32>
    %c0_12 = arith.constant 0 : index
    %c0_13 = arith.constant 0 : index
    %14 = vector.load %arg9[%c0_12, %c0_13] : memref<2x32xf32, #tpu.memory_space<vmem>>, vector<2x32xf32>
    %15 = arith.truncf %14 : vector<2x32xf32> to vector<2x32xbf16>
    %c0_14 = arith.constant 0 : index
    %c0_15 = arith.constant 0 : index
    %16 = vector.load %arg10[%c0_14, %c0_15] : memref<32x32xbf16, #tpu.memory_space<vmem>>, vector<32x32xbf16>
    %cst_16 = arith.constant dense<0.000000e+00> : vector<2x32xf32>
    %17 = tpu.matmul %15, %16, %cst_16 {dimension_numbers = #tpu.dot_dimension_numbers<[1], [0], [0], [1], [0, 0, 1, 1], [], []>} : vector<2x32xbf16>, vector<32x32xbf16>, vector<2x32xf32> -> vector<2x32xf32>
    %c0_17 = arith.constant 0 : index
    %c0_18 = arith.constant 0 : index
    %18 = vector.load %arg11[%c0_17, %c0_18] : memref<1x32xf32, #tpu.memory_space<vmem>>, vector<1x32xf32>
    %19 = vector.broadcast %18 : vector<1x32xf32> to vector<2x32xf32>
    %20 = arith.addf %17, %19 : vector<2x32xf32>
    %c0_19 = arith.constant 0 : index
    %c0_20 = arith.constant 0 : index
    %21 = vector.load %arg8[%c0_19, %c0_20] : memref<16x32xf32, #tpu.memory_space<vmem>>, vector<16x32xf32>
    %22 = vector.extract_strided_slice %6 {offsets = [0, 0], sizes = [1, 32], strides = [1, 1]} : vector<2x32xf32> to vector<1x32xf32>
    %c0_21 = arith.constant 0 : index
    %c0_22 = arith.constant 0 : index
    %23 = vector.load %arg7[%c0_21, %c0_22] : memref<1x32xf32, #tpu.memory_space<vmem>>, vector<1x32xf32>
    %24 = arith.addf %22, %23 : vector<1x32xf32>
    %25 = vector.extract_strided_slice %13 {offsets = [0, 0], sizes = [13, 32], strides = [1, 1]} : vector<26x32xf32> to vector<13x32xf32>
    %cst_23 = arith.constant 0.000000e+00 : f32
    %26 = vector.broadcast %cst_23 : f32 to vector<2x32xf32>
    %27 = tpu.concatenate %24, %25, %26 in 0 : vector<1x32xf32>, vector<13x32xf32>, vector<2x32xf32> -> vector<16x32xf32>
    %28 = arith.addf %27, %21 : vector<16x32xf32>
    %c0_24 = arith.constant 0 : index
    %c0_25 = arith.constant 0 : index
    %c0_26 = arith.constant 0 : index
    %29 = vector.load %arg12[%c0_24, %c0_25, %c0_26] : memref<2x16x32xf32, #tpu.memory_space<vmem>>, vector<1x16x32xf32>
    %30 = vector.shape_cast %29 : vector<1x16x32xf32> to vector<16x32xf32>
    %31 = vector.shape_cast %28 : vector<16x32xf32> to vector<1x16x32xf32>
    tpu.vector_store %arg12[%c0_24, %c0_25, %c0_26], %31 {strides = array<i32>} : memref<2x16x32xf32, #tpu.memory_space<vmem>>, vector<1x16x32xf32>,
    %32 = vector.extract_strided_slice %6 {offsets = [0, 0], sizes = [1, 32], strides = [1, 1]} : vector<2x32xf32> to vector<1x32xf32>
    %33 = arith.negf %32 : vector<1x32xf32>
    %34 = math.exp %33 : vector<1x32xf32>
    %cst_27 = arith.constant 1.000000e+00 : f32
    %35 = vector.broadcast %cst_27 : f32 to vector<1x32xf32>
    %36 = arith.addf %35, %34 : vector<1x32xf32>
    %37 = arith.divf %35, %36 : vector<1x32xf32>
    %38 = arith.mulf %32, %37 : vector<1x32xf32>
    %c0_28 = arith.constant 0 : index
    %c0_29 = arith.constant 0 : index
    %c0_30 = arith.constant 0 : index
    %39 = vector.load %arg13[%c0_28, %c0_29, %c0_30] : memref<2x1x32xf32, #tpu.memory_space<vmem>>, vector<1x1x32xf32>
    %40 = vector.shape_cast %39 : vector<1x1x32xf32> to vector<1x32xf32>
    %41 = vector.shape_cast %38 : vector<1x32xf32> to vector<1x1x32xf32>
    tpu.vector_store %arg13[%c0_28, %c0_29, %c0_30], %41 {strides = array<i32>} : memref<2x1x32xf32, #tpu.memory_space<vmem>>, vector<1x1x32xf32>,
    %42 = vector.extract_strided_slice %20 {offsets = [0, 0], sizes = [1, 32], strides = [1, 1]} : vector<2x32xf32> to vector<1x32xf32>
    %c0_31 = arith.constant 0 : index
    %c0_32 = arith.constant 0 : index
    %c0_33 = arith.constant 0 : index
    %43 = vector.load %arg14[%c0_31, %c0_32, %c0_33] : memref<2x1x32xf32, #tpu.memory_space<vmem>>, vector<1x1x32xf32>
    %44 = vector.shape_cast %43 : vector<1x1x32xf32> to vector<1x32xf32>
    %45 = vector.shape_cast %42 : vector<1x32xf32> to vector<1x1x32xf32>
    tpu.vector_store %arg14[%c0_31, %c0_32, %c0_33], %45 {strides = array<i32>} : memref<2x1x32xf32, #tpu.memory_space<vmem>>, vector<1x1x32xf32>,
    %46 = vector.extract_strided_slice %6 {offsets = [1, 0], sizes = [1, 32], strides = [1, 1]} : vector<2x32xf32> to vector<1x32xf32>
    %c0_34 = arith.constant 0 : index
    %c0_35 = arith.constant 0 : index
    %47 = vector.load %arg7[%c0_34, %c0_35] : memref<1x32xf32, #tpu.memory_space<vmem>>, vector<1x32xf32>
    %48 = arith.addf %46, %47 : vector<1x32xf32>
    %49 = vector.extract_strided_slice %13 {offsets = [13, 0], sizes = [13, 32], strides = [1, 1]} : vector<26x32xf32> to vector<13x32xf32>
    %cst_36 = arith.constant 0.000000e+00 : f32
    %50 = vector.broadcast %cst_36 : f32 to vector<2x32xf32>
    %51 = tpu.concatenate %48, %49, %50 in 0 : vector<1x32xf32>, vector<13x32xf32>, vector<2x32xf32> -> vector<16x32xf32>
    %52 = arith.addf %51, %21 : vector<16x32xf32>
    %c1 = arith.constant 1 : index
    %c0_37 = arith.constant 0 : index
    %c0_38 = arith.constant 0 : index
    %53 = vector.load %arg12[%c1, %c0_37, %c0_38] : memref<2x16x32xf32, #tpu.memory_space<vmem>>, vector<1x16x32xf32>
    %54 = vector.shape_cast %53 : vector<1x16x32xf32> to vector<16x32xf32>
    %55 = vector.shape_cast %52 : vector<16x32xf32> to vector<1x16x32xf32>
    tpu.vector_store %arg12[%c1, %c0_37, %c0_38], %55 {strides = array<i32>} : memref<2x16x32xf32, #tpu.memory_space<vmem>>, vector<1x16x32xf32>,
    %56 = vector.extract_strided_slice %6 {offsets = [1, 0], sizes = [1, 32], strides = [1, 1]} : vector<2x32xf32> to vector<1x32xf32>
    %57 = arith.negf %56 : vector<1x32xf32>
    %58 = math.exp %57 : vector<1x32xf32>
    %cst_39 = arith.constant 1.000000e+00 : f32
    %59 = vector.broadcast %cst_39 : f32 to vector<1x32xf32>
    %60 = arith.addf %59, %58 : vector<1x32xf32>
    %61 = arith.divf %59, %60 : vector<1x32xf32>
    %62 = arith.mulf %56, %61 : vector<1x32xf32>
    %c1_40 = arith.constant 1 : index
    %c0_41 = arith.constant 0 : index
    %c0_42 = arith.constant 0 : index
    %63 = vector.load %arg13[%c1_40, %c0_41, %c0_42] : memref<2x1x32xf32, #tpu.memory_space<vmem>>, vector<1x1x32xf32>
    %64 = vector.shape_cast %63 : vector<1x1x32xf32> to vector<1x32xf32>
    %65 = vector.shape_cast %62 : vector<1x32xf32> to vector<1x1x32xf32>
    tpu.vector_store %arg13[%c1_40, %c0_41, %c0_42], %65 {strides = array<i32>} : memref<2x1x32xf32, #tpu.memory_space<vmem>>, vector<1x1x32xf32>,
    %66 = vector.extract_strided_slice %20 {offsets = [1, 0], sizes = [1, 32], strides = [1, 1]} : vector<2x32xf32> to vector<1x32xf32>
    %c1_43 = arith.constant 1 : index
    %c0_44 = arith.constant 0 : index
    %c0_45 = arith.constant 0 : index
    %67 = vector.load %arg14[%c1_43, %c0_44, %c0_45] : memref<2x1x32xf32, #tpu.memory_space<vmem>>, vector<1x1x32xf32>
    %68 = vector.shape_cast %67 : vector<1x1x32xf32> to vector<1x32xf32>
    %69 = vector.shape_cast %66 : vector<1x32xf32> to vector<1x1x32xf32>
    tpu.vector_store %arg14[%c1_43, %c0_44, %c0_45], %69 {strides = array<i32>} : memref<2x1x32xf32, #tpu.memory_space<vmem>>, vector<1x1x32xf32>,
    return
  }
  func.func @transform_0(%arg0: i32) -> (i32, i32) {
    %c0_i32 = arith.constant 0 : i32
    %c0_i32_0 = arith.constant 0 : i32
    %c0_i32_1 = arith.constant 0 : i32
    return %c0_i32, %c0_i32_0 : i32, i32
  }
  func.func @transform_1(%arg0: i32) -> (i32, i32) {
    %c0_i32 = arith.constant 0 : i32
    %c0_i32_0 = arith.constant 0 : i32
    %c0_i32_1 = arith.constant 0 : i32
    return %c0_i32, %c0_i32_0 : i32, i32
  }
  func.func @transform_2(%arg0: i32) -> (i32, i32) {
    %c0_i32 = arith.constant 0 : i32
    %c0_i32_0 = arith.constant 0 : i32
    %c0_i32_1 = arith.constant 0 : i32
    return %c0_i32, %c0_i32_0 : i32, i32
  }
  func.func @transform_3(%arg0: i32) -> (i32, i32) {
    %c0_i32 = arith.constant 0 : i32
    %c0_i32_0 = arith.constant 0 : i32
    %c0_i32_1 = arith.constant 0 : i32
    return %c0_i32, %c0_i32_0 : i32, i32
  }
  func.func @transform_4(%arg0: i32) -> (i32, i32) {
    %c0_i32 = arith.constant 0 : i32
    %c0_i32_0 = arith.constant 0 : i32
    %c0_i32_1 = arith.constant 0 : i32
    return %c0_i32, %c0_i32_0 : i32, i32
  }
  func.func @transform_5(%arg0: i32) -> (i32, i32) {
    %c0_i32 = arith.constant 0 : i32
    %c0_i32_0 = arith.constant 0 : i32
    %c0_i32_1 = arith.constant 0 : i32
    return %c0_i32, %c0_i32_0 : i32, i32
  }
  func.func @transform_6(%arg0: i32) -> (i32, i32) {
    %c0_i32 = arith.constant 0 : i32
    %c0_i32_0 = arith.constant 0 : i32
    %c0_i32_1 = arith.constant 0 : i32
    return %c0_i32, %c0_i32_0 : i32, i32
  }
  func.func @transform_7(%arg0: i32) -> (i32, i32) {
    %c0_i32 = arith.constant 0 : i32
    %c0_i32_0 = arith.constant 0 : i32
    %c0_i32_1 = arith.constant 0 : i32
    return %c0_i32, %c0_i32_0 : i32, i32
  }
  func.func @transform_8(%arg0: i32) -> (i32, i32) {
    %c0_i32 = arith.constant 0 : i32
    %c0_i32_0 = arith.constant 0 : i32
    %c0_i32_1 = arith.constant 0 : i32
    return %c0_i32, %c0_i32_0 : i32, i32
  }
  func.func @transform_9(%arg0: i32) -> (i32, i32) {
    %c0_i32 = arith.constant 0 : i32
    %c0_i32_0 = arith.constant 0 : i32
    %c0_i32_1 = arith.constant 0 : i32
    return %c0_i32, %c0_i32_0 : i32, i32
  }
  func.func @transform_10(%arg0: i32) -> (i32, i32) {
    %c0_i32 = arith.constant 0 : i32
    %c0_i32_0 = arith.constant 0 : i32
    %c0_i32_1 = arith.constant 0 : i32
    return %c0_i32, %c0_i32_0 : i32, i32
  }
  func.func @transform_11(%arg0: i32) -> (i32, i32, i32) {
    %c0_i32 = arith.constant 0 : i32
    %c0_i32_0 = arith.constant 0 : i32
    %c0_i32_1 = arith.constant 0 : i32
    %c0_i32_2 = arith.constant 0 : i32
    return %c0_i32, %c0_i32_0, %c0_i32_1 : i32, i32, i32
  }
  func.func @transform_12(%arg0: i32) -> (i32, i32, i32) {
    %c0_i32 = arith.constant 0 : i32
    %c0_i32_0 = arith.constant 0 : i32
    %c0_i32_1 = arith.constant 0 : i32
    %c0_i32_2 = arith.constant 0 : i32
    return %c0_i32, %c0_i32_0, %c0_i32_1 : i32, i32, i32
  }
  func.func @transform_13(%arg0: i32) -> (i32, i32, i32) {
    %c0_i32 = arith.constant 0 : i32
    %c0_i32_0 = arith.constant 0 : i32
    %c0_i32_1 = arith.constant 0 : i32
    %c0_i32_2 = arith.constant 0 : i32
    return %c0_i32, %c0_i32_0, %c0_i32_1 : i32, i32, i32
  }
}

module attributes {stable_mosaic.version = 11 : i64} {
  func.func @_block_kernel(%arg0: i32, %arg1: memref<1x16x32xf32, #tpu.memory_space<vmem>>, %arg2: memref<1x1x32xf32, #tpu.memory_space<vmem>>, %arg3: memref<1x1x32xf32, #tpu.memory_space<vmem>>, %arg4: memref<1x8x64xf32, #tpu.memory_space<vmem>>, %arg5: memref<1x1x8xf32, #tpu.memory_space<vmem>>, %arg6: memref<16x16xf32, #tpu.memory_space<vmem>>, %arg7: memref<16x32xf32, #tpu.memory_space<vmem>>, %arg8: memref<16x32xf32, #tpu.memory_space<vmem>>, %arg9: memref<32x32xf32, #tpu.memory_space<vmem>>, %arg10: memref<32x32xf32, #tpu.memory_space<vmem>>, %arg11: memref<1x32xf32, #tpu.memory_space<vmem>>, %arg12: memref<1x32xf32, #tpu.memory_space<vmem>>, %arg13: memref<32x192xbf16, #tpu.memory_space<vmem>>, %arg14: memref<1x192xf32, #tpu.memory_space<vmem>>, %arg15: memref<1x192xf32, #tpu.memory_space<vmem>>, %arg16: memref<32x96xbf16, #tpu.memory_space<vmem>>, %arg17: memref<1x96xf32, #tpu.memory_space<vmem>>, %arg18: memref<32x32xbf16, #tpu.memory_space<vmem>>, %arg19: memref<1x32xf32, #tpu.memory_space<vmem>>, %arg20: memref<32x32xbf16, #tpu.memory_space<vmem>>, %arg21: memref<1x32xf32, #tpu.memory_space<vmem>>, %arg22: memref<32x32xbf16, #tpu.memory_space<vmem>>, %arg23: memref<1x32xf32, #tpu.memory_space<vmem>>, %arg24: memref<32x256xbf16, #tpu.memory_space<vmem>>, %arg25: memref<1x256xf32, #tpu.memory_space<vmem>>, %arg26: memref<128x32xbf16, #tpu.memory_space<vmem>>, %arg27: memref<1x32xf32, #tpu.memory_space<vmem>>, %arg28: memref<1x16x32xf32, #tpu.memory_space<vmem>>) attributes {dimension_semantics = [#tpu.dimension_semantics<parallel>], iteration_bounds = array<i64: 2>, scalar_prefetch = 0 : i64, scratch_operands = 0 : i64, tpu.core_type = #tpu.core_type<tc>, window_params = [{transform_indices = @transform_0, window_bounds = array<i64: 1, 16, 32>}, {transform_indices = @transform_1, window_bounds = array<i64: 1, 1, 32>}, {transform_indices = @transform_2, window_bounds = array<i64: 1, 1, 32>}, {transform_indices = @transform_3, window_bounds = array<i64: 1, 8, 64>}, {transform_indices = @transform_4, window_bounds = array<i64: 1, 1, 8>}, {pipeline_mode = #tpu.pipeline_mode<synchronous>, transform_indices = @transform_5, window_bounds = array<i64: 16, 16>}, {pipeline_mode = #tpu.pipeline_mode<synchronous>, transform_indices = @transform_6, window_bounds = array<i64: 16, 32>}, {pipeline_mode = #tpu.pipeline_mode<synchronous>, transform_indices = @transform_7, window_bounds = array<i64: 16, 32>}, {pipeline_mode = #tpu.pipeline_mode<synchronous>, transform_indices = @transform_8, window_bounds = array<i64: 32, 32>}, {pipeline_mode = #tpu.pipeline_mode<synchronous>, transform_indices = @transform_9, window_bounds = array<i64: 32, 32>}, {pipeline_mode = #tpu.pipeline_mode<synchronous>, transform_indices = @transform_10, window_bounds = array<i64: 1, 32>}, {pipeline_mode = #tpu.pipeline_mode<synchronous>, transform_indices = @transform_11, window_bounds = array<i64: 1, 32>}, {pipeline_mode = #tpu.pipeline_mode<synchronous>, transform_indices = @transform_12, window_bounds = array<i64: 32, 192>}, {pipeline_mode = #tpu.pipeline_mode<synchronous>, transform_indices = @transform_13, window_bounds = array<i64: 1, 192>}, {pipeline_mode = #tpu.pipeline_mode<synchronous>, transform_indices = @transform_14, window_bounds = array<i64: 1, 192>}, {pipeline_mode = #tpu.pipeline_mode<synchronous>, transform_indices = @transform_15, window_bounds = array<i64: 32, 96>}, {pipeline_mode = #tpu.pipeline_mode<synchronous>, transform_indices = @transform_16, window_bounds = array<i64: 1, 96>}, {pipeline_mode = #tpu.pipeline_mode<synchronous>, transform_indices = @transform_17, window_bounds = array<i64: 32, 32>}, {pipeline_mode = #tpu.pipeline_mode<synchronous>, transform_indices = @transform_18, window_bounds = array<i64: 1, 32>}, {pipeline_mode = #tpu.pipeline_mode<synchronous>, transform_indices = @transform_19, window_bounds = array<i64: 32, 32>}, {pipeline_mode = #tpu.pipeline_mode<synchronous>, transform_indices = @transform_20, window_bounds = array<i64: 1, 32>}, {pipeline_mode = #tpu.pipeline_mode<synchronous>, transform_indices = @transform_21, window_bounds = array<i64: 32, 32>}, {pipeline_mode = #tpu.pipeline_mode<synchronous>, transform_indices = @transform_22, window_bounds = array<i64: 1, 32>}, {pipeline_mode = #tpu.pipeline_mode<synchronous>, transform_indices = @transform_23, window_bounds = array<i64: 32, 256>}, {pipeline_mode = #tpu.pipeline_mode<synchronous>, transform_indices = @transform_24, window_bounds = array<i64: 1, 256>}, {pipeline_mode = #tpu.pipeline_mode<synchronous>, transform_indices = @transform_25, window_bounds = array<i64: 128, 32>}, {pipeline_mode = #tpu.pipeline_mode<synchronous>, transform_indices = @transform_26, window_bounds = array<i64: 1, 32>}, {transform_indices = @transform_27, window_bounds = array<i64: 1, 16, 32>}]} {
    %c0 = arith.constant 0 : index
    %c0_0 = arith.constant 0 : index
    %c0_1 = arith.constant 0 : index
    %0 = vector.load %arg1[%c0, %c0_0, %c0_1] : memref<1x16x32xf32, #tpu.memory_space<vmem>>, vector<1x16x32xf32>
    %1 = vector.shape_cast %0 : vector<1x16x32xf32> to vector<16x32xf32>
    %c0_2 = arith.constant 0 : index
    %c0_3 = arith.constant 0 : index
    %c0_4 = arith.constant 0 : index
    %2 = vector.load %arg2[%c0_2, %c0_3, %c0_4] : memref<1x1x32xf32, #tpu.memory_space<vmem>>, vector<1x1x32xf32>
    %3 = vector.shape_cast %2 : vector<1x1x32xf32> to vector<1x32xf32>
    %c0_5 = arith.constant 0 : index
    %c0_6 = arith.constant 0 : index
    %c0_7 = arith.constant 0 : index
    %4 = vector.load %arg3[%c0_5, %c0_6, %c0_7] : memref<1x1x32xf32, #tpu.memory_space<vmem>>, vector<1x1x32xf32>
    %5 = vector.shape_cast %4 : vector<1x1x32xf32> to vector<1x32xf32>
    %c0_8 = arith.constant 0 : index
    %c0_9 = arith.constant 0 : index
    %6 = vector.load %arg7[%c0_8, %c0_9] : memref<16x32xf32, #tpu.memory_space<vmem>>, vector<16x32xf32>
    %c0_10 = arith.constant 0 : index
    %c0_11 = arith.constant 0 : index
    %7 = vector.load %arg8[%c0_10, %c0_11] : memref<16x32xf32, #tpu.memory_space<vmem>>, vector<16x32xf32>
    %c0_12 = arith.constant 0 : index
    %c0_13 = arith.constant 0 : index
    %8 = vector.load %arg9[%c0_12, %c0_13] : memref<32x32xf32, #tpu.memory_space<vmem>>, vector<32x32xf32>
    %c0_14 = arith.constant 0 : index
    %c0_15 = arith.constant 0 : index
    %9 = vector.load %arg10[%c0_14, %c0_15] : memref<32x32xf32, #tpu.memory_space<vmem>>, vector<32x32xf32>
    %10 = arith.truncf %3 : vector<1x32xf32> to vector<1x32xbf16>
    %c0_16 = arith.constant 0 : index
    %c0_17 = arith.constant 0 : index
    %11 = vector.load %arg13[%c0_16, %c0_17] : memref<32x192xbf16, #tpu.memory_space<vmem>>, vector<32x192xbf16>
    %cst = arith.constant dense<0.000000e+00> : vector<1x192xf32>
    %12 = tpu.matmul %10, %11, %cst {dimension_numbers = #tpu.dot_dimension_numbers<[1], [0], [0], [1], [0, 0, 1, 1], [], []>} : vector<1x32xbf16>, vector<32x192xbf16>, vector<1x192xf32> -> vector<1x192xf32>
    %c0_18 = arith.constant 0 : index
    %c0_19 = arith.constant 0 : index
    %13 = vector.load %arg14[%c0_18, %c0_19] : memref<1x192xf32, #tpu.memory_space<vmem>>, vector<1x192xf32>
    %14 = arith.addf %12, %13 : vector<1x192xf32>
    %c0_20 = arith.constant 0 : index
    %c0_21 = arith.constant 0 : index
    %15 = vector.load %arg15[%c0_20, %c0_21] : memref<1x192xf32, #tpu.memory_space<vmem>>, vector<1x192xf32>
    %16 = vector.extract_strided_slice %14 {offsets = [0, 0], sizes = [1, 32], strides = [1, 1]} : vector<1x192xf32> to vector<1x32xf32>
    %17 = vector.extract_strided_slice %15 {offsets = [0, 0], sizes = [1, 32], strides = [1, 1]} : vector<1x192xf32> to vector<1x32xf32>
    %18 = arith.mulf %17, %5 : vector<1x32xf32>
    %19 = arith.addf %16, %18 : vector<1x32xf32>
    %20 = vector.extract_strided_slice %14 {offsets = [0, 32], sizes = [1, 32], strides = [1, 1]} : vector<1x192xf32> to vector<1x32xf32>
    %21 = vector.extract_strided_slice %15 {offsets = [0, 32], sizes = [1, 32], strides = [1, 1]} : vector<1x192xf32> to vector<1x32xf32>
    %22 = arith.mulf %21, %5 : vector<1x32xf32>
    %23 = arith.addf %20, %22 : vector<1x32xf32>
    %24 = vector.extract_strided_slice %14 {offsets = [0, 64], sizes = [1, 32], strides = [1, 1]} : vector<1x192xf32> to vector<1x32xf32>
    %25 = vector.extract_strided_slice %15 {offsets = [0, 64], sizes = [1, 32], strides = [1, 1]} : vector<1x192xf32> to vector<1x32xf32>
    %26 = arith.mulf %25, %5 : vector<1x32xf32>
    %27 = arith.addf %24, %26 : vector<1x32xf32>
    %28 = vector.extract_strided_slice %14 {offsets = [0, 96], sizes = [1, 32], strides = [1, 1]} : vector<1x192xf32> to vector<1x32xf32>
    %29 = vector.extract_strided_slice %15 {offsets = [0, 96], sizes = [1, 32], strides = [1, 1]} : vector<1x192xf32> to vector<1x32xf32>
    %30 = arith.mulf %29, %5 : vector<1x32xf32>
    %31 = arith.addf %28, %30 : vector<1x32xf32>
    %32 = vector.extract_strided_slice %14 {offsets = [0, 128], sizes = [1, 32], strides = [1, 1]} : vector<1x192xf32> to vector<1x32xf32>
    %33 = vector.extract_strided_slice %15 {offsets = [0, 128], sizes = [1, 32], strides = [1, 1]} : vector<1x192xf32> to vector<1x32xf32>
    %34 = arith.mulf %33, %5 : vector<1x32xf32>
    %35 = arith.addf %32, %34 : vector<1x32xf32>
    %36 = vector.extract_strided_slice %14 {offsets = [0, 160], sizes = [1, 32], strides = [1, 1]} : vector<1x192xf32> to vector<1x32xf32>
    %37 = vector.extract_strided_slice %15 {offsets = [0, 160], sizes = [1, 32], strides = [1, 1]} : vector<1x192xf32> to vector<1x32xf32>
    %38 = arith.mulf %37, %5 : vector<1x32xf32>
    %39 = arith.addf %36, %38 : vector<1x32xf32>
    %cst_22 = arith.constant dense<0.000000e+00> : vector<16xf32>
    %40 = vector.multi_reduction <add>, %1, %cst_22 [1] : vector<16x32xf32> to vector<16xf32>
    %41 = vector.shape_cast %40 : vector<16xf32> to vector<16x1xf32>
    %cst_23 = arith.constant 3.200000e+01 : f32
    %42 = vector.broadcast %cst_23 : f32 to vector<16x1xf32>
    %43 = arith.divf %41, %42 : vector<16x1xf32>
    %44 = vector.broadcast %43 : vector<16x1xf32> to vector<16x32xf32>
    %45 = arith.subf %1, %44 : vector<16x32xf32>
    %46 = arith.mulf %45, %45 : vector<16x32xf32>
    %cst_24 = arith.constant dense<0.000000e+00> : vector<16xf32>
    %47 = vector.multi_reduction <add>, %46, %cst_24 [1] : vector<16x32xf32> to vector<16xf32>
    %48 = vector.shape_cast %47 : vector<16xf32> to vector<16x1xf32>
    %cst_25 = arith.constant 3.200000e+01 : f32
    %49 = vector.broadcast %cst_25 : f32 to vector<16x1xf32>
    %50 = arith.divf %48, %49 : vector<16x1xf32>
    %cst_26 = arith.constant 9.99999997E-7 : f32
    %51 = vector.broadcast %cst_26 : f32 to vector<16x1xf32>
    %52 = arith.addf %50, %51 : vector<16x1xf32>
    %53 = math.rsqrt %52 : vector<16x1xf32>
    %54 = vector.broadcast %53 : vector<16x1xf32> to vector<16x32xf32>
    %55 = arith.mulf %45, %54 : vector<16x32xf32>
    %cst_27 = arith.constant 1.000000e+00 : f32
    %56 = vector.broadcast %cst_27 : f32 to vector<1x32xf32>
    %57 = arith.addf %27, %56 : vector<1x32xf32>
    %58 = vector.broadcast %57 : vector<1x32xf32> to vector<16x32xf32>
    %59 = arith.mulf %55, %58 : vector<16x32xf32>
    %60 = vector.broadcast %35 : vector<1x32xf32> to vector<16x32xf32>
    %61 = arith.addf %59, %60 : vector<16x32xf32>
    %62 = arith.truncf %61 : vector<16x32xf32> to vector<16x32xbf16>
    %c0_28 = arith.constant 0 : index
    %c0_29 = arith.constant 0 : index
    %63 = vector.load %arg16[%c0_28, %c0_29] : memref<32x96xbf16, #tpu.memory_space<vmem>>, vector<32x96xbf16>
    %cst_30 = arith.constant dense<0.000000e+00> : vector<16x96xf32>
    %64 = tpu.matmul %62, %63, %cst_30 {dimension_numbers = #tpu.dot_dimension_numbers<[1], [0], [0], [1], [0, 0, 1, 1], [], []>} : vector<16x32xbf16>, vector<32x96xbf16>, vector<16x96xf32> -> vector<16x96xf32>
    %c0_31 = arith.constant 0 : index
    %c0_32 = arith.constant 0 : index
    %65 = vector.load %arg17[%c0_31, %c0_32] : memref<1x96xf32, #tpu.memory_space<vmem>>, vector<1x96xf32>
    %66 = vector.broadcast %65 : vector<1x96xf32> to vector<16x96xf32>
    %67 = arith.addf %64, %66 : vector<16x96xf32>
    %68 = vector.extract_strided_slice %67 {offsets = [0, 0], sizes = [16, 32], strides = [1, 1]} : vector<16x96xf32> to vector<16x32xf32>
    %69 = arith.mulf %68, %68 : vector<16x32xf32>
    %cst_33 = arith.constant dense<0.000000e+00> : vector<16x32xf32>
    %70 = tpu.matmul %69, %9, %cst_33 {dimension_numbers = #tpu.dot_dimension_numbers<[1], [0], [0], [1], [0, 0, 1, 1], [], []>} : vector<16x32xf32>, vector<32x32xf32>, vector<16x32xf32> -> vector<16x32xf32>
    %cst_34 = arith.constant 9.99999996E-13 : f32
    %71 = vector.broadcast %cst_34 : f32 to vector<16x32xf32>
    %72 = arith.addf %70, %71 : vector<16x32xf32>
    %73 = math.rsqrt %72 : vector<16x32xf32>
    %74 = arith.mulf %68, %73 : vector<16x32xf32>
    %c0_35 = arith.constant 0 : index
    %c0_36 = arith.constant 0 : index
    %75 = vector.load %arg11[%c0_35, %c0_36] : memref<1x32xf32, #tpu.memory_space<vmem>>, vector<1x32xf32>
    %76 = vector.broadcast %75 : vector<1x32xf32> to vector<16x32xf32>
    %77 = arith.mulf %74, %76 : vector<16x32xf32>
    %78 = arith.mulf %77, %6 : vector<16x32xf32>
    %cst_37 = arith.constant dense<0.000000e+00> : vector<16x32xf32>
    %79 = tpu.matmul %77, %8, %cst_37 {dimension_numbers = #tpu.dot_dimension_numbers<[1], [0], [0], [1], [0, 0, 1, 1], [], []>} : vector<16x32xf32>, vector<32x32xf32>, vector<16x32xf32> -> vector<16x32xf32>
    %80 = arith.mulf %79, %7 : vector<16x32xf32>
    %81 = arith.addf %78, %80 : vector<16x32xf32>
    %82 = vector.extract_strided_slice %67 {offsets = [0, 32], sizes = [16, 32], strides = [1, 1]} : vector<16x96xf32> to vector<16x32xf32>
    %83 = arith.mulf %82, %82 : vector<16x32xf32>
    %cst_38 = arith.constant dense<0.000000e+00> : vector<16x32xf32>
    %84 = tpu.matmul %83, %9, %cst_38 {dimension_numbers = #tpu.dot_dimension_numbers<[1], [0], [0], [1], [0, 0, 1, 1], [], []>} : vector<16x32xf32>, vector<32x32xf32>, vector<16x32xf32> -> vector<16x32xf32>
    %cst_39 = arith.constant 9.99999996E-13 : f32
    %85 = vector.broadcast %cst_39 : f32 to vector<16x32xf32>
    %86 = arith.addf %84, %85 : vector<16x32xf32>
    %87 = math.rsqrt %86 : vector<16x32xf32>
    %88 = arith.mulf %82, %87 : vector<16x32xf32>
    %89 = arith.mulf %88, %6 : vector<16x32xf32>
    %cst_40 = arith.constant dense<0.000000e+00> : vector<16x32xf32>
    %90 = tpu.matmul %88, %8, %cst_40 {dimension_numbers = #tpu.dot_dimension_numbers<[1], [0], [0], [1], [0, 0, 1, 1], [], []>} : vector<16x32xf32>, vector<32x32xf32>, vector<16x32xf32> -> vector<16x32xf32>
    %91 = arith.mulf %90, %7 : vector<16x32xf32>
    %92 = arith.addf %89, %91 : vector<16x32xf32>
    %93 = vector.extract_strided_slice %67 {offsets = [0, 64], sizes = [16, 32], strides = [1, 1]} : vector<16x96xf32> to vector<16x32xf32>
    %c0_41 = arith.constant 0 : index
    %c0_42 = arith.constant 0 : index
    %94 = vector.load %arg6[%c0_41, %c0_42] : memref<16x16xf32, #tpu.memory_space<vmem>>, vector<16x16xf32>
    %c0_43 = arith.constant 0 : index
    %c0_44 = arith.constant 0 : index
    %95 = vector.load %arg18[%c0_43, %c0_44] : memref<32x32xbf16, #tpu.memory_space<vmem>>, vector<32x32xbf16>
    %c0_45 = arith.constant 0 : index
    %c0_46 = arith.constant 0 : index
    %96 = vector.load %arg19[%c0_45, %c0_46] : memref<1x32xf32, #tpu.memory_space<vmem>>, vector<1x32xf32>
    %97 = vector.extract_strided_slice %81 {offsets = [0, 0], sizes = [16, 8], strides = [1, 1]} : vector<16x32xf32> to vector<16x8xf32>
    %98 = arith.truncf %97 : vector<16x8xf32> to vector<16x8xbf16>
    %99 = vector.extract_strided_slice %92 {offsets = [0, 0], sizes = [16, 8], strides = [1, 1]} : vector<16x32xf32> to vector<16x8xf32>
    %100 = tpu.transpose %99, [1, 0] : vector<16x8xf32> -> vector<8x16xf32>
    %101 = arith.truncf %100 : vector<8x16xf32> to vector<8x16xbf16>
    %cst_47 = arith.constant dense<0.000000e+00> : vector<16x16xf32>
    %102 = tpu.matmul %98, %101, %cst_47 {dimension_numbers = #tpu.dot_dimension_numbers<[1], [0], [0], [1], [0, 0, 1, 1], [], []>} : vector<16x8xbf16>, vector<8x16xbf16>, vector<16x16xf32> -> vector<16x16xf32>
    %103 = arith.addf %102, %94 : vector<16x16xf32>
    %cst_48 = arith.constant dense<0xFF800000> : vector<16xf32>
    %104 = vector.multi_reduction <maximumf>, %103, %cst_48 [1] : vector<16x16xf32> to vector<16xf32>
    %105 = vector.shape_cast %104 : vector<16xf32> to vector<16x1xf32>
    %106 = vector.broadcast %105 : vector<16x1xf32> to vector<16x16xf32>
    %107 = arith.subf %103, %106 : vector<16x16xf32>
    %108 = math.exp %107 : vector<16x16xf32>
    %cst_49 = arith.constant dense<0.000000e+00> : vector<16xf32>
    %109 = vector.multi_reduction <add>, %108, %cst_49 [1] : vector<16x16xf32> to vector<16xf32>
    %110 = vector.shape_cast %109 : vector<16xf32> to vector<16x1xf32>
    %111 = tpu.reciprocal %110 {approx = true} : vector<16x1xf32> -> vector<16x1xf32>
    %112 = vector.broadcast %111 : vector<16x1xf32> to vector<16x16xf32>
    %113 = arith.mulf %108, %112 : vector<16x16xf32>
    %114 = arith.truncf %113 : vector<16x16xf32> to vector<16x16xbf16>
    %115 = vector.extract_strided_slice %93 {offsets = [0, 0], sizes = [16, 8], strides = [1, 1]} : vector<16x32xf32> to vector<16x8xf32>
    %116 = arith.truncf %115 : vector<16x8xf32> to vector<16x8xbf16>
    %cst_50 = arith.constant dense<0.000000e+00> : vector<16x8xf32>
    %117 = tpu.matmul %114, %116, %cst_50 {dimension_numbers = #tpu.dot_dimension_numbers<[1], [0], [0], [1], [0, 0, 1, 1], [], []>} : vector<16x16xbf16>, vector<16x8xbf16>, vector<16x8xf32> -> vector<16x8xf32>
    %118 = arith.truncf %117 : vector<16x8xf32> to vector<16x8xbf16>
    %119 = vector.extract_strided_slice %95 {offsets = [0, 0], sizes = [8, 32], strides = [1, 1]} : vector<32x32xbf16> to vector<8x32xbf16>
    %cst_51 = arith.constant dense<0.000000e+00> : vector<16x32xf32>
    %120 = tpu.matmul %118, %119, %cst_51 {dimension_numbers = #tpu.dot_dimension_numbers<[1], [0], [0], [1], [0, 0, 1, 1], [], []>} : vector<16x8xbf16>, vector<8x32xbf16>, vector<16x32xf32> -> vector<16x32xf32>
    %121 = vector.extract_strided_slice %81 {offsets = [0, 8], sizes = [16, 8], strides = [1, 1]} : vector<16x32xf32> to vector<16x8xf32>
    %122 = arith.truncf %121 : vector<16x8xf32> to vector<16x8xbf16>
    %123 = vector.extract_strided_slice %92 {offsets = [0, 8], sizes = [16, 8], strides = [1, 1]} : vector<16x32xf32> to vector<16x8xf32>
    %124 = tpu.transpose %123, [1, 0] : vector<16x8xf32> -> vector<8x16xf32>
    %125 = arith.truncf %124 : vector<8x16xf32> to vector<8x16xbf16>
    %cst_52 = arith.constant dense<0.000000e+00> : vector<16x16xf32>
    %126 = tpu.matmul %122, %125, %cst_52 {dimension_numbers = #tpu.dot_dimension_numbers<[1], [0], [0], [1], [0, 0, 1, 1], [], []>} : vector<16x8xbf16>, vector<8x16xbf16>, vector<16x16xf32> -> vector<16x16xf32>
    %127 = arith.addf %126, %94 : vector<16x16xf32>
    %cst_53 = arith.constant dense<0xFF800000> : vector<16xf32>
    %128 = vector.multi_reduction <maximumf>, %127, %cst_53 [1] : vector<16x16xf32> to vector<16xf32>
    %129 = vector.shape_cast %128 : vector<16xf32> to vector<16x1xf32>
    %130 = vector.broadcast %129 : vector<16x1xf32> to vector<16x16xf32>
    %131 = arith.subf %127, %130 : vector<16x16xf32>
    %132 = math.exp %131 : vector<16x16xf32>
    %cst_54 = arith.constant dense<0.000000e+00> : vector<16xf32>
    %133 = vector.multi_reduction <add>, %132, %cst_54 [1] : vector<16x16xf32> to vector<16xf32>
    %134 = vector.shape_cast %133 : vector<16xf32> to vector<16x1xf32>
    %135 = tpu.reciprocal %134 {approx = true} : vector<16x1xf32> -> vector<16x1xf32>
    %136 = vector.broadcast %135 : vector<16x1xf32> to vector<16x16xf32>
    %137 = arith.mulf %132, %136 : vector<16x16xf32>
    %138 = arith.truncf %137 : vector<16x16xf32> to vector<16x16xbf16>
    %139 = vector.extract_strided_slice %93 {offsets = [0, 8], sizes = [16, 8], strides = [1, 1]} : vector<16x32xf32> to vector<16x8xf32>
    %140 = arith.truncf %139 : vector<16x8xf32> to vector<16x8xbf16>
    %cst_55 = arith.constant dense<0.000000e+00> : vector<16x8xf32>
    %141 = tpu.matmul %138, %140, %cst_55 {dimension_numbers = #tpu.dot_dimension_numbers<[1], [0], [0], [1], [0, 0, 1, 1], [], []>} : vector<16x16xbf16>, vector<16x8xbf16>, vector<16x8xf32> -> vector<16x8xf32>
    %142 = arith.truncf %141 : vector<16x8xf32> to vector<16x8xbf16>
    %143 = vector.extract_strided_slice %95 {offsets = [8, 0], sizes = [8, 32], strides = [1, 1]} : vector<32x32xbf16> to vector<8x32xbf16>
    %cst_56 = arith.constant dense<0.000000e+00> : vector<16x32xf32>
    %144 = tpu.matmul %142, %143, %cst_56 {dimension_numbers = #tpu.dot_dimension_numbers<[1], [0], [0], [1], [0, 0, 1, 1], [], []>} : vector<16x8xbf16>, vector<8x32xbf16>, vector<16x32xf32> -> vector<16x32xf32>
    %145 = arith.addf %120, %144 : vector<16x32xf32>
    %146 = vector.extract_strided_slice %81 {offsets = [0, 16], sizes = [16, 8], strides = [1, 1]} : vector<16x32xf32> to vector<16x8xf32>
    %147 = arith.truncf %146 : vector<16x8xf32> to vector<16x8xbf16>
    %148 = vector.extract_strided_slice %92 {offsets = [0, 16], sizes = [16, 8], strides = [1, 1]} : vector<16x32xf32> to vector<16x8xf32>
    %149 = tpu.transpose %148, [1, 0] : vector<16x8xf32> -> vector<8x16xf32>
    %150 = arith.truncf %149 : vector<8x16xf32> to vector<8x16xbf16>
    %cst_57 = arith.constant dense<0.000000e+00> : vector<16x16xf32>
    %151 = tpu.matmul %147, %150, %cst_57 {dimension_numbers = #tpu.dot_dimension_numbers<[1], [0], [0], [1], [0, 0, 1, 1], [], []>} : vector<16x8xbf16>, vector<8x16xbf16>, vector<16x16xf32> -> vector<16x16xf32>
    %152 = arith.addf %151, %94 : vector<16x16xf32>
    %cst_58 = arith.constant dense<0xFF800000> : vector<16xf32>
    %153 = vector.multi_reduction <maximumf>, %152, %cst_58 [1] : vector<16x16xf32> to vector<16xf32>
    %154 = vector.shape_cast %153 : vector<16xf32> to vector<16x1xf32>
    %155 = vector.broadcast %154 : vector<16x1xf32> to vector<16x16xf32>
    %156 = arith.subf %152, %155 : vector<16x16xf32>
    %157 = math.exp %156 : vector<16x16xf32>
    %cst_59 = arith.constant dense<0.000000e+00> : vector<16xf32>
    %158 = vector.multi_reduction <add>, %157, %cst_59 [1] : vector<16x16xf32> to vector<16xf32>
    %159 = vector.shape_cast %158 : vector<16xf32> to vector<16x1xf32>
    %160 = tpu.reciprocal %159 {approx = true} : vector<16x1xf32> -> vector<16x1xf32>
    %161 = vector.broadcast %160 : vector<16x1xf32> to vector<16x16xf32>
    %162 = arith.mulf %157, %161 : vector<16x16xf32>
    %163 = arith.truncf %162 : vector<16x16xf32> to vector<16x16xbf16>
    %164 = vector.extract_strided_slice %93 {offsets = [0, 16], sizes = [16, 8], strides = [1, 1]} : vector<16x32xf32> to vector<16x8xf32>
    %165 = arith.truncf %164 : vector<16x8xf32> to vector<16x8xbf16>
    %cst_60 = arith.constant dense<0.000000e+00> : vector<16x8xf32>
    %166 = tpu.matmul %163, %165, %cst_60 {dimension_numbers = #tpu.dot_dimension_numbers<[1], [0], [0], [1], [0, 0, 1, 1], [], []>} : vector<16x16xbf16>, vector<16x8xbf16>, vector<16x8xf32> -> vector<16x8xf32>
    %167 = arith.truncf %166 : vector<16x8xf32> to vector<16x8xbf16>
    %168 = vector.extract_strided_slice %95 {offsets = [16, 0], sizes = [8, 32], strides = [1, 1]} : vector<32x32xbf16> to vector<8x32xbf16>
    %cst_61 = arith.constant dense<0.000000e+00> : vector<16x32xf32>
    %169 = tpu.matmul %167, %168, %cst_61 {dimension_numbers = #tpu.dot_dimension_numbers<[1], [0], [0], [1], [0, 0, 1, 1], [], []>} : vector<16x8xbf16>, vector<8x32xbf16>, vector<16x32xf32> -> vector<16x32xf32>
    %170 = arith.addf %145, %169 : vector<16x32xf32>
    %171 = vector.extract_strided_slice %81 {offsets = [0, 24], sizes = [16, 8], strides = [1, 1]} : vector<16x32xf32> to vector<16x8xf32>
    %172 = arith.truncf %171 : vector<16x8xf32> to vector<16x8xbf16>
    %173 = vector.extract_strided_slice %92 {offsets = [0, 24], sizes = [16, 8], strides = [1, 1]} : vector<16x32xf32> to vector<16x8xf32>
    %174 = tpu.transpose %173, [1, 0] : vector<16x8xf32> -> vector<8x16xf32>
    %175 = arith.truncf %174 : vector<8x16xf32> to vector<8x16xbf16>
    %cst_62 = arith.constant dense<0.000000e+00> : vector<16x16xf32>
    %176 = tpu.matmul %172, %175, %cst_62 {dimension_numbers = #tpu.dot_dimension_numbers<[1], [0], [0], [1], [0, 0, 1, 1], [], []>} : vector<16x8xbf16>, vector<8x16xbf16>, vector<16x16xf32> -> vector<16x16xf32>
    %177 = arith.addf %176, %94 : vector<16x16xf32>
    %cst_63 = arith.constant dense<0xFF800000> : vector<16xf32>
    %178 = vector.multi_reduction <maximumf>, %177, %cst_63 [1] : vector<16x16xf32> to vector<16xf32>
    %179 = vector.shape_cast %178 : vector<16xf32> to vector<16x1xf32>
    %180 = vector.broadcast %179 : vector<16x1xf32> to vector<16x16xf32>
    %181 = arith.subf %177, %180 : vector<16x16xf32>
    %182 = math.exp %181 : vector<16x16xf32>
    %cst_64 = arith.constant dense<0.000000e+00> : vector<16xf32>
    %183 = vector.multi_reduction <add>, %182, %cst_64 [1] : vector<16x16xf32> to vector<16xf32>
    %184 = vector.shape_cast %183 : vector<16xf32> to vector<16x1xf32>
    %185 = tpu.reciprocal %184 {approx = true} : vector<16x1xf32> -> vector<16x1xf32>
    %186 = vector.broadcast %185 : vector<16x1xf32> to vector<16x16xf32>
    %187 = arith.mulf %182, %186 : vector<16x16xf32>
    %188 = arith.truncf %187 : vector<16x16xf32> to vector<16x16xbf16>
    %189 = vector.extract_strided_slice %93 {offsets = [0, 24], sizes = [16, 8], strides = [1, 1]} : vector<16x32xf32> to vector<16x8xf32>
    %190 = arith.truncf %189 : vector<16x8xf32> to vector<16x8xbf16>
    %cst_65 = arith.constant dense<0.000000e+00> : vector<16x8xf32>
    %191 = tpu.matmul %188, %190, %cst_65 {dimension_numbers = #tpu.dot_dimension_numbers<[1], [0], [0], [1], [0, 0, 1, 1], [], []>} : vector<16x16xbf16>, vector<16x8xbf16>, vector<16x8xf32> -> vector<16x8xf32>
    %192 = arith.truncf %191 : vector<16x8xf32> to vector<16x8xbf16>
    %193 = vector.extract_strided_slice %95 {offsets = [24, 0], sizes = [8, 32], strides = [1, 1]} : vector<32x32xbf16> to vector<8x32xbf16>
    %cst_66 = arith.constant dense<0.000000e+00> : vector<16x32xf32>
    %194 = tpu.matmul %192, %193, %cst_66 {dimension_numbers = #tpu.dot_dimension_numbers<[1], [0], [0], [1], [0, 0, 1, 1], [], []>} : vector<16x8xbf16>, vector<8x32xbf16>, vector<16x32xf32> -> vector<16x32xf32>
    %195 = arith.addf %170, %194 : vector<16x32xf32>
    %196 = vector.broadcast %96 : vector<1x32xf32> to vector<16x32xf32>
    %197 = arith.addf %195, %196 : vector<16x32xf32>
    %198 = vector.broadcast %19 : vector<1x32xf32> to vector<16x32xf32>
    %199 = arith.mulf %198, %197 : vector<16x32xf32>
    %200 = arith.addf %1, %199 : vector<16x32xf32>
    %201 = arith.truncf %200 : vector<16x32xf32> to vector<16x32xbf16>
    %c0_67 = arith.constant 0 : index
    %c0_68 = arith.constant 0 : index
    %202 = vector.load %arg20[%c0_67, %c0_68] : memref<32x32xbf16, #tpu.memory_space<vmem>>, vector<32x32xbf16>
    %cst_69 = arith.constant dense<0.000000e+00> : vector<16x32xf32>
    %203 = tpu.matmul %201, %202, %cst_69 {dimension_numbers = #tpu.dot_dimension_numbers<[1], [0], [0], [1], [0, 0, 1, 1], [], []>} : vector<16x32xbf16>, vector<32x32xbf16>, vector<16x32xf32> -> vector<16x32xf32>
    %c0_70 = arith.constant 0 : index
    %c0_71 = arith.constant 0 : index
    %204 = vector.load %arg21[%c0_70, %c0_71] : memref<1x32xf32, #tpu.memory_space<vmem>>, vector<1x32xf32>
    %205 = vector.broadcast %204 : vector<1x32xf32> to vector<16x32xf32>
    %206 = arith.addf %203, %205 : vector<16x32xf32>
    %c0_72 = arith.constant 0 : index
    %c0_73 = arith.constant 0 : index
    %c0_74 = arith.constant 0 : index
    %207 = vector.load %arg4[%c0_72, %c0_73, %c0_74] : memref<1x8x64xf32, #tpu.memory_space<vmem>>, vector<1x8x64xf32>
    %208 = vector.shape_cast %207 : vector<1x8x64xf32> to vector<8x64xf32>
    %209 = vector.extract_strided_slice %208 {offsets = [0, 0], sizes = [8, 32], strides = [1, 1]} : vector<8x64xf32> to vector<8x32xf32>
    %210 = arith.mulf %209, %209 : vector<8x32xf32>
    %cst_75 = arith.constant dense<0.000000e+00> : vector<8x32xf32>
    %211 = tpu.matmul %210, %9, %cst_75 {dimension_numbers = #tpu.dot_dimension_numbers<[1], [0], [0], [1], [0, 0, 1, 1], [], []>} : vector<8x32xf32>, vector<32x32xf32>, vector<8x32xf32> -> vector<8x32xf32>
    %cst_76 = arith.constant 9.99999996E-13 : f32
    %212 = vector.broadcast %cst_76 : f32 to vector<8x32xf32>
    %213 = arith.addf %211, %212 : vector<8x32xf32>
    %214 = math.rsqrt %213 : vector<8x32xf32>
    %215 = arith.mulf %209, %214 : vector<8x32xf32>
    %216 = vector.extract_strided_slice %208 {offsets = [0, 32], sizes = [8, 32], strides = [1, 1]} : vector<8x64xf32> to vector<8x32xf32>
    %217 = arith.mulf %206, %206 : vector<16x32xf32>
    %cst_77 = arith.constant dense<0.000000e+00> : vector<16x32xf32>
    %218 = tpu.matmul %217, %9, %cst_77 {dimension_numbers = #tpu.dot_dimension_numbers<[1], [0], [0], [1], [0, 0, 1, 1], [], []>} : vector<16x32xf32>, vector<32x32xf32>, vector<16x32xf32> -> vector<16x32xf32>
    %cst_78 = arith.constant 9.99999996E-13 : f32
    %219 = vector.broadcast %cst_78 : f32 to vector<16x32xf32>
    %220 = arith.addf %218, %219 : vector<16x32xf32>
    %221 = math.rsqrt %220 : vector<16x32xf32>
    %222 = arith.mulf %206, %221 : vector<16x32xf32>
    %c0_79 = arith.constant 0 : index
    %c0_80 = arith.constant 0 : index
    %223 = vector.load %arg12[%c0_79, %c0_80] : memref<1x32xf32, #tpu.memory_space<vmem>>, vector<1x32xf32>
    %224 = vector.broadcast %223 : vector<1x32xf32> to vector<16x32xf32>
    %225 = arith.mulf %222, %224 : vector<16x32xf32>
    %c0_81 = arith.constant 0 : index
    %c0_82 = arith.constant 0 : index
    %c0_83 = arith.constant 0 : index
    %226 = vector.load %arg5[%c0_81, %c0_82, %c0_83] : memref<1x1x8xf32, #tpu.memory_space<vmem>>, vector<1x1x8xf32>
    %227 = vector.shape_cast %226 : vector<1x1x8xf32> to vector<1x8xf32>
    %c0_84 = arith.constant 0 : index
    %c0_85 = arith.constant 0 : index
    %228 = vector.load %arg22[%c0_84, %c0_85] : memref<32x32xbf16, #tpu.memory_space<vmem>>, vector<32x32xbf16>
    %c0_86 = arith.constant 0 : index
    %c0_87 = arith.constant 0 : index
    %229 = vector.load %arg23[%c0_86, %c0_87] : memref<1x32xf32, #tpu.memory_space<vmem>>, vector<1x32xf32>
    %230 = vector.extract_strided_slice %225 {offsets = [0, 0], sizes = [16, 8], strides = [1, 1]} : vector<16x32xf32> to vector<16x8xf32>
    %231 = arith.truncf %230 : vector<16x8xf32> to vector<16x8xbf16>
    %232 = vector.extract_strided_slice %215 {offsets = [0, 0], sizes = [8, 8], strides = [1, 1]} : vector<8x32xf32> to vector<8x8xf32>
    %233 = tpu.transpose %232, [1, 0] : vector<8x8xf32> -> vector<8x8xf32>
    %234 = arith.truncf %233 : vector<8x8xf32> to vector<8x8xbf16>
    %cst_88 = arith.constant dense<0.000000e+00> : vector<16x8xf32>
    %235 = tpu.matmul %231, %234, %cst_88 {dimension_numbers = #tpu.dot_dimension_numbers<[1], [0], [0], [1], [0, 0, 1, 1], [], []>} : vector<16x8xbf16>, vector<8x8xbf16>, vector<16x8xf32> -> vector<16x8xf32>
    %236 = vector.broadcast %227 : vector<1x8xf32> to vector<16x8xf32>
    %237 = arith.addf %235, %236 : vector<16x8xf32>
    %cst_89 = arith.constant dense<0xFF800000> : vector<16xf32>
    %238 = vector.multi_reduction <maximumf>, %237, %cst_89 [1] : vector<16x8xf32> to vector<16xf32>
    %239 = vector.shape_cast %238 : vector<16xf32> to vector<16x1xf32>
    %240 = vector.broadcast %239 : vector<16x1xf32> to vector<16x8xf32>
    %241 = arith.subf %237, %240 : vector<16x8xf32>
    %242 = math.exp %241 : vector<16x8xf32>
    %cst_90 = arith.constant dense<0.000000e+00> : vector<16xf32>
    %243 = vector.multi_reduction <add>, %242, %cst_90 [1] : vector<16x8xf32> to vector<16xf32>
    %244 = vector.shape_cast %243 : vector<16xf32> to vector<16x1xf32>
    %245 = tpu.reciprocal %244 {approx = true} : vector<16x1xf32> -> vector<16x1xf32>
    %246 = vector.broadcast %245 : vector<16x1xf32> to vector<16x8xf32>
    %247 = arith.mulf %242, %246 : vector<16x8xf32>
    %248 = arith.truncf %247 : vector<16x8xf32> to vector<16x8xbf16>
    %249 = vector.extract_strided_slice %216 {offsets = [0, 0], sizes = [8, 8], strides = [1, 1]} : vector<8x32xf32> to vector<8x8xf32>
    %250 = arith.truncf %249 : vector<8x8xf32> to vector<8x8xbf16>
    %cst_91 = arith.constant dense<0.000000e+00> : vector<16x8xf32>
    %251 = tpu.matmul %248, %250, %cst_91 {dimension_numbers = #tpu.dot_dimension_numbers<[1], [0], [0], [1], [0, 0, 1, 1], [], []>} : vector<16x8xbf16>, vector<8x8xbf16>, vector<16x8xf32> -> vector<16x8xf32>
    %252 = arith.truncf %251 : vector<16x8xf32> to vector<16x8xbf16>
    %253 = vector.extract_strided_slice %228 {offsets = [0, 0], sizes = [8, 32], strides = [1, 1]} : vector<32x32xbf16> to vector<8x32xbf16>
    %cst_92 = arith.constant dense<0.000000e+00> : vector<16x32xf32>
    %254 = tpu.matmul %252, %253, %cst_92 {dimension_numbers = #tpu.dot_dimension_numbers<[1], [0], [0], [1], [0, 0, 1, 1], [], []>} : vector<16x8xbf16>, vector<8x32xbf16>, vector<16x32xf32> -> vector<16x32xf32>
    %255 = vector.extract_strided_slice %225 {offsets = [0, 8], sizes = [16, 8], strides = [1, 1]} : vector<16x32xf32> to vector<16x8xf32>
    %256 = arith.truncf %255 : vector<16x8xf32> to vector<16x8xbf16>
    %257 = vector.extract_strided_slice %215 {offsets = [0, 8], sizes = [8, 8], strides = [1, 1]} : vector<8x32xf32> to vector<8x8xf32>
    %258 = tpu.transpose %257, [1, 0] : vector<8x8xf32> -> vector<8x8xf32>
    %259 = arith.truncf %258 : vector<8x8xf32> to vector<8x8xbf16>
    %cst_93 = arith.constant dense<0.000000e+00> : vector<16x8xf32>
    %260 = tpu.matmul %256, %259, %cst_93 {dimension_numbers = #tpu.dot_dimension_numbers<[1], [0], [0], [1], [0, 0, 1, 1], [], []>} : vector<16x8xbf16>, vector<8x8xbf16>, vector<16x8xf32> -> vector<16x8xf32>
    %261 = vector.broadcast %227 : vector<1x8xf32> to vector<16x8xf32>
    %262 = arith.addf %260, %261 : vector<16x8xf32>
    %cst_94 = arith.constant dense<0xFF800000> : vector<16xf32>
    %263 = vector.multi_reduction <maximumf>, %262, %cst_94 [1] : vector<16x8xf32> to vector<16xf32>
    %264 = vector.shape_cast %263 : vector<16xf32> to vector<16x1xf32>
    %265 = vector.broadcast %264 : vector<16x1xf32> to vector<16x8xf32>
    %266 = arith.subf %262, %265 : vector<16x8xf32>
    %267 = math.exp %266 : vector<16x8xf32>
    %cst_95 = arith.constant dense<0.000000e+00> : vector<16xf32>
    %268 = vector.multi_reduction <add>, %267, %cst_95 [1] : vector<16x8xf32> to vector<16xf32>
    %269 = vector.shape_cast %268 : vector<16xf32> to vector<16x1xf32>
    %270 = tpu.reciprocal %269 {approx = true} : vector<16x1xf32> -> vector<16x1xf32>
    %271 = vector.broadcast %270 : vector<16x1xf32> to vector<16x8xf32>
    %272 = arith.mulf %267, %271 : vector<16x8xf32>
    %273 = arith.truncf %272 : vector<16x8xf32> to vector<16x8xbf16>
    %274 = vector.extract_strided_slice %216 {offsets = [0, 8], sizes = [8, 8], strides = [1, 1]} : vector<8x32xf32> to vector<8x8xf32>
    %275 = arith.truncf %274 : vector<8x8xf32> to vector<8x8xbf16>
    %cst_96 = arith.constant dense<0.000000e+00> : vector<16x8xf32>
    %276 = tpu.matmul %273, %275, %cst_96 {dimension_numbers = #tpu.dot_dimension_numbers<[1], [0], [0], [1], [0, 0, 1, 1], [], []>} : vector<16x8xbf16>, vector<8x8xbf16>, vector<16x8xf32> -> vector<16x8xf32>
    %277 = arith.truncf %276 : vector<16x8xf32> to vector<16x8xbf16>
    %278 = vector.extract_strided_slice %228 {offsets = [8, 0], sizes = [8, 32], strides = [1, 1]} : vector<32x32xbf16> to vector<8x32xbf16>
    %cst_97 = arith.constant dense<0.000000e+00> : vector<16x32xf32>
    %279 = tpu.matmul %277, %278, %cst_97 {dimension_numbers = #tpu.dot_dimension_numbers<[1], [0], [0], [1], [0, 0, 1, 1], [], []>} : vector<16x8xbf16>, vector<8x32xbf16>, vector<16x32xf32> -> vector<16x32xf32>
    %280 = arith.addf %254, %279 : vector<16x32xf32>
    %281 = vector.extract_strided_slice %225 {offsets = [0, 16], sizes = [16, 8], strides = [1, 1]} : vector<16x32xf32> to vector<16x8xf32>
    %282 = arith.truncf %281 : vector<16x8xf32> to vector<16x8xbf16>
    %283 = vector.extract_strided_slice %215 {offsets = [0, 16], sizes = [8, 8], strides = [1, 1]} : vector<8x32xf32> to vector<8x8xf32>
    %284 = tpu.transpose %283, [1, 0] : vector<8x8xf32> -> vector<8x8xf32>
    %285 = arith.truncf %284 : vector<8x8xf32> to vector<8x8xbf16>
    %cst_98 = arith.constant dense<0.000000e+00> : vector<16x8xf32>
    %286 = tpu.matmul %282, %285, %cst_98 {dimension_numbers = #tpu.dot_dimension_numbers<[1], [0], [0], [1], [0, 0, 1, 1], [], []>} : vector<16x8xbf16>, vector<8x8xbf16>, vector<16x8xf32> -> vector<16x8xf32>
    %287 = vector.broadcast %227 : vector<1x8xf32> to vector<16x8xf32>
    %288 = arith.addf %286, %287 : vector<16x8xf32>
    %cst_99 = arith.constant dense<0xFF800000> : vector<16xf32>
    %289 = vector.multi_reduction <maximumf>, %288, %cst_99 [1] : vector<16x8xf32> to vector<16xf32>
    %290 = vector.shape_cast %289 : vector<16xf32> to vector<16x1xf32>
    %291 = vector.broadcast %290 : vector<16x1xf32> to vector<16x8xf32>
    %292 = arith.subf %288, %291 : vector<16x8xf32>
    %293 = math.exp %292 : vector<16x8xf32>
    %cst_100 = arith.constant dense<0.000000e+00> : vector<16xf32>
    %294 = vector.multi_reduction <add>, %293, %cst_100 [1] : vector<16x8xf32> to vector<16xf32>
    %295 = vector.shape_cast %294 : vector<16xf32> to vector<16x1xf32>
    %296 = tpu.reciprocal %295 {approx = true} : vector<16x1xf32> -> vector<16x1xf32>
    %297 = vector.broadcast %296 : vector<16x1xf32> to vector<16x8xf32>
    %298 = arith.mulf %293, %297 : vector<16x8xf32>
    %299 = arith.truncf %298 : vector<16x8xf32> to vector<16x8xbf16>
    %300 = vector.extract_strided_slice %216 {offsets = [0, 16], sizes = [8, 8], strides = [1, 1]} : vector<8x32xf32> to vector<8x8xf32>
    %301 = arith.truncf %300 : vector<8x8xf32> to vector<8x8xbf16>
    %cst_101 = arith.constant dense<0.000000e+00> : vector<16x8xf32>
    %302 = tpu.matmul %299, %301, %cst_101 {dimension_numbers = #tpu.dot_dimension_numbers<[1], [0], [0], [1], [0, 0, 1, 1], [], []>} : vector<16x8xbf16>, vector<8x8xbf16>, vector<16x8xf32> -> vector<16x8xf32>
    %303 = arith.truncf %302 : vector<16x8xf32> to vector<16x8xbf16>
    %304 = vector.extract_strided_slice %228 {offsets = [16, 0], sizes = [8, 32], strides = [1, 1]} : vector<32x32xbf16> to vector<8x32xbf16>
    %cst_102 = arith.constant dense<0.000000e+00> : vector<16x32xf32>
    %305 = tpu.matmul %303, %304, %cst_102 {dimension_numbers = #tpu.dot_dimension_numbers<[1], [0], [0], [1], [0, 0, 1, 1], [], []>} : vector<16x8xbf16>, vector<8x32xbf16>, vector<16x32xf32> -> vector<16x32xf32>
    %306 = arith.addf %280, %305 : vector<16x32xf32>
    %307 = vector.extract_strided_slice %225 {offsets = [0, 24], sizes = [16, 8], strides = [1, 1]} : vector<16x32xf32> to vector<16x8xf32>
    %308 = arith.truncf %307 : vector<16x8xf32> to vector<16x8xbf16>
    %309 = vector.extract_strided_slice %215 {offsets = [0, 24], sizes = [8, 8], strides = [1, 1]} : vector<8x32xf32> to vector<8x8xf32>
    %310 = tpu.transpose %309, [1, 0] : vector<8x8xf32> -> vector<8x8xf32>
    %311 = arith.truncf %310 : vector<8x8xf32> to vector<8x8xbf16>
    %cst_103 = arith.constant dense<0.000000e+00> : vector<16x8xf32>
    %312 = tpu.matmul %308, %311, %cst_103 {dimension_numbers = #tpu.dot_dimension_numbers<[1], [0], [0], [1], [0, 0, 1, 1], [], []>} : vector<16x8xbf16>, vector<8x8xbf16>, vector<16x8xf32> -> vector<16x8xf32>
    %313 = vector.broadcast %227 : vector<1x8xf32> to vector<16x8xf32>
    %314 = arith.addf %312, %313 : vector<16x8xf32>
    %cst_104 = arith.constant dense<0xFF800000> : vector<16xf32>
    %315 = vector.multi_reduction <maximumf>, %314, %cst_104 [1] : vector<16x8xf32> to vector<16xf32>
    %316 = vector.shape_cast %315 : vector<16xf32> to vector<16x1xf32>
    %317 = vector.broadcast %316 : vector<16x1xf32> to vector<16x8xf32>
    %318 = arith.subf %314, %317 : vector<16x8xf32>
    %319 = math.exp %318 : vector<16x8xf32>
    %cst_105 = arith.constant dense<0.000000e+00> : vector<16xf32>
    %320 = vector.multi_reduction <add>, %319, %cst_105 [1] : vector<16x8xf32> to vector<16xf32>
    %321 = vector.shape_cast %320 : vector<16xf32> to vector<16x1xf32>
    %322 = tpu.reciprocal %321 {approx = true} : vector<16x1xf32> -> vector<16x1xf32>
    %323 = vector.broadcast %322 : vector<16x1xf32> to vector<16x8xf32>
    %324 = arith.mulf %319, %323 : vector<16x8xf32>
    %325 = arith.truncf %324 : vector<16x8xf32> to vector<16x8xbf16>
    %326 = vector.extract_strided_slice %216 {offsets = [0, 24], sizes = [8, 8], strides = [1, 1]} : vector<8x32xf32> to vector<8x8xf32>
    %327 = arith.truncf %326 : vector<8x8xf32> to vector<8x8xbf16>
    %cst_106 = arith.constant dense<0.000000e+00> : vector<16x8xf32>
    %328 = tpu.matmul %325, %327, %cst_106 {dimension_numbers = #tpu.dot_dimension_numbers<[1], [0], [0], [1], [0, 0, 1, 1], [], []>} : vector<16x8xbf16>, vector<8x8xbf16>, vector<16x8xf32> -> vector<16x8xf32>
    %329 = arith.truncf %328 : vector<16x8xf32> to vector<16x8xbf16>
    %330 = vector.extract_strided_slice %228 {offsets = [24, 0], sizes = [8, 32], strides = [1, 1]} : vector<32x32xbf16> to vector<8x32xbf16>
    %cst_107 = arith.constant dense<0.000000e+00> : vector<16x32xf32>
    %331 = tpu.matmul %329, %330, %cst_107 {dimension_numbers = #tpu.dot_dimension_numbers<[1], [0], [0], [1], [0, 0, 1, 1], [], []>} : vector<16x8xbf16>, vector<8x32xbf16>, vector<16x32xf32> -> vector<16x32xf32>
    %332 = arith.addf %306, %331 : vector<16x32xf32>
    %333 = vector.broadcast %229 : vector<1x32xf32> to vector<16x32xf32>
    %334 = arith.addf %332, %333 : vector<16x32xf32>
    %335 = arith.addf %200, %334 : vector<16x32xf32>
    %cst_108 = arith.constant dense<0.000000e+00> : vector<16xf32>
    %336 = vector.multi_reduction <add>, %335, %cst_108 [1] : vector<16x32xf32> to vector<16xf32>
    %337 = vector.shape_cast %336 : vector<16xf32> to vector<16x1xf32>
    %cst_109 = arith.constant 3.200000e+01 : f32
    %338 = vector.broadcast %cst_109 : f32 to vector<16x1xf32>
    %339 = arith.divf %337, %338 : vector<16x1xf32>
    %340 = vector.broadcast %339 : vector<16x1xf32> to vector<16x32xf32>
    %341 = arith.subf %335, %340 : vector<16x32xf32>
    %342 = arith.mulf %341, %341 : vector<16x32xf32>
    %cst_110 = arith.constant dense<0.000000e+00> : vector<16xf32>
    %343 = vector.multi_reduction <add>, %342, %cst_110 [1] : vector<16x32xf32> to vector<16xf32>
    %344 = vector.shape_cast %343 : vector<16xf32> to vector<16x1xf32>
    %cst_111 = arith.constant 3.200000e+01 : f32
    %345 = vector.broadcast %cst_111 : f32 to vector<16x1xf32>
    %346 = arith.divf %344, %345 : vector<16x1xf32>
    %cst_112 = arith.constant 9.99999997E-7 : f32
    %347 = vector.broadcast %cst_112 : f32 to vector<16x1xf32>
    %348 = arith.addf %346, %347 : vector<16x1xf32>
    %349 = math.rsqrt %348 : vector<16x1xf32>
    %350 = vector.broadcast %349 : vector<16x1xf32> to vector<16x32xf32>
    %351 = arith.mulf %341, %350 : vector<16x32xf32>
    %cst_113 = arith.constant 1.000000e+00 : f32
    %352 = vector.broadcast %cst_113 : f32 to vector<1x32xf32>
    %353 = arith.addf %31, %352 : vector<1x32xf32>
    %354 = vector.broadcast %353 : vector<1x32xf32> to vector<16x32xf32>
    %355 = arith.mulf %351, %354 : vector<16x32xf32>
    %356 = vector.broadcast %39 : vector<1x32xf32> to vector<16x32xf32>
    %357 = arith.addf %355, %356 : vector<16x32xf32>
    %358 = arith.truncf %357 : vector<16x32xf32> to vector<16x32xbf16>
    %c0_114 = arith.constant 0 : index
    %c0_115 = arith.constant 0 : index
    %359 = vector.load %arg24[%c0_114, %c0_115] : memref<32x256xbf16, #tpu.memory_space<vmem>>, vector<32x256xbf16>
    %cst_116 = arith.constant dense<0.000000e+00> : vector<16x256xf32>
    %360 = tpu.matmul %358, %359, %cst_116 {dimension_numbers = #tpu.dot_dimension_numbers<[1], [0], [0], [1], [0, 0, 1, 1], [], []>} : vector<16x32xbf16>, vector<32x256xbf16>, vector<16x256xf32> -> vector<16x256xf32>
    %c0_117 = arith.constant 0 : index
    %c0_118 = arith.constant 0 : index
    %361 = vector.load %arg25[%c0_117, %c0_118] : memref<1x256xf32, #tpu.memory_space<vmem>>, vector<1x256xf32>
    %362 = vector.broadcast %361 : vector<1x256xf32> to vector<16x256xf32>
    %363 = arith.addf %360, %362 : vector<16x256xf32>
    %364 = vector.extract_strided_slice %363 {offsets = [0, 0], sizes = [16, 128], strides = [1, 1]} : vector<16x256xf32> to vector<16x128xf32>
    %365 = arith.negf %364 : vector<16x128xf32>
    %366 = math.exp %365 : vector<16x128xf32>
    %cst_119 = arith.constant 1.000000e+00 : f32
    %367 = vector.broadcast %cst_119 : f32 to vector<16x128xf32>
    %368 = arith.addf %367, %366 : vector<16x128xf32>
    %369 = arith.divf %367, %368 : vector<16x128xf32>
    %370 = arith.mulf %364, %369 : vector<16x128xf32>
    %371 = vector.extract_strided_slice %363 {offsets = [0, 128], sizes = [16, 128], strides = [1, 1]} : vector<16x256xf32> to vector<16x128xf32>
    %372 = arith.mulf %370, %371 : vector<16x128xf32>
    %373 = arith.truncf %372 : vector<16x128xf32> to vector<16x128xbf16>
    %c0_120 = arith.constant 0 : index
    %c0_121 = arith.constant 0 : index
    %374 = vector.load %arg26[%c0_120, %c0_121] : memref<128x32xbf16, #tpu.memory_space<vmem>>, vector<128x32xbf16>
    %cst_122 = arith.constant dense<0.000000e+00> : vector<16x32xf32>
    %375 = tpu.matmul %373, %374, %cst_122 {dimension_numbers = #tpu.dot_dimension_numbers<[1], [0], [0], [1], [0, 0, 1, 1], [], []>} : vector<16x128xbf16>, vector<128x32xbf16>, vector<16x32xf32> -> vector<16x32xf32>
    %c0_123 = arith.constant 0 : index
    %c0_124 = arith.constant 0 : index
    %376 = vector.load %arg27[%c0_123, %c0_124] : memref<1x32xf32, #tpu.memory_space<vmem>>, vector<1x32xf32>
    %377 = vector.broadcast %376 : vector<1x32xf32> to vector<16x32xf32>
    %378 = arith.addf %375, %377 : vector<16x32xf32>
    %379 = vector.broadcast %23 : vector<1x32xf32> to vector<16x32xf32>
    %380 = arith.mulf %379, %378 : vector<16x32xf32>
    %381 = arith.addf %335, %380 : vector<16x32xf32>
    %c0_125 = arith.constant 0 : index
    %c0_126 = arith.constant 0 : index
    %c0_127 = arith.constant 0 : index
    %382 = vector.load %arg28[%c0_125, %c0_126, %c0_127] : memref<1x16x32xf32, #tpu.memory_space<vmem>>, vector<1x16x32xf32>
    %383 = vector.shape_cast %382 : vector<1x16x32xf32> to vector<16x32xf32>
    %384 = vector.shape_cast %381 : vector<16x32xf32> to vector<1x16x32xf32>
    tpu.vector_store %arg28[%c0_125, %c0_126, %c0_127], %384 {strides = array<i32>} : memref<1x16x32xf32, #tpu.memory_space<vmem>>, vector<1x16x32xf32>,
    return
  }
  func.func @transform_0(%arg0: i32) -> (i32, i32, i32) {
    %c0_i32 = arith.constant 0 : i32
    %c0_i32_0 = arith.constant 0 : i32
    %c0_i32_1 = arith.constant 0 : i32
    return %arg0, %c0_i32, %c0_i32_0 : i32, i32, i32
  }
  func.func @transform_1(%arg0: i32) -> (i32, i32, i32) {
    %c0_i32 = arith.constant 0 : i32
    %c0_i32_0 = arith.constant 0 : i32
    %c0_i32_1 = arith.constant 0 : i32
    return %arg0, %c0_i32, %c0_i32_0 : i32, i32, i32
  }
  func.func @transform_2(%arg0: i32) -> (i32, i32, i32) {
    %c0_i32 = arith.constant 0 : i32
    %c0_i32_0 = arith.constant 0 : i32
    %c0_i32_1 = arith.constant 0 : i32
    return %arg0, %c0_i32, %c0_i32_0 : i32, i32, i32
  }
  func.func @transform_3(%arg0: i32) -> (i32, i32, i32) {
    %c0_i32 = arith.constant 0 : i32
    %c0_i32_0 = arith.constant 0 : i32
    %c0_i32_1 = arith.constant 0 : i32
    return %c0_i32, %arg0, %c0_i32_0 : i32, i32, i32
  }
  func.func @transform_4(%arg0: i32) -> (i32, i32, i32) {
    %c0_i32 = arith.constant 0 : i32
    %c0_i32_0 = arith.constant 0 : i32
    %c0_i32_1 = arith.constant 0 : i32
    return %arg0, %c0_i32, %c0_i32_0 : i32, i32, i32
  }
  func.func @transform_5(%arg0: i32) -> (i32, i32) {
    %c0_i32 = arith.constant 0 : i32
    %c0_i32_0 = arith.constant 0 : i32
    %c0_i32_1 = arith.constant 0 : i32
    return %c0_i32, %c0_i32_0 : i32, i32
  }
  func.func @transform_6(%arg0: i32) -> (i32, i32) {
    %c0_i32 = arith.constant 0 : i32
    %c0_i32_0 = arith.constant 0 : i32
    %c0_i32_1 = arith.constant 0 : i32
    return %c0_i32, %c0_i32_0 : i32, i32
  }
  func.func @transform_7(%arg0: i32) -> (i32, i32) {
    %c0_i32 = arith.constant 0 : i32
    %c0_i32_0 = arith.constant 0 : i32
    %c0_i32_1 = arith.constant 0 : i32
    return %c0_i32, %c0_i32_0 : i32, i32
  }
  func.func @transform_8(%arg0: i32) -> (i32, i32) {
    %c0_i32 = arith.constant 0 : i32
    %c0_i32_0 = arith.constant 0 : i32
    %c0_i32_1 = arith.constant 0 : i32
    return %c0_i32, %c0_i32_0 : i32, i32
  }
  func.func @transform_9(%arg0: i32) -> (i32, i32) {
    %c0_i32 = arith.constant 0 : i32
    %c0_i32_0 = arith.constant 0 : i32
    %c0_i32_1 = arith.constant 0 : i32
    return %c0_i32, %c0_i32_0 : i32, i32
  }
  func.func @transform_10(%arg0: i32) -> (i32, i32) {
    %c0_i32 = arith.constant 0 : i32
    %c0_i32_0 = arith.constant 0 : i32
    %c0_i32_1 = arith.constant 0 : i32
    return %c0_i32, %c0_i32_0 : i32, i32
  }
  func.func @transform_11(%arg0: i32) -> (i32, i32) {
    %c0_i32 = arith.constant 0 : i32
    %c0_i32_0 = arith.constant 0 : i32
    %c0_i32_1 = arith.constant 0 : i32
    return %c0_i32, %c0_i32_0 : i32, i32
  }
  func.func @transform_12(%arg0: i32) -> (i32, i32) {
    %c0_i32 = arith.constant 0 : i32
    %c0_i32_0 = arith.constant 0 : i32
    %c0_i32_1 = arith.constant 0 : i32
    return %c0_i32, %c0_i32_0 : i32, i32
  }
  func.func @transform_13(%arg0: i32) -> (i32, i32) {
    %c0_i32 = arith.constant 0 : i32
    %c0_i32_0 = arith.constant 0 : i32
    %c0_i32_1 = arith.constant 0 : i32
    return %c0_i32, %c0_i32_0 : i32, i32
  }
  func.func @transform_14(%arg0: i32) -> (i32, i32) {
    %c0_i32 = arith.constant 0 : i32
    %c0_i32_0 = arith.constant 0 : i32
    %c0_i32_1 = arith.constant 0 : i32
    return %c0_i32, %c0_i32_0 : i32, i32
  }
  func.func @transform_15(%arg0: i32) -> (i32, i32) {
    %c0_i32 = arith.constant 0 : i32
    %c0_i32_0 = arith.constant 0 : i32
    %c0_i32_1 = arith.constant 0 : i32
    return %c0_i32, %c0_i32_0 : i32, i32
  }
  func.func @transform_16(%arg0: i32) -> (i32, i32) {
    %c0_i32 = arith.constant 0 : i32
    %c0_i32_0 = arith.constant 0 : i32
    %c0_i32_1 = arith.constant 0 : i32
    return %c0_i32, %c0_i32_0 : i32, i32
  }
  func.func @transform_17(%arg0: i32) -> (i32, i32) {
    %c0_i32 = arith.constant 0 : i32
    %c0_i32_0 = arith.constant 0 : i32
    %c0_i32_1 = arith.constant 0 : i32
    return %c0_i32, %c0_i32_0 : i32, i32
  }
  func.func @transform_18(%arg0: i32) -> (i32, i32) {
    %c0_i32 = arith.constant 0 : i32
    %c0_i32_0 = arith.constant 0 : i32
    %c0_i32_1 = arith.constant 0 : i32
    return %c0_i32, %c0_i32_0 : i32, i32
  }
  func.func @transform_19(%arg0: i32) -> (i32, i32) {
    %c0_i32 = arith.constant 0 : i32
    %c0_i32_0 = arith.constant 0 : i32
    %c0_i32_1 = arith.constant 0 : i32
    return %c0_i32, %c0_i32_0 : i32, i32
  }
  func.func @transform_20(%arg0: i32) -> (i32, i32) {
    %c0_i32 = arith.constant 0 : i32
    %c0_i32_0 = arith.constant 0 : i32
    %c0_i32_1 = arith.constant 0 : i32
    return %c0_i32, %c0_i32_0 : i32, i32
  }
  func.func @transform_21(%arg0: i32) -> (i32, i32) {
    %c0_i32 = arith.constant 0 : i32
    %c0_i32_0 = arith.constant 0 : i32
    %c0_i32_1 = arith.constant 0 : i32
    return %c0_i32, %c0_i32_0 : i32, i32
  }
  func.func @transform_22(%arg0: i32) -> (i32, i32) {
    %c0_i32 = arith.constant 0 : i32
    %c0_i32_0 = arith.constant 0 : i32
    %c0_i32_1 = arith.constant 0 : i32
    return %c0_i32, %c0_i32_0 : i32, i32
  }
  func.func @transform_23(%arg0: i32) -> (i32, i32) {
    %c0_i32 = arith.constant 0 : i32
    %c0_i32_0 = arith.constant 0 : i32
    %c0_i32_1 = arith.constant 0 : i32
    return %c0_i32, %c0_i32_0 : i32, i32
  }
  func.func @transform_24(%arg0: i32) -> (i32, i32) {
    %c0_i32 = arith.constant 0 : i32
    %c0_i32_0 = arith.constant 0 : i32
    %c0_i32_1 = arith.constant 0 : i32
    return %c0_i32, %c0_i32_0 : i32, i32
  }
  func.func @transform_25(%arg0: i32) -> (i32, i32) {
    %c0_i32 = arith.constant 0 : i32
    %c0_i32_0 = arith.constant 0 : i32
    %c0_i32_1 = arith.constant 0 : i32
    return %c0_i32, %c0_i32_0 : i32, i32
  }
  func.func @transform_26(%arg0: i32) -> (i32, i32) {
    %c0_i32 = arith.constant 0 : i32
    %c0_i32_0 = arith.constant 0 : i32
    %c0_i32_1 = arith.constant 0 : i32
    return %c0_i32, %c0_i32_0 : i32, i32
  }
  func.func @transform_27(%arg0: i32) -> (i32, i32, i32) {
    %c0_i32 = arith.constant 0 : i32
    %c0_i32_0 = arith.constant 0 : i32
    %c0_i32_1 = arith.constant 0 : i32
    return %arg0, %c0_i32, %c0_i32_0 : i32, i32, i32
  }
}

module attributes {stable_mosaic.version = 11 : i64} {
  func.func @_block_kernel(%arg0: i32, %arg1: memref<1x16x32xf32, #tpu.memory_space<vmem>>, %arg2: memref<1x1x32xf32, #tpu.memory_space<vmem>>, %arg3: memref<1x1x32xf32, #tpu.memory_space<vmem>>, %arg4: memref<1x8x64xf32, #tpu.memory_space<vmem>>, %arg5: memref<1x1x8xf32, #tpu.memory_space<vmem>>, %arg6: memref<16x16xf32, #tpu.memory_space<vmem>>, %arg7: memref<16x32xf32, #tpu.memory_space<vmem>>, %arg8: memref<16x32xf32, #tpu.memory_space<vmem>>, %arg9: memref<32x32xf32, #tpu.memory_space<vmem>>, %arg10: memref<32x32xf32, #tpu.memory_space<vmem>>, %arg11: memref<1x32xf32, #tpu.memory_space<vmem>>, %arg12: memref<1x32xf32, #tpu.memory_space<vmem>>, %arg13: memref<32x192xbf16, #tpu.memory_space<vmem>>, %arg14: memref<1x192xf32, #tpu.memory_space<vmem>>, %arg15: memref<1x192xf32, #tpu.memory_space<vmem>>, %arg16: memref<32x96xbf16, #tpu.memory_space<vmem>>, %arg17: memref<1x96xf32, #tpu.memory_space<vmem>>, %arg18: memref<32x32xbf16, #tpu.memory_space<vmem>>, %arg19: memref<1x32xf32, #tpu.memory_space<vmem>>, %arg20: memref<32x32xbf16, #tpu.memory_space<vmem>>, %arg21: memref<1x32xf32, #tpu.memory_space<vmem>>, %arg22: memref<32x32xbf16, #tpu.memory_space<vmem>>, %arg23: memref<1x32xf32, #tpu.memory_space<vmem>>, %arg24: memref<32x256xbf16, #tpu.memory_space<vmem>>, %arg25: memref<1x256xf32, #tpu.memory_space<vmem>>, %arg26: memref<128x32xbf16, #tpu.memory_space<vmem>>, %arg27: memref<1x32xf32, #tpu.memory_space<vmem>>, %arg28: memref<1x16x32xf32, #tpu.memory_space<vmem>>) attributes {dimension_semantics = [#tpu.dimension_semantics<parallel>], iteration_bounds = array<i64: 2>, scalar_prefetch = 0 : i64, scratch_operands = 0 : i64, tpu.core_type = #tpu.core_type<tc>, window_params = [{transform_indices = @transform_0, window_bounds = array<i64: 1, 16, 32>}, {transform_indices = @transform_1, window_bounds = array<i64: 1, 1, 32>}, {transform_indices = @transform_2, window_bounds = array<i64: 1, 1, 32>}, {transform_indices = @transform_3, window_bounds = array<i64: 1, 8, 64>}, {transform_indices = @transform_4, window_bounds = array<i64: 1, 1, 8>}, {pipeline_mode = #tpu.pipeline_mode<synchronous>, transform_indices = @transform_5, window_bounds = array<i64: 16, 16>}, {pipeline_mode = #tpu.pipeline_mode<synchronous>, transform_indices = @transform_6, window_bounds = array<i64: 16, 32>}, {pipeline_mode = #tpu.pipeline_mode<synchronous>, transform_indices = @transform_7, window_bounds = array<i64: 16, 32>}, {pipeline_mode = #tpu.pipeline_mode<synchronous>, transform_indices = @transform_8, window_bounds = array<i64: 32, 32>}, {pipeline_mode = #tpu.pipeline_mode<synchronous>, transform_indices = @transform_9, window_bounds = array<i64: 32, 32>}, {pipeline_mode = #tpu.pipeline_mode<synchronous>, transform_indices = @transform_10, window_bounds = array<i64: 1, 32>}, {pipeline_mode = #tpu.pipeline_mode<synchronous>, transform_indices = @transform_11, window_bounds = array<i64: 1, 32>}, {pipeline_mode = #tpu.pipeline_mode<synchronous>, transform_indices = @transform_12, window_bounds = array<i64: 32, 192>}, {pipeline_mode = #tpu.pipeline_mode<synchronous>, transform_indices = @transform_13, window_bounds = array<i64: 1, 192>}, {pipeline_mode = #tpu.pipeline_mode<synchronous>, transform_indices = @transform_14, window_bounds = array<i64: 1, 192>}, {pipeline_mode = #tpu.pipeline_mode<synchronous>, transform_indices = @transform_15, window_bounds = array<i64: 32, 96>}, {pipeline_mode = #tpu.pipeline_mode<synchronous>, transform_indices = @transform_16, window_bounds = array<i64: 1, 96>}, {pipeline_mode = #tpu.pipeline_mode<synchronous>, transform_indices = @transform_17, window_bounds = array<i64: 32, 32>}, {pipeline_mode = #tpu.pipeline_mode<synchronous>, transform_indices = @transform_18, window_bounds = array<i64: 1, 32>}, {pipeline_mode = #tpu.pipeline_mode<synchronous>, transform_indices = @transform_19, window_bounds = array<i64: 32, 32>}, {pipeline_mode = #tpu.pipeline_mode<synchronous>, transform_indices = @transform_20, window_bounds = array<i64: 1, 32>}, {pipeline_mode = #tpu.pipeline_mode<synchronous>, transform_indices = @transform_21, window_bounds = array<i64: 32, 32>}, {pipeline_mode = #tpu.pipeline_mode<synchronous>, transform_indices = @transform_22, window_bounds = array<i64: 1, 32>}, {pipeline_mode = #tpu.pipeline_mode<synchronous>, transform_indices = @transform_23, window_bounds = array<i64: 32, 256>}, {pipeline_mode = #tpu.pipeline_mode<synchronous>, transform_indices = @transform_24, window_bounds = array<i64: 1, 256>}, {pipeline_mode = #tpu.pipeline_mode<synchronous>, transform_indices = @transform_25, window_bounds = array<i64: 128, 32>}, {pipeline_mode = #tpu.pipeline_mode<synchronous>, transform_indices = @transform_26, window_bounds = array<i64: 1, 32>}, {transform_indices = @transform_27, window_bounds = array<i64: 1, 16, 32>}]} {
    %c0 = arith.constant 0 : index
    %c0_0 = arith.constant 0 : index
    %c0_1 = arith.constant 0 : index
    %0 = vector.load %arg1[%c0, %c0_0, %c0_1] : memref<1x16x32xf32, #tpu.memory_space<vmem>>, vector<1x16x32xf32>
    %1 = vector.shape_cast %0 : vector<1x16x32xf32> to vector<16x32xf32>
    %c0_2 = arith.constant 0 : index
    %c0_3 = arith.constant 0 : index
    %c0_4 = arith.constant 0 : index
    %2 = vector.load %arg2[%c0_2, %c0_3, %c0_4] : memref<1x1x32xf32, #tpu.memory_space<vmem>>, vector<1x1x32xf32>
    %3 = vector.shape_cast %2 : vector<1x1x32xf32> to vector<1x32xf32>
    %c0_5 = arith.constant 0 : index
    %c0_6 = arith.constant 0 : index
    %c0_7 = arith.constant 0 : index
    %4 = vector.load %arg3[%c0_5, %c0_6, %c0_7] : memref<1x1x32xf32, #tpu.memory_space<vmem>>, vector<1x1x32xf32>
    %5 = vector.shape_cast %4 : vector<1x1x32xf32> to vector<1x32xf32>
    %c0_8 = arith.constant 0 : index
    %c0_9 = arith.constant 0 : index
    %6 = vector.load %arg7[%c0_8, %c0_9] : memref<16x32xf32, #tpu.memory_space<vmem>>, vector<16x32xf32>
    %c0_10 = arith.constant 0 : index
    %c0_11 = arith.constant 0 : index
    %7 = vector.load %arg8[%c0_10, %c0_11] : memref<16x32xf32, #tpu.memory_space<vmem>>, vector<16x32xf32>
    %c0_12 = arith.constant 0 : index
    %c0_13 = arith.constant 0 : index
    %8 = vector.load %arg9[%c0_12, %c0_13] : memref<32x32xf32, #tpu.memory_space<vmem>>, vector<32x32xf32>
    %c0_14 = arith.constant 0 : index
    %c0_15 = arith.constant 0 : index
    %9 = vector.load %arg10[%c0_14, %c0_15] : memref<32x32xf32, #tpu.memory_space<vmem>>, vector<32x32xf32>
    %10 = arith.truncf %3 : vector<1x32xf32> to vector<1x32xbf16>
    %c0_16 = arith.constant 0 : index
    %c0_17 = arith.constant 0 : index
    %11 = vector.load %arg13[%c0_16, %c0_17] : memref<32x192xbf16, #tpu.memory_space<vmem>>, vector<32x192xbf16>
    %cst = arith.constant dense<0.000000e+00> : vector<1x192xf32>
    %12 = tpu.matmul %10, %11, %cst {dimension_numbers = #tpu.dot_dimension_numbers<[1], [0], [0], [1], [0, 0, 1, 1], [], []>} : vector<1x32xbf16>, vector<32x192xbf16>, vector<1x192xf32> -> vector<1x192xf32>
    %c0_18 = arith.constant 0 : index
    %c0_19 = arith.constant 0 : index
    %13 = vector.load %arg14[%c0_18, %c0_19] : memref<1x192xf32, #tpu.memory_space<vmem>>, vector<1x192xf32>
    %14 = arith.addf %12, %13 : vector<1x192xf32>
    %c0_20 = arith.constant 0 : index
    %c0_21 = arith.constant 0 : index
    %15 = vector.load %arg15[%c0_20, %c0_21] : memref<1x192xf32, #tpu.memory_space<vmem>>, vector<1x192xf32>
    %16 = vector.extract_strided_slice %14 {offsets = [0, 0], sizes = [1, 32], strides = [1, 1]} : vector<1x192xf32> to vector<1x32xf32>
    %17 = vector.extract_strided_slice %15 {offsets = [0, 0], sizes = [1, 32], strides = [1, 1]} : vector<1x192xf32> to vector<1x32xf32>
    %18 = arith.mulf %17, %5 : vector<1x32xf32>
    %19 = arith.addf %16, %18 : vector<1x32xf32>
    %20 = vector.extract_strided_slice %14 {offsets = [0, 32], sizes = [1, 32], strides = [1, 1]} : vector<1x192xf32> to vector<1x32xf32>
    %21 = vector.extract_strided_slice %15 {offsets = [0, 32], sizes = [1, 32], strides = [1, 1]} : vector<1x192xf32> to vector<1x32xf32>
    %22 = arith.mulf %21, %5 : vector<1x32xf32>
    %23 = arith.addf %20, %22 : vector<1x32xf32>
    %24 = vector.extract_strided_slice %14 {offsets = [0, 64], sizes = [1, 32], strides = [1, 1]} : vector<1x192xf32> to vector<1x32xf32>
    %25 = vector.extract_strided_slice %15 {offsets = [0, 64], sizes = [1, 32], strides = [1, 1]} : vector<1x192xf32> to vector<1x32xf32>
    %26 = arith.mulf %25, %5 : vector<1x32xf32>
    %27 = arith.addf %24, %26 : vector<1x32xf32>
    %28 = vector.extract_strided_slice %14 {offsets = [0, 96], sizes = [1, 32], strides = [1, 1]} : vector<1x192xf32> to vector<1x32xf32>
    %29 = vector.extract_strided_slice %15 {offsets = [0, 96], sizes = [1, 32], strides = [1, 1]} : vector<1x192xf32> to vector<1x32xf32>
    %30 = arith.mulf %29, %5 : vector<1x32xf32>
    %31 = arith.addf %28, %30 : vector<1x32xf32>
    %32 = vector.extract_strided_slice %14 {offsets = [0, 128], sizes = [1, 32], strides = [1, 1]} : vector<1x192xf32> to vector<1x32xf32>
    %33 = vector.extract_strided_slice %15 {offsets = [0, 128], sizes = [1, 32], strides = [1, 1]} : vector<1x192xf32> to vector<1x32xf32>
    %34 = arith.mulf %33, %5 : vector<1x32xf32>
    %35 = arith.addf %32, %34 : vector<1x32xf32>
    %36 = vector.extract_strided_slice %14 {offsets = [0, 160], sizes = [1, 32], strides = [1, 1]} : vector<1x192xf32> to vector<1x32xf32>
    %37 = vector.extract_strided_slice %15 {offsets = [0, 160], sizes = [1, 32], strides = [1, 1]} : vector<1x192xf32> to vector<1x32xf32>
    %38 = arith.mulf %37, %5 : vector<1x32xf32>
    %39 = arith.addf %36, %38 : vector<1x32xf32>
    %cst_22 = arith.constant dense<0.000000e+00> : vector<16xf32>
    %40 = vector.multi_reduction <add>, %1, %cst_22 [1] : vector<16x32xf32> to vector<16xf32>
    %41 = vector.shape_cast %40 : vector<16xf32> to vector<16x1xf32>
    %cst_23 = arith.constant 3.200000e+01 : f32
    %42 = vector.broadcast %cst_23 : f32 to vector<16x1xf32>
    %43 = arith.divf %41, %42 : vector<16x1xf32>
    %44 = vector.broadcast %43 : vector<16x1xf32> to vector<16x32xf32>
    %45 = arith.subf %1, %44 : vector<16x32xf32>
    %46 = arith.mulf %45, %45 : vector<16x32xf32>
    %cst_24 = arith.constant dense<0.000000e+00> : vector<16xf32>
    %47 = vector.multi_reduction <add>, %46, %cst_24 [1] : vector<16x32xf32> to vector<16xf32>
    %48 = vector.shape_cast %47 : vector<16xf32> to vector<16x1xf32>
    %cst_25 = arith.constant 3.200000e+01 : f32
    %49 = vector.broadcast %cst_25 : f32 to vector<16x1xf32>
    %50 = arith.divf %48, %49 : vector<16x1xf32>
    %cst_26 = arith.constant 9.99999997E-7 : f32
    %51 = vector.broadcast %cst_26 : f32 to vector<16x1xf32>
    %52 = arith.addf %50, %51 : vector<16x1xf32>
    %53 = math.rsqrt %52 : vector<16x1xf32>
    %54 = vector.broadcast %53 : vector<16x1xf32> to vector<16x32xf32>
    %55 = arith.mulf %45, %54 : vector<16x32xf32>
    %cst_27 = arith.constant 1.000000e+00 : f32
    %56 = vector.broadcast %cst_27 : f32 to vector<1x32xf32>
    %57 = arith.addf %27, %56 : vector<1x32xf32>
    %58 = vector.broadcast %57 : vector<1x32xf32> to vector<16x32xf32>
    %59 = arith.mulf %55, %58 : vector<16x32xf32>
    %60 = vector.broadcast %35 : vector<1x32xf32> to vector<16x32xf32>
    %61 = arith.addf %59, %60 : vector<16x32xf32>
    %62 = arith.truncf %61 : vector<16x32xf32> to vector<16x32xbf16>
    %c0_28 = arith.constant 0 : index
    %c0_29 = arith.constant 0 : index
    %63 = vector.load %arg16[%c0_28, %c0_29] : memref<32x96xbf16, #tpu.memory_space<vmem>>, vector<32x96xbf16>
    %cst_30 = arith.constant dense<0.000000e+00> : vector<16x96xf32>
    %64 = tpu.matmul %62, %63, %cst_30 {dimension_numbers = #tpu.dot_dimension_numbers<[1], [0], [0], [1], [0, 0, 1, 1], [], []>} : vector<16x32xbf16>, vector<32x96xbf16>, vector<16x96xf32> -> vector<16x96xf32>
    %c0_31 = arith.constant 0 : index
    %c0_32 = arith.constant 0 : index
    %65 = vector.load %arg17[%c0_31, %c0_32] : memref<1x96xf32, #tpu.memory_space<vmem>>, vector<1x96xf32>
    %66 = vector.broadcast %65 : vector<1x96xf32> to vector<16x96xf32>
    %67 = arith.addf %64, %66 : vector<16x96xf32>
    %68 = vector.extract_strided_slice %67 {offsets = [0, 0], sizes = [16, 32], strides = [1, 1]} : vector<16x96xf32> to vector<16x32xf32>
    %69 = arith.mulf %68, %68 : vector<16x32xf32>
    %cst_33 = arith.constant dense<0.000000e+00> : vector<16x32xf32>
    %70 = tpu.matmul %69, %9, %cst_33 {dimension_numbers = #tpu.dot_dimension_numbers<[1], [0], [0], [1], [0, 0, 1, 1], [], []>} : vector<16x32xf32>, vector<32x32xf32>, vector<16x32xf32> -> vector<16x32xf32>
    %cst_34 = arith.constant 9.99999996E-13 : f32
    %71 = vector.broadcast %cst_34 : f32 to vector<16x32xf32>
    %72 = arith.addf %70, %71 : vector<16x32xf32>
    %73 = math.rsqrt %72 : vector<16x32xf32>
    %74 = arith.mulf %68, %73 : vector<16x32xf32>
    %c0_35 = arith.constant 0 : index
    %c0_36 = arith.constant 0 : index
    %75 = vector.load %arg11[%c0_35, %c0_36] : memref<1x32xf32, #tpu.memory_space<vmem>>, vector<1x32xf32>
    %76 = vector.broadcast %75 : vector<1x32xf32> to vector<16x32xf32>
    %77 = arith.mulf %74, %76 : vector<16x32xf32>
    %78 = arith.mulf %77, %6 : vector<16x32xf32>
    %cst_37 = arith.constant dense<0.000000e+00> : vector<16x32xf32>
    %79 = tpu.matmul %77, %8, %cst_37 {dimension_numbers = #tpu.dot_dimension_numbers<[1], [0], [0], [1], [0, 0, 1, 1], [], []>} : vector<16x32xf32>, vector<32x32xf32>, vector<16x32xf32> -> vector<16x32xf32>
    %80 = arith.mulf %79, %7 : vector<16x32xf32>
    %81 = arith.addf %78, %80 : vector<16x32xf32>
    %82 = vector.extract_strided_slice %67 {offsets = [0, 32], sizes = [16, 32], strides = [1, 1]} : vector<16x96xf32> to vector<16x32xf32>
    %83 = arith.mulf %82, %82 : vector<16x32xf32>
    %cst_38 = arith.constant dense<0.000000e+00> : vector<16x32xf32>
    %84 = tpu.matmul %83, %9, %cst_38 {dimension_numbers = #tpu.dot_dimension_numbers<[1], [0], [0], [1], [0, 0, 1, 1], [], []>} : vector<16x32xf32>, vector<32x32xf32>, vector<16x32xf32> -> vector<16x32xf32>
    %cst_39 = arith.constant 9.99999996E-13 : f32
    %85 = vector.broadcast %cst_39 : f32 to vector<16x32xf32>
    %86 = arith.addf %84, %85 : vector<16x32xf32>
    %87 = math.rsqrt %86 : vector<16x32xf32>
    %88 = arith.mulf %82, %87 : vector<16x32xf32>
    %89 = arith.mulf %88, %6 : vector<16x32xf32>
    %cst_40 = arith.constant dense<0.000000e+00> : vector<16x32xf32>
    %90 = tpu.matmul %88, %8, %cst_40 {dimension_numbers = #tpu.dot_dimension_numbers<[1], [0], [0], [1], [0, 0, 1, 1], [], []>} : vector<16x32xf32>, vector<32x32xf32>, vector<16x32xf32> -> vector<16x32xf32>
    %91 = arith.mulf %90, %7 : vector<16x32xf32>
    %92 = arith.addf %89, %91 : vector<16x32xf32>
    %93 = vector.extract_strided_slice %67 {offsets = [0, 64], sizes = [16, 32], strides = [1, 1]} : vector<16x96xf32> to vector<16x32xf32>
    %c0_41 = arith.constant 0 : index
    %c0_42 = arith.constant 0 : index
    %94 = vector.load %arg6[%c0_41, %c0_42] : memref<16x16xf32, #tpu.memory_space<vmem>>, vector<16x16xf32>
    %c0_43 = arith.constant 0 : index
    %c0_44 = arith.constant 0 : index
    %95 = vector.load %arg18[%c0_43, %c0_44] : memref<32x32xbf16, #tpu.memory_space<vmem>>, vector<32x32xbf16>
    %c0_45 = arith.constant 0 : index
    %c0_46 = arith.constant 0 : index
    %96 = vector.load %arg19[%c0_45, %c0_46] : memref<1x32xf32, #tpu.memory_space<vmem>>, vector<1x32xf32>
    %97 = vector.extract_strided_slice %81 {offsets = [0, 0], sizes = [16, 8], strides = [1, 1]} : vector<16x32xf32> to vector<16x8xf32>
    %98 = arith.truncf %97 : vector<16x8xf32> to vector<16x8xbf16>
    %99 = vector.extract_strided_slice %92 {offsets = [0, 0], sizes = [16, 8], strides = [1, 1]} : vector<16x32xf32> to vector<16x8xf32>
    %100 = tpu.transpose %99, [1, 0] : vector<16x8xf32> -> vector<8x16xf32>
    %101 = arith.truncf %100 : vector<8x16xf32> to vector<8x16xbf16>
    %cst_47 = arith.constant dense<0.000000e+00> : vector<16x16xf32>
    %102 = tpu.matmul %98, %101, %cst_47 {dimension_numbers = #tpu.dot_dimension_numbers<[1], [0], [0], [1], [0, 0, 1, 1], [], []>} : vector<16x8xbf16>, vector<8x16xbf16>, vector<16x16xf32> -> vector<16x16xf32>
    %103 = arith.addf %102, %94 : vector<16x16xf32>
    %cst_48 = arith.constant dense<0xFF800000> : vector<16xf32>
    %104 = vector.multi_reduction <maximumf>, %103, %cst_48 [1] : vector<16x16xf32> to vector<16xf32>
    %105 = vector.shape_cast %104 : vector<16xf32> to vector<16x1xf32>
    %106 = vector.broadcast %105 : vector<16x1xf32> to vector<16x16xf32>
    %107 = arith.subf %103, %106 : vector<16x16xf32>
    %108 = math.exp %107 : vector<16x16xf32>
    %cst_49 = arith.constant dense<0.000000e+00> : vector<16xf32>
    %109 = vector.multi_reduction <add>, %108, %cst_49 [1] : vector<16x16xf32> to vector<16xf32>
    %110 = vector.shape_cast %109 : vector<16xf32> to vector<16x1xf32>
    %111 = tpu.reciprocal %110 {approx = true} : vector<16x1xf32> -> vector<16x1xf32>
    %112 = vector.broadcast %111 : vector<16x1xf32> to vector<16x16xf32>
    %113 = arith.mulf %108, %112 : vector<16x16xf32>
    %114 = arith.truncf %113 : vector<16x16xf32> to vector<16x16xbf16>
    %115 = vector.extract_strided_slice %93 {offsets = [0, 0], sizes = [16, 8], strides = [1, 1]} : vector<16x32xf32> to vector<16x8xf32>
    %116 = arith.truncf %115 : vector<16x8xf32> to vector<16x8xbf16>
    %cst_50 = arith.constant dense<0.000000e+00> : vector<16x8xf32>
    %117 = tpu.matmul %114, %116, %cst_50 {dimension_numbers = #tpu.dot_dimension_numbers<[1], [0], [0], [1], [0, 0, 1, 1], [], []>} : vector<16x16xbf16>, vector<16x8xbf16>, vector<16x8xf32> -> vector<16x8xf32>
    %118 = arith.truncf %117 : vector<16x8xf32> to vector<16x8xbf16>
    %119 = vector.extract_strided_slice %95 {offsets = [0, 0], sizes = [8, 32], strides = [1, 1]} : vector<32x32xbf16> to vector<8x32xbf16>
    %cst_51 = arith.constant dense<0.000000e+00> : vector<16x32xf32>
    %120 = tpu.matmul %118, %119, %cst_51 {dimension_numbers = #tpu.dot_dimension_numbers<[1], [0], [0], [1], [0, 0, 1, 1], [], []>} : vector<16x8xbf16>, vector<8x32xbf16>, vector<16x32xf32> -> vector<16x32xf32>
    %121 = vector.extract_strided_slice %81 {offsets = [0, 8], sizes = [16, 8], strides = [1, 1]} : vector<16x32xf32> to vector<16x8xf32>
    %122 = arith.truncf %121 : vector<16x8xf32> to vector<16x8xbf16>
    %123 = vector.extract_strided_slice %92 {offsets = [0, 8], sizes = [16, 8], strides = [1, 1]} : vector<16x32xf32> to vector<16x8xf32>
    %124 = tpu.transpose %123, [1, 0] : vector<16x8xf32> -> vector<8x16xf32>
    %125 = arith.truncf %124 : vector<8x16xf32> to vector<8x16xbf16>
    %cst_52 = arith.constant dense<0.000000e+00> : vector<16x16xf32>
    %126 = tpu.matmul %122, %125, %cst_52 {dimension_numbers = #tpu.dot_dimension_numbers<[1], [0], [0], [1], [0, 0, 1, 1], [], []>} : vector<16x8xbf16>, vector<8x16xbf16>, vector<16x16xf32> -> vector<16x16xf32>
    %127 = arith.addf %126, %94 : vector<16x16xf32>
    %cst_53 = arith.constant dense<0xFF800000> : vector<16xf32>
    %128 = vector.multi_reduction <maximumf>, %127, %cst_53 [1] : vector<16x16xf32> to vector<16xf32>
    %129 = vector.shape_cast %128 : vector<16xf32> to vector<16x1xf32>
    %130 = vector.broadcast %129 : vector<16x1xf32> to vector<16x16xf32>
    %131 = arith.subf %127, %130 : vector<16x16xf32>
    %132 = math.exp %131 : vector<16x16xf32>
    %cst_54 = arith.constant dense<0.000000e+00> : vector<16xf32>
    %133 = vector.multi_reduction <add>, %132, %cst_54 [1] : vector<16x16xf32> to vector<16xf32>
    %134 = vector.shape_cast %133 : vector<16xf32> to vector<16x1xf32>
    %135 = tpu.reciprocal %134 {approx = true} : vector<16x1xf32> -> vector<16x1xf32>
    %136 = vector.broadcast %135 : vector<16x1xf32> to vector<16x16xf32>
    %137 = arith.mulf %132, %136 : vector<16x16xf32>
    %138 = arith.truncf %137 : vector<16x16xf32> to vector<16x16xbf16>
    %139 = vector.extract_strided_slice %93 {offsets = [0, 8], sizes = [16, 8], strides = [1, 1]} : vector<16x32xf32> to vector<16x8xf32>
    %140 = arith.truncf %139 : vector<16x8xf32> to vector<16x8xbf16>
    %cst_55 = arith.constant dense<0.000000e+00> : vector<16x8xf32>
    %141 = tpu.matmul %138, %140, %cst_55 {dimension_numbers = #tpu.dot_dimension_numbers<[1], [0], [0], [1], [0, 0, 1, 1], [], []>} : vector<16x16xbf16>, vector<16x8xbf16>, vector<16x8xf32> -> vector<16x8xf32>
    %142 = arith.truncf %141 : vector<16x8xf32> to vector<16x8xbf16>
    %143 = vector.extract_strided_slice %95 {offsets = [8, 0], sizes = [8, 32], strides = [1, 1]} : vector<32x32xbf16> to vector<8x32xbf16>
    %cst_56 = arith.constant dense<0.000000e+00> : vector<16x32xf32>
    %144 = tpu.matmul %142, %143, %cst_56 {dimension_numbers = #tpu.dot_dimension_numbers<[1], [0], [0], [1], [0, 0, 1, 1], [], []>} : vector<16x8xbf16>, vector<8x32xbf16>, vector<16x32xf32> -> vector<16x32xf32>
    %145 = arith.addf %120, %144 : vector<16x32xf32>
    %146 = vector.extract_strided_slice %81 {offsets = [0, 16], sizes = [16, 8], strides = [1, 1]} : vector<16x32xf32> to vector<16x8xf32>
    %147 = arith.truncf %146 : vector<16x8xf32> to vector<16x8xbf16>
    %148 = vector.extract_strided_slice %92 {offsets = [0, 16], sizes = [16, 8], strides = [1, 1]} : vector<16x32xf32> to vector<16x8xf32>
    %149 = tpu.transpose %148, [1, 0] : vector<16x8xf32> -> vector<8x16xf32>
    %150 = arith.truncf %149 : vector<8x16xf32> to vector<8x16xbf16>
    %cst_57 = arith.constant dense<0.000000e+00> : vector<16x16xf32>
    %151 = tpu.matmul %147, %150, %cst_57 {dimension_numbers = #tpu.dot_dimension_numbers<[1], [0], [0], [1], [0, 0, 1, 1], [], []>} : vector<16x8xbf16>, vector<8x16xbf16>, vector<16x16xf32> -> vector<16x16xf32>
    %152 = arith.addf %151, %94 : vector<16x16xf32>
    %cst_58 = arith.constant dense<0xFF800000> : vector<16xf32>
    %153 = vector.multi_reduction <maximumf>, %152, %cst_58 [1] : vector<16x16xf32> to vector<16xf32>
    %154 = vector.shape_cast %153 : vector<16xf32> to vector<16x1xf32>
    %155 = vector.broadcast %154 : vector<16x1xf32> to vector<16x16xf32>
    %156 = arith.subf %152, %155 : vector<16x16xf32>
    %157 = math.exp %156 : vector<16x16xf32>
    %cst_59 = arith.constant dense<0.000000e+00> : vector<16xf32>
    %158 = vector.multi_reduction <add>, %157, %cst_59 [1] : vector<16x16xf32> to vector<16xf32>
    %159 = vector.shape_cast %158 : vector<16xf32> to vector<16x1xf32>
    %160 = tpu.reciprocal %159 {approx = true} : vector<16x1xf32> -> vector<16x1xf32>
    %161 = vector.broadcast %160 : vector<16x1xf32> to vector<16x16xf32>
    %162 = arith.mulf %157, %161 : vector<16x16xf32>
    %163 = arith.truncf %162 : vector<16x16xf32> to vector<16x16xbf16>
    %164 = vector.extract_strided_slice %93 {offsets = [0, 16], sizes = [16, 8], strides = [1, 1]} : vector<16x32xf32> to vector<16x8xf32>
    %165 = arith.truncf %164 : vector<16x8xf32> to vector<16x8xbf16>
    %cst_60 = arith.constant dense<0.000000e+00> : vector<16x8xf32>
    %166 = tpu.matmul %163, %165, %cst_60 {dimension_numbers = #tpu.dot_dimension_numbers<[1], [0], [0], [1], [0, 0, 1, 1], [], []>} : vector<16x16xbf16>, vector<16x8xbf16>, vector<16x8xf32> -> vector<16x8xf32>
    %167 = arith.truncf %166 : vector<16x8xf32> to vector<16x8xbf16>
    %168 = vector.extract_strided_slice %95 {offsets = [16, 0], sizes = [8, 32], strides = [1, 1]} : vector<32x32xbf16> to vector<8x32xbf16>
    %cst_61 = arith.constant dense<0.000000e+00> : vector<16x32xf32>
    %169 = tpu.matmul %167, %168, %cst_61 {dimension_numbers = #tpu.dot_dimension_numbers<[1], [0], [0], [1], [0, 0, 1, 1], [], []>} : vector<16x8xbf16>, vector<8x32xbf16>, vector<16x32xf32> -> vector<16x32xf32>
    %170 = arith.addf %145, %169 : vector<16x32xf32>
    %171 = vector.extract_strided_slice %81 {offsets = [0, 24], sizes = [16, 8], strides = [1, 1]} : vector<16x32xf32> to vector<16x8xf32>
    %172 = arith.truncf %171 : vector<16x8xf32> to vector<16x8xbf16>
    %173 = vector.extract_strided_slice %92 {offsets = [0, 24], sizes = [16, 8], strides = [1, 1]} : vector<16x32xf32> to vector<16x8xf32>
    %174 = tpu.transpose %173, [1, 0] : vector<16x8xf32> -> vector<8x16xf32>
    %175 = arith.truncf %174 : vector<8x16xf32> to vector<8x16xbf16>
    %cst_62 = arith.constant dense<0.000000e+00> : vector<16x16xf32>
    %176 = tpu.matmul %172, %175, %cst_62 {dimension_numbers = #tpu.dot_dimension_numbers<[1], [0], [0], [1], [0, 0, 1, 1], [], []>} : vector<16x8xbf16>, vector<8x16xbf16>, vector<16x16xf32> -> vector<16x16xf32>
    %177 = arith.addf %176, %94 : vector<16x16xf32>
    %cst_63 = arith.constant dense<0xFF800000> : vector<16xf32>
    %178 = vector.multi_reduction <maximumf>, %177, %cst_63 [1] : vector<16x16xf32> to vector<16xf32>
    %179 = vector.shape_cast %178 : vector<16xf32> to vector<16x1xf32>
    %180 = vector.broadcast %179 : vector<16x1xf32> to vector<16x16xf32>
    %181 = arith.subf %177, %180 : vector<16x16xf32>
    %182 = math.exp %181 : vector<16x16xf32>
    %cst_64 = arith.constant dense<0.000000e+00> : vector<16xf32>
    %183 = vector.multi_reduction <add>, %182, %cst_64 [1] : vector<16x16xf32> to vector<16xf32>
    %184 = vector.shape_cast %183 : vector<16xf32> to vector<16x1xf32>
    %185 = tpu.reciprocal %184 {approx = true} : vector<16x1xf32> -> vector<16x1xf32>
    %186 = vector.broadcast %185 : vector<16x1xf32> to vector<16x16xf32>
    %187 = arith.mulf %182, %186 : vector<16x16xf32>
    %188 = arith.truncf %187 : vector<16x16xf32> to vector<16x16xbf16>
    %189 = vector.extract_strided_slice %93 {offsets = [0, 24], sizes = [16, 8], strides = [1, 1]} : vector<16x32xf32> to vector<16x8xf32>
    %190 = arith.truncf %189 : vector<16x8xf32> to vector<16x8xbf16>
    %cst_65 = arith.constant dense<0.000000e+00> : vector<16x8xf32>
    %191 = tpu.matmul %188, %190, %cst_65 {dimension_numbers = #tpu.dot_dimension_numbers<[1], [0], [0], [1], [0, 0, 1, 1], [], []>} : vector<16x16xbf16>, vector<16x8xbf16>, vector<16x8xf32> -> vector<16x8xf32>
    %192 = arith.truncf %191 : vector<16x8xf32> to vector<16x8xbf16>
    %193 = vector.extract_strided_slice %95 {offsets = [24, 0], sizes = [8, 32], strides = [1, 1]} : vector<32x32xbf16> to vector<8x32xbf16>
    %cst_66 = arith.constant dense<0.000000e+00> : vector<16x32xf32>
    %194 = tpu.matmul %192, %193, %cst_66 {dimension_numbers = #tpu.dot_dimension_numbers<[1], [0], [0], [1], [0, 0, 1, 1], [], []>} : vector<16x8xbf16>, vector<8x32xbf16>, vector<16x32xf32> -> vector<16x32xf32>
    %195 = arith.addf %170, %194 : vector<16x32xf32>
    %196 = vector.broadcast %96 : vector<1x32xf32> to vector<16x32xf32>
    %197 = arith.addf %195, %196 : vector<16x32xf32>
    %198 = vector.broadcast %19 : vector<1x32xf32> to vector<16x32xf32>
    %199 = arith.mulf %198, %197 : vector<16x32xf32>
    %200 = arith.addf %1, %199 : vector<16x32xf32>
    %201 = arith.truncf %200 : vector<16x32xf32> to vector<16x32xbf16>
    %c0_67 = arith.constant 0 : index
    %c0_68 = arith.constant 0 : index
    %202 = vector.load %arg20[%c0_67, %c0_68] : memref<32x32xbf16, #tpu.memory_space<vmem>>, vector<32x32xbf16>
    %cst_69 = arith.constant dense<0.000000e+00> : vector<16x32xf32>
    %203 = tpu.matmul %201, %202, %cst_69 {dimension_numbers = #tpu.dot_dimension_numbers<[1], [0], [0], [1], [0, 0, 1, 1], [], []>} : vector<16x32xbf16>, vector<32x32xbf16>, vector<16x32xf32> -> vector<16x32xf32>
    %c0_70 = arith.constant 0 : index
    %c0_71 = arith.constant 0 : index
    %204 = vector.load %arg21[%c0_70, %c0_71] : memref<1x32xf32, #tpu.memory_space<vmem>>, vector<1x32xf32>
    %205 = vector.broadcast %204 : vector<1x32xf32> to vector<16x32xf32>
    %206 = arith.addf %203, %205 : vector<16x32xf32>
    %c0_72 = arith.constant 0 : index
    %c0_73 = arith.constant 0 : index
    %c0_74 = arith.constant 0 : index
    %207 = vector.load %arg4[%c0_72, %c0_73, %c0_74] : memref<1x8x64xf32, #tpu.memory_space<vmem>>, vector<1x8x64xf32>
    %208 = vector.shape_cast %207 : vector<1x8x64xf32> to vector<8x64xf32>
    %209 = vector.extract_strided_slice %208 {offsets = [0, 0], sizes = [8, 32], strides = [1, 1]} : vector<8x64xf32> to vector<8x32xf32>
    %210 = arith.mulf %209, %209 : vector<8x32xf32>
    %cst_75 = arith.constant dense<0.000000e+00> : vector<8x32xf32>
    %211 = tpu.matmul %210, %9, %cst_75 {dimension_numbers = #tpu.dot_dimension_numbers<[1], [0], [0], [1], [0, 0, 1, 1], [], []>} : vector<8x32xf32>, vector<32x32xf32>, vector<8x32xf32> -> vector<8x32xf32>
    %cst_76 = arith.constant 9.99999996E-13 : f32
    %212 = vector.broadcast %cst_76 : f32 to vector<8x32xf32>
    %213 = arith.addf %211, %212 : vector<8x32xf32>
    %214 = math.rsqrt %213 : vector<8x32xf32>
    %215 = arith.mulf %209, %214 : vector<8x32xf32>
    %216 = vector.extract_strided_slice %208 {offsets = [0, 32], sizes = [8, 32], strides = [1, 1]} : vector<8x64xf32> to vector<8x32xf32>
    %217 = arith.mulf %206, %206 : vector<16x32xf32>
    %cst_77 = arith.constant dense<0.000000e+00> : vector<16x32xf32>
    %218 = tpu.matmul %217, %9, %cst_77 {dimension_numbers = #tpu.dot_dimension_numbers<[1], [0], [0], [1], [0, 0, 1, 1], [], []>} : vector<16x32xf32>, vector<32x32xf32>, vector<16x32xf32> -> vector<16x32xf32>
    %cst_78 = arith.constant 9.99999996E-13 : f32
    %219 = vector.broadcast %cst_78 : f32 to vector<16x32xf32>
    %220 = arith.addf %218, %219 : vector<16x32xf32>
    %221 = math.rsqrt %220 : vector<16x32xf32>
    %222 = arith.mulf %206, %221 : vector<16x32xf32>
    %c0_79 = arith.constant 0 : index
    %c0_80 = arith.constant 0 : index
    %223 = vector.load %arg12[%c0_79, %c0_80] : memref<1x32xf32, #tpu.memory_space<vmem>>, vector<1x32xf32>
    %224 = vector.broadcast %223 : vector<1x32xf32> to vector<16x32xf32>
    %225 = arith.mulf %222, %224 : vector<16x32xf32>
    %c0_81 = arith.constant 0 : index
    %c0_82 = arith.constant 0 : index
    %c0_83 = arith.constant 0 : index
    %226 = vector.load %arg5[%c0_81, %c0_82, %c0_83] : memref<1x1x8xf32, #tpu.memory_space<vmem>>, vector<1x1x8xf32>
    %227 = vector.shape_cast %226 : vector<1x1x8xf32> to vector<1x8xf32>
    %c0_84 = arith.constant 0 : index
    %c0_85 = arith.constant 0 : index
    %228 = vector.load %arg22[%c0_84, %c0_85] : memref<32x32xbf16, #tpu.memory_space<vmem>>, vector<32x32xbf16>
    %c0_86 = arith.constant 0 : index
    %c0_87 = arith.constant 0 : index
    %229 = vector.load %arg23[%c0_86, %c0_87] : memref<1x32xf32, #tpu.memory_space<vmem>>, vector<1x32xf32>
    %230 = vector.extract_strided_slice %225 {offsets = [0, 0], sizes = [16, 8], strides = [1, 1]} : vector<16x32xf32> to vector<16x8xf32>
    %231 = arith.truncf %230 : vector<16x8xf32> to vector<16x8xbf16>
    %232 = vector.extract_strided_slice %215 {offsets = [0, 0], sizes = [8, 8], strides = [1, 1]} : vector<8x32xf32> to vector<8x8xf32>
    %233 = tpu.transpose %232, [1, 0] : vector<8x8xf32> -> vector<8x8xf32>
    %234 = arith.truncf %233 : vector<8x8xf32> to vector<8x8xbf16>
    %cst_88 = arith.constant dense<0.000000e+00> : vector<16x8xf32>
    %235 = tpu.matmul %231, %234, %cst_88 {dimension_numbers = #tpu.dot_dimension_numbers<[1], [0], [0], [1], [0, 0, 1, 1], [], []>} : vector<16x8xbf16>, vector<8x8xbf16>, vector<16x8xf32> -> vector<16x8xf32>
    %236 = vector.broadcast %227 : vector<1x8xf32> to vector<16x8xf32>
    %237 = arith.addf %235, %236 : vector<16x8xf32>
    %cst_89 = arith.constant dense<0xFF800000> : vector<16xf32>
    %238 = vector.multi_reduction <maximumf>, %237, %cst_89 [1] : vector<16x8xf32> to vector<16xf32>
    %239 = vector.shape_cast %238 : vector<16xf32> to vector<16x1xf32>
    %240 = vector.broadcast %239 : vector<16x1xf32> to vector<16x8xf32>
    %241 = arith.subf %237, %240 : vector<16x8xf32>
    %242 = math.exp %241 : vector<16x8xf32>
    %cst_90 = arith.constant dense<0.000000e+00> : vector<16xf32>
    %243 = vector.multi_reduction <add>, %242, %cst_90 [1] : vector<16x8xf32> to vector<16xf32>
    %244 = vector.shape_cast %243 : vector<16xf32> to vector<16x1xf32>
    %245 = tpu.reciprocal %244 {approx = true} : vector<16x1xf32> -> vector<16x1xf32>
    %246 = vector.broadcast %245 : vector<16x1xf32> to vector<16x8xf32>
    %247 = arith.mulf %242, %246 : vector<16x8xf32>
    %248 = arith.truncf %247 : vector<16x8xf32> to vector<16x8xbf16>
    %249 = vector.extract_strided_slice %216 {offsets = [0, 0], sizes = [8, 8], strides = [1, 1]} : vector<8x32xf32> to vector<8x8xf32>
    %250 = arith.truncf %249 : vector<8x8xf32> to vector<8x8xbf16>
    %cst_91 = arith.constant dense<0.000000e+00> : vector<16x8xf32>
    %251 = tpu.matmul %248, %250, %cst_91 {dimension_numbers = #tpu.dot_dimension_numbers<[1], [0], [0], [1], [0, 0, 1, 1], [], []>} : vector<16x8xbf16>, vector<8x8xbf16>, vector<16x8xf32> -> vector<16x8xf32>
    %252 = arith.truncf %251 : vector<16x8xf32> to vector<16x8xbf16>
    %253 = vector.extract_strided_slice %228 {offsets = [0, 0], sizes = [8, 32], strides = [1, 1]} : vector<32x32xbf16> to vector<8x32xbf16>
    %cst_92 = arith.constant dense<0.000000e+00> : vector<16x32xf32>
    %254 = tpu.matmul %252, %253, %cst_92 {dimension_numbers = #tpu.dot_dimension_numbers<[1], [0], [0], [1], [0, 0, 1, 1], [], []>} : vector<16x8xbf16>, vector<8x32xbf16>, vector<16x32xf32> -> vector<16x32xf32>
    %255 = vector.extract_strided_slice %225 {offsets = [0, 8], sizes = [16, 8], strides = [1, 1]} : vector<16x32xf32> to vector<16x8xf32>
    %256 = arith.truncf %255 : vector<16x8xf32> to vector<16x8xbf16>
    %257 = vector.extract_strided_slice %215 {offsets = [0, 8], sizes = [8, 8], strides = [1, 1]} : vector<8x32xf32> to vector<8x8xf32>
    %258 = tpu.transpose %257, [1, 0] : vector<8x8xf32> -> vector<8x8xf32>
    %259 = arith.truncf %258 : vector<8x8xf32> to vector<8x8xbf16>
    %cst_93 = arith.constant dense<0.000000e+00> : vector<16x8xf32>
    %260 = tpu.matmul %256, %259, %cst_93 {dimension_numbers = #tpu.dot_dimension_numbers<[1], [0], [0], [1], [0, 0, 1, 1], [], []>} : vector<16x8xbf16>, vector<8x8xbf16>, vector<16x8xf32> -> vector<16x8xf32>
    %261 = vector.broadcast %227 : vector<1x8xf32> to vector<16x8xf32>
    %262 = arith.addf %260, %261 : vector<16x8xf32>
    %cst_94 = arith.constant dense<0xFF800000> : vector<16xf32>
    %263 = vector.multi_reduction <maximumf>, %262, %cst_94 [1] : vector<16x8xf32> to vector<16xf32>
    %264 = vector.shape_cast %263 : vector<16xf32> to vector<16x1xf32>
    %265 = vector.broadcast %264 : vector<16x1xf32> to vector<16x8xf32>
    %266 = arith.subf %262, %265 : vector<16x8xf32>
    %267 = math.exp %266 : vector<16x8xf32>
    %cst_95 = arith.constant dense<0.000000e+00> : vector<16xf32>
    %268 = vector.multi_reduction <add>, %267, %cst_95 [1] : vector<16x8xf32> to vector<16xf32>
    %269 = vector.shape_cast %268 : vector<16xf32> to vector<16x1xf32>
    %270 = tpu.reciprocal %269 {approx = true} : vector<16x1xf32> -> vector<16x1xf32>
    %271 = vector.broadcast %270 : vector<16x1xf32> to vector<16x8xf32>
    %272 = arith.mulf %267, %271 : vector<16x8xf32>
    %273 = arith.truncf %272 : vector<16x8xf32> to vector<16x8xbf16>
    %274 = vector.extract_strided_slice %216 {offsets = [0, 8], sizes = [8, 8], strides = [1, 1]} : vector<8x32xf32> to vector<8x8xf32>
    %275 = arith.truncf %274 : vector<8x8xf32> to vector<8x8xbf16>
    %cst_96 = arith.constant dense<0.000000e+00> : vector<16x8xf32>
    %276 = tpu.matmul %273, %275, %cst_96 {dimension_numbers = #tpu.dot_dimension_numbers<[1], [0], [0], [1], [0, 0, 1, 1], [], []>} : vector<16x8xbf16>, vector<8x8xbf16>, vector<16x8xf32> -> vector<16x8xf32>
    %277 = arith.truncf %276 : vector<16x8xf32> to vector<16x8xbf16>
    %278 = vector.extract_strided_slice %228 {offsets = [8, 0], sizes = [8, 32], strides = [1, 1]} : vector<32x32xbf16> to vector<8x32xbf16>
    %cst_97 = arith.constant dense<0.000000e+00> : vector<16x32xf32>
    %279 = tpu.matmul %277, %278, %cst_97 {dimension_numbers = #tpu.dot_dimension_numbers<[1], [0], [0], [1], [0, 0, 1, 1], [], []>} : vector<16x8xbf16>, vector<8x32xbf16>, vector<16x32xf32> -> vector<16x32xf32>
    %280 = arith.addf %254, %279 : vector<16x32xf32>
    %281 = vector.extract_strided_slice %225 {offsets = [0, 16], sizes = [16, 8], strides = [1, 1]} : vector<16x32xf32> to vector<16x8xf32>
    %282 = arith.truncf %281 : vector<16x8xf32> to vector<16x8xbf16>
    %283 = vector.extract_strided_slice %215 {offsets = [0, 16], sizes = [8, 8], strides = [1, 1]} : vector<8x32xf32> to vector<8x8xf32>
    %284 = tpu.transpose %283, [1, 0] : vector<8x8xf32> -> vector<8x8xf32>
    %285 = arith.truncf %284 : vector<8x8xf32> to vector<8x8xbf16>
    %cst_98 = arith.constant dense<0.000000e+00> : vector<16x8xf32>
    %286 = tpu.matmul %282, %285, %cst_98 {dimension_numbers = #tpu.dot_dimension_numbers<[1], [0], [0], [1], [0, 0, 1, 1], [], []>} : vector<16x8xbf16>, vector<8x8xbf16>, vector<16x8xf32> -> vector<16x8xf32>
    %287 = vector.broadcast %227 : vector<1x8xf32> to vector<16x8xf32>
    %288 = arith.addf %286, %287 : vector<16x8xf32>
    %cst_99 = arith.constant dense<0xFF800000> : vector<16xf32>
    %289 = vector.multi_reduction <maximumf>, %288, %cst_99 [1] : vector<16x8xf32> to vector<16xf32>
    %290 = vector.shape_cast %289 : vector<16xf32> to vector<16x1xf32>
    %291 = vector.broadcast %290 : vector<16x1xf32> to vector<16x8xf32>
    %292 = arith.subf %288, %291 : vector<16x8xf32>
    %293 = math.exp %292 : vector<16x8xf32>
    %cst_100 = arith.constant dense<0.000000e+00> : vector<16xf32>
    %294 = vector.multi_reduction <add>, %293, %cst_100 [1] : vector<16x8xf32> to vector<16xf32>
    %295 = vector.shape_cast %294 : vector<16xf32> to vector<16x1xf32>
    %296 = tpu.reciprocal %295 {approx = true} : vector<16x1xf32> -> vector<16x1xf32>
    %297 = vector.broadcast %296 : vector<16x1xf32> to vector<16x8xf32>
    %298 = arith.mulf %293, %297 : vector<16x8xf32>
    %299 = arith.truncf %298 : vector<16x8xf32> to vector<16x8xbf16>
    %300 = vector.extract_strided_slice %216 {offsets = [0, 16], sizes = [8, 8], strides = [1, 1]} : vector<8x32xf32> to vector<8x8xf32>
    %301 = arith.truncf %300 : vector<8x8xf32> to vector<8x8xbf16>
    %cst_101 = arith.constant dense<0.000000e+00> : vector<16x8xf32>
    %302 = tpu.matmul %299, %301, %cst_101 {dimension_numbers = #tpu.dot_dimension_numbers<[1], [0], [0], [1], [0, 0, 1, 1], [], []>} : vector<16x8xbf16>, vector<8x8xbf16>, vector<16x8xf32> -> vector<16x8xf32>
    %303 = arith.truncf %302 : vector<16x8xf32> to vector<16x8xbf16>
    %304 = vector.extract_strided_slice %228 {offsets = [16, 0], sizes = [8, 32], strides = [1, 1]} : vector<32x32xbf16> to vector<8x32xbf16>
    %cst_102 = arith.constant dense<0.000000e+00> : vector<16x32xf32>
    %305 = tpu.matmul %303, %304, %cst_102 {dimension_numbers = #tpu.dot_dimension_numbers<[1], [0], [0], [1], [0, 0, 1, 1], [], []>} : vector<16x8xbf16>, vector<8x32xbf16>, vector<16x32xf32> -> vector<16x32xf32>
    %306 = arith.addf %280, %305 : vector<16x32xf32>
    %307 = vector.extract_strided_slice %225 {offsets = [0, 24], sizes = [16, 8], strides = [1, 1]} : vector<16x32xf32> to vector<16x8xf32>
    %308 = arith.truncf %307 : vector<16x8xf32> to vector<16x8xbf16>
    %309 = vector.extract_strided_slice %215 {offsets = [0, 24], sizes = [8, 8], strides = [1, 1]} : vector<8x32xf32> to vector<8x8xf32>
    %310 = tpu.transpose %309, [1, 0] : vector<8x8xf32> -> vector<8x8xf32>
    %311 = arith.truncf %310 : vector<8x8xf32> to vector<8x8xbf16>
    %cst_103 = arith.constant dense<0.000000e+00> : vector<16x8xf32>
    %312 = tpu.matmul %308, %311, %cst_103 {dimension_numbers = #tpu.dot_dimension_numbers<[1], [0], [0], [1], [0, 0, 1, 1], [], []>} : vector<16x8xbf16>, vector<8x8xbf16>, vector<16x8xf32> -> vector<16x8xf32>
    %313 = vector.broadcast %227 : vector<1x8xf32> to vector<16x8xf32>
    %314 = arith.addf %312, %313 : vector<16x8xf32>
    %cst_104 = arith.constant dense<0xFF800000> : vector<16xf32>
    %315 = vector.multi_reduction <maximumf>, %314, %cst_104 [1] : vector<16x8xf32> to vector<16xf32>
    %316 = vector.shape_cast %315 : vector<16xf32> to vector<16x1xf32>
    %317 = vector.broadcast %316 : vector<16x1xf32> to vector<16x8xf32>
    %318 = arith.subf %314, %317 : vector<16x8xf32>
    %319 = math.exp %318 : vector<16x8xf32>
    %cst_105 = arith.constant dense<0.000000e+00> : vector<16xf32>
    %320 = vector.multi_reduction <add>, %319, %cst_105 [1] : vector<16x8xf32> to vector<16xf32>
    %321 = vector.shape_cast %320 : vector<16xf32> to vector<16x1xf32>
    %322 = tpu.reciprocal %321 {approx = true} : vector<16x1xf32> -> vector<16x1xf32>
    %323 = vector.broadcast %322 : vector<16x1xf32> to vector<16x8xf32>
    %324 = arith.mulf %319, %323 : vector<16x8xf32>
    %325 = arith.truncf %324 : vector<16x8xf32> to vector<16x8xbf16>
    %326 = vector.extract_strided_slice %216 {offsets = [0, 24], sizes = [8, 8], strides = [1, 1]} : vector<8x32xf32> to vector<8x8xf32>
    %327 = arith.truncf %326 : vector<8x8xf32> to vector<8x8xbf16>
    %cst_106 = arith.constant dense<0.000000e+00> : vector<16x8xf32>
    %328 = tpu.matmul %325, %327, %cst_106 {dimension_numbers = #tpu.dot_dimension_numbers<[1], [0], [0], [1], [0, 0, 1, 1], [], []>} : vector<16x8xbf16>, vector<8x8xbf16>, vector<16x8xf32> -> vector<16x8xf32>
    %329 = arith.truncf %328 : vector<16x8xf32> to vector<16x8xbf16>
    %330 = vector.extract_strided_slice %228 {offsets = [24, 0], sizes = [8, 32], strides = [1, 1]} : vector<32x32xbf16> to vector<8x32xbf16>
    %cst_107 = arith.constant dense<0.000000e+00> : vector<16x32xf32>
    %331 = tpu.matmul %329, %330, %cst_107 {dimension_numbers = #tpu.dot_dimension_numbers<[1], [0], [0], [1], [0, 0, 1, 1], [], []>} : vector<16x8xbf16>, vector<8x32xbf16>, vector<16x32xf32> -> vector<16x32xf32>
    %332 = arith.addf %306, %331 : vector<16x32xf32>
    %333 = vector.broadcast %229 : vector<1x32xf32> to vector<16x32xf32>
    %334 = arith.addf %332, %333 : vector<16x32xf32>
    %335 = arith.addf %200, %334 : vector<16x32xf32>
    %cst_108 = arith.constant dense<0.000000e+00> : vector<16xf32>
    %336 = vector.multi_reduction <add>, %335, %cst_108 [1] : vector<16x32xf32> to vector<16xf32>
    %337 = vector.shape_cast %336 : vector<16xf32> to vector<16x1xf32>
    %cst_109 = arith.constant 3.200000e+01 : f32
    %338 = vector.broadcast %cst_109 : f32 to vector<16x1xf32>
    %339 = arith.divf %337, %338 : vector<16x1xf32>
    %340 = vector.broadcast %339 : vector<16x1xf32> to vector<16x32xf32>
    %341 = arith.subf %335, %340 : vector<16x32xf32>
    %342 = arith.mulf %341, %341 : vector<16x32xf32>
    %cst_110 = arith.constant dense<0.000000e+00> : vector<16xf32>
    %343 = vector.multi_reduction <add>, %342, %cst_110 [1] : vector<16x32xf32> to vector<16xf32>
    %344 = vector.shape_cast %343 : vector<16xf32> to vector<16x1xf32>
    %cst_111 = arith.constant 3.200000e+01 : f32
    %345 = vector.broadcast %cst_111 : f32 to vector<16x1xf32>
    %346 = arith.divf %344, %345 : vector<16x1xf32>
    %cst_112 = arith.constant 9.99999997E-7 : f32
    %347 = vector.broadcast %cst_112 : f32 to vector<16x1xf32>
    %348 = arith.addf %346, %347 : vector<16x1xf32>
    %349 = math.rsqrt %348 : vector<16x1xf32>
    %350 = vector.broadcast %349 : vector<16x1xf32> to vector<16x32xf32>
    %351 = arith.mulf %341, %350 : vector<16x32xf32>
    %cst_113 = arith.constant 1.000000e+00 : f32
    %352 = vector.broadcast %cst_113 : f32 to vector<1x32xf32>
    %353 = arith.addf %31, %352 : vector<1x32xf32>
    %354 = vector.broadcast %353 : vector<1x32xf32> to vector<16x32xf32>
    %355 = arith.mulf %351, %354 : vector<16x32xf32>
    %356 = vector.broadcast %39 : vector<1x32xf32> to vector<16x32xf32>
    %357 = arith.addf %355, %356 : vector<16x32xf32>
    %358 = arith.truncf %357 : vector<16x32xf32> to vector<16x32xbf16>
    %c0_114 = arith.constant 0 : index
    %c0_115 = arith.constant 0 : index
    %359 = vector.load %arg24[%c0_114, %c0_115] : memref<32x256xbf16, #tpu.memory_space<vmem>>, vector<32x256xbf16>
    %cst_116 = arith.constant dense<0.000000e+00> : vector<16x256xf32>
    %360 = tpu.matmul %358, %359, %cst_116 {dimension_numbers = #tpu.dot_dimension_numbers<[1], [0], [0], [1], [0, 0, 1, 1], [], []>} : vector<16x32xbf16>, vector<32x256xbf16>, vector<16x256xf32> -> vector<16x256xf32>
    %c0_117 = arith.constant 0 : index
    %c0_118 = arith.constant 0 : index
    %361 = vector.load %arg25[%c0_117, %c0_118] : memref<1x256xf32, #tpu.memory_space<vmem>>, vector<1x256xf32>
    %362 = vector.broadcast %361 : vector<1x256xf32> to vector<16x256xf32>
    %363 = arith.addf %360, %362 : vector<16x256xf32>
    %364 = vector.extract_strided_slice %363 {offsets = [0, 0], sizes = [16, 128], strides = [1, 1]} : vector<16x256xf32> to vector<16x128xf32>
    %365 = arith.negf %364 : vector<16x128xf32>
    %366 = math.exp %365 : vector<16x128xf32>
    %cst_119 = arith.constant 1.000000e+00 : f32
    %367 = vector.broadcast %cst_119 : f32 to vector<16x128xf32>
    %368 = arith.addf %367, %366 : vector<16x128xf32>
    %369 = arith.divf %367, %368 : vector<16x128xf32>
    %370 = arith.mulf %364, %369 : vector<16x128xf32>
    %371 = vector.extract_strided_slice %363 {offsets = [0, 128], sizes = [16, 128], strides = [1, 1]} : vector<16x256xf32> to vector<16x128xf32>
    %372 = arith.mulf %370, %371 : vector<16x128xf32>
    %373 = arith.truncf %372 : vector<16x128xf32> to vector<16x128xbf16>
    %c0_120 = arith.constant 0 : index
    %c0_121 = arith.constant 0 : index
    %374 = vector.load %arg26[%c0_120, %c0_121] : memref<128x32xbf16, #tpu.memory_space<vmem>>, vector<128x32xbf16>
    %cst_122 = arith.constant dense<0.000000e+00> : vector<16x32xf32>
    %375 = tpu.matmul %373, %374, %cst_122 {dimension_numbers = #tpu.dot_dimension_numbers<[1], [0], [0], [1], [0, 0, 1, 1], [], []>} : vector<16x128xbf16>, vector<128x32xbf16>, vector<16x32xf32> -> vector<16x32xf32>
    %c0_123 = arith.constant 0 : index
    %c0_124 = arith.constant 0 : index
    %376 = vector.load %arg27[%c0_123, %c0_124] : memref<1x32xf32, #tpu.memory_space<vmem>>, vector<1x32xf32>
    %377 = vector.broadcast %376 : vector<1x32xf32> to vector<16x32xf32>
    %378 = arith.addf %375, %377 : vector<16x32xf32>
    %379 = vector.broadcast %23 : vector<1x32xf32> to vector<16x32xf32>
    %380 = arith.mulf %379, %378 : vector<16x32xf32>
    %381 = arith.addf %335, %380 : vector<16x32xf32>
    %c0_125 = arith.constant 0 : index
    %c0_126 = arith.constant 0 : index
    %c0_127 = arith.constant 0 : index
    %382 = vector.load %arg28[%c0_125, %c0_126, %c0_127] : memref<1x16x32xf32, #tpu.memory_space<vmem>>, vector<1x16x32xf32>
    %383 = vector.shape_cast %382 : vector<1x16x32xf32> to vector<16x32xf32>
    %384 = vector.shape_cast %381 : vector<16x32xf32> to vector<1x16x32xf32>
    tpu.vector_store %arg28[%c0_125, %c0_126, %c0_127], %384 {strides = array<i32>} : memref<1x16x32xf32, #tpu.memory_space<vmem>>, vector<1x16x32xf32>,
    return
  }
  func.func @transform_0(%arg0: i32) -> (i32, i32, i32) {
    %c0_i32 = arith.constant 0 : i32
    %c0_i32_0 = arith.constant 0 : i32
    %c0_i32_1 = arith.constant 0 : i32
    return %arg0, %c0_i32, %c0_i32_0 : i32, i32, i32
  }
  func.func @transform_1(%arg0: i32) -> (i32, i32, i32) {
    %c0_i32 = arith.constant 0 : i32
    %c0_i32_0 = arith.constant 0 : i32
    %c0_i32_1 = arith.constant 0 : i32
    return %arg0, %c0_i32, %c0_i32_0 : i32, i32, i32
  }
  func.func @transform_2(%arg0: i32) -> (i32, i32, i32) {
    %c0_i32 = arith.constant 0 : i32
    %c0_i32_0 = arith.constant 0 : i32
    %c0_i32_1 = arith.constant 0 : i32
    return %arg0, %c0_i32, %c0_i32_0 : i32, i32, i32
  }
  func.func @transform_3(%arg0: i32) -> (i32, i32, i32) {
    %c1_i32 = arith.constant 1 : i32
    %c0_i32 = arith.constant 0 : i32
    %c0_i32_0 = arith.constant 0 : i32
    return %c1_i32, %arg0, %c0_i32 : i32, i32, i32
  }
  func.func @transform_4(%arg0: i32) -> (i32, i32, i32) {
    %c0_i32 = arith.constant 0 : i32
    %c0_i32_0 = arith.constant 0 : i32
    %c0_i32_1 = arith.constant 0 : i32
    return %arg0, %c0_i32, %c0_i32_0 : i32, i32, i32
  }
  func.func @transform_5(%arg0: i32) -> (i32, i32) {
    %c0_i32 = arith.constant 0 : i32
    %c0_i32_0 = arith.constant 0 : i32
    %c0_i32_1 = arith.constant 0 : i32
    return %c0_i32, %c0_i32_0 : i32, i32
  }
  func.func @transform_6(%arg0: i32) -> (i32, i32) {
    %c0_i32 = arith.constant 0 : i32
    %c0_i32_0 = arith.constant 0 : i32
    %c0_i32_1 = arith.constant 0 : i32
    return %c0_i32, %c0_i32_0 : i32, i32
  }
  func.func @transform_7(%arg0: i32) -> (i32, i32) {
    %c0_i32 = arith.constant 0 : i32
    %c0_i32_0 = arith.constant 0 : i32
    %c0_i32_1 = arith.constant 0 : i32
    return %c0_i32, %c0_i32_0 : i32, i32
  }
  func.func @transform_8(%arg0: i32) -> (i32, i32) {
    %c0_i32 = arith.constant 0 : i32
    %c0_i32_0 = arith.constant 0 : i32
    %c0_i32_1 = arith.constant 0 : i32
    return %c0_i32, %c0_i32_0 : i32, i32
  }
  func.func @transform_9(%arg0: i32) -> (i32, i32) {
    %c0_i32 = arith.constant 0 : i32
    %c0_i32_0 = arith.constant 0 : i32
    %c0_i32_1 = arith.constant 0 : i32
    return %c0_i32, %c0_i32_0 : i32, i32
  }
  func.func @transform_10(%arg0: i32) -> (i32, i32) {
    %c0_i32 = arith.constant 0 : i32
    %c0_i32_0 = arith.constant 0 : i32
    %c0_i32_1 = arith.constant 0 : i32
    return %c0_i32, %c0_i32_0 : i32, i32
  }
  func.func @transform_11(%arg0: i32) -> (i32, i32) {
    %c0_i32 = arith.constant 0 : i32
    %c0_i32_0 = arith.constant 0 : i32
    %c0_i32_1 = arith.constant 0 : i32
    return %c0_i32, %c0_i32_0 : i32, i32
  }
  func.func @transform_12(%arg0: i32) -> (i32, i32) {
    %c0_i32 = arith.constant 0 : i32
    %c0_i32_0 = arith.constant 0 : i32
    %c0_i32_1 = arith.constant 0 : i32
    return %c0_i32, %c0_i32_0 : i32, i32
  }
  func.func @transform_13(%arg0: i32) -> (i32, i32) {
    %c0_i32 = arith.constant 0 : i32
    %c0_i32_0 = arith.constant 0 : i32
    %c0_i32_1 = arith.constant 0 : i32
    return %c0_i32, %c0_i32_0 : i32, i32
  }
  func.func @transform_14(%arg0: i32) -> (i32, i32) {
    %c0_i32 = arith.constant 0 : i32
    %c0_i32_0 = arith.constant 0 : i32
    %c0_i32_1 = arith.constant 0 : i32
    return %c0_i32, %c0_i32_0 : i32, i32
  }
  func.func @transform_15(%arg0: i32) -> (i32, i32) {
    %c0_i32 = arith.constant 0 : i32
    %c0_i32_0 = arith.constant 0 : i32
    %c0_i32_1 = arith.constant 0 : i32
    return %c0_i32, %c0_i32_0 : i32, i32
  }
  func.func @transform_16(%arg0: i32) -> (i32, i32) {
    %c0_i32 = arith.constant 0 : i32
    %c0_i32_0 = arith.constant 0 : i32
    %c0_i32_1 = arith.constant 0 : i32
    return %c0_i32, %c0_i32_0 : i32, i32
  }
  func.func @transform_17(%arg0: i32) -> (i32, i32) {
    %c0_i32 = arith.constant 0 : i32
    %c0_i32_0 = arith.constant 0 : i32
    %c0_i32_1 = arith.constant 0 : i32
    return %c0_i32, %c0_i32_0 : i32, i32
  }
  func.func @transform_18(%arg0: i32) -> (i32, i32) {
    %c0_i32 = arith.constant 0 : i32
    %c0_i32_0 = arith.constant 0 : i32
    %c0_i32_1 = arith.constant 0 : i32
    return %c0_i32, %c0_i32_0 : i32, i32
  }
  func.func @transform_19(%arg0: i32) -> (i32, i32) {
    %c0_i32 = arith.constant 0 : i32
    %c0_i32_0 = arith.constant 0 : i32
    %c0_i32_1 = arith.constant 0 : i32
    return %c0_i32, %c0_i32_0 : i32, i32
  }
  func.func @transform_20(%arg0: i32) -> (i32, i32) {
    %c0_i32 = arith.constant 0 : i32
    %c0_i32_0 = arith.constant 0 : i32
    %c0_i32_1 = arith.constant 0 : i32
    return %c0_i32, %c0_i32_0 : i32, i32
  }
  func.func @transform_21(%arg0: i32) -> (i32, i32) {
    %c0_i32 = arith.constant 0 : i32
    %c0_i32_0 = arith.constant 0 : i32
    %c0_i32_1 = arith.constant 0 : i32
    return %c0_i32, %c0_i32_0 : i32, i32
  }
  func.func @transform_22(%arg0: i32) -> (i32, i32) {
    %c0_i32 = arith.constant 0 : i32
    %c0_i32_0 = arith.constant 0 : i32
    %c0_i32_1 = arith.constant 0 : i32
    return %c0_i32, %c0_i32_0 : i32, i32
  }
  func.func @transform_23(%arg0: i32) -> (i32, i32) {
    %c0_i32 = arith.constant 0 : i32
    %c0_i32_0 = arith.constant 0 : i32
    %c0_i32_1 = arith.constant 0 : i32
    return %c0_i32, %c0_i32_0 : i32, i32
  }
  func.func @transform_24(%arg0: i32) -> (i32, i32) {
    %c0_i32 = arith.constant 0 : i32
    %c0_i32_0 = arith.constant 0 : i32
    %c0_i32_1 = arith.constant 0 : i32
    return %c0_i32, %c0_i32_0 : i32, i32
  }
  func.func @transform_25(%arg0: i32) -> (i32, i32) {
    %c0_i32 = arith.constant 0 : i32
    %c0_i32_0 = arith.constant 0 : i32
    %c0_i32_1 = arith.constant 0 : i32
    return %c0_i32, %c0_i32_0 : i32, i32
  }
  func.func @transform_26(%arg0: i32) -> (i32, i32) {
    %c0_i32 = arith.constant 0 : i32
    %c0_i32_0 = arith.constant 0 : i32
    %c0_i32_1 = arith.constant 0 : i32
    return %c0_i32, %c0_i32_0 : i32, i32
  }
  func.func @transform_27(%arg0: i32) -> (i32, i32, i32) {
    %c0_i32 = arith.constant 0 : i32
    %c0_i32_0 = arith.constant 0 : i32
    %c0_i32_1 = arith.constant 0 : i32
    return %arg0, %c0_i32, %c0_i32_0 : i32, i32, i32
  }
}

module attributes {stable_mosaic.version = 11 : i64} {
  func.func @_head_kernel(%arg0: i32, %arg1: memref<1x16x32xf32, #tpu.memory_space<vmem>>, %arg2: memref<1x1x32xf32, #tpu.memory_space<vmem>>, %arg3: memref<32x64xbf16, #tpu.memory_space<vmem>>, %arg4: memref<1x64xf32, #tpu.memory_space<vmem>>, %arg5: memref<32x128xbf16, #tpu.memory_space<vmem>>, %arg6: memref<1x128xf32, #tpu.memory_space<vmem>>, %arg7: memref<1x16x128xf32, #tpu.memory_space<vmem>>) attributes {dimension_semantics = [#tpu.dimension_semantics<parallel>], iteration_bounds = array<i64: 2>, scalar_prefetch = 0 : i64, scratch_operands = 0 : i64, tpu.core_type = #tpu.core_type<tc>, window_params = [{transform_indices = @transform_0, window_bounds = array<i64: 1, 16, 32>}, {transform_indices = @transform_1, window_bounds = array<i64: 1, 1, 32>}, {pipeline_mode = #tpu.pipeline_mode<synchronous>, transform_indices = @transform_2, window_bounds = array<i64: 32, 64>}, {pipeline_mode = #tpu.pipeline_mode<synchronous>, transform_indices = @transform_3, window_bounds = array<i64: 1, 64>}, {pipeline_mode = #tpu.pipeline_mode<synchronous>, transform_indices = @transform_4, window_bounds = array<i64: 32, 128>}, {pipeline_mode = #tpu.pipeline_mode<synchronous>, transform_indices = @transform_5, window_bounds = array<i64: 1, 128>}, {transform_indices = @transform_6, window_bounds = array<i64: 1, 16, 128>}]} {
    %c0 = arith.constant 0 : index
    %c0_0 = arith.constant 0 : index
    %c0_1 = arith.constant 0 : index
    %0 = vector.load %arg1[%c0, %c0_0, %c0_1] : memref<1x16x32xf32, #tpu.memory_space<vmem>>, vector<1x16x32xf32>
    %1 = vector.shape_cast %0 : vector<1x16x32xf32> to vector<16x32xf32>
    %c0_2 = arith.constant 0 : index
    %c0_3 = arith.constant 0 : index
    %c0_4 = arith.constant 0 : index
    %2 = vector.load %arg2[%c0_2, %c0_3, %c0_4] : memref<1x1x32xf32, #tpu.memory_space<vmem>>, vector<1x1x32xf32>
    %3 = vector.shape_cast %2 : vector<1x1x32xf32> to vector<1x32xf32>
    %4 = arith.truncf %3 : vector<1x32xf32> to vector<1x32xbf16>
    %c0_5 = arith.constant 0 : index
    %c0_6 = arith.constant 0 : index
    %5 = vector.load %arg3[%c0_5, %c0_6] : memref<32x64xbf16, #tpu.memory_space<vmem>>, vector<32x64xbf16>
    %cst = arith.constant dense<0.000000e+00> : vector<1x64xf32>
    %6 = tpu.matmul %4, %5, %cst {dimension_numbers = #tpu.dot_dimension_numbers<[1], [0], [0], [1], [0, 0, 1, 1], [], []>} : vector<1x32xbf16>, vector<32x64xbf16>, vector<1x64xf32> -> vector<1x64xf32>
    %c0_7 = arith.constant 0 : index
    %c0_8 = arith.constant 0 : index
    %7 = vector.load %arg4[%c0_7, %c0_8] : memref<1x64xf32, #tpu.memory_space<vmem>>, vector<1x64xf32>
    %8 = arith.addf %6, %7 : vector<1x64xf32>
    %9 = vector.extract_strided_slice %8 {offsets = [0, 0], sizes = [1, 32], strides = [1, 1]} : vector<1x64xf32> to vector<1x32xf32>
    %10 = vector.extract_strided_slice %8 {offsets = [0, 32], sizes = [1, 32], strides = [1, 1]} : vector<1x64xf32> to vector<1x32xf32>
    %cst_9 = arith.constant dense<0.000000e+00> : vector<16xf32>
    %11 = vector.multi_reduction <add>, %1, %cst_9 [1] : vector<16x32xf32> to vector<16xf32>
    %12 = vector.shape_cast %11 : vector<16xf32> to vector<16x1xf32>
    %cst_10 = arith.constant 3.200000e+01 : f32
    %13 = vector.broadcast %cst_10 : f32 to vector<16x1xf32>
    %14 = arith.divf %12, %13 : vector<16x1xf32>
    %15 = vector.broadcast %14 : vector<16x1xf32> to vector<16x32xf32>
    %16 = arith.subf %1, %15 : vector<16x32xf32>
    %17 = arith.mulf %16, %16 : vector<16x32xf32>
    %cst_11 = arith.constant dense<0.000000e+00> : vector<16xf32>
    %18 = vector.multi_reduction <add>, %17, %cst_11 [1] : vector<16x32xf32> to vector<16xf32>
    %19 = vector.shape_cast %18 : vector<16xf32> to vector<16x1xf32>
    %cst_12 = arith.constant 3.200000e+01 : f32
    %20 = vector.broadcast %cst_12 : f32 to vector<16x1xf32>
    %21 = arith.divf %19, %20 : vector<16x1xf32>
    %cst_13 = arith.constant 9.99999997E-7 : f32
    %22 = vector.broadcast %cst_13 : f32 to vector<16x1xf32>
    %23 = arith.addf %21, %22 : vector<16x1xf32>
    %24 = math.rsqrt %23 : vector<16x1xf32>
    %25 = vector.broadcast %24 : vector<16x1xf32> to vector<16x32xf32>
    %26 = arith.mulf %16, %25 : vector<16x32xf32>
    %cst_14 = arith.constant 1.000000e+00 : f32
    %27 = vector.broadcast %cst_14 : f32 to vector<1x32xf32>
    %28 = arith.addf %9, %27 : vector<1x32xf32>
    %29 = vector.broadcast %28 : vector<1x32xf32> to vector<16x32xf32>
    %30 = arith.mulf %26, %29 : vector<16x32xf32>
    %31 = vector.broadcast %10 : vector<1x32xf32> to vector<16x32xf32>
    %32 = arith.addf %30, %31 : vector<16x32xf32>
    %33 = arith.truncf %32 : vector<16x32xf32> to vector<16x32xbf16>
    %c0_15 = arith.constant 0 : index
    %c0_16 = arith.constant 0 : index
    %34 = vector.load %arg5[%c0_15, %c0_16] : memref<32x128xbf16, #tpu.memory_space<vmem>>, vector<32x128xbf16>
    %cst_17 = arith.constant dense<0.000000e+00> : vector<16x128xf32>
    %35 = tpu.matmul %33, %34, %cst_17 {dimension_numbers = #tpu.dot_dimension_numbers<[1], [0], [0], [1], [0, 0, 1, 1], [], []>} : vector<16x32xbf16>, vector<32x128xbf16>, vector<16x128xf32> -> vector<16x128xf32>
    %c0_18 = arith.constant 0 : index
    %c0_19 = arith.constant 0 : index
    %36 = vector.load %arg6[%c0_18, %c0_19] : memref<1x128xf32, #tpu.memory_space<vmem>>, vector<1x128xf32>
    %37 = vector.broadcast %36 : vector<1x128xf32> to vector<16x128xf32>
    %38 = arith.addf %35, %37 : vector<16x128xf32>
    %c0_20 = arith.constant 0 : index
    %c0_21 = arith.constant 0 : index
    %c0_22 = arith.constant 0 : index
    %39 = vector.load %arg7[%c0_20, %c0_21, %c0_22] : memref<1x16x128xf32, #tpu.memory_space<vmem>>, vector<1x16x128xf32>
    %40 = vector.shape_cast %39 : vector<1x16x128xf32> to vector<16x128xf32>
    %41 = vector.shape_cast %38 : vector<16x128xf32> to vector<1x16x128xf32>
    tpu.vector_store %arg7[%c0_20, %c0_21, %c0_22], %41 {strides = array<i32>} : memref<1x16x128xf32, #tpu.memory_space<vmem>>, vector<1x16x128xf32>,
    return
  }
  func.func @transform_0(%arg0: i32) -> (i32, i32, i32) {
    %c0_i32 = arith.constant 0 : i32
    %c0_i32_0 = arith.constant 0 : i32
    %c0_i32_1 = arith.constant 0 : i32
    return %arg0, %c0_i32, %c0_i32_0 : i32, i32, i32
  }
  func.func @transform_1(%arg0: i32) -> (i32, i32, i32) {
    %c0_i32 = arith.constant 0 : i32
    %c0_i32_0 = arith.constant 0 : i32
    %c0_i32_1 = arith.constant 0 : i32
    return %arg0, %c0_i32, %c0_i32_0 : i32, i32, i32
  }
  func.func @transform_2(%arg0: i32) -> (i32, i32) {
    %c0_i32 = arith.constant 0 : i32
    %c0_i32_0 = arith.constant 0 : i32
    %c0_i32_1 = arith.constant 0 : i32
    return %c0_i32, %c0_i32_0 : i32, i32
  }
  func.func @transform_3(%arg0: i32) -> (i32, i32) {
    %c0_i32 = arith.constant 0 : i32
    %c0_i32_0 = arith.constant 0 : i32
    %c0_i32_1 = arith.constant 0 : i32
    return %c0_i32, %c0_i32_0 : i32, i32
  }
  func.func @transform_4(%arg0: i32) -> (i32, i32) {
    %c0_i32 = arith.constant 0 : i32
    %c0_i32_0 = arith.constant 0 : i32
    %c0_i32_1 = arith.constant 0 : i32
    return %c0_i32, %c0_i32_0 : i32, i32
  }
  func.func @transform_5(%arg0: i32) -> (i32, i32) {
    %c0_i32 = arith.constant 0 : i32
    %c0_i32_0 = arith.constant 0 : i32
    %c0_i32_1 = arith.constant 0 : i32
    return %c0_i32, %c0_i32_0 : i32, i32
  }
  func.func @transform_6(%arg0: i32) -> (i32, i32, i32) {
    %c0_i32 = arith.constant 0 : i32
    %c0_i32_0 = arith.constant 0 : i32
    %c0_i32_1 = arith.constant 0 : i32
    return %arg0, %c0_i32, %c0_i32_0 : i32, i32, i32
  }
}

</mosaic_0001>

<llo_original>
// kernel: mul.11
$region0: #{mul.11}
  %s0 = inlined_call_operand.vmem [shape: f32[2,4], index: 0, kind: input, shape index: {}]
  %s1 = inlined_call_operand.vmem [shape: f32[8], index: 1, kind: output, shape index: {}]
  $region1: #{mul.11} parent=0
    #allocation0 [shape = 'u8[4096]{0}', space=vmem, size = 0x1000, scoped, tag = 'scoped mem for output reshape']
    #allocation1 [shape = 'u8[4096]{0}', space=vmem, size = 0x1000, scoped, tag = 'scoped mem for input reshape']
    %s3 = ssub.s32 4, 1
    %v4 = vld [vmem:[%s0] sm:%s3]
    %5 = vst [vmem:[#allocation1] sm:%s3] %v4
    %v6 = vld [vmem:[#allocation1] sm:$0x1]
    %vm7 = vcmask 31744
    %8 = vst.msk [vmem:[#allocation0] sm:$0x1] %vm7, %v6
    %s9 = scalar_lea.vmem [#allocation1], 1
    %v10 = vld [vmem:[%s9] sm:$0x1]
    %11 = vrot.lane.b32.xlu0 %v10, 4
    %v12 = vpop.permute.xlu0 %11
    %vm13 = vcmask 64544
    %14 = vst.msk [vmem:[#allocation0] sm:$0x1] %vm13, %v12
    %s16 = ssub.s32 2, 1
    %v17 = vld [vmem:[#allocation0] sm:%s16]
    %s19 = ssub.s32 2, 1
    %20 = vst [vmem:[%s1] sm:%s19] %v17

// kernel: switti_forward.5
$region0: #{switti_forward.5}
  #allocation0 [shape = 'u32[]', space=smem, size = 0x4, offset = 0x4, fixed_abs, tag = 'smem constant byte address 0x4 - core index']
  #allocation1 [shape = 'u32[72,128]{1,0:T(1,128)}', space=vmem, size = 0x9000, scoped, tag = 'internal scratch']
  %s0 = inlined_call_operand.vmem [shape: f32[2,1280], index: 0, kind: input, shape index: {}]
  %s1 = inlined_call_operand.vmem [shape: bf16[1280,32], index: 1, kind: input, shape index: {}]
  %s2 = inlined_call_operand.vmem [shape: f32[1,32], index: 2, kind: input, shape index: {}]
  %s3 = inlined_call_operand.vmem [shape: f32[26,8], index: 3, kind: input, shape index: {}]
  %s4 = inlined_call_operand.vmem [shape: bf16[8,32], index: 4, kind: input, shape index: {}]
  %s5 = inlined_call_operand.vmem [shape: f32[1,32], index: 5, kind: input, shape index: {}]
  %s6 = inlined_call_operand.vmem [shape: f32[1,32], index: 6, kind: input, shape index: {}]
  %s7 = inlined_call_operand.vmem [shape: f32[16,32], index: 7, kind: input, shape index: {}]
  %s8 = inlined_call_operand.vmem [shape: f32[2,32], index: 8, kind: input, shape index: {}]
  %s9 = inlined_call_operand.vmem [shape: bf16[32,32], index: 9, kind: input, shape index: {}]
  %s10 = inlined_call_operand.vmem [shape: f32[1,32], index: 10, kind: input, shape index: {}]
  %s11 = inlined_call_operand.vmem [shape: f32[2,16,32], index: 11, kind: output, shape index: {0}]
  %s12 = inlined_call_operand.vmem [shape: f32[2,1,32], index: 12, kind: output, shape index: {1}]
  %s13 = inlined_call_operand.vmem [shape: f32[2,1,32], index: 13, kind: output, shape index: {2}]
  %14 = xla_tuple %s11, %s12, %s13
  %s15 = sld [smem:[#allocation0]]
  $region70: #{switti_forward.5} parent=0
    _
  %s17 = ssub.s32 1, %s15
  %s18 = scalar_select 0, %s17, %s15
  // Predicated region
  $region2: #{switti_forward.5} parent=0 // pred_check
    _
  $region3: #{switti_forward.5} parent=0 // pred_check_branch
    %20 = sbr.rel (0) target = $region5
  $region4: #{switti_forward.5} parent=0 // pred_region
    _
  $region5: #{switti_forward.5} parent=0 // pred_fallthru
    _
  // Predicated region
  $region6: #{switti_forward.5} parent=0 // pred_check
    _
  $region7: #{switti_forward.5} parent=0 // pred_check_branch
    %22 = sbr.rel (0) target = $region9
  $region8: #{switti_forward.5} parent=0 // pred_region
    _
  $region9: #{switti_forward.5} parent=0 // pred_fallthru
    _
  // Predicated region
  $region10: #{switti_forward.5} parent=0 // pred_check
    _
  $region11: #{switti_forward.5} parent=0 // pred_check_branch
    %24 = sbr.rel (0) target = $region13
  $region12: #{switti_forward.5} parent=0 // pred_region
    _
  $region13: #{switti_forward.5} parent=0 // pred_fallthru
    _
  // Predicated region
  $region14: #{switti_forward.5} parent=0 // pred_check
    _
  $region15: #{switti_forward.5} parent=0 // pred_check_branch
    %26 = sbr.rel (0) target = $region17
  $region16: #{switti_forward.5} parent=0 // pred_region
    _
  $region17: #{switti_forward.5} parent=0 // pred_fallthru
    _
  // Predicated region
  $region18: #{switti_forward.5} parent=0 // pred_check
    _
  $region19: #{switti_forward.5} parent=0 // pred_check_branch
    %28 = sbr.rel (0) target = $region21
  $region20: #{switti_forward.5} parent=0 // pred_region
    _
  $region21: #{switti_forward.5} parent=0 // pred_fallthru
    _
  // Predicated region
  $region22: #{switti_forward.5} parent=0 // pred_check
    _
  $region23: #{switti_forward.5} parent=0 // pred_check_branch
    %30 = sbr.rel (0) target = $region25
  $region24: #{switti_forward.5} parent=0 // pred_region
    _
  $region25: #{switti_forward.5} parent=0 // pred_fallthru
    _
  // Predicated region
  $region26: #{switti_forward.5} parent=0 // pred_check
    _
  $region27: #{switti_forward.5} parent=0 // pred_check_branch
    %32 = sbr.rel (0) target = $region29
  $region28: #{switti_forward.5} parent=0 // pred_region
    _
  $region29: #{switti_forward.5} parent=0 // pred_fallthru
    _
  // Predicated region
  $region30: #{switti_forward.5} parent=0 // pred_check
    _
  $region31: #{switti_forward.5} parent=0 // pred_check_branch
    %34 = sbr.rel (0) target = $region33
  $region32: #{switti_forward.5} parent=0 // pred_region
    _
  $region33: #{switti_forward.5} parent=0 // pred_fallthru
    _
  // Predicated region
  $region34: #{switti_forward.5} parent=0 // pred_check
    _
  $region35: #{switti_forward.5} parent=0 // pred_check_branch
    %36 = sbr.rel (0) target = $region37
  $region36: #{switti_forward.5} parent=0 // pred_region
    _
  $region37: #{switti_forward.5} parent=0 // pred_fallthru
    _
  // Predicated region
  $region38: #{switti_forward.5} parent=0 // pred_check
    _
  $region39: #{switti_forward.5} parent=0 // pred_check_branch
    %38 = sbr.rel (0) target = $region41
  $region40: #{switti_forward.5} parent=0 // pred_region
    _
  $region41: #{switti_forward.5} parent=0 // pred_fallthru
    _
  // Predicated region
  $region42: #{switti_forward.5} parent=0 // pred_check
    _
  $region43: #{switti_forward.5} parent=0 // pred_check_branch
    %40 = sbr.rel (0) target = $region45
  $region44: #{switti_forward.5} parent=0 // pred_region
    _
  $region45: #{switti_forward.5} parent=0 // pred_fallthru
    _
  %v42 = vld [vmem:[%s0] sm:$0xff]
  %v43 = vld [vmem:[%s0 + $0x8] sm:$0xff]
  %v44 = vld [vmem:[%s0 + $0x10] sm:$0xf]
  %48 = vst [vmem:[#allocation1] ss:$4 sm:$0xff] %v42
  %s49 = scalar_lea.vmem [#allocation1], 32
  %50 = vst [vmem:[%s49] ss:$4 sm:$0xff] %v43
  %v51 = vld.sshfl [vmem:[#allocation1] sm:$0xff pattern:$0x73625140]
  %v52 = vld.sshfl [vmem:[#allocation1 + $0x8] sm:$0xff pattern:$0x73625140]
  %v53 = vld.sshfl [vmem:[#allocation1 + $0x10] sm:$0xff pattern:$0x73625140]
  %v54 = vld.sshfl [vmem:[#allocation1 + $0x18] sm:$0xff pattern:$0x73625140]
  %v55 = vld.sshfl [vmem:[#allocation1 + $0x20] sm:$0xff pattern:$0x73625140]
  %v56 = vld.sshfl [vmem:[#allocation1 + $0x28] sm:$0xff pattern:$0x73625140]
  %v57 = vld.sshfl [vmem:[#allocation1 + $0x30] sm:$0xff pattern:$0x73625140]
  %v58 = vld.sshfl [vmem:[#allocation1 + $0x38] sm:$0xff pattern:$0x73625140]
  %59 = vst [vmem:[#allocation1] ss:$4 sm:$0xff] %v44
  %v60 = vld.sshfl [vmem:[#allocation1] sm:$0xff pattern:$0x73625140]
  %v61 = vld.sshfl [vmem:[#allocation1 + $0x8] sm:$0xff pattern:$0x73625140]
  %v72 = vpack.c.bf16 %v51, %v51
  %v73 = vpack.c.bf16 %v52, %v52
  %v74 = vpack.c.bf16 %v53, %v53
  %v75 = vpack.c.bf16 %v54, %v54
  %v76 = vpack.c.bf16 %v55, %v55
  %v77 = vpack.c.bf16 %v56, %v56
  %v78 = vpack.c.bf16 %v57, %v57
  %v79 = vpack.c.bf16 %v58, %v58
  %v80 = vpack.c.bf16 %v60, %v60
  %v81 = vpack.c.bf16 %v61, %v61
  %v82 = vld [vmem:[%s1] sm:$0xf]
  %v83 = vld [vmem:[%s1 + $0x4] sm:$0xf]
  %v84 = vld [vmem:[%s1 + $0x8] sm:$0xf]
  %v85 = vld [vmem:[%s1 + $0xc] sm:$0xf]
  %v86 = vld [vmem:[%s1 + $0x10] sm:$0xf]
  %v87 = vld [vmem:[%s1 + $0x14] sm:$0xf]
  %v88 = vld [vmem:[%s1 + $0x18] sm:$0xf]
  %v89 = vld [vmem:[%s1 + $0x1c] sm:$0xf]
  %v90 = vld [vmem:[%s1 + $0x20] sm:$0xf]
  %v91 = vld [vmem:[%s1 + $0x24] sm:$0xf]
  %v92 = vld [vmem:[%s1 + $0x28] sm:$0xf]
  %v93 = vld [vmem:[%s1 + $0x2c] sm:$0xf]
  %v94 = vld [vmem:[%s1 + $0x30] sm:$0xf]
  %v95 = vld [vmem:[%s1 + $0x34] sm:$0xf]
  %v96 = vld [vmem:[%s1 + $0x38] sm:$0xf]
  %v97 = vld [vmem:[%s1 + $0x3c] sm:$0xf]
  %v98 = vld [vmem:[%s1 + $0x40] sm:$0xf]
  %v99 = vld [vmem:[%s1 + $0x44] sm:$0xf]
  %v100 = vld [vmem:[%s1 + $0x48] sm:$0xf]
  %v101 = vld [vmem:[%s1 + $0x4c] sm:$0xf]
  %v102 = vld [vmem:[%s1 + $0x50] sm:$0xf]
  %v103 = vld [vmem:[%s1 + $0x54] sm:$0xf]
  %v104 = vld [vmem:[%s1 + $0x58] sm:$0xf]
  %v105 = vld [vmem:[%s1 + $0x5c] sm:$0xf]
  %v106 = vld [vmem:[%s1 + $0x60] sm:$0xf]
  %v107 = vld [vmem:[%s1 + $0x64] sm:$0xf]
  %v108 = vld [vmem:[%s1 + $0x68] sm:$0xf]
  %v109 = vld [vmem:[%s1 + $0x6c] sm:$0xf]
  %v110 = vld [vmem:[%s1 + $0x70] sm:$0xf]
  %v111 = vld [vmem:[%s1 + $0x74] sm:$0xf]
  %v112 = vld [vmem:[%s1 + $0x78] sm:$0xf]
  %v113 = vld [vmem:[%s1 + $0x7c] sm:$0xf]
  %v114 = vld [vmem:[%s1 + $0x80] sm:$0xf]
  %v115 = vld [vmem:[%s1 + $0x84] sm:$0xf]
  %v116 = vld [vmem:[%s1 + $0x88] sm:$0xf]
  %v117 = vld [vmem:[%s1 + $0x8c] sm:$0xf]
  %v118 = vld [vmem:[%s1 + $0x90] sm:$0xf]
  %v119 = vld [vmem:[%s1 + $0x94] sm:$0xf]
  %v120 = vld [vmem:[%s1 + $0x98] sm:$0xf]
  %v121 = vld [vmem:[%s1 + $0x9c] sm:$0xf]
  %v122 = vld [vmem:[%s1 + $0xa0] sm:$0xf]
  %v123 = vld [vmem:[%s1 + $0xa4] sm:$0xf]
  %v124 = vld [vmem:[%s1 + $0xa8] sm:$0xf]
  %v125 = vld [vmem:[%s1 + $0xac] sm:$0xf]
  %v126 = vld [vmem:[%s1 + $0xb0] sm:$0xf]
  %v127 = vld [vmem:[%s1 + $0xb4] sm:$0xf]
  %v128 = vld [vmem:[%s1 + $0xb8] sm:$0xf]
  %v129 = vld [vmem:[%s1 + $0xbc] sm:$0xf]
  %v130 = vld [vmem:[%s1 + $0xc0] sm:$0xf]
  %v131 = vld [vmem:[%s1 + $0xc4] sm:$0xf]
  %v132 = vld [vmem:[%s1 + $0xc8] sm:$0xf]
  %v133 = vld [vmem:[%s1 + $0xcc] sm:$0xf]
  %v134 = vld [vmem:[%s1 + $0xd0] sm:$0xf]
  %v135 = vld [vmem:[%s1 + $0xd4] sm:$0xf]
  %v136 = vld [vmem:[%s1 + $0xd8] sm:$0xf]
  %v137 = vld [vmem:[%s1 + $0xdc] sm:$0xf]
  %v138 = vld [vmem:[%s1 + $0xe0] sm:$0xf]
  %v139 = vld [vmem:[%s1 + $0xe4] sm:$0xf]
  %v140 = vld [vmem:[%s1 + $0xe8] sm:$0xf]
  %v141 = vld [vmem:[%s1 + $0xec] sm:$0xf]
  %v142 = vld [vmem:[%s1 + $0xf0] sm:$0xf]
  %v143 = vld [vmem:[%s1 + $0xf4] sm:$0xf]
  %v144 = vld [vmem:[%s1 + $0xf8] sm:$0xf]
  %v145 = vld [vmem:[%s1 + $0xfc] sm:$0xf]
  %v146 = vld [vmem:[%s1 + $0x100] sm:$0xf]
  %v147 = vld [vmem:[%s1 + $0x104] sm:$0xf]
  %v148 = vld [vmem:[%s1 + $0x108] sm:$0xf]
  %v149 = vld [vmem:[%s1 + $0x10c] sm:$0xf]
  %v150 = vld [vmem:[%s1 + $0x110] sm:$0xf]
  %v151 = vld [vmem:[%s1 + $0x114] sm:$0xf]
  %v152 = vld [vmem:[%s1 + $0x118] sm:$0xf]
  %v153 = vld [vmem:[%s1 + $0x11c] sm:$0xf]
  %v154 = vld [vmem:[%s1 + $0x120] sm:$0xf]
  %v155 = vld [vmem:[%s1 + $0x124] sm:$0xf]
  %v156 = vld [vmem:[%s1 + $0x128] sm:$0xf]
  %v157 = vld [vmem:[%s1 + $0x12c] sm:$0xf]
  %v158 = vld [vmem:[%s1 + $0x130] sm:$0xf]
  %v159 = vld [vmem:[%s1 + $0x134] sm:$0xf]
  %v160 = vld [vmem:[%s1 + $0x138] sm:$0xf]
  %v161 = vld [vmem:[%s1 + $0x13c] sm:$0xf]
  %v162 = vld [vmem:[%s1 + $0x140] sm:$0xf]
  %v163 = vld [vmem:[%s1 + $0x144] sm:$0xf]
  %v164 = vld [vmem:[%s1 + $0x148] sm:$0xf]
  %v165 = vld [vmem:[%s1 + $0x14c] sm:$0xf]
  %v166 = vld [vmem:[%s1 + $0x150] sm:$0xf]
  %v167 = vld [vmem:[%s1 + $0x154] sm:$0xf]
  %v168 = vld [vmem:[%s1 + $0x158] sm:$0xf]
  %v169 = vld [vmem:[%s1 + $0x15c] sm:$0xf]
  %v170 = vld [vmem:[%s1 + $0x160] sm:$0xf]
  %v171 = vld [vmem:[%s1 + $0x164] sm:$0xf]
  %v172 = vld [vmem:[%s1 + $0x168] sm:$0xf]
  %v173 = vld [vmem:[%s1 + $0x16c] sm:$0xf]
  %v174 = vld [vmem:[%s1 + $0x170] sm:$0xf]
  %v175 = vld [vmem:[%s1 + $0x174] sm:$0xf]
  %v176 = vld [vmem:[%s1 + $0x178] sm:$0xf]
  %v177 = vld [vmem:[%s1 + $0x17c] sm:$0xf]
  %v178 = vld [vmem:[%s1 + $0x180] sm:$0xf]
  %v179 = vld [vmem:[%s1 + $0x184] sm:$0xf]
  %v180 = vld [vmem:[%s1 + $0x188] sm:$0xf]
  %v181 = vld [vmem:[%s1 + $0x18c] sm:$0xf]
  %v182 = vld [vmem:[%s1 + $0x190] sm:$0xf]
  %v183 = vld [vmem:[%s1 + $0x194] sm:$0xf]
  %v184 = vld [vmem:[%s1 + $0x198] sm:$0xf]
  %v185 = vld [vmem:[%s1 + $0x19c] sm:$0xf]
  %v186 = vld [vmem:[%s1 + $0x1a0] sm:$0xf]
  %v187 = vld [vmem:[%s1 + $0x1a4] sm:$0xf]
  %v188 = vld [vmem:[%s1 + $0x1a8] sm:$0xf]
  %v189 = vld [vmem:[%s1 + $0x1ac] sm:$0xf]
  %v190 = vld [vmem:[%s1 + $0x1b0] sm:$0xf]
  %v191 = vld [vmem:[%s1 + $0x1b4] sm:$0xf]
  %v192 = vld [vmem:[%s1 + $0x1b8] sm:$0xf]
  %v193 = vld [vmem:[%s1 + $0x1bc] sm:$0xf]
  %v194 = vld [vmem:[%s1 + $0x1c0] sm:$0xf]
  %v195 = vld [vmem:[%s1 + $0x1c4] sm:$0xf]
  %v196 = vld [vmem:[%s1 + $0x1c8] sm:$0xf]
  %v197 = vld [vmem:[%s1 + $0x1cc] sm:$0xf]
  %v198 = vld [vmem:[%s1 + $0x1d0] sm:$0xf]
  %v199 = vld [vmem:[%s1 + $0x1d4] sm:$0xf]
  %v200 = vld [vmem:[%s1 + $0x1d8] sm:$0xf]
  %v201 = vld [vmem:[%s1 + $0x1dc] sm:$0xf]
  %v202 = vld [vmem:[%s1 + $0x1e0] sm:$0xf]
  %v203 = vld [vmem:[%s1 + $0x1e4] sm:$0xf]
  %v204 = vld [vmem:[%s1 + $0x1e8] sm:$0xf]
  %v205 = vld [vmem:[%s1 + $0x1ec] sm:$0xf]
  %v206 = vld [vmem:[%s1 + $0x1f0] sm:$0xf]
  %v207 = vld [vmem:[%s1 + $0x1f4] sm:$0xf]
  %v208 = vld [vmem:[%s1 + $0x1f8] sm:$0xf]
  %v209 = vld [vmem:[%s1 + $0x1fc] sm:$0xf]
  %v210 = vld [vmem:[%s1 + $0x200] sm:$0xf]
  %v211 = vld [vmem:[%s1 + $0x204] sm:$0xf]
  %v212 = vld [vmem:[%s1 + $0x208] sm:$0xf]
  %v213 = vld [vmem:[%s1 + $0x20c] sm:$0xf]
  %v214 = vld [vmem:[%s1 + $0x210] sm:$0xf]
  %v215 = vld [vmem:[%s1 + $0x214] sm:$0xf]
  %v216 = vld [vmem:[%s1 + $0x218] sm:$0xf]
  %v217 = vld [vmem:[%s1 + $0x21c] sm:$0xf]
  %v218 = vld [vmem:[%s1 + $0x220] sm:$0xf]
  %v219 = vld [vmem:[%s1 + $0x224] sm:$0xf]
  %v220 = vld [vmem:[%s1 + $0x228] sm:$0xf]
  %v221 = vld [vmem:[%s1 + $0x22c] sm:$0xf]
  %v222 = vld [vmem:[%s1 + $0x230] sm:$0xf]
  %v223 = vld [vmem:[%s1 + $0x234] sm:$0xf]
  %v224 = vld [vmem:[%s1 + $0x238] sm:$0xf]
  %v225 = vld [vmem:[%s1 + $0x23c] sm:$0xf]
  %v226 = vld [vmem:[%s1 + $0x240] sm:$0xf]
  %v227 = vld [vmem:[%s1 + $0x244] sm:$0xf]
  %v228 = vld [vmem:[%s1 + $0x248] sm:$0xf]
  %v229 = vld [vmem:[%s1 + $0x24c] sm:$0xf]
  %v230 = vld [vmem:[%s1 + $0x250] sm:$0xf]
  %v231 = vld [vmem:[%s1 + $0x254] sm:$0xf]
  %v232 = vld [vmem:[%s1 + $0x258] sm:$0xf]
  %v233 = vld [vmem:[%s1 + $0x25c] sm:$0xf]
  %v234 = vld [vmem:[%s1 + $0x260] sm:$0xf]
  %v235 = vld [vmem:[%s1 + $0x264] sm:$0xf]
  %v236 = vld [vmem:[%s1 + $0x268] sm:$0xf]
  %v237 = vld [vmem:[%s1 + $0x26c] sm:$0xf]
  %v238 = vld [vmem:[%s1 + $0x270] sm:$0xf]
  %v239 = vld [vmem:[%s1 + $0x274] sm:$0xf]
  %v240 = vld [vmem:[%s1 + $0x278] sm:$0xf]
  %v241 = vld [vmem:[%s1 + $0x27c] sm:$0xf]
  %v242 = vld [vmem:[%s2] sm:$0x1]
  %v244 = vperm.slane %v242, 0
  %v406 = vunpack.c.l.b16 %v82
  %v407 = vunpack.c.l.b16 %v83
  %v408 = vunpack.c.l.b16 %v84
  %v409 = vunpack.c.l.b16 %v85
  %v410 = vunpack.c.l.b16 %v86
  %v411 = vunpack.c.l.b16 %v87
  %v412 = vunpack.c.l.b16 %v88
  %v413 = vunpack.c.l.b16 %v89
  %v414 = vunpack.c.l.b16 %v90
  %v415 = vunpack.c.l.b16 %v91
  %v416 = vunpack.c.l.b16 %v92
  %v417 = vunpack.c.l.b16 %v93
  %v418 = vunpack.c.l.b16 %v94
  %v419 = vunpack.c.l.b16 %v95
  %v420 = vunpack.c.l.b16 %v96
  %v421 = vunpack.c.l.b16 %v97
  %v422 = vunpack.c.l.b16 %v98
  %v423 = vunpack.c.l.b16 %v99
  %v424 = vunpack.c.l.b16 %v100
  %v425 = vunpack.c.l.b16 %v101
  %v426 = vunpack.c.l.b16 %v102
  %v427 = vunpack.c.l.b16 %v103
  %v428 = vunpack.c.l.b16 %v104
  %v429 = vunpack.c.l.b16 %v105
  %v430 = vunpack.c.l.b16 %v106
  %v431 = vunpack.c.l.b16 %v107
  %v432 = vunpack.c.l.b16 %v108
  %v433 = vunpack.c.l.b16 %v109
  %v434 = vunpack.c.l.b16 %v110
  %v435 = vunpack.c.l.b16 %v111
  %v436 = vunpack.c.l.b16 %v112
  %v437 = vunpack.c.l.b16 %v113
  %v438 = vunpack.c.l.b16 %v114
  %v439 = vunpack.c.l.b16 %v115
  %v440 = vunpack.c.l.b16 %v116
  %v441 = vunpack.c.l.b16 %v117
  %v442 = vunpack.c.l.b16 %v118
  %v443 = vunpack.c.l.b16 %v119
  %v444 = vunpack.c.l.b16 %v120
  %v445 = vunpack.c.l.b16 %v121
  %v446 = vunpack.c.l.b16 %v122
  %v447 = vunpack.c.l.b16 %v123
  %v448 = vunpack.c.l.b16 %v124
  %v449 = vunpack.c.l.b16 %v125
  %v450 = vunpack.c.l.b16 %v126
  %v451 = vunpack.c.l.b16 %v127
  %v452 = vunpack.c.l.b16 %v128
  %v453 = vunpack.c.l.b16 %v129
  %v454 = vunpack.c.l.b16 %v130
  %v455 = vunpack.c.l.b16 %v131
  %v456 = vunpack.c.l.b16 %v132
  %v457 = vunpack.c.l.b16 %v133
  %v458 = vunpack.c.l.b16 %v134
  %v459 = vunpack.c.l.b16 %v135
  %v460 = vunpack.c.l.b16 %v136
  %v461 = vunpack.c.l.b16 %v137
  %v462 = vunpack.c.l.b16 %v138
  %v463 = vunpack.c.l.b16 %v139
  %v464 = vunpack.c.l.b16 %v140
  %v465 = vunpack.c.l.b16 %v141
  %v466 = vunpack.c.l.b16 %v142
  %v467 = vunpack.c.l.b16 %v143
  %v468 = vunpack.c.l.b16 %v144
  %v469 = vunpack.c.l.b16 %v145
  %v470 = vunpack.c.l.b16 %v146
  %v471 = vunpack.c.l.b16 %v147
  %v472 = vunpack.c.l.b16 %v148
  %v473 = vunpack.c.l.b16 %v149
  %v474 = vunpack.c.l.b16 %v150
  %v475 = vunpack.c.l.b16 %v151
  %v476 = vunpack.c.l.b16 %v152
  %v477 = vunpack.c.l.b16 %v153
  %v478 = vunpack.c.l.b16 %v154
  %v479 = vunpack.c.l.b16 %v155
  %v480 = vunpack.c.l.b16 %v156
  %v481 = vunpack.c.l.b16 %v157
  %v482 = vunpack.c.l.b16 %v158
  %v483 = vunpack.c.l.b16 %v159
  %v484 = vunpack.c.l.b16 %v160
  %v485 = vunpack.c.l.b16 %v161
  %v486 = vunpack.c.l.b16 %v162
  %v487 = vunpack.c.l.b16 %v163
  %v488 = vunpack.c.l.b16 %v164
  %v489 = vunpack.c.l.b16 %v165
  %v490 = vunpack.c.l.b16 %v166
  %v491 = vunpack.c.l.b16 %v167
  %v492 = vunpack.c.l.b16 %v168
  %v493 = vunpack.c.l.b16 %v169
  %v494 = vunpack.c.l.b16 %v170
  %v495 = vunpack.c.l.b16 %v171
  %v496 = vunpack.c.l.b16 %v172
  %v497 = vunpack.c.l.b16 %v173
  %v498 = vunpack.c.l.b16 %v174
  %v499 = vunpack.c.l.b16 %v175
  %v500 = vunpack.c.l.b16 %v176
  %v501 = vunpack.c.l.b16 %v177
  %v502 = vunpack.c.l.b16 %v178
  %v503 = vunpack.c.l.b16 %v179
  %v504 = vunpack.c.l.b16 %v180
  %v505 = vunpack.c.l.b16 %v181
  %v506 = vunpack.c.l.b16 %v182
  %v507 = vunpack.c.l.b16 %v183
  %v508 = vunpack.c.l.b16 %v184
  %v509 = vunpack.c.l.b16 %v185
  %v510 = vunpack.c.l.b16 %v186
  %v511 = vunpack.c.l.b16 %v187
  %v512 = vunpack.c.l.b16 %v188
  %v513 = vunpack.c.l.b16 %v189
  %v514 = vunpack.c.l.b16 %v190
  %v515 = vunpack.c.l.b16 %v191
  %v516 = vunpack.c.l.b16 %v192
  %v517 = vunpack.c.l.b16 %v193
  %v518 = vunpack.c.l.b16 %v194
  %v519 = vunpack.c.l.b16 %v195
  %v520 = vunpack.c.l.b16 %v196
  %v521 = vunpack.c.l.b16 %v197
  %v522 = vunpack.c.l.b16 %v198
  %v523 = vunpack.c.l.b16 %v199
  %v524 = vunpack.c.l.b16 %v200
  %v525 = vunpack.c.l.b16 %v201
  %v526 = vunpack.c.l.b16 %v202
  %v527 = vunpack.c.l.b16 %v203
  %v528 = vunpack.c.l.b16 %v204
  %v529 = vunpack.c.l.b16 %v205
  %v530 = vunpack.c.l.b16 %v206
  %v531 = vunpack.c.l.b16 %v207
  %v532 = vunpack.c.l.b16 %v208
  %v533 = vunpack.c.l.b16 %v209
  %v534 = vunpack.c.l.b16 %v210
  %v535 = vunpack.c.l.b16 %v211
  %v536 = vunpack.c.l.b16 %v212
  %v537 = vunpack.c.l.b16 %v213
  %v538 = vunpack.c.l.b16 %v214
  %v539 = vunpack.c.l.b16 %v215
  %v540 = vunpack.c.l.b16 %v216
  %v541 = vunpack.c.l.b16 %v217
  %v542 = vunpack.c.l.b16 %v218
  %v543 = vunpack.c.l.b16 %v219
  %v544 = vunpack.c.l.b16 %v220
  %v545 = vunpack.c.l.b16 %v221
  %v546 = vunpack.c.l.b16 %v222
  %v547 = vunpack.c.l.b16 %v223
  %v548 = vunpack.c.l.b16 %v224
  %v549 = vunpack.c.l.b16 %v225
  %v550 = vunpack.c.l.b16 %v226
  %v551 = vunpack.c.l.b16 %v227
  %v552 = vunpack.c.l.b16 %v228
  %v553 = vunpack.c.l.b16 %v229
  %v554 = vunpack.c.l.b16 %v230
  %v555 = vunpack.c.l.b16 %v231
  %v556 = vunpack.c.l.b16 %v232
  %v557 = vunpack.c.l.b16 %v233
  %v558 = vunpack.c.l.b16 %v234
  %v559 = vunpack.c.l.b16 %v235
  %v560 = vunpack.c.l.b16 %v236
  %v561 = vunpack.c.l.b16 %v237
  %v562 = vunpack.c.l.b16 %v238
  %v563 = vunpack.c.l.b16 %v239
  %v564 = vunpack.c.l.b16 %v240
  %v565 = vunpack.c.l.b16 %v241
  %v566 = vpack.c.b16 %v407, %v406
  %v567 = vpack.c.b16 %v409, %v408
  %v568 = vpack.c.b16 %v411, %v410
  %v569 = vpack.c.b16 %v413, %v412
  %v570 = vpack.c.b16 %v415, %v414
  %v571 = vpack.c.b16 %v417, %v416
  %v572 = vpack.c.b16 %v419, %v418
  %v573 = vpack.c.b16 %v421, %v420
  %v574 = vpack.c.b16 %v423, %v422
  %v575 = vpack.c.b16 %v425, %v424
  %v576 = vpack.c.b16 %v427, %v426
  %v577 = vpack.c.b16 %v429, %v428
  %v578 = vpack.c.b16 %v431, %v430
  %v579 = vpack.c.b16 %v433, %v432
  %v580 = vpack.c.b16 %v435, %v434
  %v581 = vpack.c.b16 %v437, %v436
  %v582 = vpack.c.b16 %v439, %v438
  %v583 = vpack.c.b16 %v441, %v440
  %v584 = vpack.c.b16 %v443, %v442
  %v585 = vpack.c.b16 %v445, %v444
  %v586 = vpack.c.b16 %v447, %v446
  %v587 = vpack.c.b16 %v449, %v448
  %v588 = vpack.c.b16 %v451, %v450
  %v589 = vpack.c.b16 %v453, %v452
  %v590 = vpack.c.b16 %v455, %v454
  %v591 = vpack.c.b16 %v457, %v456
  %v592 = vpack.c.b16 %v459, %v458
  %v593 = vpack.c.b16 %v461, %v460
  %v594 = vpack.c.b16 %v463, %v462
  %v595 = vpack.c.b16 %v465, %v464
  %v596 = vpack.c.b16 %v467, %v466
  %v597 = vpack.c.b16 %v469, %v468
  %v598 = vpack.c.b16 %v471, %v470
  %v599 = vpack.c.b16 %v473, %v472
  %v600 = vpack.c.b16 %v475, %v474
  %v601 = vpack.c.b16 %v477, %v476
  %v602 = vpack.c.b16 %v479, %v478
  %v603 = vpack.c.b16 %v481, %v480
  %v604 = vpack.c.b16 %v483, %v482
  %v605 = vpack.c.b16 %v485, %v484
  %v606 = vpack.c.b16 %v487, %v486
  %v607 = vpack.c.b16 %v489, %v488
  %v608 = vpack.c.b16 %v491, %v490
  %v609 = vpack.c.b16 %v493, %v492
  %v610 = vpack.c.b16 %v495, %v494
  %v611 = vpack.c.b16 %v497, %v496
  %v612 = vpack.c.b16 %v499, %v498
  %v613 = vpack.c.b16 %v501, %v500
  %v614 = vpack.c.b16 %v503, %v502
  %v615 = vpack.c.b16 %v505, %v504
  %v616 = vpack.c.b16 %v507, %v506
  %v617 = vpack.c.b16 %v509, %v508
  %v618 = vpack.c.b16 %v511, %v510
  %v619 = vpack.c.b16 %v513, %v512
  %v620 = vpack.c.b16 %v515, %v514
  %v621 = vpack.c.b16 %v517, %v516
  %v622 = vpack.c.b16 %v519, %v518
  %v623 = vpack.c.b16 %v521, %v520
  %v624 = vpack.c.b16 %v523, %v522
  %v625 = vpack.c.b16 %v525, %v524
  %v626 = vpack.c.b16 %v527, %v526
  %v627 = vpack.c.b16 %v529, %v528
  %v628 = vpack.c.b16 %v531, %v530
  %v629 = vpack.c.b16 %v533, %v532
  %v630 = vpack.c.b16 %v535, %v534
  %v631 = vpack.c.b16 %v537, %v536
  %v632 = vpack.c.b16 %v539, %v538
  %v633 = vpack.c.b16 %v541, %v540
  %v634 = vpack.c.b16 %v543, %v542
  %v635 = vpack.c.b16 %v545, %v544
  %v636 = vpack.c.b16 %v547, %v546
  %v637 = vpack.c.b16 %v549, %v548
  %v638 = vpack.c.b16 %v551, %v550
  %v639 = vpack.c.b16 %v553, %v552
  %v640 = vpack.c.b16 %v555, %v554
  %v641 = vpack.c.b16 %v557, %v556
  %v642 = vpack.c.b16 %v559, %v558
  %v643 = vpack.c.b16 %v561, %v560
  %v644 = vpack.c.b16 %v563, %v562
  %v645 = vpack.c.b16 %v565, %v564
  %726 = vmatpush.bf16.msra.mxu0 %v573
  %727 = vmatpush.bf16.msra.mxu0 %v572
  %728 = vmatpush.bf16.msra.mxu0 %v571
  %729 = vmatpush.bf16.msra.mxu0 %v570
  %730 = vmatpush.bf16.msra.mxu0 %v569
  %731 = vmatpush.bf16.msra.mxu0 %v568
  %732 = vmatpush.bf16.msra.mxu0 %v567
  %733 = vmatpush.bf16.msra.mxu0 %v566
  %734 = vmatmul.bf16.gmra.mxu0 %v72
  %v735 = vpop.f32.mrf.mxu0
  %v736 = vadd.f32 %v244, %v735
  %v737 = vpop.f32.mrf.mxu0
  %738 = vdwg.mxu0
  %739 = vmatpush.bf16.msra.mxu0 %v581
  %740 = vmatpush.bf16.msra.mxu0 %v580
  %741 = vmatpush.bf16.msra.mxu0 %v579
  %742 = vmatpush.bf16.msra.mxu0 %v578
  %743 = vmatpush.bf16.msra.mxu0 %v577
  %744 = vmatpush.bf16.msra.mxu0 %v576
  %745 = vmatpush.bf16.msra.mxu0 %v575
  %746 = vmatpush.bf16.msra.mxu0 %v574
  %747 = vmatmul.bf16.gmra.mxu0 %v73
  %v748 = vpop.f32.mrf.mxu0
  %v749 = vadd.f32 %v736, %v748
  %v750 = vpop.f32.mrf.mxu0
  %751 = vdwg.mxu0
  %752 = vmatpush.bf16.msra.mxu0 %v589
  %753 = vmatpush.bf16.msra.mxu0 %v588
  %754 = vmatpush.bf16.msra.mxu0 %v587
  %755 = vmatpush.bf16.msra.mxu0 %v586
  %756 = vmatpush.bf16.msra.mxu0 %v585
  %757 = vmatpush.bf16.msra.mxu0 %v584
  %758 = vmatpush.bf16.msra.mxu0 %v583
  %759 = vmatpush.bf16.msra.mxu0 %v582
  %760 = vmatmul.bf16.gmra.mxu0 %v74
  %v761 = vpop.f32.mrf.mxu0
  %v762 = vadd.f32 %v749, %v761
  %v763 = vpop.f32.mrf.mxu0
  %764 = vdwg.mxu0
  %765 = vmatpush.bf16.msra.mxu0 %v597
  %766 = vmatpush.bf16.msra.mxu0 %v596
  %767 = vmatpush.bf16.msra.mxu0 %v595
  %768 = vmatpush.bf16.msra.mxu0 %v594
  %769 = vmatpush.bf16.msra.mxu0 %v593
  %770 = vmatpush.bf16.msra.mxu0 %v592
  %771 = vmatpush.bf16.msra.mxu0 %v591
  %772 = vmatpush.bf16.msra.mxu0 %v590
  %773 = vmatmul.bf16.gmra.mxu0 %v75
  %v774 = vpop.f32.mrf.mxu0
  %v775 = vadd.f32 %v762, %v774
  %v776 = vpop.f32.mrf.mxu0
  %777 = vdwg.mxu0
  %778 = vmatpush.bf16.msra.mxu0 %v605
  %779 = vmatpush.bf16.msra.mxu0 %v604
  %780 = vmatpush.bf16.msra.mxu0 %v603
  %781 = vmatpush.bf16.msra.mxu0 %v602
  %782 = vmatpush.bf16.msra.mxu0 %v601
  %783 = vmatpush.bf16.msra.mxu0 %v600
  %784 = vmatpush.bf16.msra.mxu0 %v599
  %785 = vmatpush.bf16.msra.mxu0 %v598
  %786 = vmatmul.bf16.gmra.mxu0 %v76
  %v787 = vpop.f32.mrf.mxu0
  %v788 = vadd.f32 %v775, %v787
  %v789 = vpop.f32.mrf.mxu0
  %790 = vdwg.mxu0
  %791 = vmatpush.bf16.msra.mxu0 %v613
  %792 = vmatpush.bf16.msra.mxu0 %v612
  %793 = vmatpush.bf16.msra.mxu0 %v611
  %794 = vmatpush.bf16.msra.mxu0 %v610
  %795 = vmatpush.bf16.msra.mxu0 %v609
  %796 = vmatpush.bf16.msra.mxu0 %v608
  %797 = vmatpush.bf16.msra.mxu0 %v607
  %798 = vmatpush.bf16.msra.mxu0 %v606
  %799 = vmatmul.bf16.gmra.mxu0 %v77
  %v800 = vpop.f32.mrf.mxu0
  %v801 = vadd.f32 %v788, %v800
  %v802 = vpop.f32.mrf.mxu0
  %803 = vdwg.mxu0
  %804 = vmatpush.bf16.msra.mxu0 %v621
  %805 = vmatpush.bf16.msra.mxu0 %v620
  %806 = vmatpush.bf16.msra.mxu0 %v619
  %807 = vmatpush.bf16.msra.mxu0 %v618
  %808 = vmatpush.bf16.msra.mxu0 %v617
  %809 = vmatpush.bf16.msra.mxu0 %v616
  %810 = vmatpush.bf16.msra.mxu0 %v615
  %811 = vmatpush.bf16.msra.mxu0 %v614
  %812 = vmatmul.bf16.gmra.mxu0 %v78
  %v813 = vpop.f32.mrf.mxu0
  %v814 = vadd.f32 %v801, %v813
  %v815 = vpop.f32.mrf.mxu0
  %816 = vdwg.mxu0
  %817 = vmatpush.bf16.msra.mxu0 %v629
  %818 = vmatpush.bf16.msra.mxu0 %v628
  %819 = vmatpush.bf16.msra.mxu0 %v627
  %820 = vmatpush.bf16.msra.mxu0 %v626
  %821 = vmatpush.bf16.msra.mxu0 %v625
  %822 = vmatpush.bf16.msra.mxu0 %v624
  %823 = vmatpush.bf16.msra.mxu0 %v623
  %824 = vmatpush.bf16.msra.mxu0 %v622
  %825 = vmatmul.bf16.gmra.mxu0 %v79
  %v826 = vpop.f32.mrf.mxu0
  %v827 = vadd.f32 %v814, %v826
  %v828 = vpop.f32.mrf.mxu0
  %829 = vdwg.mxu0
  %830 = vmatpush.bf16.msra.mxu0 %v637
  %831 = vmatpush.bf16.msra.mxu0 %v636
  %832 = vmatpush.bf16.msra.mxu0 %v635
  %833 = vmatpush.bf16.msra.mxu0 %v634
  %834 = vmatpush.bf16.msra.mxu0 %v633
  %835 = vmatpush.bf16.msra.mxu0 %v632
  %836 = vmatpush.bf16.msra.mxu0 %v631
  %837 = vmatpush.bf16.msra.mxu0 %v630
  %838 = vmatmul.bf16.gmra.mxu0 %v80
  %v839 = vpop.f32.mrf.mxu0
  %v840 = vadd.f32 %v827, %v839
  %v841 = vpop.f32.mrf.mxu0
  %842 = vdwg.mxu0
  %843 = vmatpush.bf16.msra.mxu0 %v645
  %844 = vmatpush.bf16.msra.mxu0 %v644
  %845 = vmatpush.bf16.msra.mxu0 %v643
  %846 = vmatpush.bf16.msra.mxu0 %v642
  %847 = vmatpush.bf16.msra.mxu0 %v641
  %848 = vmatpush.bf16.msra.mxu0 %v640
  %849 = vmatpush.bf16.msra.mxu0 %v639
  %850 = vmatpush.bf16.msra.mxu0 %v638
  %851 = vmatmul.bf16.gmra.mxu0 %v81
  %v852 = vpop.f32.mrf.mxu0
  %v853 = vadd.f32 %v840, %v852
  %v854 = vpop.f32.mrf.mxu0
  %855 = vdwg.mxu0
  %v856 = vld [vmem:[%s3] sm:$0xff]
  %v857 = vld [vmem:[%s3 + $0x8] sm:$0xff]
  %v858 = vld [vmem:[%s3 + $0x10] sm:$0xff]
  %v859 = vld [vmem:[%s3 + $0x18] sm:$0x3]
  %v860 = vpack.c.bf16 %v857, %v856
  %v861 = vpack.c.bf16 %v859, %v858
  %v862 = vld [vmem:[%s4] sm:$0xf]
  %v863 = vld [vmem:[%s5] sm:$0x1]
  %v865 = vperm.slane %v863, 0
  %vm867 = vcmask 64512
  %v869 = vsel %vm867, %v860, 0
  %v872 = vsel %vm867, %v861, 0
  %vm874 = vcmask 1043456
  %v876 = vsel %vm874, %v862, 0
  %878 = vmatpush.bf16.msra.mxu0 0
  %879 = vmatpush.bf16.msra.mxu0 0
  %880 = vmatpush.bf16.msra.mxu0 0
  %881 = vmatpush.bf16.msra.mxu0 0
  %882 = vmatpush.bf16.msra.mxu0 0
  %883 = vmatpush.bf16.msra.mxu0 0
  %884 = vmatpush.bf16.msra.mxu0 0
  %885 = vmatpush.bf16.msra.mxu0 %v876
  %886 = vmatmul.bf16.gmra.mxu0 %v869
  %v887 = vpop.f32.mrf.mxu0
  %v888 = vadd.f32 %v865, %v887
  %v889 = vpop.f32.mrf.mxu0
  %v890 = vadd.f32 %v865, %v889
  %891 = vmatmul.bf16.gmra.mxu0 %v872
  %v892 = vpop.f32.mrf.mxu0
  %v893 = vadd.f32 %v865, %v892
  %v894 = vpop.f32.mrf.mxu0
  %v895 = vadd.f32 %v865, %v894
  %896 = vdwg.mxu0
  %v897 = vld [vmem:[%s8] sm:$0x3]
  %v898 = vpack.c.bf16 %v897, %v897
  %v899 = vld [vmem:[%s9] sm:$0xf]
  %v900 = vld [vmem:[%s9 + $0x4] sm:$0xf]
  %v901 = vld [vmem:[%s9 + $0x8] sm:$0xf]
  %v902 = vld [vmem:[%s9 + $0xc] sm:$0xf]
  %v903 = vld [vmem:[%s10] sm:$0x1]
  %v905 = vperm.slane %v903, 0
  %v911 = vunpack.c.l.b16 %v899
  %v912 = vunpack.c.l.b16 %v900
  %v913 = vunpack.c.l.b16 %v901
  %v914 = vunpack.c.l.b16 %v902
  %v915 = vpack.c.b16 %v912, %v911
  %v916 = vpack.c.b16 %v914, %v913
  %vm919 = vcmask 261120
  %v921 = vsel %vm919, %v898, 0
  %923 = vmatpush.bf16.msra.mxu0 0
  %924 = vmatpush.bf16.msra.mxu0 0
  %925 = vmatpush.bf16.msra.mxu0 0
  %926 = vmatpush.bf16.msra.mxu0 0
  %927 = vmatpush.bf16.msra.mxu0 0
  %928 = vmatpush.bf16.msra.mxu0 0
  %929 = vmatpush.bf16.msra.mxu0 %v916
  %930 = vmatpush.bf16.msra.mxu0 %v915
  %931 = vmatmul.bf16.gmra.mxu0 %v921
  %v932 = vpop.f32.mrf.mxu0
  %v933 = vadd.f32 %v905, %v932
  %v934 = vpop.f32.mrf.mxu0
  %935 = vdwg.mxu0
  %v936 = vld [vmem:[%s7] sm:$0xff]
  %v937 = vld [vmem:[%s7 + $0x8] sm:$0xff]
  %v938 = vld [vmem:[%s6] sm:$0x1]
  %v939 = vadd.f32 %v853, %v938
  %vm942 = vcmask 1040384
  %v943 = vrot.slane %v888, 7
  %v944 = vrot.slane %v890, 7
  %v945 = vsel %vm942, %v943, %v944
  %v948 = vsel %vm942, %v939, %v943
  %vm949 = vcmask 1045504
  %v950 = vsel %vm949, %v945, 0.0
  %v951 = vadd.f32 %v948, %v936
  %v952 = vadd.f32 %v950, %v937
  %953 = vst.msk [vmem:[%s11] sm:$0xff] %vm919, %v951
  %954 = vst.msk [vmem:[%s11 + $0x8] sm:$0xff] %vm919, %v952
  %v955 = vxor.u32 %v853, 2147483648
  %v956 = vmul.f32 %v955, 1.442695
  %v957 = vpow.pop %v956
  %v958 = vadd.f32 %v957, 1.0
  %v959 = vrcp.pop %v958
  %v960 = vmul.f32 %v958, %v959
  %v961 = vsub.f32 1.0, %v960
  %v962 = vmul.f32 %v959, %v961
  %v963 = vadd.f32 %v959, %v962
  %vm964 = vweird.f32 %v958
  %vm965 = vweird.f32 %v959
  %vm966 = vmor %vm964, %vm965
  %v967 = vsel %vm966, %v959, %v963
  %v968 = vand.u32 2147483647, %v958
  %vm969 = vcmp.eq.f32.partialorder %v968, 8.507059e+37
  %v970 = vand.u32 %v958, 2147483648
  %v971 = vor.u32 1.1754944e-38, %v970
  %v972 = vsel %vm969, %v971, %v967
  %v973 = vmul.f32 1.0, %v972
  %v974 = vmul.f32 %v853, %v973
  %vm975 = vcmask 253952
  %976 = vst.msk [vmem:[%s12] sm:$0x1] %vm975, %v974
  %977 = vst.msk [vmem:[%s13] sm:$0x1] %vm975, %v933
  %v978 = vld [vmem:[%s6] sm:$0x1]
  %v980 = vperm.slane %v978, 0
  %v982 = vadd.f32 %v853, %v980
  %v984 = vrot.slane %v982, 1
  %v988 = vrot.slane %v890, 4
  %v989 = vrot.slane %v893, 4
  %v990 = vsel %vm874, %v988, %v989
  %v991 = vrot.slane %v895, 4
  %v992 = vsel %vm874, %v989, %v991
  %v995 = vsel %vm942, %v984, %v990
  %v996 = vsel %vm949, %v992, 0.0
  %v997 = vadd.f32 %v995, %v936
  %v998 = vadd.f32 %v996, %v937
  %s999 = scalar_lea.vmem %s11, 16
  %1000 = vst.msk [vmem:[%s999] sm:$0xff] %vm919, %v997
  %1001 = vst.msk [vmem:[%s999 + $0x8] sm:$0xff] %vm919, %v998
  %s1002 = scalar_lea.vmem %s12, 1
  %vm1003 = vcmask 254977
  %1004 = vst.msk [vmem:[%s1002 - $0x1] sm:$0x2] %vm1003, %v974
  %s1005 = scalar_lea.vmem %s13, 1
  %1006 = vst.msk [vmem:[%s1005 - $0x1] sm:$0x2] %vm1003, %v933
  // Predicated region
  $region46: #{switti_forward.5} parent=0 // pred_check
    _
  $region47: #{switti_forward.5} parent=0 // pred_check_branch
    %1008 = sbr.rel (0) target = $region49
  $region48: #{switti_forward.5} parent=0 // pred_region
    _
  $region49: #{switti_forward.5} parent=0 // pred_fallthru
    _
  // Predicated region
  $region50: #{switti_forward.5} parent=0 // pred_check
    _
  $region51: #{switti_forward.5} parent=0 // pred_check_branch
    %1010 = sbr.rel (0) target = $region53
  $region52: #{switti_forward.5} parent=0 // pred_region
    _
  $region53: #{switti_forward.5} parent=0 // pred_fallthru
    _
  // Predicated region
  $region54: #{switti_forward.5} parent=0 // pred_check
    _
  $region55: #{switti_forward.5} parent=0 // pred_check_branch
    %1012 = sbr.rel (0) target = $region57
  $region56: #{switti_forward.5} parent=0 // pred_region
    _
  $region57: #{switti_forward.5} parent=0 // pred_fallthru
    _
  // Predicated region
  $region58: #{switti_forward.5} parent=0 // pred_check
    _
  $region59: #{switti_forward.5} parent=0 // pred_check_branch
    %1014 = sbr.rel (0) target = $region61
  $region60: #{switti_forward.5} parent=0 // pred_region
    _
  $region61: #{switti_forward.5} parent=0 // pred_fallthru
    _
  // Predicated region
  $region62: #{switti_forward.5} parent=0 // pred_check
    _
  $region63: #{switti_forward.5} parent=0 // pred_check_branch
    %1016 = sbr.rel (0) target = $region65
  $region64: #{switti_forward.5} parent=0 // pred_region
    _
  $region65: #{switti_forward.5} parent=0 // pred_fallthru
    _
  // Predicated region
  $region66: #{switti_forward.5} parent=0 // pred_check
    _
  $region67: #{switti_forward.5} parent=0 // pred_check_branch
    %1018 = sbr.rel (0) target = $region69
  $region68: #{switti_forward.5} parent=0 // pred_region
    _
  $region69: #{switti_forward.5} parent=0 // pred_fallthru
    _

// kernel: switti_forward.6
$region0: #{switti_forward.6}
  #allocation0 [shape = 'u32[]', space=smem, size = 0x4, offset = 0x4, fixed_abs, tag = 'smem constant byte address 0x4 - core index']
  #allocation1 [shape = 'u32[72,128]{1,0:T(1,128)}', space=vmem, size = 0x9000, scoped, tag = 'internal scratch']
  %s0 = inlined_call_operand.vmem [shape: f32[16,2048], index: 0, kind: input, shape index: {}]
  %s1 = inlined_call_operand.hbm [shape: bf16[2048,128], index: 1, kind: input, shape index: {}]
  %s2 = inlined_call_operand.vmem [shape: f32[2,16,64], index: 2, kind: output, shape index: {}]
  %s3 = sld [smem:[#allocation0]]
  $region22: #{switti_forward.6} parent=0
    _
  %s5 = ssub.s32 1, %s3
  %s6 = scalar_select 0, %s5, %s3
  $region1: #{switti_forward.6} parent=0
    #allocation2 [shape = 'u8[524288]{0}', space=vmem, size = 0x80000, scoped, tag = 'input window, operand 1, single buffered']
    #allocation3 [shape = 's32[1]{0}', space=sflag, size = 0x4, scoped, tag = 'scoped memory for switti_forward.6']
    %7 = vsyncpa [#allocation3], 0
    // Predicated region
    $region2: #{switti_forward.6} parent=1 // pred_check
      _
    $region3: #{switti_forward.6} parent=1 // pred_check_branch
      %9 = sbr.rel (0) target = $region5
    $region4: #{switti_forward.6} parent=1 // pred_region
      _
    $region5: #{switti_forward.6} parent=1 // pred_fallthru
      _
    // Predicated region
    $region6: #{switti_forward.6} parent=1 // pred_check
      _
    $region7: #{switti_forward.6} parent=1 // pred_check_branch
      %11 = sbr.rel (0) target = $region9
    $region8: #{switti_forward.6} parent=1 // pred_region
      %13 = vsyncadd [#allocation3], 0
      %s14 = sshll.u32 %s1, 4
      %s15 = int_to_ptr.hbm [resolvable:$true] %s14
      %s16 = sshll.u32 [#allocation2], 4
      %s17 = int_to_ptr.vmem [resolvable:$true] %s16
      %22 = dma.hbm_to_vmem [thread:$0]  %s15, 16384, %s17, [#allocation3], 64, 64, 4
    $region9: #{switti_forward.6} parent=1 // pred_fallthru
      _
    // Predicated region
    $region10: #{switti_forward.6} parent=1 // pred_check
      _
    $region11: #{switti_forward.6} parent=1 // pred_check_branch
      %24 = sbr.rel (0) target = $region13
    $region12: #{switti_forward.6} parent=1 // pred_region
      %26 = dma.done [#allocation3], 16384
    $region13: #{switti_forward.6} parent=1 // pred_fallthru
      _
    %v27 = vld [vmem:[%s0] sm:$0xff]
    %v28 = vld [vmem:[%s0 + $0x8] sm:$0xff]
    %v29 = vld [vmem:[%s0 + $0x10] sm:$0xff]
    %v30 = vld [vmem:[%s0 + $0x18] sm:$0xff]
    %v31 = vld [vmem:[%s0 + $0x20] sm:$0xff]
    %v32 = vld [vmem:[%s0 + $0x28] sm:$0xff]
    %v33 = vld [vmem:[%s0 + $0x30] sm:$0xff]
    %v34 = vld [vmem:[%s0 + $0x38] sm:$0xff]
    %v35 = vld [vmem:[%s0 + $0x40] sm:$0xff]
    %v36 = vld [vmem:[%s0 + $0x48] sm:$0xff]
    %v37 = vld [vmem:[%s0 + $0x50] sm:$0xff]
    %v38 = vld [vmem:[%s0 + $0x58] sm:$0xff]
    %v39 = vld [vmem:[%s0 + $0x60] sm:$0xff]
    %v40 = vld [vmem:[%s0 + $0x68] sm:$0xff]
    %v41 = vld [vmem:[%s0 + $0x70] sm:$0xff]
    %v42 = vld [vmem:[%s0 + $0x78] sm:$0xff]
    %v43 = vld [vmem:[%s0 + $0x80] sm:$0xff]
    %v44 = vld [vmem:[%s0 + $0x88] sm:$0xff]
    %v45 = vld [vmem:[%s0 + $0x90] sm:$0xff]
    %v46 = vld [vmem:[%s0 + $0x98] sm:$0xff]
    %v47 = vld [vmem:[%s0 + $0xa0] sm:$0xff]
    %v48 = vld [vmem:[%s0 + $0xa8] sm:$0xff]
    %v49 = vld [vmem:[%s0 + $0xb0] sm:$0xff]
    %v50 = vld [vmem:[%s0 + $0xb8] sm:$0xff]
    %v51 = vld [vmem:[%s0 + $0xc0] sm:$0xff]
    %v52 = vld [vmem:[%s0 + $0xc8] sm:$0xff]
    %v53 = vld [vmem:[%s0 + $0xd0] sm:$0xff]
    %v54 = vld [vmem:[%s0 + $0xd8] sm:$0xff]
    %v55 = vld [vmem:[%s0 + $0xe0] sm:$0xff]
    %v56 = vld [vmem:[%s0 + $0xe8] sm:$0xff]
    %v57 = vld [vmem:[%s0 + $0xf0] sm:$0xff]
    %v58 = vld [vmem:[%s0 + $0xf8] sm:$0xff]
    %v59 = vpack.c.bf16 %v43, %v27
    %v60 = vpack.c.bf16 %v44, %v28
    %v61 = vpack.c.bf16 %v45, %v29
    %v62 = vpack.c.bf16 %v46, %v30
    %v63 = vpack.c.bf16 %v47, %v31
    %v64 = vpack.c.bf16 %v48, %v32
    %v65 = vpack.c.bf16 %v49, %v33
    %v66 = vpack.c.bf16 %v50, %v34
    %v67 = vpack.c.bf16 %v51, %v35
    %v68 = vpack.c.bf16 %v52, %v36
    %v69 = vpack.c.bf16 %v53, %v37
    %v70 = vpack.c.bf16 %v54, %v38
    %v71 = vpack.c.bf16 %v55, %v39
    %v72 = vpack.c.bf16 %v56, %v40
    %v73 = vpack.c.bf16 %v57, %v41
    %v74 = vpack.c.bf16 %v58, %v42
    %v75 = vld [vmem:[#allocation2] sm:$0xf]
    %v76 = vld [vmem:[#allocation2 + $0x4] sm:$0xf]
    %v77 = vld [vmem:[#allocation2 + $0x8] sm:$0xf]
    %v78 = vld [vmem:[#allocation2 + $0xc] sm:$0xf]
    %v79 = vld [vmem:[#allocation2 + $0x10] sm:$0xf]
    %v80 = vld [vmem:[#allocation2 + $0x14] sm:$0xf]
    %v81 = vld [vmem:[#allocation2 + $0x18] sm:$0xf]
    %v82 = vld [vmem:[#allocation2 + $0x1c] sm:$0xf]
    %v83 = vld [vmem:[#allocation2 + $0x20] sm:$0xf]
    %v84 = vld [vmem:[#allocation2 + $0x24] sm:$0xf]
    %v85 = vld [vmem:[#allocation2 + $0x28] sm:$0xf]
    %v86 = vld [vmem:[#allocation2 + $0x2c] sm:$0xf]
    %v87 = vld [vmem:[#allocation2 + $0x30] sm:$0xf]
    %v88 = vld [vmem:[#allocation2 + $0x34] sm:$0xf]
    %v89 = vld [vmem:[#allocation2 + $0x38] sm:$0xf]
    %v90 = vld [vmem:[#allocation2 + $0x3c] sm:$0xf]
    %v91 = vld [vmem:[#allocation2 + $0x40] sm:$0xf]
    %v92 = vld [vmem:[#allocation2 + $0x44] sm:$0xf]
    %v93 = vld [vmem:[#allocation2 + $0x48] sm:$0xf]
    %v94 = vld [vmem:[#allocation2 + $0x4c] sm:$0xf]
    %v95 = vld [vmem:[#allocation2 + $0x50] sm:$0xf]
    %v96 = vld [vmem:[#allocation2 + $0x54] sm:$0xf]
    %v97 = vld [vmem:[#allocation2 + $0x58] sm:$0xf]
    %v98 = vld [vmem:[#allocation2 + $0x5c] sm:$0xf]
    %v99 = vld [vmem:[#allocation2 + $0x60] sm:$0xf]
    %v100 = vld [vmem:[#allocation2 + $0x64] sm:$0xf]
    %v101 = vld [vmem:[#allocation2 + $0x68] sm:$0xf]
    %v102 = vld [vmem:[#allocation2 + $0x6c] sm:$0xf]
    %v103 = vld [vmem:[#allocation2 + $0x70] sm:$0xf]
    %v104 = vld [vmem:[#allocation2 + $0x74] sm:$0xf]
    %v105 = vld [vmem:[#allocation2 + $0x78] sm:$0xf]
    %v106 = vld [vmem:[#allocation2 + $0x7c] sm:$0xf]
    %v107 = vld [vmem:[#allocation2 + $0x80] sm:$0xf]
    %v108 = vld [vmem:[#allocation2 + $0x84] sm:$0xf]
    %v109 = vld [vmem:[#allocation2 + $0x88] sm:$0xf]
    %v110 = vld [vmem:[#allocation2 + $0x8c] sm:$0xf]
    %v111 = vld [vmem:[#allocation2 + $0x90] sm:$0xf]
    %v112 = vld [vmem:[#allocation2 + $0x94] sm:$0xf]
    %v113 = vld [vmem:[#allocation2 + $0x98] sm:$0xf]
    %v114 = vld [vmem:[#allocation2 + $0x9c] sm:$0xf]
    %v115 = vld [vmem:[#allocation2 + $0xa0] sm:$0xf]
    %v116 = vld [vmem:[#allocation2 + $0xa4] sm:$0xf]
    %v117 = vld [vmem:[#allocation2 + $0xa8] sm:$0xf]
    %v118 = vld [vmem:[#allocation2 + $0xac] sm:$0xf]
    %v119 = vld [vmem:[#allocation2 + $0xb0] sm:$0xf]
    %v120 = vld [vmem:[#allocation2 + $0xb4] sm:$0xf]
    %v121 = vld [vmem:[#allocation2 + $0xb8] sm:$0xf]
    %v122 = vld [vmem:[#allocation2 + $0xbc] sm:$0xf]
    %v123 = vld [vmem:[#allocation2 + $0xc0] sm:$0xf]
    %v124 = vld [vmem:[#allocation2 + $0xc4] sm:$0xf]
    %v125 = vld [vmem:[#allocation2 + $0xc8] sm:$0xf]
    %v126 = vld [vmem:[#allocation2 + $0xcc] sm:$0xf]
    %v127 = vld [vmem:[#allocation2 + $0xd0] sm:$0xf]
    %v128 = vld [vmem:[#allocation2 + $0xd4] sm:$0xf]
    %v129 = vld [vmem:[#allocation2 + $0xd8] sm:$0xf]
    %v130 = vld [vmem:[#allocation2 + $0xdc] sm:$0xf]
    %v131 = vld [vmem:[#allocation2 + $0xe0] sm:$0xf]
    %v132 = vld [vmem:[#allocation2 + $0xe4] sm:$0xf]
    %v133 = vld [vmem:[#allocation2 + $0xe8] sm:$0xf]
    %v134 = vld [vmem:[#allocation2 + $0xec] sm:$0xf]
    %v135 = vld [vmem:[#allocation2 + $0xf0] sm:$0xf]
    %v136 = vld [vmem:[#allocation2 + $0xf4] sm:$0xf]
    %v137 = vld [vmem:[#allocation2 + $0xf8] sm:$0xf]
    %v138 = vld [vmem:[#allocation2 + $0xfc] sm:$0xf]
    %v139 = vld [vmem:[#allocation2 + $0x100] sm:$0xf]
    %v140 = vld [vmem:[#allocation2 + $0x104] sm:$0xf]
    %v141 = vld [vmem:[#allocation2 + $0x108] sm:$0xf]
    %v142 = vld [vmem:[#allocation2 + $0x10c] sm:$0xf]
    %v143 = vld [vmem:[#allocation2 + $0x110] sm:$0xf]
    %v144 = vld [vmem:[#allocation2 + $0x114] sm:$0xf]
    %v145 = vld [vmem:[#allocation2 + $0x118] sm:$0xf]
    %v146 = vld [vmem:[#allocation2 + $0x11c] sm:$0xf]
    %v147 = vld [vmem:[#allocation2 + $0x120] sm:$0xf]
    %v148 = vld [vmem:[#allocation2 + $0x124] sm:$0xf]
    %v149 = vld [vmem:[#allocation2 + $0x128] sm:$0xf]
    %v150 = vld [vmem:[#allocation2 + $0x12c] sm:$0xf]
    %v151 = vld [vmem:[#allocation2 + $0x130] sm:$0xf]
    %v152 = vld [vmem:[#allocation2 + $0x134] sm:$0xf]
    %v153 = vld [vmem:[#allocation2 + $0x138] sm:$0xf]
    %v154 = vld [vmem:[#allocation2 + $0x13c] sm:$0xf]
    %v155 = vld [vmem:[#allocation2 + $0x140] sm:$0xf]
    %v156 = vld [vmem:[#allocation2 + $0x144] sm:$0xf]
    %v157 = vld [vmem:[#allocation2 + $0x148] sm:$0xf]
    %v158 = vld [vmem:[#allocation2 + $0x14c] sm:$0xf]
    %v159 = vld [vmem:[#allocation2 + $0x150] sm:$0xf]
    %v160 = vld [vmem:[#allocation2 + $0x154] sm:$0xf]
    %v161 = vld [vmem:[#allocation2 + $0x158] sm:$0xf]
    %v162 = vld [vmem:[#allocation2 + $0x15c] sm:$0xf]
    %v163 = vld [vmem:[#allocation2 + $0x160] sm:$0xf]
    %v164 = vld [vmem:[#allocation2 + $0x164] sm:$0xf]
    %v165 = vld [vmem:[#allocation2 + $0x168] sm:$0xf]
    %v166 = vld [vmem:[#allocation2 + $0x16c] sm:$0xf]
    %v167 = vld [vmem:[#allocation2 + $0x170] sm:$0xf]
    %v168 = vld [vmem:[#allocation2 + $0x174] sm:$0xf]
    %v169 = vld [vmem:[#allocation2 + $0x178] sm:$0xf]
    %v170 = vld [vmem:[#allocation2 + $0x17c] sm:$0xf]
    %v171 = vld [vmem:[#allocation2 + $0x180] sm:$0xf]
    %v172 = vld [vmem:[#allocation2 + $0x184] sm:$0xf]
    %v173 = vld [vmem:[#allocation2 + $0x188] sm:$0xf]
    %v174 = vld [vmem:[#allocation2 + $0x18c] sm:$0xf]
    %v175 = vld [vmem:[#allocation2 + $0x190] sm:$0xf]
    %v176 = vld [vmem:[#allocation2 + $0x194] sm:$0xf]
    %v177 = vld [vmem:[#allocation2 + $0x198] sm:$0xf]
    %v178 = vld [vmem:[#allocation2 + $0x19c] sm:$0xf]
    %v179 = vld [vmem:[#allocation2 + $0x1a0] sm:$0xf]
    %v180 = vld [vmem:[#allocation2 + $0x1a4] sm:$0xf]
    %v181 = vld [vmem:[#allocation2 + $0x1a8] sm:$0xf]
    %v182 = vld [vmem:[#allocation2 + $0x1ac] sm:$0xf]
    %v183 = vld [vmem:[#allocation2 + $0x1b0] sm:$0xf]
    %v184 = vld [vmem:[#allocation2 + $0x1b4] sm:$0xf]
    %v185 = vld [vmem:[#allocation2 + $0x1b8] sm:$0xf]
    %v186 = vld [vmem:[#allocation2 + $0x1bc] sm:$0xf]
    %v187 = vld [vmem:[#allocation2 + $0x1c0] sm:$0xf]
    %v188 = vld [vmem:[#allocation2 + $0x1c4] sm:$0xf]
    %v189 = vld [vmem:[#allocation2 + $0x1c8] sm:$0xf]
    %v190 = vld [vmem:[#allocation2 + $0x1cc] sm:$0xf]
    %v191 = vld [vmem:[#allocation2 + $0x1d0] sm:$0xf]
    %v192 = vld [vmem:[#allocation2 + $0x1d4] sm:$0xf]
    %v193 = vld [vmem:[#allocation2 + $0x1d8] sm:$0xf]
    %v194 = vld [vmem:[#allocation2 + $0x1dc] sm:$0xf]
    %v195 = vld [vmem:[#allocation2 + $0x1e0] sm:$0xf]
    %v196 = vld [vmem:[#allocation2 + $0x1e4] sm:$0xf]
    %v197 = vld [vmem:[#allocation2 + $0x1e8] sm:$0xf]
    %v198 = vld [vmem:[#allocation2 + $0x1ec] sm:$0xf]
    %v199 = vld [vmem:[#allocation2 + $0x1f0] sm:$0xf]
    %v200 = vld [vmem:[#allocation2 + $0x1f4] sm:$0xf]
    %v201 = vld [vmem:[#allocation2 + $0x1f8] sm:$0xf]
    %v202 = vld [vmem:[#allocation2 + $0x1fc] sm:$0xf]
    %v203 = vld [vmem:[#allocation2 + $0x200] sm:$0xf]
    %v204 = vld [vmem:[#allocation2 + $0x204] sm:$0xf]
    %v205 = vld [vmem:[#allocation2 + $0x208] sm:$0xf]
    %v206 = vld [vmem:[#allocation2 + $0x20c] sm:$0xf]
    %v207 = vld [vmem:[#allocation2 + $0x210] sm:$0xf]
    %v208 = vld [vmem:[#allocation2 + $0x214] sm:$0xf]
    %v209 = vld [vmem:[#allocation2 + $0x218] sm:$0xf]
    %v210 = vld [vmem:[#allocation2 + $0x21c] sm:$0xf]
    %v211 = vld [vmem:[#allocation2 + $0x220] sm:$0xf]
    %v212 = vld [vmem:[#allocation2 + $0x224] sm:$0xf]
    %v213 = vld [vmem:[#allocation2 + $0x228] sm:$0xf]
    %v214 = vld [vmem:[#allocation2 + $0x22c] sm:$0xf]
    %v215 = vld [vmem:[#allocation2 + $0x230] sm:$0xf]
    %v216 = vld [vmem:[#allocation2 + $0x234] sm:$0xf]
    %v217 = vld [vmem:[#allocation2 + $0x238] sm:$0xf]
    %v218 = vld [vmem:[#allocation2 + $0x23c] sm:$0xf]
    %v219 = vld [vmem:[#allocation2 + $0x240] sm:$0xf]
    %v220 = vld [vmem:[#allocation2 + $0x244] sm:$0xf]
    %v221 = vld [vmem:[#allocation2 + $0x248] sm:$0xf]
    %v222 = vld [vmem:[#allocation2 + $0x24c] sm:$0xf]
    %v223 = vld [vmem:[#allocation2 + $0x250] sm:$0xf]
    %v224 = vld [vmem:[#allocation2 + $0x254] sm:$0xf]
    %v225 = vld [vmem:[#allocation2 + $0x258] sm:$0xf]
    %v226 = vld [vmem:[#allocation2 + $0x25c] sm:$0xf]
    %v227 = vld [vmem:[#allocation2 + $0x260] sm:$0xf]
    %v228 = vld [vmem:[#allocation2 + $0x264] sm:$0xf]
    %v229 = vld [vmem:[#allocation2 + $0x268] sm:$0xf]
    %v230 = vld [vmem:[#allocation2 + $0x26c] sm:$0xf]
    %v231 = vld [vmem:[#allocation2 + $0x270] sm:$0xf]
    %v232 = vld [vmem:[#allocation2 + $0x274] sm:$0xf]
    %v233 = vld [vmem:[#allocation2 + $0x278] sm:$0xf]
    %v234 = vld [vmem:[#allocation2 + $0x27c] sm:$0xf]
    %v235 = vld [vmem:[#allocation2 + $0x280] sm:$0xf]
    %v236 = vld [vmem:[#allocation2 + $0x284] sm:$0xf]
    %v237 = vld [vmem:[#allocation2 + $0x288] sm:$0xf]
    %v238 = vld [vmem:[#allocation2 + $0x28c] sm:$0xf]
    %v239 = vld [vmem:[#allocation2 + $0x290] sm:$0xf]
    %v240 = vld [vmem:[#allocation2 + $0x294] sm:$0xf]
    %v241 = vld [vmem:[#allocation2 + $0x298] sm:$0xf]
    %v242 = vld [vmem:[#allocation2 + $0x29c] sm:$0xf]
    %v243 = vld [vmem:[#allocation2 + $0x2a0] sm:$0xf]
    %v244 = vld [vmem:[#allocation2 + $0x2a4] sm:$0xf]
    %v245 = vld [vmem:[#allocation2 + $0x2a8] sm:$0xf]
    %v246 = vld [vmem:[#allocation2 + $0x2ac] sm:$0xf]
    %v247 = vld [vmem:[#allocation2 + $0x2b0] sm:$0xf]
    %v248 = vld [vmem:[#allocation2 + $0x2b4] sm:$0xf]
    %v249 = vld [vmem:[#allocation2 + $0x2b8] sm:$0xf]
    %v250 = vld [vmem:[#allocation2 + $0x2bc] sm:$0xf]
    %v251 = vld [vmem:[#allocation2 + $0x2c0] sm:$0xf]
    %v252 = vld [vmem:[#allocation2 + $0x2c4] sm:$0xf]
    %v253 = vld [vmem:[#allocation2 + $0x2c8] sm:$0xf]
    %v254 = vld [vmem:[#allocation2 + $0x2cc] sm:$0xf]
    %v255 = vld [vmem:[#allocation2 + $0x2d0] sm:$0xf]
    %v256 = vld [vmem:[#allocation2 + $0x2d4] sm:$0xf]
    %v257 = vld [vmem:[#allocation2 + $0x2d8] sm:$0xf]
    %v258 = vld [vmem:[#allocation2 + $0x2dc] sm:$0xf]
    %v259 = vld [vmem:[#allocation2 + $0x2e0] sm:$0xf]
    %v260 = vld [vmem:[#allocation2 + $0x2e4] sm:$0xf]
    %v261 = vld [vmem:[#allocation2 + $0x2e8] sm:$0xf]
    %v262 = vld [vmem:[#allocation2 + $0x2ec] sm:$0xf]
    %v263 = vld [vmem:[#allocation2 + $0x2f0] sm:$0xf]
    %v264 = vld [vmem:[#allocation2 + $0x2f4] sm:$0xf]
    %v265 = vld [vmem:[#allocation2 + $0x2f8] sm:$0xf]
    %v266 = vld [vmem:[#allocation2 + $0x2fc] sm:$0xf]
    %v267 = vld [vmem:[#allocation2 + $0x300] sm:$0xf]
    %v268 = vld [vmem:[#allocation2 + $0x304] sm:$0xf]
    %v269 = vld [vmem:[#allocation2 + $0x308] sm:$0xf]
    %v270 = vld [vmem:[#allocation2 + $0x30c] sm:$0xf]
    %v271 = vld [vmem:[#allocation2 + $0x310] sm:$0xf]
    %v272 = vld [vmem:[#allocation2 + $0x314] sm:$0xf]
    %v273 = vld [vmem:[#allocation2 + $0x318] sm:$0xf]
    %v274 = vld [vmem:[#allocation2 + $0x31c] sm:$0xf]
    %v275 = vld [vmem:[#allocation2 + $0x320] sm:$0xf]
    %v276 = vld [vmem:[#allocation2 + $0x324] sm:$0xf]
    %v277 = vld [vmem:[#allocation2 + $0x328] sm:$0xf]
    %v278 = vld [vmem:[#allocation2 + $0x32c] sm:$0xf]
    %v279 = vld [vmem:[#allocation2 + $0x330] sm:$0xf]
    %v280 = vld [vmem:[#allocation2 + $0x334] sm:$0xf]
    %v281 = vld [vmem:[#allocation2 + $0x338] sm:$0xf]
    %v282 = vld [vmem:[#allocation2 + $0x33c] sm:$0xf]
    %v283 = vld [vmem:[#allocation2 + $0x340] sm:$0xf]
    %v284 = vld [vmem:[#allocation2 + $0x344] sm:$0xf]
    %v285 = vld [vmem:[#allocation2 + $0x348] sm:$0xf]
    %v286 = vld [vmem:[#allocation2 + $0x34c] sm:$0xf]
    %v287 = vld [vmem:[#allocation2 + $0x350] sm:$0xf]
    %v288 = vld [vmem:[#allocation2 + $0x354] sm:$0xf]
    %v289 = vld [vmem:[#allocation2 + $0x358] sm:$0xf]
    %v290 = vld [vmem:[#allocation2 + $0x35c] sm:$0xf]
    %v291 = vld [vmem:[#allocation2 + $0x360] sm:$0xf]
    %v292 = vld [vmem:[#allocation2 + $0x364] sm:$0xf]
    %v293 = vld [vmem:[#allocation2 + $0x368] sm:$0xf]
    %v294 = vld [vmem:[#allocation2 + $0x36c] sm:$0xf]
    %v295 = vld [vmem:[#allocation2 + $0x370] sm:$0xf]
    %v296 = vld [vmem:[#allocation2 + $0x374] sm:$0xf]
    %v297 = vld [vmem:[#allocation2 + $0x378] sm:$0xf]
    %v298 = vld [vmem:[#allocation2 + $0x37c] sm:$0xf]
    %v299 = vld [vmem:[#allocation2 + $0x380] sm:$0xf]
    %v300 = vld [vmem:[#allocation2 + $0x384] sm:$0xf]
    %v301 = vld [vmem:[#allocation2 + $0x388] sm:$0xf]
    %v302 = vld [vmem:[#allocation2 + $0x38c] sm:$0xf]
    %v303 = vld [vmem:[#allocation2 + $0x390] sm:$0xf]
    %v304 = vld [vmem:[#allocation2 + $0x394] sm:$0xf]
    %v305 = vld [vmem:[#allocation2 + $0x398] sm:$0xf]
    %v306 = vld [vmem:[#allocation2 + $0x39c] sm:$0xf]
    %v307 = vld [vmem:[#allocation2 + $0x3a0] sm:$0xf]
    %v308 = vld [vmem:[#allocation2 + $0x3a4] sm:$0xf]
    %v309 = vld [vmem:[#allocation2 + $0x3a8] sm:$0xf]
    %v310 = vld [vmem:[#allocation2 + $0x3ac] sm:$0xf]
    %v311 = vld [vmem:[#allocation2 + $0x3b0] sm:$0xf]
    %v312 = vld [vmem:[#allocation2 + $0x3b4] sm:$0xf]
    %v313 = vld [vmem:[#allocation2 + $0x3b8] sm:$0xf]
    %v314 = vld [vmem:[#allocation2 + $0x3bc] sm:$0xf]
    %v315 = vld [vmem:[#allocation2 + $0x3c0] sm:$0xf]
    %v316 = vld [vmem:[#allocation2 + $0x3c4] sm:$0xf]
    %v317 = vld [vmem:[#allocation2 + $0x3c8] sm:$0xf]
    %v318 = vld [vmem:[#allocation2 + $0x3cc] sm:$0xf]
    %v319 = vld [vmem:[#allocation2 + $0x3d0] sm:$0xf]
    %v320 = vld [vmem:[#allocation2 + $0x3d4] sm:$0xf]
    %v321 = vld [vmem:[#allocation2 + $0x3d8] sm:$0xf]
    %v322 = vld [vmem:[#allocation2 + $0x3dc] sm:$0xf]
    %v323 = vld [vmem:[#allocation2 + $0x3e0] sm:$0xf]
    %v324 = vld [vmem:[#allocation2 + $0x3e4] sm:$0xf]
    %v325 = vld [vmem:[#allocation2 + $0x3e8] sm:$0xf]
    %v326 = vld [vmem:[#allocation2 + $0x3ec] sm:$0xf]
    %v327 = vld [vmem:[#allocation2 + $0x3f0] sm:$0xf]
    %v328 = vld [vmem:[#allocation2 + $0x3f4] sm:$0xf]
    %v329 = vld [vmem:[#allocation2 + $0x3f8] sm:$0xf]
    %v330 = vld [vmem:[#allocation2 + $0x3fc] sm:$0xf]
    %v587 = vunpack.c.l.b16 %v75
    %v588 = vunpack.c.l.b16 %v76
    %v589 = vunpack.c.l.b16 %v77
    %v590 = vunpack.c.l.b16 %v78
    %v591 = vunpack.c.l.b16 %v79
    %v592 = vunpack.c.l.b16 %v80
    %v593 = vunpack.c.l.b16 %v81
    %v594 = vunpack.c.l.b16 %v82
    %v595 = vunpack.c.l.b16 %v83
    %v596 = vunpack.c.l.b16 %v84
    %v597 = vunpack.c.l.b16 %v85
    %v598 = vunpack.c.l.b16 %v86
    %v599 = vunpack.c.l.b16 %v87
    %v600 = vunpack.c.l.b16 %v88
    %v601 = vunpack.c.l.b16 %v89
    %v602 = vunpack.c.l.b16 %v90
    %v603 = vunpack.c.l.b16 %v91
    %v604 = vunpack.c.l.b16 %v92
    %v605 = vunpack.c.l.b16 %v93
    %v606 = vunpack.c.l.b16 %v94
    %v607 = vunpack.c.l.b16 %v95
    %v608 = vunpack.c.l.b16 %v96
    %v609 = vunpack.c.l.b16 %v97
    %v610 = vunpack.c.l.b16 %v98
    %v611 = vunpack.c.l.b16 %v99
    %v612 = vunpack.c.l.b16 %v100
    %v613 = vunpack.c.l.b16 %v101
    %v614 = vunpack.c.l.b16 %v102
    %v615 = vunpack.c.l.b16 %v103
    %v616 = vunpack.c.l.b16 %v104
    %v617 = vunpack.c.l.b16 %v105
    %v618 = vunpack.c.l.b16 %v106
    %v619 = vunpack.c.l.b16 %v107
    %v620 = vunpack.c.l.b16 %v108
    %v621 = vunpack.c.l.b16 %v109
    %v622 = vunpack.c.l.b16 %v110
    %v623 = vunpack.c.l.b16 %v111
    %v624 = vunpack.c.l.b16 %v112
    %v625 = vunpack.c.l.b16 %v113
    %v626 = vunpack.c.l.b16 %v114
    %v627 = vunpack.c.l.b16 %v115
    %v628 = vunpack.c.l.b16 %v116
    %v629 = vunpack.c.l.b16 %v117
    %v630 = vunpack.c.l.b16 %v118
    %v631 = vunpack.c.l.b16 %v119
    %v632 = vunpack.c.l.b16 %v120
    %v633 = vunpack.c.l.b16 %v121
    %v634 = vunpack.c.l.b16 %v122
    %v635 = vunpack.c.l.b16 %v123
    %v636 = vunpack.c.l.b16 %v124
    %v637 = vunpack.c.l.b16 %v125
    %v638 = vunpack.c.l.b16 %v126
    %v639 = vunpack.c.l.b16 %v127
    %v640 = vunpack.c.l.b16 %v128
    %v641 = vunpack.c.l.b16 %v129
    %v642 = vunpack.c.l.b16 %v130
    %v643 = vunpack.c.l.b16 %v131
    %v644 = vunpack.c.l.b16 %v132
    %v645 = vunpack.c.l.b16 %v133
    %v646 = vunpack.c.l.b16 %v134
    %v647 = vunpack.c.l.b16 %v135
    %v648 = vunpack.c.l.b16 %v136
    %v649 = vunpack.c.l.b16 %v137
    %v650 = vunpack.c.l.b16 %v138
    %v651 = vunpack.c.l.b16 %v139
    %v652 = vunpack.c.l.b16 %v140
    %v653 = vunpack.c.l.b16 %v141
    %v654 = vunpack.c.l.b16 %v142
    %v655 = vunpack.c.l.b16 %v143
    %v656 = vunpack.c.l.b16 %v144
    %v657 = vunpack.c.l.b16 %v145
    %v658 = vunpack.c.l.b16 %v146
    %v659 = vunpack.c.l.b16 %v147
    %v660 = vunpack.c.l.b16 %v148
    %v661 = vunpack.c.l.b16 %v149
    %v662 = vunpack.c.l.b16 %v150
    %v663 = vunpack.c.l.b16 %v151
    %v664 = vunpack.c.l.b16 %v152
    %v665 = vunpack.c.l.b16 %v153
    %v666 = vunpack.c.l.b16 %v154
    %v667 = vunpack.c.l.b16 %v155
    %v668 = vunpack.c.l.b16 %v156
    %v669 = vunpack.c.l.b16 %v157
    %v670 = vunpack.c.l.b16 %v158
    %v671 = vunpack.c.l.b16 %v159
    %v672 = vunpack.c.l.b16 %v160
    %v673 = vunpack.c.l.b16 %v161
    %v674 = vunpack.c.l.b16 %v162
    %v675 = vunpack.c.l.b16 %v163
    %v676 = vunpack.c.l.b16 %v164
    %v677 = vunpack.c.l.b16 %v165
    %v678 = vunpack.c.l.b16 %v166
    %v679 = vunpack.c.l.b16 %v167
    %v680 = vunpack.c.l.b16 %v168
    %v681 = vunpack.c.l.b16 %v169
    %v682 = vunpack.c.l.b16 %v170
    %v683 = vunpack.c.l.b16 %v171
    %v684 = vunpack.c.l.b16 %v172
    %v685 = vunpack.c.l.b16 %v173
    %v686 = vunpack.c.l.b16 %v174
    %v687 = vunpack.c.l.b16 %v175
    %v688 = vunpack.c.l.b16 %v176
    %v689 = vunpack.c.l.b16 %v177
    %v690 = vunpack.c.l.b16 %v178
    %v691 = vunpack.c.l.b16 %v179
    %v692 = vunpack.c.l.b16 %v180
    %v693 = vunpack.c.l.b16 %v181
    %v694 = vunpack.c.l.b16 %v182
    %v695 = vunpack.c.l.b16 %v183
    %v696 = vunpack.c.l.b16 %v184
    %v697 = vunpack.c.l.b16 %v185
    %v698 = vunpack.c.l.b16 %v186
    %v699 = vunpack.c.l.b16 %v187
    %v700 = vunpack.c.l.b16 %v188
    %v701 = vunpack.c.l.b16 %v189
    %v702 = vunpack.c.l.b16 %v190
    %v703 = vunpack.c.l.b16 %v191
    %v704 = vunpack.c.l.b16 %v192
    %v705 = vunpack.c.l.b16 %v193
    %v706 = vunpack.c.l.b16 %v194
    %v707 = vunpack.c.l.b16 %v195
    %v708 = vunpack.c.l.b16 %v196
    %v709 = vunpack.c.l.b16 %v197
    %v710 = vunpack.c.l.b16 %v198
    %v711 = vunpack.c.l.b16 %v199
    %v712 = vunpack.c.l.b16 %v200
    %v713 = vunpack.c.l.b16 %v201
    %v714 = vunpack.c.l.b16 %v202
    %v715 = vunpack.c.l.b16 %v203
    %v716 = vunpack.c.l.b16 %v204
    %v717 = vunpack.c.l.b16 %v205
    %v718 = vunpack.c.l.b16 %v206
    %v719 = vunpack.c.l.b16 %v207
    %v720 = vunpack.c.l.b16 %v208
    %v721 = vunpack.c.l.b16 %v209
    %v722 = vunpack.c.l.b16 %v210
    %v723 = vunpack.c.l.b16 %v211
    %v724 = vunpack.c.l.b16 %v212
    %v725 = vunpack.c.l.b16 %v213
    %v726 = vunpack.c.l.b16 %v214
    %v727 = vunpack.c.l.b16 %v215
    %v728 = vunpack.c.l.b16 %v216
    %v729 = vunpack.c.l.b16 %v217
    %v730 = vunpack.c.l.b16 %v218
    %v731 = vunpack.c.l.b16 %v219
    %v732 = vunpack.c.l.b16 %v220
    %v733 = vunpack.c.l.b16 %v221
    %v734 = vunpack.c.l.b16 %v222
    %v735 = vunpack.c.l.b16 %v223
    %v736 = vunpack.c.l.b16 %v224
    %v737 = vunpack.c.l.b16 %v225
    %v738 = vunpack.c.l.b16 %v226
    %v739 = vunpack.c.l.b16 %v227
    %v740 = vunpack.c.l.b16 %v228
    %v741 = vunpack.c.l.b16 %v229
    %v742 = vunpack.c.l.b16 %v230
    %v743 = vunpack.c.l.b16 %v231
    %v744 = vunpack.c.l.b16 %v232
    %v745 = vunpack.c.l.b16 %v233
    %v746 = vunpack.c.l.b16 %v234
    %v747 = vunpack.c.l.b16 %v235
    %v748 = vunpack.c.l.b16 %v236
    %v749 = vunpack.c.l.b16 %v237
    %v750 = vunpack.c.l.b16 %v238
    %v751 = vunpack.c.l.b16 %v239
    %v752 = vunpack.c.l.b16 %v240
    %v753 = vunpack.c.l.b16 %v241
    %v754 = vunpack.c.l.b16 %v242
    %v755 = vunpack.c.l.b16 %v243
    %v756 = vunpack.c.l.b16 %v244
    %v757 = vunpack.c.l.b16 %v245
    %v758 = vunpack.c.l.b16 %v246
    %v759 = vunpack.c.l.b16 %v247
    %v760 = vunpack.c.l.b16 %v248
    %v761 = vunpack.c.l.b16 %v249
    %v762 = vunpack.c.l.b16 %v250
    %v763 = vunpack.c.l.b16 %v251
    %v764 = vunpack.c.l.b16 %v252
    %v765 = vunpack.c.l.b16 %v253
    %v766 = vunpack.c.l.b16 %v254
    %v767 = vunpack.c.l.b16 %v255
    %v768 = vunpack.c.l.b16 %v256
    %v769 = vunpack.c.l.b16 %v257
    %v770 = vunpack.c.l.b16 %v258
    %v771 = vunpack.c.l.b16 %v259
    %v772 = vunpack.c.l.b16 %v260
    %v773 = vunpack.c.l.b16 %v261
    %v774 = vunpack.c.l.b16 %v262
    %v775 = vunpack.c.l.b16 %v263
    %v776 = vunpack.c.l.b16 %v264
    %v777 = vunpack.c.l.b16 %v265
    %v778 = vunpack.c.l.b16 %v266
    %v779 = vunpack.c.l.b16 %v267
    %v780 = vunpack.c.l.b16 %v268
    %v781 = vunpack.c.l.b16 %v269
    %v782 = vunpack.c.l.b16 %v270
    %v783 = vunpack.c.l.b16 %v271
    %v784 = vunpack.c.l.b16 %v272
    %v785 = vunpack.c.l.b16 %v273
    %v786 = vunpack.c.l.b16 %v274
    %v787 = vunpack.c.l.b16 %v275
    %v788 = vunpack.c.l.b16 %v276
    %v789 = vunpack.c.l.b16 %v277
    %v790 = vunpack.c.l.b16 %v278
    %v791 = vunpack.c.l.b16 %v279
    %v792 = vunpack.c.l.b16 %v280
    %v793 = vunpack.c.l.b16 %v281
    %v794 = vunpack.c.l.b16 %v282
    %v795 = vunpack.c.l.b16 %v283
    %v796 = vunpack.c.l.b16 %v284
    %v797 = vunpack.c.l.b16 %v285
    %v798 = vunpack.c.l.b16 %v286
    %v799 = vunpack.c.l.b16 %v287
    %v800 = vunpack.c.l.b16 %v288
    %v801 = vunpack.c.l.b16 %v289
    %v802 = vunpack.c.l.b16 %v290
    %v803 = vunpack.c.l.b16 %v291
    %v804 = vunpack.c.l.b16 %v292
    %v805 = vunpack.c.l.b16 %v293
    %v806 = vunpack.c.l.b16 %v294
    %v807 = vunpack.c.l.b16 %v295
    %v808 = vunpack.c.l.b16 %v296
    %v809 = vunpack.c.l.b16 %v297
    %v810 = vunpack.c.l.b16 %v298
    %v811 = vunpack.c.l.b16 %v299
    %v812 = vunpack.c.l.b16 %v300
    %v813 = vunpack.c.l.b16 %v301
    %v814 = vunpack.c.l.b16 %v302
    %v815 = vunpack.c.l.b16 %v303
    %v816 = vunpack.c.l.b16 %v304
    %v817 = vunpack.c.l.b16 %v305
    %v818 = vunpack.c.l.b16 %v306
    %v819 = vunpack.c.l.b16 %v307
    %v820 = vunpack.c.l.b16 %v308
    %v821 = vunpack.c.l.b16 %v309
    %v822 = vunpack.c.l.b16 %v310
    %v823 = vunpack.c.l.b16 %v311
    %v824 = vunpack.c.l.b16 %v312
    %v825 = vunpack.c.l.b16 %v313
    %v826 = vunpack.c.l.b16 %v314
    %v827 = vunpack.c.l.b16 %v315
    %v828 = vunpack.c.l.b16 %v316
    %v829 = vunpack.c.l.b16 %v317
    %v830 = vunpack.c.l.b16 %v318
    %v831 = vunpack.c.l.b16 %v319
    %v832 = vunpack.c.l.b16 %v320
    %v833 = vunpack.c.l.b16 %v321
    %v834 = vunpack.c.l.b16 %v322
    %v835 = vunpack.c.l.b16 %v323
    %v836 = vunpack.c.l.b16 %v324
    %v837 = vunpack.c.l.b16 %v325
    %v838 = vunpack.c.l.b16 %v326
    %v839 = vunpack.c.l.b16 %v327
    %v840 = vunpack.c.l.b16 %v328
    %v841 = vunpack.c.l.b16 %v329
    %v842 = vunpack.c.l.b16 %v330
    %v843 = vpack.c.b16 %v588, %v587
    %v844 = vpack.c.b16 %v590, %v589
    %v845 = vpack.c.b16 %v592, %v591
    %v846 = vpack.c.b16 %v594, %v593
    %v847 = vpack.c.b16 %v596, %v595
    %v848 = vpack.c.b16 %v598, %v597
    %v849 = vpack.c.b16 %v600, %v599
    %v850 = vpack.c.b16 %v602, %v601
    %v851 = vpack.c.b16 %v604, %v603
    %v852 = vpack.c.b16 %v606, %v605
    %v853 = vpack.c.b16 %v608, %v607
    %v854 = vpack.c.b16 %v610, %v609
    %v855 = vpack.c.b16 %v612, %v611
    %v856 = vpack.c.b16 %v614, %v613
    %v857 = vpack.c.b16 %v616, %v615
    %v858 = vpack.c.b16 %v618, %v617
    %v859 = vpack.c.b16 %v620, %v619
    %v860 = vpack.c.b16 %v622, %v621
    %v861 = vpack.c.b16 %v624, %v623
    %v862 = vpack.c.b16 %v626, %v625
    %v863 = vpack.c.b16 %v628, %v627
    %v864 = vpack.c.b16 %v630, %v629
    %v865 = vpack.c.b16 %v632, %v631
    %v866 = vpack.c.b16 %v634, %v633
    %v867 = vpack.c.b16 %v636, %v635
    %v868 = vpack.c.b16 %v638, %v637
    %v869 = vpack.c.b16 %v640, %v639
    %v870 = vpack.c.b16 %v642, %v641
    %v871 = vpack.c.b16 %v644, %v643
    %v872 = vpack.c.b16 %v646, %v645
    %v873 = vpack.c.b16 %v648, %v647
    %v874 = vpack.c.b16 %v650, %v649
    %v875 = vpack.c.b16 %v652, %v651
    %v876 = vpack.c.b16 %v654, %v653
    %v877 = vpack.c.b16 %v656, %v655
    %v878 = vpack.c.b16 %v658, %v657
    %v879 = vpack.c.b16 %v660, %v659
    %v880 = vpack.c.b16 %v662, %v661
    %v881 = vpack.c.b16 %v664, %v663
    %v882 = vpack.c.b16 %v666, %v665
    %v883 = vpack.c.b16 %v668, %v667
    %v884 = vpack.c.b16 %v670, %v669
    %v885 = vpack.c.b16 %v672, %v671
    %v886 = vpack.c.b16 %v674, %v673
    %v887 = vpack.c.b16 %v676, %v675
    %v888 = vpack.c.b16 %v678, %v677
    %v889 = vpack.c.b16 %v680, %v679
    %v890 = vpack.c.b16 %v682, %v681
    %v891 = vpack.c.b16 %v684, %v683
    %v892 = vpack.c.b16 %v686, %v685
    %v893 = vpack.c.b16 %v688, %v687
    %v894 = vpack.c.b16 %v690, %v689
    %v895 = vpack.c.b16 %v692, %v691
    %v896 = vpack.c.b16 %v694, %v693
    %v897 = vpack.c.b16 %v696, %v695
    %v898 = vpack.c.b16 %v698, %v697
    %v899 = vpack.c.b16 %v700, %v699
    %v900 = vpack.c.b16 %v702, %v701
    %v901 = vpack.c.b16 %v704, %v703
    %v902 = vpack.c.b16 %v706, %v705
    %v903 = vpack.c.b16 %v708, %v707
    %v904 = vpack.c.b16 %v710, %v709
    %v905 = vpack.c.b16 %v712, %v711
    %v906 = vpack.c.b16 %v714, %v713
    %v907 = vpack.c.b16 %v716, %v715
    %v908 = vpack.c.b16 %v718, %v717
    %v909 = vpack.c.b16 %v720, %v719
    %v910 = vpack.c.b16 %v722, %v721
    %v911 = vpack.c.b16 %v724, %v723
    %v912 = vpack.c.b16 %v726, %v725
    %v913 = vpack.c.b16 %v728, %v727
    %v914 = vpack.c.b16 %v730, %v729
    %v915 = vpack.c.b16 %v732, %v731
    %v916 = vpack.c.b16 %v734, %v733
    %v917 = vpack.c.b16 %v736, %v735
    %v918 = vpack.c.b16 %v738, %v737
    %v919 = vpack.c.b16 %v740, %v739
    %v920 = vpack.c.b16 %v742, %v741
    %v921 = vpack.c.b16 %v744, %v743
    %v922 = vpack.c.b16 %v746, %v745
    %v923 = vpack.c.b16 %v748, %v747
    %v924 = vpack.c.b16 %v750, %v749
    %v925 = vpack.c.b16 %v752, %v751
    %v926 = vpack.c.b16 %v754, %v753
    %v927 = vpack.c.b16 %v756, %v755
    %v928 = vpack.c.b16 %v758, %v757
    %v929 = vpack.c.b16 %v760, %v759
    %v930 = vpack.c.b16 %v762, %v761
    %v931 = vpack.c.b16 %v764, %v763
    %v932 = vpack.c.b16 %v766, %v765
    %v933 = vpack.c.b16 %v768, %v767
    %v934 = vpack.c.b16 %v770, %v769
    %v935 = vpack.c.b16 %v772, %v771
    %v936 = vpack.c.b16 %v774, %v773
    %v937 = vpack.c.b16 %v776, %v775
    %v938 = vpack.c.b16 %v778, %v777
    %v939 = vpack.c.b16 %v780, %v779
    %v940 = vpack.c.b16 %v782, %v781
    %v941 = vpack.c.b16 %v784, %v783
    %v942 = vpack.c.b16 %v786, %v785
    %v943 = vpack.c.b16 %v788, %v787
    %v944 = vpack.c.b16 %v790, %v789
    %v945 = vpack.c.b16 %v792, %v791
    %v946 = vpack.c.b16 %v794, %v793
    %v947 = vpack.c.b16 %v796, %v795
    %v948 = vpack.c.b16 %v798, %v797
    %v949 = vpack.c.b16 %v800, %v799
    %v950 = vpack.c.b16 %v802, %v801
    %v951 = vpack.c.b16 %v804, %v803
    %v952 = vpack.c.b16 %v806, %v805
    %v953 = vpack.c.b16 %v808, %v807
    %v954 = vpack.c.b16 %v810, %v809
    %v955 = vpack.c.b16 %v812, %v811
    %v956 = vpack.c.b16 %v814, %v813
    %v957 = vpack.c.b16 %v816, %v815
    %v958 = vpack.c.b16 %v818, %v817
    %v959 = vpack.c.b16 %v820, %v819
    %v960 = vpack.c.b16 %v822, %v821
    %v961 = vpack.c.b16 %v824, %v823
    %v962 = vpack.c.b16 %v826, %v825
    %v963 = vpack.c.b16 %v828, %v827
    %v964 = vpack.c.b16 %v830, %v829
    %v965 = vpack.c.b16 %v832, %v831
    %v966 = vpack.c.b16 %v834, %v833
    %v967 = vpack.c.b16 %v836, %v835
    %v968 = vpack.c.b16 %v838, %v837
    %v969 = vpack.c.b16 %v840, %v839
    %v970 = vpack.c.b16 %v842, %v841
    %1099 = vmatpush.bf16.msra.mxu0 %v850
    %1100 = vmatpush.bf16.msra.mxu0 %v849
    %1101 = vmatpush.bf16.msra.mxu0 %v848
    %1102 = vmatpush.bf16.msra.mxu0 %v847
    %1103 = vmatpush.bf16.msra.mxu0 %v846
    %1104 = vmatpush.bf16.msra.mxu0 %v845
    %1105 = vmatpush.bf16.msra.mxu0 %v844
    %1106 = vmatpush.bf16.msra.mxu0 %v843
    %1107 = vmatmul.bf16.gmra.mxu0 %v59
    %v1108 = vpop.f32.mrf.mxu0
    %v1109 = vadd.f32 0.0, %v1108
    %v1110 = vpop.f32.mrf.mxu0
    %v1111 = vadd.f32 0.0, %v1110
    %1112 = vdwg.mxu0
    %1113 = vmatpush.bf16.msra.mxu0 %v858
    %1114 = vmatpush.bf16.msra.mxu0 %v857
    %1115 = vmatpush.bf16.msra.mxu0 %v856
    %1116 = vmatpush.bf16.msra.mxu0 %v855
    %1117 = vmatpush.bf16.msra.mxu0 %v854
    %1118 = vmatpush.bf16.msra.mxu0 %v853
    %1119 = vmatpush.bf16.msra.mxu0 %v852
    %1120 = vmatpush.bf16.msra.mxu0 %v851
    %1121 = vmatmul.bf16.gmra.mxu0 %v60
    %v1122 = vpop.f32.mrf.mxu0
    %v1123 = vadd.f32 %v1109, %v1122
    %v1124 = vpop.f32.mrf.mxu0
    %v1125 = vadd.f32 %v1111, %v1124
    %1126 = vdwg.mxu0
    %1127 = vmatpush.bf16.msra.mxu0 %v866
    %1128 = vmatpush.bf16.msra.mxu0 %v865
    %1129 = vmatpush.bf16.msra.mxu0 %v864
    %1130 = vmatpush.bf16.msra.mxu0 %v863
    %1131 = vmatpush.bf16.msra.mxu0 %v862
    %1132 = vmatpush.bf16.msra.mxu0 %v861
    %1133 = vmatpush.bf16.msra.mxu0 %v860
    %1134 = vmatpush.bf16.msra.mxu0 %v859
    %1135 = vmatmul.bf16.gmra.mxu0 %v61
    %v1136 = vpop.f32.mrf.mxu0
    %v1137 = vadd.f32 %v1123, %v1136
    %v1138 = vpop.f32.mrf.mxu0
    %v1139 = vadd.f32 %v1125, %v1138
    %1140 = vdwg.mxu0
    %1141 = vmatpush.bf16.msra.mxu0 %v874
    %1142 = vmatpush.bf16.msra.mxu0 %v873
    %1143 = vmatpush.bf16.msra.mxu0 %v872
    %1144 = vmatpush.bf16.msra.mxu0 %v871
    %1145 = vmatpush.bf16.msra.mxu0 %v870
    %1146 = vmatpush.bf16.msra.mxu0 %v869
    %1147 = vmatpush.bf16.msra.mxu0 %v868
    %1148 = vmatpush.bf16.msra.mxu0 %v867
    %1149 = vmatmul.bf16.gmra.mxu0 %v62
    %v1150 = vpop.f32.mrf.mxu0
    %v1151 = vadd.f32 %v1137, %v1150
    %v1152 = vpop.f32.mrf.mxu0
    %v1153 = vadd.f32 %v1139, %v1152
    %1154 = vdwg.mxu0
    %1155 = vmatpush.bf16.msra.mxu0 %v882
    %1156 = vmatpush.bf16.msra.mxu0 %v881
    %1157 = vmatpush.bf16.msra.mxu0 %v880
    %1158 = vmatpush.bf16.msra.mxu0 %v879
    %1159 = vmatpush.bf16.msra.mxu0 %v878
    %1160 = vmatpush.bf16.msra.mxu0 %v877
    %1161 = vmatpush.bf16.msra.mxu0 %v876
    %1162 = vmatpush.bf16.msra.mxu0 %v875
    %1163 = vmatmul.bf16.gmra.mxu0 %v63
    %v1164 = vpop.f32.mrf.mxu0
    %v1165 = vadd.f32 %v1151, %v1164
    %v1166 = vpop.f32.mrf.mxu0
    %v1167 = vadd.f32 %v1153, %v1166
    %1168 = vdwg.mxu0
    %1169 = vmatpush.bf16.msra.mxu0 %v890
    %1170 = vmatpush.bf16.msra.mxu0 %v889
    %1171 = vmatpush.bf16.msra.mxu0 %v888
    %1172 = vmatpush.bf16.msra.mxu0 %v887
    %1173 = vmatpush.bf16.msra.mxu0 %v886
    %1174 = vmatpush.bf16.msra.mxu0 %v885
    %1175 = vmatpush.bf16.msra.mxu0 %v884
    %1176 = vmatpush.bf16.msra.mxu0 %v883
    %1177 = vmatmul.bf16.gmra.mxu0 %v64
    %v1178 = vpop.f32.mrf.mxu0
    %v1179 = vadd.f32 %v1165, %v1178
    %v1180 = vpop.f32.mrf.mxu0
    %v1181 = vadd.f32 %v1167, %v1180
    %1182 = vdwg.mxu0
    %1183 = vmatpush.bf16.msra.mxu0 %v898
    %1184 = vmatpush.bf16.msra.mxu0 %v897
    %1185 = vmatpush.bf16.msra.mxu0 %v896
    %1186 = vmatpush.bf16.msra.mxu0 %v895
    %1187 = vmatpush.bf16.msra.mxu0 %v894
    %1188 = vmatpush.bf16.msra.mxu0 %v893
    %1189 = vmatpush.bf16.msra.mxu0 %v892
    %1190 = vmatpush.bf16.msra.mxu0 %v891
    %1191 = vmatmul.bf16.gmra.mxu0 %v65
    %v1192 = vpop.f32.mrf.mxu0
    %v1193 = vadd.f32 %v1179, %v1192
    %v1194 = vpop.f32.mrf.mxu0
    %v1195 = vadd.f32 %v1181, %v1194
    %1196 = vdwg.mxu0
    %1197 = vmatpush.bf16.msra.mxu0 %v906
    %1198 = vmatpush.bf16.msra.mxu0 %v905
    %1199 = vmatpush.bf16.msra.mxu0 %v904
    %1200 = vmatpush.bf16.msra.mxu0 %v903
    %1201 = vmatpush.bf16.msra.mxu0 %v902
    %1202 = vmatpush.bf16.msra.mxu0 %v901
    %1203 = vmatpush.bf16.msra.mxu0 %v900
    %1204 = vmatpush.bf16.msra.mxu0 %v899
    %1205 = vmatmul.bf16.gmra.mxu0 %v66
    %v1206 = vpop.f32.mrf.mxu0
    %v1207 = vadd.f32 %v1193, %v1206
    %v1208 = vpop.f32.mrf.mxu0
    %v1209 = vadd.f32 %v1195, %v1208
    %1210 = vdwg.mxu0
    %1211 = vmatpush.bf16.msra.mxu0 %v914
    %1212 = vmatpush.bf16.msra.mxu0 %v913
    %1213 = vmatpush.bf16.msra.mxu0 %v912
    %1214 = vmatpush.bf16.msra.mxu0 %v911
    %1215 = vmatpush.bf16.msra.mxu0 %v910
    %1216 = vmatpush.bf16.msra.mxu0 %v909
    %1217 = vmatpush.bf16.msra.mxu0 %v908
    %1218 = vmatpush.bf16.msra.mxu0 %v907
    %1219 = vmatmul.bf16.gmra.mxu0 %v67
    %v1220 = vpop.f32.mrf.mxu0
    %v1221 = vadd.f32 %v1207, %v1220
    %v1222 = vpop.f32.mrf.mxu0
    %v1223 = vadd.f32 %v1209, %v1222
    %1224 = vdwg.mxu0
    %1225 = vmatpush.bf16.msra.mxu0 %v922
    %1226 = vmatpush.bf16.msra.mxu0 %v921
    %1227 = vmatpush.bf16.msra.mxu0 %v920
    %1228 = vmatpush.bf16.msra.mxu0 %v919
    %1229 = vmatpush.bf16.msra.mxu0 %v918
    %1230 = vmatpush.bf16.msra.mxu0 %v917
    %1231 = vmatpush.bf16.msra.mxu0 %v916
    %1232 = vmatpush.bf16.msra.mxu0 %v915
    %1233 = vmatmul.bf16.gmra.mxu0 %v68
    %v1234 = vpop.f32.mrf.mxu0
    %v1235 = vadd.f32 %v1221, %v1234
    %v1236 = vpop.f32.mrf.mxu0
    %v1237 = vadd.f32 %v1223, %v1236
    %1238 = vdwg.mxu0
    %1239 = vmatpush.bf16.msra.mxu0 %v930
    %1240 = vmatpush.bf16.msra.mxu0 %v929
    %1241 = vmatpush.bf16.msra.mxu0 %v928
    %1242 = vmatpush.bf16.msra.mxu0 %v927
    %1243 = vmatpush.bf16.msra.mxu0 %v926
    %1244 = vmatpush.bf16.msra.mxu0 %v925
    %1245 = vmatpush.bf16.msra.mxu0 %v924
    %1246 = vmatpush.bf16.msra.mxu0 %v923
    %1247 = vmatmul.bf16.gmra.mxu0 %v69
    %v1248 = vpop.f32.mrf.mxu0
    %v1249 = vadd.f32 %v1235, %v1248
    %v1250 = vpop.f32.mrf.mxu0
    %v1251 = vadd.f32 %v1237, %v1250
    %1252 = vdwg.mxu0
    %1253 = vmatpush.bf16.msra.mxu0 %v938
    %1254 = vmatpush.bf16.msra.mxu0 %v937
    %1255 = vmatpush.bf16.msra.mxu0 %v936
    %1256 = vmatpush.bf16.msra.mxu0 %v935
    %1257 = vmatpush.bf16.msra.mxu0 %v934
    %1258 = vmatpush.bf16.msra.mxu0 %v933
    %1259 = vmatpush.bf16.msra.mxu0 %v932
    %1260 = vmatpush.bf16.msra.mxu0 %v931
    %1261 = vmatmul.bf16.gmra.mxu0 %v70
    %v1262 = vpop.f32.mrf.mxu0
    %v1263 = vadd.f32 %v1249, %v1262
    %v1264 = vpop.f32.mrf.mxu0
    %v1265 = vadd.f32 %v1251, %v1264
    %1266 = vdwg.mxu0
    %1267 = vmatpush.bf16.msra.mxu0 %v946
    %1268 = vmatpush.bf16.msra.mxu0 %v945
    %1269 = vmatpush.bf16.msra.mxu0 %v944
    %1270 = vmatpush.bf16.msra.mxu0 %v943
    %1271 = vmatpush.bf16.msra.mxu0 %v942
    %1272 = vmatpush.bf16.msra.mxu0 %v941
    %1273 = vmatpush.bf16.msra.mxu0 %v940
    %1274 = vmatpush.bf16.msra.mxu0 %v939
    %1275 = vmatmul.bf16.gmra.mxu0 %v71
    %v1276 = vpop.f32.mrf.mxu0
    %v1277 = vadd.f32 %v1263, %v1276
    %v1278 = vpop.f32.mrf.mxu0
    %v1279 = vadd.f32 %v1265, %v1278
    %1280 = vdwg.mxu0
    %1281 = vmatpush.bf16.msra.mxu0 %v954
    %1282 = vmatpush.bf16.msra.mxu0 %v953
    %1283 = vmatpush.bf16.msra.mxu0 %v952
    %1284 = vmatpush.bf16.msra.mxu0 %v951
    %1285 = vmatpush.bf16.msra.mxu0 %v950
    %1286 = vmatpush.bf16.msra.mxu0 %v949
    %1287 = vmatpush.bf16.msra.mxu0 %v948
    %1288 = vmatpush.bf16.msra.mxu0 %v947
    %1289 = vmatmul.bf16.gmra.mxu0 %v72
    %v1290 = vpop.f32.mrf.mxu0
    %v1291 = vadd.f32 %v1277, %v1290
    %v1292 = vpop.f32.mrf.mxu0
    %v1293 = vadd.f32 %v1279, %v1292
    %1294 = vdwg.mxu0
    %1295 = vmatpush.bf16.msra.mxu0 %v962
    %1296 = vmatpush.bf16.msra.mxu0 %v961
    %1297 = vmatpush.bf16.msra.mxu0 %v960
    %1298 = vmatpush.bf16.msra.mxu0 %v959
    %1299 = vmatpush.bf16.msra.mxu0 %v958
    %1300 = vmatpush.bf16.msra.mxu0 %v957
    %1301 = vmatpush.bf16.msra.mxu0 %v956
    %1302 = vmatpush.bf16.msra.mxu0 %v955
    %1303 = vmatmul.bf16.gmra.mxu0 %v73
    %v1304 = vpop.f32.mrf.mxu0
    %v1305 = vadd.f32 %v1291, %v1304
    %v1306 = vpop.f32.mrf.mxu0
    %v1307 = vadd.f32 %v1293, %v1306
    %1308 = vdwg.mxu0
    %1309 = vmatpush.bf16.msra.mxu0 %v970
    %1310 = vmatpush.bf16.msra.mxu0 %v969
    %1311 = vmatpush.bf16.msra.mxu0 %v968
    %1312 = vmatpush.bf16.msra.mxu0 %v967
    %1313 = vmatpush.bf16.msra.mxu0 %v966
    %1314 = vmatpush.bf16.msra.mxu0 %v965
    %1315 = vmatpush.bf16.msra.mxu0 %v964
    %1316 = vmatpush.bf16.msra.mxu0 %v963
    %1317 = vmatmul.bf16.gmra.mxu0 %v74
    %v1318 = vpop.f32.mrf.mxu0
    %v1319 = vadd.f32 %v1305, %v1318
    %v1320 = vpop.f32.mrf.mxu0
    %v1321 = vadd.f32 %v1307, %v1320
    %1322 = vdwg.mxu0
    %vm1323 = vcmask 523264
    %1324 = vst.msk [vmem:[%s2] sm:$0xff] %vm1323, %v1319
    %1325 = vst.msk [vmem:[%s2 + $0x8] sm:$0xff] %vm1323, %v1321
    %1328 = vrot.lane.b32.xlu0 %v1319, 64
    %v1329 = vpop.permute.xlu0 %1328
    %1330 = vrot.lane.b32.xlu0 %v1321, 64
    %v1331 = vpop.permute.xlu0 %1330
    %s1334 = scalar_lea.vmem %s2, 16
    %1335 = vst.msk [vmem:[%s1334] sm:$0xff] %vm1323, %v1329
    %1336 = vst.msk [vmem:[%s1334 + $0x8] sm:$0xff] %vm1323, %v1331
    // Predicated region
    $region14: #{switti_forward.6} parent=1 // pred_check
      _
    $region15: #{switti_forward.6} parent=1 // pred_check_branch
      %1338 = sbr.rel (0) target = $region17
    $region16: #{switti_forward.6} parent=1 // pred_region
      _
    $region17: #{switti_forward.6} parent=1 // pred_fallthru
      _
    // Predicated region
    $region18: #{switti_forward.6} parent=1 // pred_check
      _
    $region19: #{switti_forward.6} parent=1 // pred_check_branch
      %1340 = sbr.rel (0) target = $region21
    $region20: #{switti_forward.6} parent=1 // pred_region
      _
    $region21: #{switti_forward.6} parent=1 // pred_fallthru
      _
    %1341 = vsyncpa [#allocation3], 1

// kernel: switti_forward.7
$region0: #{switti_forward.7}
  #allocation0 [shape = 'u32[]', space=smem, size = 0x4, offset = 0x4, fixed_abs, tag = 'smem constant byte address 0x4 - core index']
  #allocation1 [shape = 'u32[72,128]{1,0:T(1,128)}', space=vmem, size = 0x9000, scoped, tag = 'internal scratch']
  %s0 = inlined_call_operand.vmem [shape: f32[2,16,32], index: 0, kind: input, shape index: {}]
  %s1 = inlined_call_operand.vmem [shape: f32[2,1,32], index: 1, kind: input, shape index: {}]
  %s2 = inlined_call_operand.vmem [shape: f32[2,1,32], index: 2, kind: input, shape index: {}]
  %s3 = inlined_call_operand.vmem [shape: f32[2,16,64], index: 3, kind: input, shape index: {}]
  %s4 = inlined_call_operand.vmem [shape: f32[2,1,8], index: 4, kind: input, shape index: {}]
  %s5 = inlined_call_operand.vmem [shape: f32[16,16], index: 5, kind: input, shape index: {}]
  %s6 = inlined_call_operand.vmem [shape: f32[16,32], index: 6, kind: input, shape index: {}]
  %s7 = inlined_call_operand.vmem [shape: f32[16,32], index: 7, kind: input, shape index: {}]
  %s8 = inlined_call_operand.vmem [shape: f32[32,32], index: 8, kind: input, shape index: {}]
  %s9 = inlined_call_operand.vmem [shape: f32[32,32], index: 9, kind: input, shape index: {}]
  %s10 = inlined_call_operand.vmem [shape: f32[1,32], index: 10, kind: input, shape index: {}]
  %s11 = inlined_call_operand.vmem [shape: f32[1,32], index: 11, kind: input, shape index: {}]
  %s12 = inlined_call_operand.vmem [shape: bf16[32,192], index: 12, kind: input, shape index: {}]
  %s13 = inlined_call_operand.vmem [shape: f32[1,192], index: 13, kind: input, shape index: {}]
  %s14 = inlined_call_operand.vmem [shape: f32[1,192], index: 14, kind: input, shape index: {}]
  %s15 = inlined_call_operand.vmem [shape: bf16[32,96], index: 15, kind: input, shape index: {}]
  %s16 = inlined_call_operand.vmem [shape: f32[1,96], index: 16, kind: input, shape index: {}]
  %s17 = inlined_call_operand.vmem [shape: bf16[32,32], index: 17, kind: input, shape index: {}]
  %s18 = inlined_call_operand.vmem [shape: f32[1,32], index: 18, kind: input, shape index: {}]
  %s19 = inlined_call_operand.vmem [shape: bf16[32,32], index: 19, kind: input, shape index: {}]
  %s20 = inlined_call_operand.vmem [shape: f32[1,32], index: 20, kind: input, shape index: {}]
  %s21 = inlined_call_operand.vmem [shape: bf16[32,32], index: 21, kind: input, shape index: {}]
  %s22 = inlined_call_operand.hbm [shape: f32[1,32], index: 22, kind: input, shape index: {}]
  %s23 = inlined_call_operand.vmem [shape: bf16[32,256], index: 23, kind: input, shape index: {}]
  %s24 = inlined_call_operand.vmem [shape: f32[1,256], index: 24, kind: input, shape index: {}]
  %s25 = inlined_call_operand.vmem [shape: bf16[128,32], index: 25, kind: input, shape index: {}]
  %s26 = inlined_call_operand.hbm [shape: f32[1,32], index: 26, kind: input, shape index: {}]
  %s27 = inlined_call_operand.vmem [shape: f32[2,16,32], index: 27, kind: output, shape index: {}]
  %s28 = sld [smem:[#allocation0]]
  $region149: #{switti_forward.7} parent=0
    _
  %s30 = ssub.s32 1, %s28
  %s31 = scalar_select 0, %s30, %s28
  $region1: #{switti_forward.7} parent=0
    #allocation2 [shape = 'u8[512]{0}', space=vmem, size = 0x400, scoped, tag = 'input window, operand 22, single buffered']
    #allocation3 [shape = 's32[2]{0}', space=sflag, size = 0x8, scoped, tag = 'scoped memory for switti_forward.7']
    #allocation4 [shape = 'u8[512]{0}', space=vmem, size = 0x400, scoped, tag = 'input window, operand 26, single buffered']
    #allocation5 [shape = 's32[1]{0}', space=sflag, size = 0x4, scoped, tag = 'scoped memory for switti_forward.7']
    %32 = vsyncpa [#allocation3], 0
    %33 = vsyncpa [#allocation5], 0
    loop: start=0, step=1, limit=4
    $region2: #{switti_forward.7} parent=1 // loop_pre_header
      _
    $region3: #{switti_forward.7} parent=1 // loop_header
      %s35 = sphi 0, %s39
      %p36 = scmp.ge.s32.totalorder %s35, 4
      %s45 = sphi 0, %s47
      %s48 = sphi 0, %s45
      %s49 = sphi 0, %s48
      %s65 = sphi 0, %s49
      %s71 = sphi 0, %s73
      %s74 = sphi 0, %s71
      %s75 = sphi 0, %s74
      %s91 = sphi 0, %s75
      %s97 = sphi 0, %s99
      %s100 = sphi 0, %s97
      %s101 = sphi 0, %s100
      %s117 = sphi 0, %s101
      %s123 = sphi 0, %s125
      %s126 = sphi 0, %s123
      %s127 = sphi 0, %s126
      %s143 = sphi 0, %s127
      %s149 = sphi 0, %s151
      %s152 = sphi 0, %s149
      %s153 = sphi 0, %s152
      %s169 = sphi 0, %s153
      %s173 = sphi 0, %s173
      %s175 = sphi 0, %s173
      %s176 = sphi 0, %s175
      %s190 = sphi 0, %s176
      %s194 = sphi 0, %s194
      %s196 = sphi 0, %s194
      %s197 = sphi 0, %s196
      %s211 = sphi 0, %s197
      %s215 = sphi 0, %s215
      %s217 = sphi 0, %s215
      %s218 = sphi 0, %s217
      %s232 = sphi 0, %s218
      %s236 = sphi 0, %s236
      %s238 = sphi 0, %s236
      %s239 = sphi 0, %s238
      %s253 = sphi 0, %s239
      %s257 = sphi 0, %s257
      %s259 = sphi 0, %s257
      %s260 = sphi 0, %s259
      %s274 = sphi 0, %s260
      %s278 = sphi 0, %s278
      %s280 = sphi 0, %s278
      %s281 = sphi 0, %s280
      %s295 = sphi 0, %s281
      %s299 = sphi 0, %s299
      %s301 = sphi 0, %s299
      %s302 = sphi 0, %s301
      %s316 = sphi 0, %s302
      %s320 = sphi 0, %s320
      %s322 = sphi 0, %s320
      %s323 = sphi 0, %s322
      %s337 = sphi 0, %s323
      %s341 = sphi 0, %s341
      %s343 = sphi 0, %s341
      %s344 = sphi 0, %s343
      %s358 = sphi 0, %s344
      %s362 = sphi 0, %s362
      %s364 = sphi 0, %s362
      %s365 = sphi 0, %s364
      %s379 = sphi 0, %s365
      %s383 = sphi 0, %s383
      %s385 = sphi 0, %s383
      %s386 = sphi 0, %s385
      %s400 = sphi 0, %s386
      %s404 = sphi 0, %s404
      %s406 = sphi 0, %s404
      %s407 = sphi 0, %s406
      %s421 = sphi 0, %s407
      %s425 = sphi 0, %s425
      %s427 = sphi 0, %s425
      %s428 = sphi 0, %s427
      %s442 = sphi 0, %s428
      %s446 = sphi 0, %s446
      %s448 = sphi 0, %s446
      %s449 = sphi 0, %s448
      %s463 = sphi 0, %s449
      %s467 = sphi 0, %s467
      %s469 = sphi 0, %s467
      %s470 = sphi 0, %s469
      %s484 = sphi 0, %s470
      %s488 = sphi 0, %s488
      %s490 = sphi 0, %s488
      %s491 = sphi 0, %s490
      %s505 = sphi 0, %s491
      %s509 = sphi 0, %s509
      %s511 = sphi 0, %s509
      %s512 = sphi 0, %s511
      %s526 = sphi 0, %s512
      %s530 = sphi 0, %s530
      %s532 = sphi 0, %s530
      %s533 = sphi 0, %s532
      %s547 = sphi 0, %s533
      %s551 = sphi 0, %s551
      %s553 = sphi 0, %s551
      %s554 = sphi 0, %s553
      %s568 = sphi 0, %s554
      %s572 = sphi 0, %s572
      %s574 = sphi 0, %s572
      %s575 = sphi 0, %s574
      %s589 = sphi 0, %s575
      %s593 = sphi 0, %s593
      %s595 = sphi 0, %s593
      %s596 = sphi 0, %s595
      %s610 = sphi 0, %s596
      %s614 = sphi 0, %s614
      %s616 = sphi 0, %s614
      %s617 = sphi 0, %s616
      %s631 = sphi 0, %s617
      %s637 = sphi 0, %s639
      %s640 = sphi 0, %s637
      %s641 = sphi 0, %s640
      %s657 = sphi 0, %s641
    $region4: #{switti_forward.7} parent=1 // loop_header_branch
      %38 = sbr.rel (%p36) target = $region8
    $region5: #{switti_forward.7} parent=1 // loop_body
      %s40 = ssub.s32 %s35, 1
      %s41 = ssub.s32 %s35, 2
      %s42 = sadd.s32 %s35, 1
      %s43 = ssub.s32 %s35, %s42
      %p44 = scmp.eq.s32.totalorder %s43, 0
      %s46 = sadd.s32 %s45, 1
      %s47 = scalar_select %p44, %s45, %s46
      %p50 = pneg %p44
      %p51 = scmp.eq.s32.totalorder %s35, 1
      %p52 = por %p50, %p51
      %p53 = scmp.ne.s32.totalorder %s45, %s48
      %p54 = scmp.eq.s32.totalorder %s35, 0
      %p55 = por %p53, %p54
      %p56 = scmp.ne.s32.totalorder %s45, %s48
      %p57 = scmp.eq.s32.totalorder %s40, 1
      %p58 = por %p56, %p57
      %p59 = scmp.ne.s32.totalorder %s48, %s49
      %p60 = scmp.eq.s32.totalorder %s40, 0
      %p61 = por %p59, %p60
      %p62 = scmp.ne.s32.totalorder %s48, %s49
      %p63 = scmp.eq.s32.totalorder %s41, 1
      %p64 = por %p62, %p63
      %p66 = scmp.ne.s32.totalorder %s49, %s65
      %p67 = scmp.eq.s32.totalorder %s41, 0
      %p68 = por %p66, %p67
      %s69 = ssub.s32 %s35, %s42
      %p70 = scmp.eq.s32.totalorder %s69, 0
      %s72 = sadd.s32 %s71, 1
      %s73 = scalar_select %p70, %s71, %s72
      %p76 = pneg %p70
      %p77 = scmp.eq.s32.totalorder %s35, 1
      %p78 = por %p76, %p77
      %p79 = scmp.ne.s32.totalorder %s71, %s74
      %p80 = scmp.eq.s32.totalorder %s35, 0
      %p81 = por %p79, %p80
      %p82 = scmp.ne.s32.totalorder %s71, %s74
      %p83 = scmp.eq.s32.totalorder %s40, 1
      %p84 = por %p82, %p83
      %p85 = scmp.ne.s32.totalorder %s74, %s75
      %p86 = scmp.eq.s32.totalorder %s40, 0
      %p87 = por %p85, %p86
      %p88 = scmp.ne.s32.totalorder %s74, %s75
      %p89 = scmp.eq.s32.totalorder %s41, 1
      %p90 = por %p88, %p89
      %p92 = scmp.ne.s32.totalorder %s75, %s91
      %p93 = scmp.eq.s32.totalorder %s41, 0
      %p94 = por %p92, %p93
      %s95 = ssub.s32 %s35, %s42
      %p96 = scmp.eq.s32.totalorder %s95, 0
      %s98 = sadd.s32 %s97, 1
      %s99 = scalar_select %p96, %s97, %s98
      %p102 = pneg %p96
      %p103 = scmp.eq.s32.totalorder %s35, 1
      %p104 = por %p102, %p103
      %p105 = scmp.ne.s32.totalorder %s97, %s100
      %p106 = scmp.eq.s32.totalorder %s35, 0
      %p107 = por %p105, %p106
      %p108 = scmp.ne.s32.totalorder %s97, %s100
      %p109 = scmp.eq.s32.totalorder %s40, 1
      %p110 = por %p108, %p109
      %p111 = scmp.ne.s32.totalorder %s100, %s101
      %p112 = scmp.eq.s32.totalorder %s40, 0
      %p113 = por %p111, %p112
      %p114 = scmp.ne.s32.totalorder %s100, %s101
      %p115 = scmp.eq.s32.totalorder %s41, 1
      %p116 = por %p114, %p115
      %p118 = scmp.ne.s32.totalorder %s101, %s117
      %p119 = scmp.eq.s32.totalorder %s41, 0
      %p120 = por %p118, %p119
      %s121 = ssub.s32 %s35, %s42
      %p122 = scmp.eq.s32.totalorder %s121, 0
      %s124 = sadd.s32 %s123, 1
      %s125 = scalar_select %p122, %s123, %s124
      %p128 = pneg %p122
      %p129 = scmp.eq.s32.totalorder %s35, 1
      %p130 = por %p128, %p129
      %p131 = scmp.ne.s32.totalorder %s123, %s126
      %p132 = scmp.eq.s32.totalorder %s35, 0
      %p133 = por %p131, %p132
      %p134 = scmp.ne.s32.totalorder %s123, %s126
      %p135 = scmp.eq.s32.totalorder %s40, 1
      %p136 = por %p134, %p135
      %p137 = scmp.ne.s32.totalorder %s126, %s127
      %p138 = scmp.eq.s32.totalorder %s40, 0
      %p139 = por %p137, %p138
      %p140 = scmp.ne.s32.totalorder %s126, %s127
      %p141 = scmp.eq.s32.totalorder %s41, 1
      %p142 = por %p140, %p141
      %p144 = scmp.ne.s32.totalorder %s127, %s143
      %p145 = scmp.eq.s32.totalorder %s41, 0
      %p146 = por %p144, %p145
      %s147 = ssub.s32 %s35, %s42
      %p148 = scmp.eq.s32.totalorder %s147, 0
      %s150 = sadd.s32 %s149, 1
      %s151 = scalar_select %p148, %s149, %s150
      %p154 = pneg %p148
      %p155 = scmp.eq.s32.totalorder %s35, 1
      %p156 = por %p154, %p155
      %p157 = scmp.ne.s32.totalorder %s149, %s152
      %p158 = scmp.eq.s32.totalorder %s35, 0
      %p159 = por %p157, %p158
      %p160 = scmp.ne.s32.totalorder %s149, %s152
      %p161 = scmp.eq.s32.totalorder %s40, 1
      %p162 = por %p160, %p161
      %p163 = scmp.ne.s32.totalorder %s152, %s153
      %p164 = scmp.eq.s32.totalorder %s40, 0
      %p165 = por %p163, %p164
      %p166 = scmp.ne.s32.totalorder %s152, %s153
      %p167 = scmp.eq.s32.totalorder %s41, 1
      %p168 = por %p166, %p167
      %p170 = scmp.ne.s32.totalorder %s153, %s169
      %p171 = scmp.eq.s32.totalorder %s41, 0
      %p172 = por %p170, %p171
      %s174 = sadd.s32 %s173, 1
      %p177 = scmp.eq.s32.totalorder %s35, 1
      %p178 = scmp.ne.s32.totalorder %s173, %s175
      %p179 = scmp.eq.s32.totalorder %s35, 0
      %p180 = por %p178, %p179
      %p181 = scmp.ne.s32.totalorder %s173, %s175
      %p182 = scmp.eq.s32.totalorder %s40, 1
      %p183 = por %p181, %p182
      %p184 = scmp.ne.s32.totalorder %s175, %s176
      %p185 = scmp.eq.s32.totalorder %s40, 0
      %p186 = por %p184, %p185
      %p187 = scmp.ne.s32.totalorder %s175, %s176
      %p188 = scmp.eq.s32.totalorder %s41, 1
      %p189 = por %p187, %p188
      %p191 = scmp.ne.s32.totalorder %s176, %s190
      %p192 = scmp.eq.s32.totalorder %s41, 0
      %p193 = por %p191, %p192
      %s195 = sadd.s32 %s194, 1
      %p198 = scmp.eq.s32.totalorder %s35, 1
      %p199 = scmp.ne.s32.totalorder %s194, %s196
      %p200 = scmp.eq.s32.totalorder %s35, 0
      %p201 = por %p199, %p200
      %p202 = scmp.ne.s32.totalorder %s194, %s196
      %p203 = scmp.eq.s32.totalorder %s40, 1
      %p204 = por %p202, %p203
      %p205 = scmp.ne.s32.totalorder %s196, %s197
      %p206 = scmp.eq.s32.totalorder %s40, 0
      %p207 = por %p205, %p206
      %p208 = scmp.ne.s32.totalorder %s196, %s197
      %p209 = scmp.eq.s32.totalorder %s41, 1
      %p210 = por %p208, %p209
      %p212 = scmp.ne.s32.totalorder %s197, %s211
      %p213 = scmp.eq.s32.totalorder %s41, 0
      %p214 = por %p212, %p213
      %s216 = sadd.s32 %s215, 1
      %p219 = scmp.eq.s32.totalorder %s35, 1
      %p220 = scmp.ne.s32.totalorder %s215, %s217
      %p221 = scmp.eq.s32.totalorder %s35, 0
      %p222 = por %p220, %p221
      %p223 = scmp.ne.s32.totalorder %s215, %s217
      %p224 = scmp.eq.s32.totalorder %s40, 1
      %p225 = por %p223, %p224
      %p226 = scmp.ne.s32.totalorder %s217, %s218
      %p227 = scmp.eq.s32.totalorder %s40, 0
      %p228 = por %p226, %p227
      %p229 = scmp.ne.s32.totalorder %s217, %s218
      %p230 = scmp.eq.s32.totalorder %s41, 1
      %p231 = por %p229, %p230
      %p233 = scmp.ne.s32.totalorder %s218, %s232
      %p234 = scmp.eq.s32.totalorder %s41, 0
      %p235 = por %p233, %p234
      %s237 = sadd.s32 %s236, 1
      %p240 = scmp.eq.s32.totalorder %s35, 1
      %p241 = scmp.ne.s32.totalorder %s236, %s238
      %p242 = scmp.eq.s32.totalorder %s35, 0
      %p243 = por %p241, %p242
      %p244 = scmp.ne.s32.totalorder %s236, %s238
      %p245 = scmp.eq.s32.totalorder %s40, 1
      %p246 = por %p244, %p245
      %p247 = scmp.ne.s32.totalorder %s238, %s239
      %p248 = scmp.eq.s32.totalorder %s40, 0
      %p249 = por %p247, %p248
      %p250 = scmp.ne.s32.totalorder %s238, %s239
      %p251 = scmp.eq.s32.totalorder %s41, 1
      %p252 = por %p250, %p251
      %p254 = scmp.ne.s32.totalorder %s239, %s253
      %p255 = scmp.eq.s32.totalorder %s41, 0
      %p256 = por %p254, %p255
      %s258 = sadd.s32 %s257, 1
      %p261 = scmp.eq.s32.totalorder %s35, 1
      %p262 = scmp.ne.s32.totalorder %s257, %s259
      %p263 = scmp.eq.s32.totalorder %s35, 0
      %p264 = por %p262, %p263
      %p265 = scmp.ne.s32.totalorder %s257, %s259
      %p266 = scmp.eq.s32.totalorder %s40, 1
      %p267 = por %p265, %p266
      %p268 = scmp.ne.s32.totalorder %s259, %s260
      %p269 = scmp.eq.s32.totalorder %s40, 0
      %p270 = por %p268, %p269
      %p271 = scmp.ne.s32.totalorder %s259, %s260
      %p272 = scmp.eq.s32.totalorder %s41, 1
      %p273 = por %p271, %p272
      %p275 = scmp.ne.s32.totalorder %s260, %s274
      %p276 = scmp.eq.s32.totalorder %s41, 0
      %p277 = por %p275, %p276
      %s279 = sadd.s32 %s278, 1
      %p282 = scmp.eq.s32.totalorder %s35, 1
      %p283 = scmp.ne.s32.totalorder %s278, %s280
      %p284 = scmp.eq.s32.totalorder %s35, 0
      %p285 = por %p283, %p284
      %p286 = scmp.ne.s32.totalorder %s278, %s280
      %p287 = scmp.eq.s32.totalorder %s40, 1
      %p288 = por %p286, %p287
      %p289 = scmp.ne.s32.totalorder %s280, %s281
      %p290 = scmp.eq.s32.totalorder %s40, 0
      %p291 = por %p289, %p290
      %p292 = scmp.ne.s32.totalorder %s280, %s281
      %p293 = scmp.eq.s32.totalorder %s41, 1
      %p294 = por %p292, %p293
      %p296 = scmp.ne.s32.totalorder %s281, %s295
      %p297 = scmp.eq.s32.totalorder %s41, 0
      %p298 = por %p296, %p297
      %s300 = sadd.s32 %s299, 1
      %p303 = scmp.eq.s32.totalorder %s35, 1
      %p304 = scmp.ne.s32.totalorder %s299, %s301
      %p305 = scmp.eq.s32.totalorder %s35, 0
      %p306 = por %p304, %p305
      %p307 = scmp.ne.s32.totalorder %s299, %s301
      %p308 = scmp.eq.s32.totalorder %s40, 1
      %p309 = por %p307, %p308
      %p310 = scmp.ne.s32.totalorder %s301, %s302
      %p311 = scmp.eq.s32.totalorder %s40, 0
      %p312 = por %p310, %p311
      %p313 = scmp.ne.s32.totalorder %s301, %s302
      %p314 = scmp.eq.s32.totalorder %s41, 1
      %p315 = por %p313, %p314
      %p317 = scmp.ne.s32.totalorder %s302, %s316
      %p318 = scmp.eq.s32.totalorder %s41, 0
      %p319 = por %p317, %p318
      %s321 = sadd.s32 %s320, 1
      %p324 = scmp.eq.s32.totalorder %s35, 1
      %p325 = scmp.ne.s32.totalorder %s320, %s322
      %p326 = scmp.eq.s32.totalorder %s35, 0
      %p327 = por %p325, %p326
      %p328 = scmp.ne.s32.totalorder %s320, %s322
      %p329 = scmp.eq.s32.totalorder %s40, 1
      %p330 = por %p328, %p329
      %p331 = scmp.ne.s32.totalorder %s322, %s323
      %p332 = scmp.eq.s32.totalorder %s40, 0
      %p333 = por %p331, %p332
      %p334 = scmp.ne.s32.totalorder %s322, %s323
      %p335 = scmp.eq.s32.totalorder %s41, 1
      %p336 = por %p334, %p335
      %p338 = scmp.ne.s32.totalorder %s323, %s337
      %p339 = scmp.eq.s32.totalorder %s41, 0
      %p340 = por %p338, %p339
      %s342 = sadd.s32 %s341, 1
      %p345 = scmp.eq.s32.totalorder %s35, 1
      %p346 = scmp.ne.s32.totalorder %s341, %s343
      %p347 = scmp.eq.s32.totalorder %s35, 0
      %p348 = por %p346, %p347
      %p349 = scmp.ne.s32.totalorder %s341, %s343
      %p350 = scmp.eq.s32.totalorder %s40, 1
      %p351 = por %p349, %p350
      %p352 = scmp.ne.s32.totalorder %s343, %s344
      %p353 = scmp.eq.s32.totalorder %s40, 0
      %p354 = por %p352, %p353
      %p355 = scmp.ne.s32.totalorder %s343, %s344
      %p356 = scmp.eq.s32.totalorder %s41, 1
      %p357 = por %p355, %p356
      %p359 = scmp.ne.s32.totalorder %s344, %s358
      %p360 = scmp.eq.s32.totalorder %s41, 0
      %p361 = por %p359, %p360
      %s363 = sadd.s32 %s362, 1
      %p366 = scmp.eq.s32.totalorder %s35, 1
      %p367 = scmp.ne.s32.totalorder %s362, %s364
      %p368 = scmp.eq.s32.totalorder %s35, 0
      %p369 = por %p367, %p368
      %p370 = scmp.ne.s32.totalorder %s362, %s364
      %p371 = scmp.eq.s32.totalorder %s40, 1
      %p372 = por %p370, %p371
      %p373 = scmp.ne.s32.totalorder %s364, %s365
      %p374 = scmp.eq.s32.totalorder %s40, 0
      %p375 = por %p373, %p374
      %p376 = scmp.ne.s32.totalorder %s364, %s365
      %p377 = scmp.eq.s32.totalorder %s41, 1
      %p378 = por %p376, %p377
      %p380 = scmp.ne.s32.totalorder %s365, %s379
      %p381 = scmp.eq.s32.totalorder %s41, 0
      %p382 = por %p380, %p381
      %s384 = sadd.s32 %s383, 1
      %p387 = scmp.eq.s32.totalorder %s35, 1
      %p388 = scmp.ne.s32.totalorder %s383, %s385
      %p389 = scmp.eq.s32.totalorder %s35, 0
      %p390 = por %p388, %p389
      %p391 = scmp.ne.s32.totalorder %s383, %s385
      %p392 = scmp.eq.s32.totalorder %s40, 1
      %p393 = por %p391, %p392
      %p394 = scmp.ne.s32.totalorder %s385, %s386
      %p395 = scmp.eq.s32.totalorder %s40, 0
      %p396 = por %p394, %p395
      %p397 = scmp.ne.s32.totalorder %s385, %s386
      %p398 = scmp.eq.s32.totalorder %s41, 1
      %p399 = por %p397, %p398
      %p401 = scmp.ne.s32.totalorder %s386, %s400
      %p402 = scmp.eq.s32.totalorder %s41, 0
      %p403 = por %p401, %p402
      %s405 = sadd.s32 %s404, 1
      %p408 = scmp.eq.s32.totalorder %s35, 1
      %p409 = scmp.ne.s32.totalorder %s404, %s406
      %p410 = scmp.eq.s32.totalorder %s35, 0
      %p411 = por %p409, %p410
      %p412 = scmp.ne.s32.totalorder %s404, %s406
      %p413 = scmp.eq.s32.totalorder %s40, 1
      %p414 = por %p412, %p413
      %p415 = scmp.ne.s32.totalorder %s406, %s407
      %p416 = scmp.eq.s32.totalorder %s40, 0
      %p417 = por %p415, %p416
      %p418 = scmp.ne.s32.totalorder %s406, %s407
      %p419 = scmp.eq.s32.totalorder %s41, 1
      %p420 = por %p418, %p419
      %p422 = scmp.ne.s32.totalorder %s407, %s421
      %p423 = scmp.eq.s32.totalorder %s41, 0
      %p424 = por %p422, %p423
      %s426 = sadd.s32 %s425, 1
      %p429 = scmp.eq.s32.totalorder %s35, 1
      %p430 = scmp.ne.s32.totalorder %s425, %s427
      %p431 = scmp.eq.s32.totalorder %s35, 0
      %p432 = por %p430, %p431
      %p433 = scmp.ne.s32.totalorder %s425, %s427
      %p434 = scmp.eq.s32.totalorder %s40, 1
      %p435 = por %p433, %p434
      %p436 = scmp.ne.s32.totalorder %s427, %s428
      %p437 = scmp.eq.s32.totalorder %s40, 0
      %p438 = por %p436, %p437
      %p439 = scmp.ne.s32.totalorder %s427, %s428
      %p440 = scmp.eq.s32.totalorder %s41, 1
      %p441 = por %p439, %p440
      %p443 = scmp.ne.s32.totalorder %s428, %s442
      %p444 = scmp.eq.s32.totalorder %s41, 0
      %p445 = por %p443, %p444
      %s447 = sadd.s32 %s446, 1
      %p450 = scmp.eq.s32.totalorder %s35, 1
      %p451 = scmp.ne.s32.totalorder %s446, %s448
      %p452 = scmp.eq.s32.totalorder %s35, 0
      %p453 = por %p451, %p452
      %p454 = scmp.ne.s32.totalorder %s446, %s448
      %p455 = scmp.eq.s32.totalorder %s40, 1
      %p456 = por %p454, %p455
      %p457 = scmp.ne.s32.totalorder %s448, %s449
      %p458 = scmp.eq.s32.totalorder %s40, 0
      %p459 = por %p457, %p458
      %p460 = scmp.ne.s32.totalorder %s448, %s449
      %p461 = scmp.eq.s32.totalorder %s41, 1
      %p462 = por %p460, %p461
      %p464 = scmp.ne.s32.totalorder %s449, %s463
      %p465 = scmp.eq.s32.totalorder %s41, 0
      %p466 = por %p464, %p465
      %s468 = sadd.s32 %s467, 1
      %p471 = scmp.eq.s32.totalorder %s35, 1
      %p472 = scmp.ne.s32.totalorder %s467, %s469
      %p473 = scmp.eq.s32.totalorder %s35, 0
      %p474 = por %p472, %p473
      %p475 = scmp.ne.s32.totalorder %s467, %s469
      %p476 = scmp.eq.s32.totalorder %s40, 1
      %p477 = por %p475, %p476
      %p478 = scmp.ne.s32.totalorder %s469, %s470
      %p479 = scmp.eq.s32.totalorder %s40, 0
      %p480 = por %p478, %p479
      %p481 = scmp.ne.s32.totalorder %s469, %s470
      %p482 = scmp.eq.s32.totalorder %s41, 1
      %p483 = por %p481, %p482
      %p485 = scmp.ne.s32.totalorder %s470, %s484
      %p486 = scmp.eq.s32.totalorder %s41, 0
      %p487 = por %p485, %p486
      %s489 = sadd.s32 %s488, 1
      %p492 = scmp.eq.s32.totalorder %s35, 1
      %p493 = scmp.ne.s32.totalorder %s488, %s490
      %p494 = scmp.eq.s32.totalorder %s35, 0
      %p495 = por %p493, %p494
      %p496 = scmp.ne.s32.totalorder %s488, %s490
      %p497 = scmp.eq.s32.totalorder %s40, 1
      %p498 = por %p496, %p497
      %p499 = scmp.ne.s32.totalorder %s490, %s491
      %p500 = scmp.eq.s32.totalorder %s40, 0
      %p501 = por %p499, %p500
      %p502 = scmp.ne.s32.totalorder %s490, %s491
      %p503 = scmp.eq.s32.totalorder %s41, 1
      %p504 = por %p502, %p503
      %p506 = scmp.ne.s32.totalorder %s491, %s505
      %p507 = scmp.eq.s32.totalorder %s41, 0
      %p508 = por %p506, %p507
      %s510 = sadd.s32 %s509, 1
      %p513 = scmp.eq.s32.totalorder %s35, 1
      %p514 = scmp.ne.s32.totalorder %s509, %s511
      %p515 = scmp.eq.s32.totalorder %s35, 0
      %p516 = por %p514, %p515
      %p517 = scmp.ne.s32.totalorder %s509, %s511
      %p518 = scmp.eq.s32.totalorder %s40, 1
      %p519 = por %p517, %p518
      %p520 = scmp.ne.s32.totalorder %s511, %s512
      %p521 = scmp.eq.s32.totalorder %s40, 0
      %p522 = por %p520, %p521
      %p523 = scmp.ne.s32.totalorder %s511, %s512
      %p524 = scmp.eq.s32.totalorder %s41, 1
      %p525 = por %p523, %p524
      %p527 = scmp.ne.s32.totalorder %s512, %s526
      %p528 = scmp.eq.s32.totalorder %s41, 0
      %p529 = por %p527, %p528
      %s531 = sadd.s32 %s530, 1
      %p534 = scmp.eq.s32.totalorder %s35, 1
      %p535 = scmp.ne.s32.totalorder %s530, %s532
      %p536 = scmp.eq.s32.totalorder %s35, 0
      %p537 = por %p535, %p536
      %p538 = scmp.ne.s32.totalorder %s530, %s532
      %p539 = scmp.eq.s32.totalorder %s40, 1
      %p540 = por %p538, %p539
      %p541 = scmp.ne.s32.totalorder %s532, %s533
      %p542 = scmp.eq.s32.totalorder %s40, 0
      %p543 = por %p541, %p542
      %p544 = scmp.ne.s32.totalorder %s532, %s533
      %p545 = scmp.eq.s32.totalorder %s41, 1
      %p546 = por %p544, %p545
      %p548 = scmp.ne.s32.totalorder %s533, %s547
      %p549 = scmp.eq.s32.totalorder %s41, 0
      %p550 = por %p548, %p549
      %s552 = sadd.s32 %s551, 1
      %p555 = scmp.eq.s32.totalorder %s35, 1
      %p556 = scmp.ne.s32.totalorder %s551, %s553
      %p557 = scmp.eq.s32.totalorder %s35, 0
      %p558 = por %p556, %p557
      %p559 = scmp.ne.s32.totalorder %s551, %s553
      %p560 = scmp.eq.s32.totalorder %s40, 1
      %p561 = por %p559, %p560
      %p562 = scmp.ne.s32.totalorder %s553, %s554
      %p563 = scmp.eq.s32.totalorder %s40, 0
      %p564 = por %p562, %p563
      %p565 = scmp.ne.s32.totalorder %s553, %s554
      %p566 = scmp.eq.s32.totalorder %s41, 1
      %p567 = por %p565, %p566
      %p569 = scmp.ne.s32.totalorder %s554, %s568
      %p570 = scmp.eq.s32.totalorder %s41, 0
      %p571 = por %p569, %p570
      %s573 = sadd.s32 %s572, 1
      %p576 = scmp.eq.s32.totalorder %s35, 1
      %p577 = scmp.ne.s32.totalorder %s572, %s574
      %p578 = scmp.eq.s32.totalorder %s35, 0
      %p579 = por %p577, %p578
      %p580 = scmp.ne.s32.totalorder %s572, %s574
      %p581 = scmp.eq.s32.totalorder %s40, 1
      %p582 = por %p580, %p581
      %p583 = scmp.ne.s32.totalorder %s574, %s575
      %p584 = scmp.eq.s32.totalorder %s40, 0
      %p585 = por %p583, %p584
      %p586 = scmp.ne.s32.totalorder %s574, %s575
      %p587 = scmp.eq.s32.totalorder %s41, 1
      %p588 = por %p586, %p587
      %p590 = scmp.ne.s32.totalorder %s575, %s589
      %p591 = scmp.eq.s32.totalorder %s41, 0
      %p592 = por %p590, %p591
      %s594 = sadd.s32 %s593, 1
      %p597 = scmp.eq.s32.totalorder %s35, 1
      %p598 = scmp.ne.s32.totalorder %s593, %s595
      %p599 = scmp.eq.s32.totalorder %s35, 0
      %p600 = por %p598, %p599
      %p601 = scmp.ne.s32.totalorder %s593, %s595
      %p602 = scmp.eq.s32.totalorder %s40, 1
      %p603 = por %p601, %p602
      %p604 = scmp.ne.s32.totalorder %s595, %s596
      %p605 = scmp.eq.s32.totalorder %s40, 0
      %p606 = por %p604, %p605
      %p607 = scmp.ne.s32.totalorder %s595, %s596
      %p608 = scmp.eq.s32.totalorder %s41, 1
      %p609 = por %p607, %p608
      %p611 = scmp.ne.s32.totalorder %s596, %s610
      %p612 = scmp.eq.s32.totalorder %s41, 0
      %p613 = por %p611, %p612
      %s615 = sadd.s32 %s614, 1
      %p618 = scmp.eq.s32.totalorder %s35, 1
      %p619 = scmp.ne.s32.totalorder %s614, %s616
      %p620 = scmp.eq.s32.totalorder %s35, 0
      %p621 = por %p619, %p620
      %p622 = scmp.ne.s32.totalorder %s614, %s616
      %p623 = scmp.eq.s32.totalorder %s40, 1
      %p624 = por %p622, %p623
      %p625 = scmp.ne.s32.totalorder %s616, %s617
      %p626 = scmp.eq.s32.totalorder %s40, 0
      %p627 = por %p625, %p626
      %p628 = scmp.ne.s32.totalorder %s616, %s617
      %p629 = scmp.eq.s32.totalorder %s41, 1
      %p630 = por %p628, %p629
      %p632 = scmp.ne.s32.totalorder %s617, %s631
      %p633 = scmp.eq.s32.totalorder %s41, 0
      %p634 = por %p632, %p633
      %s635 = ssub.s32 %s35, %s42
      %p636 = scmp.eq.s32.totalorder %s635, 0
      %s638 = sadd.s32 %s637, 1
      %s639 = scalar_select %p636, %s637, %s638
      %p642 = pneg %p636
      %p643 = scmp.eq.s32.totalorder %s35, 1
      %p644 = por %p642, %p643
      %p645 = scmp.ne.s32.totalorder %s637, %s640
      %p646 = scmp.eq.s32.totalorder %s35, 0
      %p647 = por %p645, %p646
      %p648 = scmp.ne.s32.totalorder %s637, %s640
      %p649 = scmp.eq.s32.totalorder %s40, 1
      %p650 = por %p648, %p649
      %p651 = scmp.ne.s32.totalorder %s640, %s641
      %p652 = scmp.eq.s32.totalorder %s40, 0
      %p653 = por %p651, %p652
      %p654 = scmp.ne.s32.totalorder %s640, %s641
      %p655 = scmp.eq.s32.totalorder %s41, 1
      %p656 = por %p654, %p655
      %p658 = scmp.ne.s32.totalorder %s641, %s657
      %p659 = scmp.eq.s32.totalorder %s41, 0
      %p660 = por %p658, %p659
      %p661 = scmp.le.s32.totalorder 1, %s35
      %p662 = scmp.lt.s32.totalorder %s35, 3
      %p663 = pnand %p661, %p662
      %p664 = pneg %p663
      // Predicated region
      $region9: #{switti_forward.7} parent=5 // pred_check
        _
      $region10: #{switti_forward.7} parent=5 // pred_check_branch
        %666 = sbr.rel (%p663) target = $region12
      $region11: #{switti_forward.7} parent=5 // pred_region
        %s667 = ssub.s32 %s35, 1
        // Predicated region
        $region13: #{switti_forward.7} parent=11 // pred_check
          %p668 = pneg %p186
        $region14: #{switti_forward.7} parent=11 // pred_check_branch
          %670 = sbr.rel (%p668) target = $region16
        $region15: #{switti_forward.7} parent=11 // pred_region
          _
        $region16: #{switti_forward.7} parent=11 // pred_fallthru
          _
        // Predicated region
        $region17: #{switti_forward.7} parent=11 // pred_check
          %p671 = pneg %p207
        $region18: #{switti_forward.7} parent=11 // pred_check_branch
          %673 = sbr.rel (%p671) target = $region20
        $region19: #{switti_forward.7} parent=11 // pred_region
          _
        $region20: #{switti_forward.7} parent=11 // pred_fallthru
          _
        // Predicated region
        $region21: #{switti_forward.7} parent=11 // pred_check
          %p674 = pneg %p228
        $region22: #{switti_forward.7} parent=11 // pred_check_branch
          %676 = sbr.rel (%p674) target = $region24
        $region23: #{switti_forward.7} parent=11 // pred_region
          _
        $region24: #{switti_forward.7} parent=11 // pred_fallthru
          _
        // Predicated region
        $region25: #{switti_forward.7} parent=11 // pred_check
          %p677 = pneg %p249
        $region26: #{switti_forward.7} parent=11 // pred_check_branch
          %679 = sbr.rel (%p677) target = $region28
        $region27: #{switti_forward.7} parent=11 // pred_region
          _
        $region28: #{switti_forward.7} parent=11 // pred_fallthru
          _
        // Predicated region
        $region29: #{switti_forward.7} parent=11 // pred_check
          %p680 = pneg %p270
        $region30: #{switti_forward.7} parent=11 // pred_check_branch
          %682 = sbr.rel (%p680) target = $region32
        $region31: #{switti_forward.7} parent=11 // pred_region
          _
        $region32: #{switti_forward.7} parent=11 // pred_fallthru
          _
        // Predicated region
        $region33: #{switti_forward.7} parent=11 // pred_check
          %p683 = pneg %p291
        $region34: #{switti_forward.7} parent=11 // pred_check_branch
          %685 = sbr.rel (%p683) target = $region36
        $region35: #{switti_forward.7} parent=11 // pred_region
          _
        $region36: #{switti_forward.7} parent=11 // pred_fallthru
          _
        // Predicated region
        $region37: #{switti_forward.7} parent=11 // pred_check
          %p686 = pneg %p312
        $region38: #{switti_forward.7} parent=11 // pred_check_branch
          %688 = sbr.rel (%p686) target = $region40
        $region39: #{switti_forward.7} parent=11 // pred_region
          _
        $region40: #{switti_forward.7} parent=11 // pred_fallthru
          _
        // Predicated region
        $region41: #{switti_forward.7} parent=11 // pred_check
          %p689 = pneg %p333
        $region42: #{switti_forward.7} parent=11 // pred_check_branch
          %691 = sbr.rel (%p689) target = $region44
        $region43: #{switti_forward.7} parent=11 // pred_region
          _
        $region44: #{switti_forward.7} parent=11 // pred_fallthru
          _
        // Predicated region
        $region45: #{switti_forward.7} parent=11 // pred_check
          %p692 = pneg %p354
        $region46: #{switti_forward.7} parent=11 // pred_check_branch
          %694 = sbr.rel (%p692) target = $region48
        $region47: #{switti_forward.7} parent=11 // pred_region
          _
        $region48: #{switti_forward.7} parent=11 // pred_fallthru
          _
        // Predicated region
        $region49: #{switti_forward.7} parent=11 // pred_check
          %p695 = pneg %p375
        $region50: #{switti_forward.7} parent=11 // pred_check_branch
          %697 = sbr.rel (%p695) target = $region52
        $region51: #{switti_forward.7} parent=11 // pred_region
          _
        $region52: #{switti_forward.7} parent=11 // pred_fallthru
          _
        // Predicated region
        $region53: #{switti_forward.7} parent=11 // pred_check
          %p698 = pneg %p396
        $region54: #{switti_forward.7} parent=11 // pred_check_branch
          %700 = sbr.rel (%p698) target = $region56
        $region55: #{switti_forward.7} parent=11 // pred_region
          _
        $region56: #{switti_forward.7} parent=11 // pred_fallthru
          _
        // Predicated region
        $region57: #{switti_forward.7} parent=11 // pred_check
          %p701 = pneg %p417
        $region58: #{switti_forward.7} parent=11 // pred_check_branch
          %703 = sbr.rel (%p701) target = $region60
        $region59: #{switti_forward.7} parent=11 // pred_region
          _
        $region60: #{switti_forward.7} parent=11 // pred_fallthru
          _
        // Predicated region
        $region61: #{switti_forward.7} parent=11 // pred_check
          %p704 = pneg %p438
        $region62: #{switti_forward.7} parent=11 // pred_check_branch
          %706 = sbr.rel (%p704) target = $region64
        $region63: #{switti_forward.7} parent=11 // pred_region
          _
        $region64: #{switti_forward.7} parent=11 // pred_fallthru
          _
        // Predicated region
        $region65: #{switti_forward.7} parent=11 // pred_check
          %p707 = pneg %p459
        $region66: #{switti_forward.7} parent=11 // pred_check_branch
          %709 = sbr.rel (%p707) target = $region68
        $region67: #{switti_forward.7} parent=11 // pred_region
          _
        $region68: #{switti_forward.7} parent=11 // pred_fallthru
          _
        // Predicated region
        $region69: #{switti_forward.7} parent=11 // pred_check
          %p710 = pneg %p480
        $region70: #{switti_forward.7} parent=11 // pred_check_branch
          %712 = sbr.rel (%p710) target = $region72
        $region71: #{switti_forward.7} parent=11 // pred_region
          _
        $region72: #{switti_forward.7} parent=11 // pred_fallthru
          _
        // Predicated region
        $region73: #{switti_forward.7} parent=11 // pred_check
          %p713 = pneg %p501
        $region74: #{switti_forward.7} parent=11 // pred_check_branch
          %715 = sbr.rel (%p713) target = $region76
        $region75: #{switti_forward.7} parent=11 // pred_region
          _
        $region76: #{switti_forward.7} parent=11 // pred_fallthru
          _
        // Predicated region
        $region77: #{switti_forward.7} parent=11 // pred_check
          %p716 = pneg %p522
        $region78: #{switti_forward.7} parent=11 // pred_check_branch
          %718 = sbr.rel (%p716) target = $region80
        $region79: #{switti_forward.7} parent=11 // pred_region
          _
        $region80: #{switti_forward.7} parent=11 // pred_fallthru
          _
        // Predicated region
        $region81: #{switti_forward.7} parent=11 // pred_check
          %p719 = pneg %p543
        $region82: #{switti_forward.7} parent=11 // pred_check_branch
          %721 = sbr.rel (%p719) target = $region84
        $region83: #{switti_forward.7} parent=11 // pred_region
          %723 = vsyncadd [#allocation3], 0
          %s725 = sshll.u32 %s22, 4
          %s726 = int_to_ptr.hbm [resolvable:$true] %s725
          %s727 = sshll.u32 [#allocation2], 4
          %s728 = int_to_ptr.vmem [resolvable:$true] %s727
          %730 = dma.hbm_to_vmem [thread:$0]  %s726, 16, %s728, [#allocation3]
        $region84: #{switti_forward.7} parent=11 // pred_fallthru
          _
        // Predicated region
        $region85: #{switti_forward.7} parent=11 // pred_check
          %p731 = pneg %p564
        $region86: #{switti_forward.7} parent=11 // pred_check_branch
          %733 = sbr.rel (%p731) target = $region88
        $region87: #{switti_forward.7} parent=11 // pred_region
          _
        $region88: #{switti_forward.7} parent=11 // pred_fallthru
          _
        // Predicated region
        $region89: #{switti_forward.7} parent=11 // pred_check
          %p734 = pneg %p585
        $region90: #{switti_forward.7} parent=11 // pred_check_branch
          %736 = sbr.rel (%p734) target = $region92
        $region91: #{switti_forward.7} parent=11 // pred_region
          _
        $region92: #{switti_forward.7} parent=11 // pred_fallthru
          _
        // Predicated region
        $region93: #{switti_forward.7} parent=11 // pred_check
          %p737 = pneg %p606
        $region94: #{switti_forward.7} parent=11 // pred_check_branch
          %739 = sbr.rel (%p737) target = $region96
        $region95: #{switti_forward.7} parent=11 // pred_region
          _
        $region96: #{switti_forward.7} parent=11 // pred_fallthru
          _
        // Predicated region
        $region97: #{switti_forward.7} parent=11 // pred_check
          %p740 = pneg %p627
        $region98: #{switti_forward.7} parent=11 // pred_check_branch
          %742 = sbr.rel (%p740) target = $region100
        $region99: #{switti_forward.7} parent=11 // pred_region
          %744 = vsyncadd [#allocation5], 0
          %s746 = sshll.u32 %s26, 4
          %s747 = int_to_ptr.hbm [resolvable:$true] %s746
          %s748 = sshll.u32 [#allocation4], 4
          %s749 = int_to_ptr.vmem [resolvable:$true] %s748
          %751 = dma.hbm_to_vmem [thread:$0]  %s747, 16, %s749, [#allocation5]
        $region100: #{switti_forward.7} parent=11 // pred_fallthru
          _
      $region12: #{switti_forward.7} parent=5 // pred_fallthru
        _
      %p752 = scmp.lt.s32.totalorder %s35, 2
      // Predicated region
      $region101: #{switti_forward.7} parent=5 // pred_check
        %p753 = pneg %p752
      $region102: #{switti_forward.7} parent=5 // pred_check_branch
        %755 = sbr.rel (%p753) target = $region104
      $region103: #{switti_forward.7} parent=5 // pred_region
        // Predicated region
        $region105: #{switti_forward.7} parent=103 // pred_check
          %p756 = pneg %p55
        $region106: #{switti_forward.7} parent=103 // pred_check_branch
          %758 = sbr.rel (%p756) target = $region108
        $region107: #{switti_forward.7} parent=103 // pred_region
          %p759 = scmp.lt.s32.totalorder %s35, 1
          %s760 = scalar_select %p759, %s35, 1
          %s761 = smul.addr %s760, 2
          %s762 = smul.addr %s761, 8
          %s763 = scalar_lea.vmem %s0, %s762
        $region108: #{switti_forward.7} parent=103 // pred_fallthru
          _
        // Predicated region
        $region109: #{switti_forward.7} parent=103 // pred_check
          %p764 = pneg %p81
        $region110: #{switti_forward.7} parent=103 // pred_check_branch
          %766 = sbr.rel (%p764) target = $region112
        $region111: #{switti_forward.7} parent=103 // pred_region
          %p767 = scmp.lt.s32.totalorder %s35, 1
          %s768 = scalar_select %p767, %s35, 1
          %s769 = scalar_lea.vmem %s1, %s768
        $region112: #{switti_forward.7} parent=103 // pred_fallthru
          _
        // Predicated region
        $region113: #{switti_forward.7} parent=103 // pred_check
          %p770 = pneg %p107
        $region114: #{switti_forward.7} parent=103 // pred_check_branch
          %772 = sbr.rel (%p770) target = $region116
        $region115: #{switti_forward.7} parent=103 // pred_region
          %p773 = scmp.lt.s32.totalorder %s35, 1
          %s774 = scalar_select %p773, %s35, 1
          %s775 = scalar_lea.vmem %s2, %s774
        $region116: #{switti_forward.7} parent=103 // pred_fallthru
          _
        // Predicated region
        $region117: #{switti_forward.7} parent=103 // pred_check
          %p776 = pneg %p133
        $region118: #{switti_forward.7} parent=103 // pred_check_branch
          %778 = sbr.rel (%p776) target = $region120
        $region119: #{switti_forward.7} parent=103 // pred_region
          %p779 = scmp.lt.s32.totalorder %s35, 1
          %s780 = scalar_select %p779, %s35, 1
          %s781 = smul.addr %s780, 8
          %s782 = scalar_lea.vmem %s3, %s781
        $region120: #{switti_forward.7} parent=103 // pred_fallthru
          _
        // Predicated region
        $region121: #{switti_forward.7} parent=103 // pred_check
          %p783 = pneg %p159
        $region122: #{switti_forward.7} parent=103 // pred_check_branch
          %785 = sbr.rel (%p783) target = $region124
        $region123: #{switti_forward.7} parent=103 // pred_region
          %p786 = scmp.lt.s32.totalorder %s35, 1
          %s787 = scalar_select %p786, %s35, 1
          %s788 = scalar_lea.vmem %s4, %s787
        $region124: #{switti_forward.7} parent=103 // pred_fallthru
          _
      $region104: #{switti_forward.7} parent=5 // pred_fallthru
        _
      %p789 = scmp.le.s32.totalorder 1, %s35
      %p790 = scmp.lt.s32.totalorder %s35, 3
      %p791 = pnand %p789, %p790
      %p792 = pneg %p791
      // Predicated region
      $region125: #{switti_forward.7} parent=5 // pred_check
        _
      $region126: #{switti_forward.7} parent=5 // pred_check_branch
        %794 = sbr.rel (%p791) target = $region128
      $region127: #{switti_forward.7} parent=5 // pred_region
        %s795 = ssub.s32 %s35, 1
        // Predicated region
        $region129: #{switti_forward.7} parent=127 // pred_check
          %p796 = pneg %p543
        $region130: #{switti_forward.7} parent=127 // pred_check_branch
          %798 = sbr.rel (%p796) target = $region132
        $region131: #{switti_forward.7} parent=127 // pred_region
          %800 = dma.done [#allocation3], 16
        $region132: #{switti_forward.7} parent=127 // pred_fallthru
          _
        // Predicated region
        $region133: #{switti_forward.7} parent=127 // pred_check
          %p801 = pneg %p627
        $region134: #{switti_forward.7} parent=127 // pred_check_branch
          %803 = sbr.rel (%p801) target = $region136
        $region135: #{switti_forward.7} parent=127 // pred_region
          %805 = dma.done [#allocation5], 16
        $region136: #{switti_forward.7} parent=127 // pred_fallthru
          _
        %p806 = scmp.lt.s32.totalorder %s40, 1
        %s807 = scalar_select %p806, %s40, 1
        %s808 = smul.addr %s807, 2
        %s809 = smul.addr %s808, 8
        %s810 = scalar_lea.vmem %s0, %s809
        %p811 = pneg %p61
        %p812 = pneg %p58
        %p813 = scmp.lt.s32.totalorder %s40, 1
        %s814 = scalar_select %p813, %s40, 1
        %s815 = scalar_lea.vmem %s1, %s814
        %p816 = pneg %p87
        %p817 = pneg %p84
        %p818 = scmp.lt.s32.totalorder %s40, 1
        %s819 = scalar_select %p818, %s40, 1
        %s820 = scalar_lea.vmem %s2, %s819
        %p821 = pneg %p113
        %p822 = pneg %p110
        %p823 = scmp.lt.s32.totalorder %s40, 1
        %s824 = scalar_select %p823, %s40, 1
        %s825 = smul.addr %s824, 8
        %s826 = scalar_lea.vmem %s3, %s825
        %p827 = pneg %p139
        %p828 = pneg %p136
        %p829 = scmp.lt.s32.totalorder %s40, 1
        %s830 = scalar_select %p829, %s40, 1
        %s831 = scalar_lea.vmem %s4, %s830
        %p832 = pneg %p165
        %p833 = pneg %p162
        %p834 = pneg %p186
        %p835 = pneg %p183
        %p836 = pneg %p207
        %p837 = pneg %p204
        %p838 = pneg %p228
        %p839 = pneg %p225
        %p840 = pneg %p249
        %p841 = pneg %p246
        %p842 = pneg %p270
        %p843 = pneg %p267
        %p844 = pneg %p291
        %p845 = pneg %p288
        %p846 = pneg %p312
        %p847 = pneg %p309
        %p848 = pneg %p333
        %p849 = pneg %p330
        %p850 = pneg %p354
        %p851 = pneg %p351
        %p852 = pneg %p375
        %p853 = pneg %p372
        %p854 = pneg %p396
        %p855 = pneg %p393
        %p856 = pneg %p417
        %p857 = pneg %p414
        %p858 = pneg %p438
        %p859 = pneg %p435
        %p860 = pneg %p459
        %p861 = pneg %p456
        %p862 = pneg %p480
        %p863 = pneg %p477
        %p864 = pneg %p501
        %p865 = pneg %p498
        %p866 = pneg %p522
        %p867 = pneg %p519
        %p868 = pneg %p543
        %p869 = pneg %p540
        %p870 = pneg %p564
        %p871 = pneg %p561
        %p872 = pneg %p585
        %p873 = pneg %p582
        %p874 = pneg %p606
        %p875 = pneg %p603
        %p876 = pneg %p627
        %p877 = pneg %p624
        %p878 = pneg %p653
        %p879 = pneg %p650
        %p880 = scmp.lt.s32.totalorder %s40, 1
        %s881 = scalar_select %p880, %s40, 1
        %s882 = smul.addr %s881, 2
        %s883 = smul.addr %s882, 8
        %s884 = scalar_lea.vmem %s27, %s883
        %p885 = scmp.lt.s32.totalorder %s40, 1
        %s886 = scalar_select %p885, %s40, 1
        %s887 = smul.addr %s886, 2
        %s888 = smul.addr %s887, 8
        %s889 = scalar_lea.vmem %s0, %s888
        %p890 = scmp.lt.s32.totalorder %s40, 1
        %s891 = scalar_select %p890, %s40, 1
        %s892 = scalar_lea.vmem %s1, %s891
        %p893 = scmp.lt.s32.totalorder %s40, 1
        %s894 = scalar_select %p893, %s40, 1
        %s895 = scalar_lea.vmem %s2, %s894
        %p896 = scmp.lt.s32.totalorder %s40, 1
        %s897 = scalar_select %p896, %s40, 1
        %s898 = smul.addr %s897, 8
        %s899 = scalar_lea.vmem %s3, %s898
        %p900 = scmp.lt.s32.totalorder %s40, 1
        %s901 = scalar_select %p900, %s40, 1
        %s902 = scalar_lea.vmem %s4, %s901
        %p903 = scmp.lt.s32.totalorder %s40, 1
        %s904 = scalar_select %p903, %s40, 1
        %s905 = smul.addr %s904, 2
        %s906 = smul.addr %s905, 8
        %s907 = scalar_lea.vmem %s27, %s906
        %v909 = vld [vmem:[%s889] sm:$0xff]
        %v910 = vld [vmem:[%s889 + $0x8] sm:$0xff]
        %v911 = vld [vmem:[%s892] sm:$0x1]
        %v912 = vld [vmem:[%s895] sm:$0x1]
        %v913 = vld [vmem:[%s6] sm:$0xff]
        %v914 = vld [vmem:[%s6 + $0x8] sm:$0xff]
        %v915 = vld [vmem:[%s7] sm:$0xff]
        %v916 = vld [vmem:[%s7 + $0x8] sm:$0xff]
        %v917 = vld [vmem:[%s8] sm:$0xff]
        %v918 = vld [vmem:[%s8 + $0x8] sm:$0xff]
        %v919 = vld [vmem:[%s8 + $0x10] sm:$0xff]
        %v920 = vld [vmem:[%s8 + $0x18] sm:$0xff]
        %v921 = vld [vmem:[%s9] sm:$0xff]
        %v922 = vld [vmem:[%s9 + $0x8] sm:$0xff]
        %v923 = vld [vmem:[%s9 + $0x10] sm:$0xff]
        %v924 = vld [vmem:[%s9 + $0x18] sm:$0xff]
        %v925 = vpack.c.bf16 %v911, %v911
        %v926 = vld [vmem:[%s12] sm:$0xff]
        %v927 = vld [vmem:[%s12 + $0x8] sm:$0xff]
        %v928 = vld [vmem:[%s12 + $0x10] sm:$0xff]
        %v929 = vld [vmem:[%s12 + $0x18] sm:$0xff]
        %v930 = vld [vmem:[%s13] sm:$0x3]
        %v935 = vunpack.c.l.b16 %v926
        %v936 = vunpack.c.h.b16 %v926
        %v937 = vunpack.c.l.b16 %v927
        %v938 = vunpack.c.h.b16 %v927
        %v939 = vunpack.c.l.b16 %v928
        %v940 = vunpack.c.h.b16 %v928
        %v941 = vunpack.c.l.b16 %v929
        %v942 = vunpack.c.h.b16 %v929
        %v943 = vpack.c.b16 %v937, %v935
        %v944 = vpack.c.b16 %v938, %v936
        %v945 = vpack.c.b16 %v941, %v939
        %v946 = vpack.c.b16 %v942, %v940
        %v952 = vperm.slane %v930, 0
        %v953 = vperm.slane %v930, 1
        %vm956 = vcmask 261120
        %v958 = vsel %vm956, %v925, 0
        %960 = vmatpush.bf16.msra.mxu0 0
        %961 = vmatpush.bf16.msra.mxu0 0
        %962 = vmatpush.bf16.msra.mxu0 0
        %963 = vmatpush.bf16.msra.mxu0 0
        %964 = vmatpush.bf16.msra.mxu0 0
        %965 = vmatpush.bf16.msra.mxu0 0
        %966 = vmatpush.bf16.msra.mxu0 %v945
        %967 = vmatpush.bf16.msra.mxu0 %v943
        %968 = vmatmul.bf16.gmra.mxu0 %v958
        %v969 = vpop.f32.mrf.mxu0
        %v970 = vadd.f32 %v952, %v969
        %v971 = vpop.f32.mrf.mxu0
        %972 = vdwg.mxu0
        %973 = vmatpush.bf16.msra.mxu0 0
        %974 = vmatpush.bf16.msra.mxu0 0
        %975 = vmatpush.bf16.msra.mxu0 0
        %976 = vmatpush.bf16.msra.mxu0 0
        %977 = vmatpush.bf16.msra.mxu0 0
        %978 = vmatpush.bf16.msra.mxu0 0
        %979 = vmatpush.bf16.msra.mxu0 %v946
        %980 = vmatpush.bf16.msra.mxu0 %v944
        %981 = vmatmul.bf16.gmra.mxu0 %v958
        %v982 = vpop.f32.mrf.mxu0
        %v983 = vadd.f32 %v953, %v982
        %v984 = vpop.f32.mrf.mxu0
        %985 = vdwg.mxu0
        %v986 = vld [vmem:[%s14] sm:$0x3]
        %v987 = vmul.f32 %v986, %v912
        %v988 = vadd.f32 %v970, %v987
        %990 = vrot.lane.b32.xlu0 %v912, 32
        %v991 = vpop.permute.xlu0 %990
        %v993 = vmul.f32 %v986, %v991
        %v994 = vadd.f32 %v970, %v993
        %995 = vrot.lane.b32.xlu0 %v912, 64
        %v996 = vpop.permute.xlu0 %995
        %v998 = vmul.f32 %v986, %v996
        %v999 = vadd.f32 %v970, %v998
        %1000 = vrot.lane.b32.xlu0 %v912, 96
        %v1001 = vpop.permute.xlu0 %1000
        %v1003 = vmul.f32 %v986, %v1001
        %v1004 = vadd.f32 %v970, %v1003
        %v1006 = vrot.slane %v986, 1
        %v1008 = vmul.f32 %v1006, %v912
        %v1009 = vadd.f32 %v983, %v1008
        %1010 = vrot.lane.b32.xlu0 %v986, 96
        %v1011 = vpop.permute.xlu0 %1010
        %v1012 = vrot.slane %v1011, 1
        %v1014 = vmul.f32 %v1012, %v912
        %v1016 = vperm.slane %v1014, 0
        %1017 = vrot.lane.b32.xlu0 %v1016, 32
        %v1018 = vpop.permute.xlu0 %1017
        %v1020 = vadd.f32 %v983, %v1018
        %v1021 = vsel %vm956, %v909, 0.0
        %1022 = vadd.xlane.f32.xlu0 %v1021
        %v1023 = vpop.xlane.xlu0 %1022
        %v1024 = vsel %vm956, %v910, 0.0
        %1025 = vadd.xlane.f32.xlu0 %v1024
        %v1026 = vpop.xlane.xlu0 %1025
        %v1027 = vrcp.pop 32.0
        %v1028 = vmul.f32 32.0, %v1027
        %v1029 = vsub.f32 1.0, %v1028
        %v1030 = vmul.f32 %v1027, %v1029
        %v1031 = vadd.f32 %v1027, %v1030
        %vm1032 = vweird.f32 %v1027
        %v1033 = vsel %vm1032, %v1027, %v1031
        %v1034 = vmul.f32 %v1023, %v1033
        %v1035 = vmul.f32 %v1026, %v1033
        %v1036 = vsub.f32 %v909, %v1034
        %v1037 = vsub.f32 %v910, %v1035
        %v1038 = vmul.f32 %v1036, %v1036
        %v1039 = vmul.f32 %v1037, %v1037
        %v1040 = vsel %vm956, %v1038, 0.0
        %1041 = vadd.xlane.f32.xlu0 %v1040
        %v1042 = vpop.xlane.xlu0 %1041
        %v1043 = vsel %vm956, %v1039, 0.0
        %1044 = vadd.xlane.f32.xlu0 %v1043
        %v1045 = vpop.xlane.xlu0 %1044
        %v1046 = vmul.f32 %v1042, %v1033
        %v1047 = vmul.f32 %v1045, %v1033
        %v1048 = vadd.f32 %v1046, 1e-06
        %v1049 = vadd.f32 %v1047, 1e-06
        %v1050 = vrsqrt.pop %v1048
        %v1051 = vmul.f32 %v1050, %v1048
        %v1052 = vmul.f32 %v1051, %v1050
        %v1053 = vmul.f32 0.5, %v1052
        %v1054 = vsub.f32 1.5, %v1053
        %v1055 = vmul.f32 %v1050, %v1054
        %vm1056 = vweird.f32 %v1048
        %vm1057 = vweird.f32 %v1050
        %vm1058 = vmor %vm1056, %vm1057
        %v1059 = vsel %vm1058, %v1050, %v1055
        %v1060 = vrsqrt.pop %v1049
        %v1061 = vmul.f32 %v1060, %v1049
        %v1062 = vmul.f32 %v1061, %v1060
        %v1063 = vmul.f32 0.5, %v1062
        %v1064 = vsub.f32 1.5, %v1063
        %v1065 = vmul.f32 %v1060, %v1064
        %vm1066 = vweird.f32 %v1049
        %vm1067 = vweird.f32 %v1060
        %vm1068 = vmor %vm1066, %vm1067
        %v1069 = vsel %vm1068, %v1060, %v1065
        %v1070 = vmul.f32 %v1036, %v1059
        %v1071 = vmul.f32 %v1037, %v1069
        %v1072 = vadd.f32 %v999, 1.0
        %v1073 = vperm.slane %v1072, 0
        %1075 = vrot.lane.b32.xlu0 %v1073, 64
        %v1076 = vpop.permute.xlu0 %1075
        %v1078 = vmul.f32 %v1070, %v1076
        %v1079 = vmul.f32 %v1071, %v1076
        %v1080 = vperm.slane %v1009, 0
        %v1081 = vadd.f32 %v1078, %v1080
        %v1082 = vadd.f32 %v1079, %v1080
        %v1083 = vpack.c.bf16 %v1082, %v1081
        %v1084 = vld [vmem:[%s15] sm:$0xf]
        %v1085 = vld [vmem:[%s15 + $0x4] sm:$0xf]
        %v1086 = vld [vmem:[%s15 + $0x8] sm:$0xf]
        %v1087 = vld [vmem:[%s15 + $0xc] sm:$0xf]
        %v1088 = vld [vmem:[%s16] sm:$0x1]
        %v1090 = vperm.slane %v1088, 0
        %v1096 = vunpack.c.l.b16 %v1084
        %v1097 = vunpack.c.l.b16 %v1085
        %v1098 = vunpack.c.l.b16 %v1086
        %v1099 = vunpack.c.l.b16 %v1087
        %v1100 = vpack.c.b16 %v1097, %v1096
        %v1101 = vpack.c.b16 %v1099, %v1098
        %v1105 = vsel %vm956, %v1083, 0
        %1107 = vmatpush.bf16.msra.mxu0 0
        %1108 = vmatpush.bf16.msra.mxu0 0
        %1109 = vmatpush.bf16.msra.mxu0 0
        %1110 = vmatpush.bf16.msra.mxu0 0
        %1111 = vmatpush.bf16.msra.mxu0 0
        %1112 = vmatpush.bf16.msra.mxu0 0
        %1113 = vmatpush.bf16.msra.mxu0 %v1101
        %1114 = vmatpush.bf16.msra.mxu0 %v1100
        %1115 = vmatmul.bf16.gmra.mxu0 %v1105
        %v1116 = vpop.f32.mrf.mxu0
        %v1117 = vadd.f32 %v1090, %v1116
        %v1118 = vpop.f32.mrf.mxu0
        %v1119 = vadd.f32 %v1090, %v1118
        %1120 = vdwg.mxu0
        %v1121 = vmul.f32 %v1117, %v1117
        %v1122 = vmul.f32 %v1119, %v1119
        %v1124 = vsel %vm956, %v1121, 0
        %v1127 = vsel %vm956, %v1122, 0
        %1129 = vmatpush.msra.mxu0 0.0
        %1130 = vmatpush.msra.mxu0 0.0
        %1131 = vmatpush.msra.mxu0 0.0
        %1132 = vmatpush.msra.mxu0 0.0
        %1133 = vmatpush.msra.mxu0 0.0
        %1134 = vmatpush.msra.mxu0 0.0
        %1135 = vmatpush.msra.mxu0 0.0
        %1136 = vmatpush.msra.mxu0 0.0
        %1137 = vmatpush.msra.mxu0 0.0
        %1138 = vmatpush.msra.mxu0 0.0
        %1139 = vmatpush.msra.mxu0 0.0
        %1140 = vmatpush.msra.mxu0 0.0
        %1141 = vmatpush.msra.mxu0 %v924
        %1142 = vmatpush.msra.mxu0 %v923
        %1143 = vmatpush.msra.mxu0 %v922
        %1144 = vmatpush.msra.mxu0 %v921
        %1145 = vmatmul.f32.gmra.mxu0 %v1124
        %v1146 = vpop.f32.mrf.mxu0
        %v1147 = vadd.f32 1e-12, %v1146
        %1148 = vmatmul.f32.gmra.mxu0 %v1127
        %v1149 = vpop.f32.mrf.mxu0
        %v1150 = vadd.f32 1e-12, %v1149
        %1151 = vdwg.mxu0
        %v1152 = vrsqrt.pop %v1147
        %v1153 = vmul.f32 %v1152, %v1147
        %v1154 = vmul.f32 %v1153, %v1152
        %v1155 = vmul.f32 0.5, %v1154
        %v1156 = vsub.f32 1.5, %v1155
        %v1157 = vmul.f32 %v1152, %v1156
        %vm1158 = vweird.f32 %v1147
        %vm1159 = vweird.f32 %v1152
        %vm1160 = vmor %vm1158, %vm1159
        %v1161 = vsel %vm1160, %v1152, %v1157
        %v1162 = vrsqrt.pop %v1150
        %v1163 = vmul.f32 %v1162, %v1150
        %v1164 = vmul.f32 %v1163, %v1162
        %v1165 = vmul.f32 0.5, %v1164
        %v1166 = vsub.f32 1.5, %v1165
        %v1167 = vmul.f32 %v1162, %v1166
        %vm1168 = vweird.f32 %v1150
        %vm1169 = vweird.f32 %v1162
        %vm1170 = vmor %vm1168, %vm1169
        %v1171 = vsel %vm1170, %v1162, %v1167
        %v1172 = vmul.f32 %v1117, %v1161
        %v1173 = vmul.f32 %v1119, %v1171
        %v1174 = vld [vmem:[%s10] sm:$0x1]
        %v1176 = vperm.slane %v1174, 0
        %v1178 = vmul.f32 %v1172, %v1176
        %v1179 = vmul.f32 %v1173, %v1176
        %v1180 = vmul.f32 %v1178, %v913
        %v1181 = vmul.f32 %v1179, %v914
        %v1183 = vsel %vm956, %v1178, 0
        %v1186 = vsel %vm956, %v1179, 0
        %1188 = vmatpush.msra.mxu0 0.0
        %1189 = vmatpush.msra.mxu0 0.0
        %1190 = vmatpush.msra.mxu0 0.0
        %1191 = vmatpush.msra.mxu0 0.0
        %1192 = vmatpush.msra.mxu0 0.0
        %1193 = vmatpush.msra.mxu0 0.0
        %1194 = vmatpush.msra.mxu0 0.0
        %1195 = vmatpush.msra.mxu0 0.0
        %1196 = vmatpush.msra.mxu0 0.0
        %1197 = vmatpush.msra.mxu0 0.0
        %1198 = vmatpush.msra.mxu0 0.0
        %1199 = vmatpush.msra.mxu0 0.0
        %1200 = vmatpush.msra.mxu0 %v920
        %1201 = vmatpush.msra.mxu0 %v919
        %1202 = vmatpush.msra.mxu0 %v918
        %1203 = vmatpush.msra.mxu0 %v917
        %1204 = vmatmul.f32.gmra.mxu0 %v1183
        %v1205 = vpop.f32.mrf.mxu0
        %v1206 = vadd.f32 0.0, %v1205
        %1207 = vmatmul.f32.gmra.mxu0 %v1186
        %v1208 = vpop.f32.mrf.mxu0
        %v1209 = vadd.f32 0.0, %v1208
        %1210 = vdwg.mxu0
        %v1211 = vmul.f32 %v1206, %v915
        %v1212 = vmul.f32 %v1209, %v916
        %v1213 = vadd.f32 %v1180, %v1211
        %v1214 = vadd.f32 %v1181, %v1212
        %1215 = vrot.lane.b32.xlu0 %v1121, 96
        %v1216 = vpop.permute.xlu0 %1215
        %1217 = vrot.lane.b32.xlu0 %v1122, 96
        %v1218 = vpop.permute.xlu0 %1217
        %v1219 = vsel %vm956, %v1216, 0
        %v1221 = vsel %vm956, %v1218, 0
        %1223 = vmatpush.msra.mxu0 0.0
        %1224 = vmatpush.msra.mxu0 0.0
        %1225 = vmatpush.msra.mxu0 0.0
        %1226 = vmatpush.msra.mxu0 0.0
        %1227 = vmatpush.msra.mxu0 0.0
        %1228 = vmatpush.msra.mxu0 0.0
        %1229 = vmatpush.msra.mxu0 0.0
        %1230 = vmatpush.msra.mxu0 0.0
        %1231 = vmatpush.msra.mxu0 0.0
        %1232 = vmatpush.msra.mxu0 0.0
        %1233 = vmatpush.msra.mxu0 0.0
        %1234 = vmatpush.msra.mxu0 0.0
        %1235 = vmatpush.msra.mxu0 %v924
        %1236 = vmatpush.msra.mxu0 %v923
        %1237 = vmatpush.msra.mxu0 %v922
        %1238 = vmatpush.msra.mxu0 %v921
        %1239 = vmatmul.f32.gmra.mxu0 %v1219
        %v1240 = vpop.f32.mrf.mxu0
        %v1241 = vadd.f32 1e-12, %v1240
        %1242 = vmatmul.f32.gmra.mxu0 %v1221
        %v1243 = vpop.f32.mrf.mxu0
        %v1244 = vadd.f32 1e-12, %v1243
        %1245 = vdwg.mxu0
        %v1246 = vrsqrt.pop %v1241
        %v1247 = vmul.f32 %v1246, %v1241
        %v1248 = vmul.f32 %v1247, %v1246
        %v1249 = vmul.f32 0.5, %v1248
        %v1250 = vsub.f32 1.5, %v1249
        %v1251 = vmul.f32 %v1246, %v1250
        %vm1252 = vweird.f32 %v1241
        %vm1253 = vweird.f32 %v1246
        %vm1254 = vmor %vm1252, %vm1253
        %v1255 = vsel %vm1254, %v1246, %v1251
        %v1256 = vrsqrt.pop %v1244
        %v1257 = vmul.f32 %v1256, %v1244
        %v1258 = vmul.f32 %v1257, %v1256
        %v1259 = vmul.f32 0.5, %v1258
        %v1260 = vsub.f32 1.5, %v1259
        %v1261 = vmul.f32 %v1256, %v1260
        %vm1262 = vweird.f32 %v1244
        %vm1263 = vweird.f32 %v1256
        %vm1264 = vmor %vm1262, %vm1263
        %v1265 = vsel %vm1264, %v1256, %v1261
        %1268 = vrot.lane.b32.xlu0 %v1255, 32
        %v1269 = vpop.permute.xlu0 %1268
        %1270 = vrot.lane.b32.xlu0 %v1265, 32
        %v1271 = vpop.permute.xlu0 %1270
        %v1274 = vmul.f32 %v1117, %v1269
        %v1275 = vmul.f32 %v1119, %v1271
        %1278 = vrot.lane.b32.xlu0 %v913, 32
        %v1279 = vpop.permute.xlu0 %1278
        %1280 = vrot.lane.b32.xlu0 %v914, 32
        %v1281 = vpop.permute.xlu0 %1280
        %v1284 = vmul.f32 %v1274, %v1279
        %v1285 = vmul.f32 %v1275, %v1281
        %1288 = vrot.lane.b32.xlu0 %v1274, 96
        %v1289 = vpop.permute.xlu0 %1288
        %1290 = vrot.lane.b32.xlu0 %v1275, 96
        %v1291 = vpop.permute.xlu0 %1290
        %v1292 = vsel %vm956, %v1289, 0
        %v1294 = vsel %vm956, %v1291, 0
        %1296 = vmatpush.msra.mxu0 0.0
        %1297 = vmatpush.msra.mxu0 0.0
        %1298 = vmatpush.msra.mxu0 0.0
        %1299 = vmatpush.msra.mxu0 0.0
        %1300 = vmatpush.msra.mxu0 0.0
        %1301 = vmatpush.msra.mxu0 0.0
        %1302 = vmatpush.msra.mxu0 0.0
        %1303 = vmatpush.msra.mxu0 0.0
        %1304 = vmatpush.msra.mxu0 0.0
        %1305 = vmatpush.msra.mxu0 0.0
        %1306 = vmatpush.msra.mxu0 0.0
        %1307 = vmatpush.msra.mxu0 0.0
        %1308 = vmatpush.msra.mxu0 %v920
        %1309 = vmatpush.msra.mxu0 %v919
        %1310 = vmatpush.msra.mxu0 %v918
        %1311 = vmatpush.msra.mxu0 %v917
        %1312 = vmatmul.f32.gmra.mxu0 %v1292
        %v1313 = vpop.f32.mrf.mxu0
        %v1314 = vadd.f32 0.0, %v1313
        %1315 = vmatmul.f32.gmra.mxu0 %v1294
        %v1316 = vpop.f32.mrf.mxu0
        %v1317 = vadd.f32 0.0, %v1316
        %1318 = vdwg.mxu0
        %v1319 = vmul.f32 %v1314, %v915
        %v1320 = vmul.f32 %v1317, %v916
        %1323 = vrot.lane.b32.xlu0 %v1319, 32
        %v1324 = vpop.permute.xlu0 %1323
        %1325 = vrot.lane.b32.xlu0 %v1320, 32
        %v1326 = vpop.permute.xlu0 %1325
        %v1329 = vadd.f32 %v1284, %v1324
        %v1330 = vadd.f32 %v1285, %v1326
        %v1331 = vld [vmem:[%s5] sm:$0xff]
        %v1332 = vld [vmem:[%s5 + $0x8] sm:$0xff]
        %v1333 = vld [vmem:[%s17] sm:$0xf]
        %v1334 = vld [vmem:[%s17 + $0x4] sm:$0xf]
        %v1335 = vld [vmem:[%s17 + $0x8] sm:$0xf]
        %v1336 = vld [vmem:[%s17 + $0xc] sm:$0xf]
        %v1337 = vld [vmem:[%s18] sm:$0x1]
        %v1338 = vpack.c.bf16 %v1214, %v1213
        %1341 = vrot.lane.b32.xlu0 %v1329, 96
        %v1342 = vpop.permute.xlu0 %1341
        %1343 = vrot.lane.b32.xlu0 %v1330, 96
        %v1344 = vpop.permute.xlu0 %1343
        %1347 = vxpose.xlu0.b32.start [1/16] %v1342, 128
        %1348 = vxpose.xlu0.b32.cont [2/16] %v1344, 128
        %1349 = vxpose.xlu0.b32.cont [3/16] 0.0, 128
        %1350 = vxpose.xlu0.b32.cont [4/16] 0.0, 128
        %1351 = vxpose.xlu0.b32.cont [5/16] 0.0, 128
        %1352 = vxpose.xlu0.b32.cont [6/16] 0.0, 128
        %1353 = vxpose.xlu0.b32.cont [7/16] 0.0, 128
        %1354 = vxpose.xlu0.b32.cont [8/16] 0.0, 128
        %1355 = vxpose.xlu0.b32.cont [9/16] 0.0, 128
        %1356 = vxpose.xlu0.b32.cont [10/16] 0.0, 128
        %1357 = vxpose.xlu0.b32.cont [11/16] 0.0, 128
        %1358 = vxpose.xlu0.b32.cont [12/16] 0.0, 128
        %1359 = vxpose.xlu0.b32.cont [13/16] 0.0, 128
        %1360 = vxpose.xlu0.b32.cont [14/16] 0.0, 128
        %1361 = vxpose.xlu0.b32.cont [15/16] 0.0, 128
        %1362 = vxpose.xlu0.b32.end [16/16] 0.0, 128
        %v1363 = vpop.trf.xlu0
        %v1364 = vpop.trf.xlu0
        %v1365 = vpop.trf.xlu0
        %v1366 = vpop.trf.xlu0
        %v1367 = vpop.trf.xlu0
        %v1368 = vpop.trf.xlu0
        %v1369 = vpop.trf.xlu0
        %v1370 = vpop.trf.xlu0
        %v1371 = vpop.trf.xlu0
        %v1372 = vpop.trf.xlu0
        %v1373 = vpop.trf.xlu0
        %v1374 = vpop.trf.xlu0
        %v1375 = vpop.trf.xlu0
        %v1376 = vpop.trf.xlu0
        %v1377 = vpop.trf.xlu0
        %v1378 = vpop.trf.xlu0
        %v1379 = vpack.c.bf16 %v1363, %v1363
        %vm1380 = vcmask 64512
        %v1382 = vsel %vm1380, %v1338, 0
        %vm1384 = vcmask 1043456
        %v1386 = vsel %vm1384, %v1379, 0
        %1388 = vmatpush.bf16.msra.mxu0 0
        %1389 = vmatpush.bf16.msra.mxu0 0
        %1390 = vmatpush.bf16.msra.mxu0 0
        %1391 = vmatpush.bf16.msra.mxu0 0
        %1392 = vmatpush.bf16.msra.mxu0 0
        %1393 = vmatpush.bf16.msra.mxu0 0
        %1394 = vmatpush.bf16.msra.mxu0 0
        %1395 = vmatpush.bf16.msra.mxu0 %v1386
        %1396 = vmatmul.bf16.gmra.mxu0 %v1382
        %v1397 = vpop.f32.mrf.mxu0
        %v1398 = vadd.f32 %v1331, %v1397
        %v1399 = vpop.f32.mrf.mxu0
        %v1400 = vadd.f32 %v1332, %v1399
        %1401 = vdwg.mxu0
        %vm1402 = vcmask 130048
        %v1403 = vsel %vm1402, %v1398, -inf
        %1404 = vmax.xlane.f32.xlu0 %v1403
        %v1405 = vpop.xlane.xlu0 %1404
        %v1406 = vsel %vm1402, %v1400, -inf
        %1407 = vmax.xlane.f32.xlu0 %v1406
        %v1408 = vpop.xlane.xlu0 %1407
        %v1409 = vsub.f32 %v1398, %v1405
        %v1410 = vsub.f32 %v1400, %v1408
        %v1411 = vmul.f32 %v1409, 1.442695
        %v1412 = vpow.pop %v1411
        %v1413 = vmul.f32 %v1410, 1.442695
        %v1414 = vpow.pop %v1413
        %v1415 = vsel %vm1402, %v1412, 0.0
        %1416 = vadd.xlane.f32.xlu0 %v1415
        %v1417 = vpop.xlane.xlu0 %1416
        %v1418 = vsel %vm1402, %v1414, 0.0
        %1419 = vadd.xlane.f32.xlu0 %v1418
        %v1420 = vpop.xlane.xlu0 %1419
        %v1421 = vrcp.pop %v1417
        %v1422 = vrcp.pop %v1420
        %v1423 = vmul.f32 %v1412, %v1421
        %v1424 = vmul.f32 %v1414, %v1422
        %v1425 = vpack.c.bf16 %v1424, %v1423
        %v1426 = vpack.c.bf16 %v1119, %v1117
        %1428 = vrot.lane.b32.xlu0 %v1426, 64
        %v1429 = vpop.permute.xlu0 %1428
        %v1432 = vsel %vm1402, %v1425, 0
        %1434 = vmatpush.bf16.msra.mxu0 0
        %1435 = vmatpush.bf16.msra.mxu0 0
        %1436 = vmatpush.bf16.msra.mxu0 0
        %1437 = vmatpush.bf16.msra.mxu0 0
        %1438 = vmatpush.bf16.msra.mxu0 0
        %1439 = vmatpush.bf16.msra.mxu0 0
        %1440 = vmatpush.bf16.msra.mxu0 0
        %1441 = vmatpush.bf16.msra.mxu0 %v1429
        %1442 = vmatmul.bf16.gmra.mxu0 %v1432
        %v1443 = vpop.f32.mrf.mxu0
        %v1444 = vadd.f32 0.0, %v1443
        %v1445 = vpop.f32.mrf.mxu0
        %v1446 = vadd.f32 0.0, %v1445
        %1447 = vdwg.mxu0
        %v1448 = vpack.c.bf16 %v1446, %v1444
        %1449 = vrot.lane.b32.xlu0 %v1329, 88
        %v1450 = vpop.permute.xlu0 %1449
        %1451 = vrot.lane.b32.xlu0 %v1330, 88
        %v1452 = vpop.permute.xlu0 %1451
        %1455 = vxpose.xlu0.b32.start [1/16] %v1450, 128
        %1456 = vxpose.xlu0.b32.cont [2/16] %v1452, 128
        %1457 = vxpose.xlu0.b32.cont [3/16] 0.0, 128
        %1458 = vxpose.xlu0.b32.cont [4/16] 0.0, 128
        %1459 = vxpose.xlu0.b32.cont [5/16] 0.0, 128
        %1460 = vxpose.xlu0.b32.cont [6/16] 0.0, 128
        %1461 = vxpose.xlu0.b32.cont [7/16] 0.0, 128
        %1462 = vxpose.xlu0.b32.cont [8/16] 0.0, 128
        %1463 = vxpose.xlu0.b32.cont [9/16] 0.0, 128
        %1464 = vxpose.xlu0.b32.cont [10/16] 0.0, 128
        %1465 = vxpose.xlu0.b32.cont [11/16] 0.0, 128
        %1466 = vxpose.xlu0.b32.cont [12/16] 0.0, 128
        %1467 = vxpose.xlu0.b32.cont [13/16] 0.0, 128
        %1468 = vxpose.xlu0.b32.cont [14/16] 0.0, 128
        %1469 = vxpose.xlu0.b32.cont [15/16] 0.0, 128
        %1470 = vxpose.xlu0.b32.end [16/16] 0.0, 128
        %v1471 = vpop.trf.xlu0
        %v1472 = vpop.trf.xlu0
        %v1473 = vpop.trf.xlu0
        %v1474 = vpop.trf.xlu0
        %v1475 = vpop.trf.xlu0
        %v1476 = vpop.trf.xlu0
        %v1477 = vpop.trf.xlu0
        %v1478 = vpop.trf.xlu0
        %v1479 = vpop.trf.xlu0
        %v1480 = vpop.trf.xlu0
        %v1481 = vpop.trf.xlu0
        %v1482 = vpop.trf.xlu0
        %v1483 = vpop.trf.xlu0
        %v1484 = vpop.trf.xlu0
        %v1485 = vpop.trf.xlu0
        %v1486 = vpop.trf.xlu0
        %v1487 = vpack.c.bf16 %v1471, %v1471
        %1489 = vrot.lane.b32.xlu0 %v1338, 120
        %v1490 = vpop.permute.xlu0 %1489
        %v1492 = vsel %vm1380, %v1490, 0
        %v1495 = vsel %vm1384, %v1487, 0
        %1497 = vmatpush.bf16.msra.mxu0 0
        %1498 = vmatpush.bf16.msra.mxu0 0
        %1499 = vmatpush.bf16.msra.mxu0 0
        %1500 = vmatpush.bf16.msra.mxu0 0
        %1501 = vmatpush.bf16.msra.mxu0 0
        %1502 = vmatpush.bf16.msra.mxu0 0
        %1503 = vmatpush.bf16.msra.mxu0 0
        %1504 = vmatpush.bf16.msra.mxu0 %v1495
        %1505 = vmatmul.bf16.gmra.mxu0 %v1492
        %v1506 = vpop.f32.mrf.mxu0
        %v1507 = vadd.f32 %v1331, %v1506
        %v1508 = vpop.f32.mrf.mxu0
        %v1509 = vadd.f32 %v1332, %v1508
        %1510 = vdwg.mxu0
        %v1511 = vsel %vm1402, %v1507, -inf
        %1512 = vmax.xlane.f32.xlu0 %v1511
        %v1513 = vpop.xlane.xlu0 %1512
        %v1514 = vsel %vm1402, %v1509, -inf
        %1515 = vmax.xlane.f32.xlu0 %v1514
        %v1516 = vpop.xlane.xlu0 %1515
        %v1517 = vsub.f32 %v1507, %v1513
        %v1518 = vsub.f32 %v1509, %v1516
        %v1519 = vmul.f32 %v1517, 1.442695
        %v1520 = vpow.pop %v1519
        %v1521 = vmul.f32 %v1518, 1.442695
        %v1522 = vpow.pop %v1521
        %v1523 = vsel %vm1402, %v1520, 0.0
        %1524 = vadd.xlane.f32.xlu0 %v1523
        %v1525 = vpop.xlane.xlu0 %1524
        %v1526 = vsel %vm1402, %v1522, 0.0
        %1527 = vadd.xlane.f32.xlu0 %v1526
        %v1528 = vpop.xlane.xlu0 %1527
        %v1529 = vrcp.pop %v1525
        %v1530 = vrcp.pop %v1528
        %v1531 = vmul.f32 %v1520, %v1529
        %v1532 = vmul.f32 %v1522, %v1530
        %v1533 = vpack.c.bf16 %v1532, %v1531
        %1534 = vrot.lane.b32.xlu0 %v1426, 56
        %v1535 = vpop.permute.xlu0 %1534
        %v1538 = vsel %vm1402, %v1533, 0
        %1540 = vmatpush.bf16.msra.mxu0 0
        %1541 = vmatpush.bf16.msra.mxu0 0
        %1542 = vmatpush.bf16.msra.mxu0 0
        %1543 = vmatpush.bf16.msra.mxu0 0
        %1544 = vmatpush.bf16.msra.mxu0 0
        %1545 = vmatpush.bf16.msra.mxu0 0
        %1546 = vmatpush.bf16.msra.mxu0 0
        %1547 = vmatpush.bf16.msra.mxu0 %v1535
        %1548 = vmatmul.bf16.gmra.mxu0 %v1538
        %v1549 = vpop.f32.mrf.mxu0
        %v1550 = vadd.f32 0.0, %v1549
        %v1551 = vpop.f32.mrf.mxu0
        %v1552 = vadd.f32 0.0, %v1551
        %1553 = vdwg.mxu0
        %v1554 = vpack.c.bf16 %v1552, %v1550
        %v1556 = vsel %vm1380, %v1554, 0
        %v1559 = vsel %vm1384, %v1334, 0
        %1561 = vmatpush.bf16.msra.mxu0 0
        %1562 = vmatpush.bf16.msra.mxu0 0
        %1563 = vmatpush.bf16.msra.mxu0 0
        %1564 = vmatpush.bf16.msra.mxu0 0
        %1565 = vmatpush.bf16.msra.mxu0 0
        %1566 = vmatpush.bf16.msra.mxu0 0
        %1567 = vmatpush.bf16.msra.mxu0 0
        %1568 = vmatpush.bf16.msra.mxu0 %v1559
        %1569 = vmatmul.bf16.gmra.mxu0 %v1556
        %v1570 = vpop.f32.mrf.mxu0
        %v1571 = vadd.f32 0.0, %v1570
        %v1572 = vpop.f32.mrf.mxu0
        %v1573 = vadd.f32 0.0, %v1572
        %1574 = vdwg.mxu0
        %v1576 = vsel %vm1380, %v1448, 0
        %v1579 = vsel %vm1384, %v1333, 0
        %1581 = vmatpush.bf16.msra.mxu0 0
        %1582 = vmatpush.bf16.msra.mxu0 0
        %1583 = vmatpush.bf16.msra.mxu0 0
        %1584 = vmatpush.bf16.msra.mxu0 0
        %1585 = vmatpush.bf16.msra.mxu0 0
        %1586 = vmatpush.bf16.msra.mxu0 0
        %1587 = vmatpush.bf16.msra.mxu0 0
        %1588 = vmatpush.bf16.msra.mxu0 %v1579
        %1589 = vmatmul.bf16.gmra.mxu0 %v1576
        %v1590 = vpop.f32.mrf.mxu0
        %v1591 = vadd.f32 %v1571, %v1590
        %v1592 = vpop.f32.mrf.mxu0
        %v1593 = vadd.f32 %v1573, %v1592
        %1594 = vdwg.mxu0
        %1595 = vrot.lane.b32.xlu0 %v1329, 80
        %v1596 = vpop.permute.xlu0 %1595
        %1597 = vrot.lane.b32.xlu0 %v1330, 80
        %v1598 = vpop.permute.xlu0 %1597
        %1601 = vxpose.xlu0.b32.start [1/16] %v1596, 128
        %1602 = vxpose.xlu0.b32.cont [2/16] %v1598, 128
        %1603 = vxpose.xlu0.b32.cont [3/16] 0.0, 128
        %1604 = vxpose.xlu0.b32.cont [4/16] 0.0, 128
        %1605 = vxpose.xlu0.b32.cont [5/16] 0.0, 128
        %1606 = vxpose.xlu0.b32.cont [6/16] 0.0, 128
        %1607 = vxpose.xlu0.b32.cont [7/16] 0.0, 128
        %1608 = vxpose.xlu0.b32.cont [8/16] 0.0, 128
        %1609 = vxpose.xlu0.b32.cont [9/16] 0.0, 128
        %1610 = vxpose.xlu0.b32.cont [10/16] 0.0, 128
        %1611 = vxpose.xlu0.b32.cont [11/16] 0.0, 128
        %1612 = vxpose.xlu0.b32.cont [12/16] 0.0, 128
        %1613 = vxpose.xlu0.b32.cont [13/16] 0.0, 128
        %1614 = vxpose.xlu0.b32.cont [14/16] 0.0, 128
        %1615 = vxpose.xlu0.b32.cont [15/16] 0.0, 128
        %1616 = vxpose.xlu0.b32.end [16/16] 0.0, 128
        %v1617 = vpop.trf.xlu0
        %v1618 = vpop.trf.xlu0
        %v1619 = vpop.trf.xlu0
        %v1620 = vpop.trf.xlu0
        %v1621 = vpop.trf.xlu0
        %v1622 = vpop.trf.xlu0
        %v1623 = vpop.trf.xlu0
        %v1624 = vpop.trf.xlu0
        %v1625 = vpop.trf.xlu0
        %v1626 = vpop.trf.xlu0
        %v1627 = vpop.trf.xlu0
        %v1628 = vpop.trf.xlu0
        %v1629 = vpop.trf.xlu0
        %v1630 = vpop.trf.xlu0
        %v1631 = vpop.trf.xlu0
        %v1632 = vpop.trf.xlu0
        %v1633 = vpack.c.bf16 %v1617, %v1617
        %1634 = vrot.lane.b32.xlu0 %v1338, 112
        %v1635 = vpop.permute.xlu0 %1634
        %v1637 = vsel %vm1380, %v1635, 0
        %v1640 = vsel %vm1384, %v1633, 0
        %1642 = vmatpush.bf16.msra.mxu0 0
        %1643 = vmatpush.bf16.msra.mxu0 0
        %1644 = vmatpush.bf16.msra.mxu0 0
        %1645 = vmatpush.bf16.msra.mxu0 0
        %1646 = vmatpush.bf16.msra.mxu0 0
        %1647 = vmatpush.bf16.msra.mxu0 0
        %1648 = vmatpush.bf16.msra.mxu0 0
        %1649 = vmatpush.bf16.msra.mxu0 %v1640
        %1650 = vmatmul.bf16.gmra.mxu0 %v1637
        %v1651 = vpop.f32.mrf.mxu0
        %v1652 = vadd.f32 %v1331, %v1651
        %v1653 = vpop.f32.mrf.mxu0
        %v1654 = vadd.f32 %v1332, %v1653
        %1655 = vdwg.mxu0
        %v1656 = vsel %vm1402, %v1652, -inf
        %1657 = vmax.xlane.f32.xlu0 %v1656
        %v1658 = vpop.xlane.xlu0 %1657
        %v1659 = vsel %vm1402, %v1654, -inf
        %1660 = vmax.xlane.f32.xlu0 %v1659
        %v1661 = vpop.xlane.xlu0 %1660
        %v1662 = vsub.f32 %v1652, %v1658
        %v1663 = vsub.f32 %v1654, %v1661
        %v1664 = vmul.f32 %v1662, 1.442695
        %v1665 = vpow.pop %v1664
        %v1666 = vmul.f32 %v1663, 1.442695
        %v1667 = vpow.pop %v1666
        %v1668 = vsel %vm1402, %v1665, 0.0
        %1669 = vadd.xlane.f32.xlu0 %v1668
        %v1670 = vpop.xlane.xlu0 %1669
        %v1671 = vsel %vm1402, %v1667, 0.0
        %1672 = vadd.xlane.f32.xlu0 %v1671
        %v1673 = vpop.xlane.xlu0 %1672
        %v1674 = vrcp.pop %v1670
        %v1675 = vrcp.pop %v1673
        %v1676 = vmul.f32 %v1665, %v1674
        %v1677 = vmul.f32 %v1667, %v1675
        %v1678 = vpack.c.bf16 %v1677, %v1676
        %1679 = vrot.lane.b32.xlu0 %v1426, 48
        %v1680 = vpop.permute.xlu0 %1679
        %v1683 = vsel %vm1402, %v1678, 0
        %1685 = vmatpush.bf16.msra.mxu0 0
        %1686 = vmatpush.bf16.msra.mxu0 0
        %1687 = vmatpush.bf16.msra.mxu0 0
        %1688 = vmatpush.bf16.msra.mxu0 0
        %1689 = vmatpush.bf16.msra.mxu0 0
        %1690 = vmatpush.bf16.msra.mxu0 0
        %1691 = vmatpush.bf16.msra.mxu0 0
        %1692 = vmatpush.bf16.msra.mxu0 %v1680
        %1693 = vmatmul.bf16.gmra.mxu0 %v1683
        %v1694 = vpop.f32.mrf.mxu0
        %v1695 = vadd.f32 0.0, %v1694
        %v1696 = vpop.f32.mrf.mxu0
        %v1697 = vadd.f32 0.0, %v1696
        %1698 = vdwg.mxu0
        %v1699 = vpack.c.bf16 %v1697, %v1695
        %v1701 = vsel %vm1380, %v1699, 0
        %v1704 = vsel %vm1384, %v1335, 0
        %1706 = vmatpush.bf16.msra.mxu0 0
        %1707 = vmatpush.bf16.msra.mxu0 0
        %1708 = vmatpush.bf16.msra.mxu0 0
        %1709 = vmatpush.bf16.msra.mxu0 0
        %1710 = vmatpush.bf16.msra.mxu0 0
        %1711 = vmatpush.bf16.msra.mxu0 0
        %1712 = vmatpush.bf16.msra.mxu0 0
        %1713 = vmatpush.bf16.msra.mxu0 %v1704
        %1714 = vmatmul.bf16.gmra.mxu0 %v1701
        %v1715 = vpop.f32.mrf.mxu0
        %v1716 = vadd.f32 0.0, %v1715
        %v1717 = vpop.f32.mrf.mxu0
        %v1718 = vadd.f32 0.0, %v1717
        %1719 = vdwg.mxu0
        %v1720 = vadd.f32 %v1591, %v1716
        %v1721 = vadd.f32 %v1593, %v1718
        %1722 = vrot.lane.b32.xlu0 %v1329, 72
        %v1723 = vpop.permute.xlu0 %1722
        %1724 = vrot.lane.b32.xlu0 %v1330, 72
        %v1725 = vpop.permute.xlu0 %1724
        %1728 = vxpose.xlu0.b32.start [1/16] %v1723, 128
        %1729 = vxpose.xlu0.b32.cont [2/16] %v1725, 128
        %1730 = vxpose.xlu0.b32.cont [3/16] 0.0, 128
        %1731 = vxpose.xlu0.b32.cont [4/16] 0.0, 128
        %1732 = vxpose.xlu0.b32.cont [5/16] 0.0, 128
        %1733 = vxpose.xlu0.b32.cont [6/16] 0.0, 128
        %1734 = vxpose.xlu0.b32.cont [7/16] 0.0, 128
        %1735 = vxpose.xlu0.b32.cont [8/16] 0.0, 128
        %1736 = vxpose.xlu0.b32.cont [9/16] 0.0, 128
        %1737 = vxpose.xlu0.b32.cont [10/16] 0.0, 128
        %1738 = vxpose.xlu0.b32.cont [11/16] 0.0, 128
        %1739 = vxpose.xlu0.b32.cont [12/16] 0.0, 128
        %1740 = vxpose.xlu0.b32.cont [13/16] 0.0, 128
        %1741 = vxpose.xlu0.b32.cont [14/16] 0.0, 128
        %1742 = vxpose.xlu0.b32.cont [15/16] 0.0, 128
        %1743 = vxpose.xlu0.b32.end [16/16] 0.0, 128
        %v1744 = vpop.trf.xlu0
        %v1745 = vpop.trf.xlu0
        %v1746 = vpop.trf.xlu0
        %v1747 = vpop.trf.xlu0
        %v1748 = vpop.trf.xlu0
        %v1749 = vpop.trf.xlu0
        %v1750 = vpop.trf.xlu0
        %v1751 = vpop.trf.xlu0
        %v1752 = vpop.trf.xlu0
        %v1753 = vpop.trf.xlu0
        %v1754 = vpop.trf.xlu0
        %v1755 = vpop.trf.xlu0
        %v1756 = vpop.trf.xlu0
        %v1757 = vpop.trf.xlu0
        %v1758 = vpop.trf.xlu0
        %v1759 = vpop.trf.xlu0
        %v1760 = vpack.c.bf16 %v1744, %v1744
        %1761 = vrot.lane.b32.xlu0 %v1338, 104
        %v1762 = vpop.permute.xlu0 %1761
        %v1764 = vsel %vm1380, %v1762, 0
        %v1767 = vsel %vm1384, %v1760, 0
        %1769 = vmatpush.bf16.msra.mxu0 0
        %1770 = vmatpush.bf16.msra.mxu0 0
        %1771 = vmatpush.bf16.msra.mxu0 0
        %1772 = vmatpush.bf16.msra.mxu0 0
        %1773 = vmatpush.bf16.msra.mxu0 0
        %1774 = vmatpush.bf16.msra.mxu0 0
        %1775 = vmatpush.bf16.msra.mxu0 0
        %1776 = vmatpush.bf16.msra.mxu0 %v1767
        %1777 = vmatmul.bf16.gmra.mxu0 %v1764
        %v1778 = vpop.f32.mrf.mxu0
        %v1779 = vadd.f32 %v1331, %v1778
        %v1780 = vpop.f32.mrf.mxu0
        %v1781 = vadd.f32 %v1332, %v1780
        %1782 = vdwg.mxu0
        %v1783 = vsel %vm1402, %v1779, -inf
        %1784 = vmax.xlane.f32.xlu0 %v1783
        %v1785 = vpop.xlane.xlu0 %1784
        %v1786 = vsel %vm1402, %v1781, -inf
        %1787 = vmax.xlane.f32.xlu0 %v1786
        %v1788 = vpop.xlane.xlu0 %1787
        %v1789 = vsub.f32 %v1779, %v1785
        %v1790 = vsub.f32 %v1781, %v1788
        %v1791 = vmul.f32 %v1789, 1.442695
        %v1792 = vpow.pop %v1791
        %v1793 = vmul.f32 %v1790, 1.442695
        %v1794 = vpow.pop %v1793
        %v1795 = vsel %vm1402, %v1792, 0.0
        %1796 = vadd.xlane.f32.xlu0 %v1795
        %v1797 = vpop.xlane.xlu0 %1796
        %v1798 = vsel %vm1402, %v1794, 0.0
        %1799 = vadd.xlane.f32.xlu0 %v1798
        %v1800 = vpop.xlane.xlu0 %1799
        %v1801 = vrcp.pop %v1797
        %v1802 = vrcp.pop %v1800
        %v1803 = vmul.f32 %v1792, %v1801
        %v1804 = vmul.f32 %v1794, %v1802
        %v1805 = vpack.c.bf16 %v1804, %v1803
        %1806 = vrot.lane.b32.xlu0 %v1426, 40
        %v1807 = vpop.permute.xlu0 %1806
        %v1810 = vsel %vm1402, %v1805, 0
        %1812 = vmatpush.bf16.msra.mxu0 0
        %1813 = vmatpush.bf16.msra.mxu0 0
        %1814 = vmatpush.bf16.msra.mxu0 0
        %1815 = vmatpush.bf16.msra.mxu0 0
        %1816 = vmatpush.bf16.msra.mxu0 0
        %1817 = vmatpush.bf16.msra.mxu0 0
        %1818 = vmatpush.bf16.msra.mxu0 0
        %1819 = vmatpush.bf16.msra.mxu0 %v1807
        %1820 = vmatmul.bf16.gmra.mxu0 %v1810
        %v1821 = vpop.f32.mrf.mxu0
        %v1822 = vadd.f32 0.0, %v1821
        %v1823 = vpop.f32.mrf.mxu0
        %v1824 = vadd.f32 0.0, %v1823
        %1825 = vdwg.mxu0
        %v1826 = vpack.c.bf16 %v1824, %v1822
        %v1828 = vsel %vm1380, %v1826, 0
        %v1831 = vsel %vm1384, %v1336, 0
        %1833 = vmatpush.bf16.msra.mxu0 0
        %1834 = vmatpush.bf16.msra.mxu0 0
        %1835 = vmatpush.bf16.msra.mxu0 0
        %1836 = vmatpush.bf16.msra.mxu0 0
        %1837 = vmatpush.bf16.msra.mxu0 0
        %1838 = vmatpush.bf16.msra.mxu0 0
        %1839 = vmatpush.bf16.msra.mxu0 0
        %1840 = vmatpush.bf16.msra.mxu0 %v1831
        %1841 = vmatmul.bf16.gmra.mxu0 %v1828
        %v1842 = vpop.f32.mrf.mxu0
        %v1843 = vadd.f32 0.0, %v1842
        %v1844 = vpop.f32.mrf.mxu0
        %v1845 = vadd.f32 0.0, %v1844
        %1846 = vdwg.mxu0
        %v1847 = vadd.f32 %v1720, %v1843
        %v1848 = vadd.f32 %v1721, %v1845
        %v1850 = vperm.slane %v1337, 0
        %v1852 = vadd.f32 %v1847, %v1850
        %v1853 = vadd.f32 %v1848, %v1850
        %v1854 = vperm.slane %v988, 0
        %v1855 = vmul.f32 %v1854, %v1852
        %v1856 = vmul.f32 %v1854, %v1853
        %v1857 = vadd.f32 %v909, %v1855
        %v1858 = vadd.f32 %v910, %v1856
        %v1859 = vpack.c.bf16 %v1858, %v1857
        %v1860 = vld [vmem:[%s19] sm:$0xf]
        %v1861 = vld [vmem:[%s19 + $0x4] sm:$0xf]
        %v1862 = vld [vmem:[%s19 + $0x8] sm:$0xf]
        %v1863 = vld [vmem:[%s19 + $0xc] sm:$0xf]
        %v1864 = vld [vmem:[%s20] sm:$0x1]
        %v1866 = vperm.slane %v1864, 0
        %v1872 = vunpack.c.l.b16 %v1860
        %v1873 = vunpack.c.l.b16 %v1861
        %v1874 = vunpack.c.l.b16 %v1862
        %v1875 = vunpack.c.l.b16 %v1863
        %v1876 = vpack.c.b16 %v1873, %v1872
        %v1877 = vpack.c.b16 %v1875, %v1874
        %v1881 = vsel %vm956, %v1859, 0
        %1883 = vmatpush.bf16.msra.mxu0 0
        %1884 = vmatpush.bf16.msra.mxu0 0
        %1885 = vmatpush.bf16.msra.mxu0 0
        %1886 = vmatpush.bf16.msra.mxu0 0
        %1887 = vmatpush.bf16.msra.mxu0 0
        %1888 = vmatpush.bf16.msra.mxu0 0
        %1889 = vmatpush.bf16.msra.mxu0 %v1877
        %1890 = vmatpush.bf16.msra.mxu0 %v1876
        %1891 = vmatmul.bf16.gmra.mxu0 %v1881
        %v1892 = vpop.f32.mrf.mxu0
        %v1893 = vadd.f32 %v1866, %v1892
        %v1894 = vpop.f32.mrf.mxu0
        %v1895 = vadd.f32 %v1866, %v1894
        %1896 = vdwg.mxu0
        %v1897 = vld [vmem:[%s899] sm:$0xff]
        %v1898 = vmul.f32 %v1897, %v1897
        %v1900 = vsel %vm956, %v1898, 0
        %1902 = vmatpush.msra.mxu0 0.0
        %1903 = vmatpush.msra.mxu0 0.0
        %1904 = vmatpush.msra.mxu0 0.0
        %1905 = vmatpush.msra.mxu0 0.0
        %1906 = vmatpush.msra.mxu0 0.0
        %1907 = vmatpush.msra.mxu0 0.0
        %1908 = vmatpush.msra.mxu0 0.0
        %1909 = vmatpush.msra.mxu0 0.0
        %1910 = vmatpush.msra.mxu0 0.0
        %1911 = vmatpush.msra.mxu0 0.0
        %1912 = vmatpush.msra.mxu0 0.0
        %1913 = vmatpush.msra.mxu0 0.0
        %1914 = vmatpush.msra.mxu0 %v924
        %1915 = vmatpush.msra.mxu0 %v923
        %1916 = vmatpush.msra.mxu0 %v922
        %1917 = vmatpush.msra.mxu0 %v921
        %1918 = vmatmul.f32.gmra.mxu0 %v1900
        %v1919 = vpop.f32.mrf.mxu0
        %v1920 = vadd.f32 1e-12, %v1919
        %1921 = vdwg.mxu0
        %v1922 = vrsqrt.pop %v1920
        %v1923 = vmul.f32 %v1922, %v1920
        %v1924 = vmul.f32 %v1923, %v1922
        %v1925 = vmul.f32 0.5, %v1924
        %v1926 = vsub.f32 1.5, %v1925
        %v1927 = vmul.f32 %v1922, %v1926
        %vm1928 = vweird.f32 %v1920
        %vm1929 = vweird.f32 %v1922
        %vm1930 = vmor %vm1928, %vm1929
        %v1931 = vsel %vm1930, %v1922, %v1927
        %v1932 = vmul.f32 %v1897, %v1931
        %v1933 = vmul.f32 %v1893, %v1893
        %v1934 = vmul.f32 %v1895, %v1895
        %v1936 = vsel %vm956, %v1933, 0
        %v1939 = vsel %vm956, %v1934, 0
        %1941 = vmatpush.msra.mxu0 0.0
        %1942 = vmatpush.msra.mxu0 0.0
        %1943 = vmatpush.msra.mxu0 0.0
        %1944 = vmatpush.msra.mxu0 0.0
        %1945 = vmatpush.msra.mxu0 0.0
        %1946 = vmatpush.msra.mxu0 0.0
        %1947 = vmatpush.msra.mxu0 0.0
        %1948 = vmatpush.msra.mxu0 0.0
        %1949 = vmatpush.msra.mxu0 0.0
        %1950 = vmatpush.msra.mxu0 0.0
        %1951 = vmatpush.msra.mxu0 0.0
        %1952 = vmatpush.msra.mxu0 0.0
        %1953 = vmatpush.msra.mxu0 %v924
        %1954 = vmatpush.msra.mxu0 %v923
        %1955 = vmatpush.msra.mxu0 %v922
        %1956 = vmatpush.msra.mxu0 %v921
        %1957 = vmatmul.f32.gmra.mxu0 %v1936
        %v1958 = vpop.f32.mrf.mxu0
        %v1959 = vadd.f32 1e-12, %v1958
        %1960 = vmatmul.f32.gmra.mxu0 %v1939
        %v1961 = vpop.f32.mrf.mxu0
        %v1962 = vadd.f32 1e-12, %v1961
        %1963 = vdwg.mxu0
        %v1964 = vrsqrt.pop %v1959
        %v1965 = vmul.f32 %v1964, %v1959
        %v1966 = vmul.f32 %v1965, %v1964
        %v1967 = vmul.f32 0.5, %v1966
        %v1968 = vsub.f32 1.5, %v1967
        %v1969 = vmul.f32 %v1964, %v1968
        %vm1970 = vweird.f32 %v1959
        %vm1971 = vweird.f32 %v1964
        %vm1972 = vmor %vm1970, %vm1971
        %v1973 = vsel %vm1972, %v1964, %v1969
        %v1974 = vrsqrt.pop %v1962
        %v1975 = vmul.f32 %v1974, %v1962
        %v1976 = vmul.f32 %v1975, %v1974
        %v1977 = vmul.f32 0.5, %v1976
        %v1978 = vsub.f32 1.5, %v1977
        %v1979 = vmul.f32 %v1974, %v1978
        %vm1980 = vweird.f32 %v1962
        %vm1981 = vweird.f32 %v1974
        %vm1982 = vmor %vm1980, %vm1981
        %v1983 = vsel %vm1982, %v1974, %v1979
        %v1984 = vmul.f32 %v1893, %v1973
        %v1985 = vmul.f32 %v1895, %v1983
        %v1986 = vld [vmem:[%s11] sm:$0x1]
        %v1988 = vperm.slane %v1986, 0
        %v1990 = vmul.f32 %v1984, %v1988
        %v1991 = vmul.f32 %v1985, %v1988
        %v1992 = vld [vmem:[%s902] sm:$0x1]
        %v1993 = vld [vmem:[%s21] sm:$0xf]
        %v1994 = vld [vmem:[%s21 + $0x4] sm:$0xf]
        %v1995 = vld [vmem:[%s21 + $0x8] sm:$0xf]
        %v1996 = vld [vmem:[%s21 + $0xc] sm:$0xf]
        %v1997 = vld [vmem:[#allocation2] sm:$0x1]
        %v1998 = vpack.c.bf16 %v1991, %v1990
        %1999 = vxpose.xlu0.b32.start [1/16] %v1932, 128
        %2000 = vxpose.xlu0.b32.cont [2/16] 0.0, 128
        %2001 = vxpose.xlu0.b32.cont [3/16] 0.0, 128
        %2002 = vxpose.xlu0.b32.cont [4/16] 0.0, 128
        %2003 = vxpose.xlu0.b32.cont [5/16] 0.0, 128
        %2004 = vxpose.xlu0.b32.cont [6/16] 0.0, 128
        %2005 = vxpose.xlu0.b32.cont [7/16] 0.0, 128
        %2006 = vxpose.xlu0.b32.cont [8/16] 0.0, 128
        %2007 = vxpose.xlu0.b32.cont [9/16] 0.0, 128
        %2008 = vxpose.xlu0.b32.cont [10/16] 0.0, 128
        %2009 = vxpose.xlu0.b32.cont [11/16] 0.0, 128
        %2010 = vxpose.xlu0.b32.cont [12/16] 0.0, 128
        %2011 = vxpose.xlu0.b32.cont [13/16] 0.0, 128
        %2012 = vxpose.xlu0.b32.cont [14/16] 0.0, 128
        %2013 = vxpose.xlu0.b32.cont [15/16] 0.0, 128
        %2014 = vxpose.xlu0.b32.end [16/16] 0.0, 128
        %v2015 = vpop.trf.xlu0
        %v2016 = vpop.trf.xlu0
        %v2017 = vpop.trf.xlu0
        %v2018 = vpop.trf.xlu0
        %v2019 = vpop.trf.xlu0
        %v2020 = vpop.trf.xlu0
        %v2021 = vpop.trf.xlu0
        %v2022 = vpop.trf.xlu0
        %v2023 = vpop.trf.xlu0
        %v2024 = vpop.trf.xlu0
        %v2025 = vpop.trf.xlu0
        %v2026 = vpop.trf.xlu0
        %v2027 = vpop.trf.xlu0
        %v2028 = vpop.trf.xlu0
        %v2029 = vpop.trf.xlu0
        %v2030 = vpop.trf.xlu0
        %v2031 = vpack.c.bf16 %v2015, %v2015
        %v2033 = vperm.slane %v1992, 0
        %v2036 = vsel %vm1380, %v1998, 0
        %v2039 = vsel %vm1384, %v2031, 0
        %2041 = vmatpush.bf16.msra.mxu0 0
        %2042 = vmatpush.bf16.msra.mxu0 0
        %2043 = vmatpush.bf16.msra.mxu0 0
        %2044 = vmatpush.bf16.msra.mxu0 0
        %2045 = vmatpush.bf16.msra.mxu0 0
        %2046 = vmatpush.bf16.msra.mxu0 0
        %2047 = vmatpush.bf16.msra.mxu0 0
        %2048 = vmatpush.bf16.msra.mxu0 %v2039
        %2049 = vmatmul.bf16.gmra.mxu0 %v2036
        %v2050 = vpop.f32.mrf.mxu0
        %v2051 = vadd.f32 %v2033, %v2050
        %v2052 = vpop.f32.mrf.mxu0
        %v2053 = vadd.f32 %v2033, %v2052
        %2054 = vdwg.mxu0
        %v2055 = vsel %vm1380, %v2051, -inf
        %2056 = vmax.xlane.f32.xlu0 %v2055
        %v2057 = vpop.xlane.xlu0 %2056
        %v2058 = vsel %vm1380, %v2053, -inf
        %2059 = vmax.xlane.f32.xlu0 %v2058
        %v2060 = vpop.xlane.xlu0 %2059
        %v2061 = vsub.f32 %v2051, %v2057
        %v2062 = vsub.f32 %v2053, %v2060
        %v2063 = vmul.f32 %v2061, 1.442695
        %v2064 = vpow.pop %v2063
        %v2065 = vmul.f32 %v2062, 1.442695
        %v2066 = vpow.pop %v2065
        %v2067 = vsel %vm1380, %v2064, 0.0
        %2068 = vadd.xlane.f32.xlu0 %v2067
        %v2069 = vpop.xlane.xlu0 %2068
        %v2070 = vsel %vm1380, %v2066, 0.0
        %2071 = vadd.xlane.f32.xlu0 %v2070
        %v2072 = vpop.xlane.xlu0 %2071
        %v2073 = vrcp.pop %v2069
        %v2074 = vrcp.pop %v2072
        %v2075 = vmul.f32 %v2064, %v2073
        %v2076 = vmul.f32 %v2066, %v2074
        %v2077 = vpack.c.bf16 %v2076, %v2075
        %v2078 = vpack.c.bf16 %v1897, %v1897
        %2080 = vrot.lane.b32.xlu0 %v2078, 96
        %v2081 = vpop.permute.xlu0 %2080
        %v2083 = vsel %vm1380, %v2077, 0
        %v2086 = vsel %vm1384, %v2081, 0
        %2088 = vmatpush.bf16.msra.mxu0 0
        %2089 = vmatpush.bf16.msra.mxu0 0
        %2090 = vmatpush.bf16.msra.mxu0 0
        %2091 = vmatpush.bf16.msra.mxu0 0
        %2092 = vmatpush.bf16.msra.mxu0 0
        %2093 = vmatpush.bf16.msra.mxu0 0
        %2094 = vmatpush.bf16.msra.mxu0 0
        %2095 = vmatpush.bf16.msra.mxu0 %v2086
        %2096 = vmatmul.bf16.gmra.mxu0 %v2083
        %v2097 = vpop.f32.mrf.mxu0
        %v2098 = vadd.f32 0.0, %v2097
        %v2099 = vpop.f32.mrf.mxu0
        %v2100 = vadd.f32 0.0, %v2099
        %2101 = vdwg.mxu0
        %v2102 = vpack.c.bf16 %v2100, %v2098
        %2104 = vrot.lane.b32.xlu0 %v1932, 120
        %v2105 = vpop.permute.xlu0 %2104
        %2107 = vxpose.xlu0.b32.start [1/16] %v2105, 128
        %2108 = vxpose.xlu0.b32.cont [2/16] 0.0, 128
        %2109 = vxpose.xlu0.b32.cont [3/16] 0.0, 128
        %2110 = vxpose.xlu0.b32.cont [4/16] 0.0, 128
        %2111 = vxpose.xlu0.b32.cont [5/16] 0.0, 128
        %2112 = vxpose.xlu0.b32.cont [6/16] 0.0, 128
        %2113 = vxpose.xlu0.b32.cont [7/16] 0.0, 128
        %2114 = vxpose.xlu0.b32.cont [8/16] 0.0, 128
        %2115 = vxpose.xlu0.b32.cont [9/16] 0.0, 128
        %2116 = vxpose.xlu0.b32.cont [10/16] 0.0, 128
        %2117 = vxpose.xlu0.b32.cont [11/16] 0.0, 128
        %2118 = vxpose.xlu0.b32.cont [12/16] 0.0, 128
        %2119 = vxpose.xlu0.b32.cont [13/16] 0.0, 128
        %2120 = vxpose.xlu0.b32.cont [14/16] 0.0, 128
        %2121 = vxpose.xlu0.b32.cont [15/16] 0.0, 128
        %2122 = vxpose.xlu0.b32.end [16/16] 0.0, 128
        %v2123 = vpop.trf.xlu0
        %v2124 = vpop.trf.xlu0
        %v2125 = vpop.trf.xlu0
        %v2126 = vpop.trf.xlu0
        %v2127 = vpop.trf.xlu0
        %v2128 = vpop.trf.xlu0
        %v2129 = vpop.trf.xlu0
        %v2130 = vpop.trf.xlu0
        %v2131 = vpop.trf.xlu0
        %v2132 = vpop.trf.xlu0
        %v2133 = vpop.trf.xlu0
        %v2134 = vpop.trf.xlu0
        %v2135 = vpop.trf.xlu0
        %v2136 = vpop.trf.xlu0
        %v2137 = vpop.trf.xlu0
        %v2138 = vpop.trf.xlu0
        %v2139 = vpack.c.bf16 %v2123, %v2123
        %2141 = vrot.lane.b32.xlu0 %v1998, 120
        %v2142 = vpop.permute.xlu0 %2141
        %v2144 = vsel %vm1380, %v2142, 0
        %v2147 = vsel %vm1384, %v2139, 0
        %2149 = vmatpush.bf16.msra.mxu0 0
        %2150 = vmatpush.bf16.msra.mxu0 0
        %2151 = vmatpush.bf16.msra.mxu0 0
        %2152 = vmatpush.bf16.msra.mxu0 0
        %2153 = vmatpush.bf16.msra.mxu0 0
        %2154 = vmatpush.bf16.msra.mxu0 0
        %2155 = vmatpush.bf16.msra.mxu0 0
        %2156 = vmatpush.bf16.msra.mxu0 %v2147
        %2157 = vmatmul.bf16.gmra.mxu0 %v2144
        %v2158 = vpop.f32.mrf.mxu0
        %v2159 = vadd.f32 %v2033, %v2158
        %v2160 = vpop.f32.mrf.mxu0
        %v2161 = vadd.f32 %v2033, %v2160
        %2162 = vdwg.mxu0
        %v2163 = vsel %vm1380, %v2159, -inf
        %2164 = vmax.xlane.f32.xlu0 %v2163
        %v2165 = vpop.xlane.xlu0 %2164
        %v2166 = vsel %vm1380, %v2161, -inf
        %2167 = vmax.xlane.f32.xlu0 %v2166
        %v2168 = vpop.xlane.xlu0 %2167
        %v2169 = vsub.f32 %v2159, %v2165
        %v2170 = vsub.f32 %v2161, %v2168
        %v2171 = vmul.f32 %v2169, 1.442695
        %v2172 = vpow.pop %v2171
        %v2173 = vmul.f32 %v2170, 1.442695
        %v2174 = vpow.pop %v2173
        %v2175 = vsel %vm1380, %v2172, 0.0
        %2176 = vadd.xlane.f32.xlu0 %v2175
        %v2177 = vpop.xlane.xlu0 %2176
        %v2178 = vsel %vm1380, %v2174, 0.0
        %2179 = vadd.xlane.f32.xlu0 %v2178
        %v2180 = vpop.xlane.xlu0 %2179
        %v2181 = vrcp.pop %v2177
        %v2182 = vrcp.pop %v2180
        %v2183 = vmul.f32 %v2172, %v2181
        %v2184 = vmul.f32 %v2174, %v2182
        %v2185 = vpack.c.bf16 %v2184, %v2183
        %2186 = vrot.lane.b32.xlu0 %v2078, 88
        %v2187 = vpop.permute.xlu0 %2186
        %v2189 = vsel %vm1380, %v2185, 0
        %v2192 = vsel %vm1384, %v2187, 0
        %2194 = vmatpush.bf16.msra.mxu0 0
        %2195 = vmatpush.bf16.msra.mxu0 0
        %2196 = vmatpush.bf16.msra.mxu0 0
        %2197 = vmatpush.bf16.msra.mxu0 0
        %2198 = vmatpush.bf16.msra.mxu0 0
        %2199 = vmatpush.bf16.msra.mxu0 0
        %2200 = vmatpush.bf16.msra.mxu0 0
        %2201 = vmatpush.bf16.msra.mxu0 %v2192
        %2202 = vmatmul.bf16.gmra.mxu0 %v2189
        %v2203 = vpop.f32.mrf.mxu0
        %v2204 = vadd.f32 0.0, %v2203
        %v2205 = vpop.f32.mrf.mxu0
        %v2206 = vadd.f32 0.0, %v2205
        %2207 = vdwg.mxu0
        %v2208 = vpack.c.bf16 %v2206, %v2204
        %v2210 = vsel %vm1380, %v2208, 0
        %v2213 = vsel %vm1384, %v1994, 0
        %2215 = vmatpush.bf16.msra.mxu0 0
        %2216 = vmatpush.bf16.msra.mxu0 0
        %2217 = vmatpush.bf16.msra.mxu0 0
        %2218 = vmatpush.bf16.msra.mxu0 0
        %2219 = vmatpush.bf16.msra.mxu0 0
        %2220 = vmatpush.bf16.msra.mxu0 0
        %2221 = vmatpush.bf16.msra.mxu0 0
        %2222 = vmatpush.bf16.msra.mxu0 %v2213
        %2223 = vmatmul.bf16.gmra.mxu0 %v2210
        %v2224 = vpop.f32.mrf.mxu0
        %v2225 = vadd.f32 0.0, %v2224
        %v2226 = vpop.f32.mrf.mxu0
        %v2227 = vadd.f32 0.0, %v2226
        %2228 = vdwg.mxu0
        %v2230 = vsel %vm1380, %v2102, 0
        %v2233 = vsel %vm1384, %v1993, 0
        %2235 = vmatpush.bf16.msra.mxu0 0
        %2236 = vmatpush.bf16.msra.mxu0 0
        %2237 = vmatpush.bf16.msra.mxu0 0
        %2238 = vmatpush.bf16.msra.mxu0 0
        %2239 = vmatpush.bf16.msra.mxu0 0
        %2240 = vmatpush.bf16.msra.mxu0 0
        %2241 = vmatpush.bf16.msra.mxu0 0
        %2242 = vmatpush.bf16.msra.mxu0 %v2233
        %2243 = vmatmul.bf16.gmra.mxu0 %v2230
        %v2244 = vpop.f32.mrf.mxu0
        %v2245 = vadd.f32 %v2225, %v2244
        %v2246 = vpop.f32.mrf.mxu0
        %v2247 = vadd.f32 %v2227, %v2246
        %2248 = vdwg.mxu0
        %2249 = vrot.lane.b32.xlu0 %v1932, 112
        %v2250 = vpop.permute.xlu0 %2249
        %2252 = vxpose.xlu0.b32.start [1/16] %v2250, 128
        %2253 = vxpose.xlu0.b32.cont [2/16] 0.0, 128
        %2254 = vxpose.xlu0.b32.cont [3/16] 0.0, 128
        %2255 = vxpose.xlu0.b32.cont [4/16] 0.0, 128
        %2256 = vxpose.xlu0.b32.cont [5/16] 0.0, 128
        %2257 = vxpose.xlu0.b32.cont [6/16] 0.0, 128
        %2258 = vxpose.xlu0.b32.cont [7/16] 0.0, 128
        %2259 = vxpose.xlu0.b32.cont [8/16] 0.0, 128
        %2260 = vxpose.xlu0.b32.cont [9/16] 0.0, 128
        %2261 = vxpose.xlu0.b32.cont [10/16] 0.0, 128
        %2262 = vxpose.xlu0.b32.cont [11/16] 0.0, 128
        %2263 = vxpose.xlu0.b32.cont [12/16] 0.0, 128
        %2264 = vxpose.xlu0.b32.cont [13/16] 0.0, 128
        %2265 = vxpose.xlu0.b32.cont [14/16] 0.0, 128
        %2266 = vxpose.xlu0.b32.cont [15/16] 0.0, 128
        %2267 = vxpose.xlu0.b32.end [16/16] 0.0, 128
        %v2268 = vpop.trf.xlu0
        %v2269 = vpop.trf.xlu0
        %v2270 = vpop.trf.xlu0
        %v2271 = vpop.trf.xlu0
        %v2272 = vpop.trf.xlu0
        %v2273 = vpop.trf.xlu0
        %v2274 = vpop.trf.xlu0
        %v2275 = vpop.trf.xlu0
        %v2276 = vpop.trf.xlu0
        %v2277 = vpop.trf.xlu0
        %v2278 = vpop.trf.xlu0
        %v2279 = vpop.trf.xlu0
        %v2280 = vpop.trf.xlu0
        %v2281 = vpop.trf.xlu0
        %v2282 = vpop.trf.xlu0
        %v2283 = vpop.trf.xlu0
        %v2284 = vpack.c.bf16 %v2268, %v2268
        %2285 = vrot.lane.b32.xlu0 %v1998, 112
        %v2286 = vpop.permute.xlu0 %2285
        %v2288 = vsel %vm1380, %v2286, 0
        %v2291 = vsel %vm1384, %v2284, 0
        %2293 = vmatpush.bf16.msra.mxu0 0
        %2294 = vmatpush.bf16.msra.mxu0 0
        %2295 = vmatpush.bf16.msra.mxu0 0
        %2296 = vmatpush.bf16.msra.mxu0 0
        %2297 = vmatpush.bf16.msra.mxu0 0
        %2298 = vmatpush.bf16.msra.mxu0 0
        %2299 = vmatpush.bf16.msra.mxu0 0
        %2300 = vmatpush.bf16.msra.mxu0 %v2291
        %2301 = vmatmul.bf16.gmra.mxu0 %v2288
        %v2302 = vpop.f32.mrf.mxu0
        %v2303 = vadd.f32 %v2033, %v2302
        %v2304 = vpop.f32.mrf.mxu0
        %v2305 = vadd.f32 %v2033, %v2304
        %2306 = vdwg.mxu0
        %v2307 = vsel %vm1380, %v2303, -inf
        %2308 = vmax.xlane.f32.xlu0 %v2307
        %v2309 = vpop.xlane.xlu0 %2308
        %v2310 = vsel %vm1380, %v2305, -inf
        %2311 = vmax.xlane.f32.xlu0 %v2310
        %v2312 = vpop.xlane.xlu0 %2311
        %v2313 = vsub.f32 %v2303, %v2309
        %v2314 = vsub.f32 %v2305, %v2312
        %v2315 = vmul.f32 %v2313, 1.442695
        %v2316 = vpow.pop %v2315
        %v2317 = vmul.f32 %v2314, 1.442695
        %v2318 = vpow.pop %v2317
        %v2319 = vsel %vm1380, %v2316, 0.0
        %2320 = vadd.xlane.f32.xlu0 %v2319
        %v2321 = vpop.xlane.xlu0 %2320
        %v2322 = vsel %vm1380, %v2318, 0.0
        %2323 = vadd.xlane.f32.xlu0 %v2322
        %v2324 = vpop.xlane.xlu0 %2323
        %v2325 = vrcp.pop %v2321
        %v2326 = vrcp.pop %v2324
        %v2327 = vmul.f32 %v2316, %v2325
        %v2328 = vmul.f32 %v2318, %v2326
        %v2329 = vpack.c.bf16 %v2328, %v2327
        %2330 = vrot.lane.b32.xlu0 %v2078, 80
        %v2331 = vpop.permute.xlu0 %2330
        %v2333 = vsel %vm1380, %v2329, 0
        %v2336 = vsel %vm1384, %v2331, 0
        %2338 = vmatpush.bf16.msra.mxu0 0
        %2339 = vmatpush.bf16.msra.mxu0 0
        %2340 = vmatpush.bf16.msra.mxu0 0
        %2341 = vmatpush.bf16.msra.mxu0 0
        %2342 = vmatpush.bf16.msra.mxu0 0
        %2343 = vmatpush.bf16.msra.mxu0 0
        %2344 = vmatpush.bf16.msra.mxu0 0
        %2345 = vmatpush.bf16.msra.mxu0 %v2336
        %2346 = vmatmul.bf16.gmra.mxu0 %v2333
        %v2347 = vpop.f32.mrf.mxu0
        %v2348 = vadd.f32 0.0, %v2347
        %v2349 = vpop.f32.mrf.mxu0
        %v2350 = vadd.f32 0.0, %v2349
        %2351 = vdwg.mxu0
        %v2352 = vpack.c.bf16 %v2350, %v2348
        %v2354 = vsel %vm1380, %v2352, 0
        %v2357 = vsel %vm1384, %v1995, 0
        %2359 = vmatpush.bf16.msra.mxu0 0
        %2360 = vmatpush.bf16.msra.mxu0 0
        %2361 = vmatpush.bf16.msra.mxu0 0
        %2362 = vmatpush.bf16.msra.mxu0 0
        %2363 = vmatpush.bf16.msra.mxu0 0
        %2364 = vmatpush.bf16.msra.mxu0 0
        %2365 = vmatpush.bf16.msra.mxu0 0
        %2366 = vmatpush.bf16.msra.mxu0 %v2357
        %2367 = vmatmul.bf16.gmra.mxu0 %v2354
        %v2368 = vpop.f32.mrf.mxu0
        %v2369 = vadd.f32 0.0, %v2368
        %v2370 = vpop.f32.mrf.mxu0
        %v2371 = vadd.f32 0.0, %v2370
        %2372 = vdwg.mxu0
        %v2373 = vadd.f32 %v2245, %v2369
        %v2374 = vadd.f32 %v2247, %v2371
        %2375 = vrot.lane.b32.xlu0 %v1932, 104
        %v2376 = vpop.permute.xlu0 %2375
        %2378 = vxpose.xlu0.b32.start [1/16] %v2376, 128
        %2379 = vxpose.xlu0.b32.cont [2/16] 0.0, 128
        %2380 = vxpose.xlu0.b32.cont [3/16] 0.0, 128
        %2381 = vxpose.xlu0.b32.cont [4/16] 0.0, 128
        %2382 = vxpose.xlu0.b32.cont [5/16] 0.0, 128
        %2383 = vxpose.xlu0.b32.cont [6/16] 0.0, 128
        %2384 = vxpose.xlu0.b32.cont [7/16] 0.0, 128
        %2385 = vxpose.xlu0.b32.cont [8/16] 0.0, 128
        %2386 = vxpose.xlu0.b32.cont [9/16] 0.0, 128
        %2387 = vxpose.xlu0.b32.cont [10/16] 0.0, 128
        %2388 = vxpose.xlu0.b32.cont [11/16] 0.0, 128
        %2389 = vxpose.xlu0.b32.cont [12/16] 0.0, 128
        %2390 = vxpose.xlu0.b32.cont [13/16] 0.0, 128
        %2391 = vxpose.xlu0.b32.cont [14/16] 0.0, 128
        %2392 = vxpose.xlu0.b32.cont [15/16] 0.0, 128
        %2393 = vxpose.xlu0.b32.end [16/16] 0.0, 128
        %v2394 = vpop.trf.xlu0
        %v2395 = vpop.trf.xlu0
        %v2396 = vpop.trf.xlu0
        %v2397 = vpop.trf.xlu0
        %v2398 = vpop.trf.xlu0
        %v2399 = vpop.trf.xlu0
        %v2400 = vpop.trf.xlu0
        %v2401 = vpop.trf.xlu0
        %v2402 = vpop.trf.xlu0
        %v2403 = vpop.trf.xlu0
        %v2404 = vpop.trf.xlu0
        %v2405 = vpop.trf.xlu0
        %v2406 = vpop.trf.xlu0
        %v2407 = vpop.trf.xlu0
        %v2408 = vpop.trf.xlu0
        %v2409 = vpop.trf.xlu0
        %v2410 = vpack.c.bf16 %v2394, %v2394
        %2411 = vrot.lane.b32.xlu0 %v1998, 104
        %v2412 = vpop.permute.xlu0 %2411
        %v2414 = vsel %vm1380, %v2412, 0
        %v2417 = vsel %vm1384, %v2410, 0
        %2419 = vmatpush.bf16.msra.mxu0 0
        %2420 = vmatpush.bf16.msra.mxu0 0
        %2421 = vmatpush.bf16.msra.mxu0 0
        %2422 = vmatpush.bf16.msra.mxu0 0
        %2423 = vmatpush.bf16.msra.mxu0 0
        %2424 = vmatpush.bf16.msra.mxu0 0
        %2425 = vmatpush.bf16.msra.mxu0 0
        %2426 = vmatpush.bf16.msra.mxu0 %v2417
        %2427 = vmatmul.bf16.gmra.mxu0 %v2414
        %v2428 = vpop.f32.mrf.mxu0
        %v2429 = vadd.f32 %v2033, %v2428
        %v2430 = vpop.f32.mrf.mxu0
        %v2431 = vadd.f32 %v2033, %v2430
        %2432 = vdwg.mxu0
        %v2433 = vsel %vm1380, %v2429, -inf
        %2434 = vmax.xlane.f32.xlu0 %v2433
        %v2435 = vpop.xlane.xlu0 %2434
        %v2436 = vsel %vm1380, %v2431, -inf
        %2437 = vmax.xlane.f32.xlu0 %v2436
        %v2438 = vpop.xlane.xlu0 %2437
        %v2439 = vsub.f32 %v2429, %v2435
        %v2440 = vsub.f32 %v2431, %v2438
        %v2441 = vmul.f32 %v2439, 1.442695
        %v2442 = vpow.pop %v2441
        %v2443 = vmul.f32 %v2440, 1.442695
        %v2444 = vpow.pop %v2443
        %v2445 = vsel %vm1380, %v2442, 0.0
        %2446 = vadd.xlane.f32.xlu0 %v2445
        %v2447 = vpop.xlane.xlu0 %2446
        %v2448 = vsel %vm1380, %v2444, 0.0
        %2449 = vadd.xlane.f32.xlu0 %v2448
        %v2450 = vpop.xlane.xlu0 %2449
        %v2451 = vrcp.pop %v2447
        %v2452 = vrcp.pop %v2450
        %v2453 = vmul.f32 %v2442, %v2451
        %v2454 = vmul.f32 %v2444, %v2452
        %v2455 = vpack.c.bf16 %v2454, %v2453
        %2456 = vrot.lane.b32.xlu0 %v2078, 72
        %v2457 = vpop.permute.xlu0 %2456
        %v2459 = vsel %vm1380, %v2455, 0
        %v2462 = vsel %vm1384, %v2457, 0
        %2464 = vmatpush.bf16.msra.mxu0 0
        %2465 = vmatpush.bf16.msra.mxu0 0
        %2466 = vmatpush.bf16.msra.mxu0 0
        %2467 = vmatpush.bf16.msra.mxu0 0
        %2468 = vmatpush.bf16.msra.mxu0 0
        %2469 = vmatpush.bf16.msra.mxu0 0
        %2470 = vmatpush.bf16.msra.mxu0 0
        %2471 = vmatpush.bf16.msra.mxu0 %v2462
        %2472 = vmatmul.bf16.gmra.mxu0 %v2459
        %v2473 = vpop.f32.mrf.mxu0
        %v2474 = vadd.f32 0.0, %v2473
        %v2475 = vpop.f32.mrf.mxu0
        %v2476 = vadd.f32 0.0, %v2475
        %2477 = vdwg.mxu0
        %v2478 = vpack.c.bf16 %v2476, %v2474
        %v2480 = vsel %vm1380, %v2478, 0
        %v2483 = vsel %vm1384, %v1996, 0
        %2485 = vmatpush.bf16.msra.mxu0 0
        %2486 = vmatpush.bf16.msra.mxu0 0
        %2487 = vmatpush.bf16.msra.mxu0 0
        %2488 = vmatpush.bf16.msra.mxu0 0
        %2489 = vmatpush.bf16.msra.mxu0 0
        %2490 = vmatpush.bf16.msra.mxu0 0
        %2491 = vmatpush.bf16.msra.mxu0 0
        %2492 = vmatpush.bf16.msra.mxu0 %v2483
        %2493 = vmatmul.bf16.gmra.mxu0 %v2480
        %v2494 = vpop.f32.mrf.mxu0
        %v2495 = vadd.f32 0.0, %v2494
        %v2496 = vpop.f32.mrf.mxu0
        %v2497 = vadd.f32 0.0, %v2496
        %2498 = vdwg.mxu0
        %v2499 = vadd.f32 %v2373, %v2495
        %v2500 = vadd.f32 %v2374, %v2497
        %v2502 = vperm.slane %v1997, 0
        %v2504 = vadd.f32 %v2499, %v2502
        %v2505 = vadd.f32 %v2500, %v2502
        %v2506 = vadd.f32 %v1857, %v2504
        %v2507 = vadd.f32 %v1858, %v2505
        %v2508 = vsel %vm956, %v2506, 0.0
        %2509 = vadd.xlane.f32.xlu0 %v2508
        %v2510 = vpop.xlane.xlu0 %2509
        %v2511 = vsel %vm956, %v2507, 0.0
        %2512 = vadd.xlane.f32.xlu0 %v2511
        %v2513 = vpop.xlane.xlu0 %2512
        %v2514 = vmul.f32 %v2510, %v1033
        %v2515 = vmul.f32 %v2513, %v1033
        %v2516 = vsub.f32 %v2506, %v2514
        %v2517 = vsub.f32 %v2507, %v2515
        %v2518 = vmul.f32 %v2516, %v2516
        %v2519 = vmul.f32 %v2517, %v2517
        %v2520 = vsel %vm956, %v2518, 0.0
        %2521 = vadd.xlane.f32.xlu0 %v2520
        %v2522 = vpop.xlane.xlu0 %2521
        %v2523 = vsel %vm956, %v2519, 0.0
        %2524 = vadd.xlane.f32.xlu0 %v2523
        %v2525 = vpop.xlane.xlu0 %2524
        %v2526 = vmul.f32 %v2522, %v1033
        %v2527 = vmul.f32 %v2525, %v1033
        %v2528 = vadd.f32 %v2526, 1e-06
        %v2529 = vadd.f32 %v2527, 1e-06
        %v2530 = vrsqrt.pop %v2528
        %v2531 = vmul.f32 %v2530, %v2528
        %v2532 = vmul.f32 %v2531, %v2530
        %v2533 = vmul.f32 0.5, %v2532
        %v2534 = vsub.f32 1.5, %v2533
        %v2535 = vmul.f32 %v2530, %v2534
        %vm2536 = vweird.f32 %v2528
        %vm2537 = vweird.f32 %v2530
        %vm2538 = vmor %vm2536, %vm2537
        %v2539 = vsel %vm2538, %v2530, %v2535
        %v2540 = vrsqrt.pop %v2529
        %v2541 = vmul.f32 %v2540, %v2529
        %v2542 = vmul.f32 %v2541, %v2540
        %v2543 = vmul.f32 0.5, %v2542
        %v2544 = vsub.f32 1.5, %v2543
        %v2545 = vmul.f32 %v2540, %v2544
        %vm2546 = vweird.f32 %v2529
        %vm2547 = vweird.f32 %v2540
        %vm2548 = vmor %vm2546, %vm2547
        %v2549 = vsel %vm2548, %v2540, %v2545
        %v2550 = vmul.f32 %v2516, %v2539
        %v2551 = vmul.f32 %v2517, %v2549
        %v2552 = vadd.f32 %v1004, 1.0
        %v2553 = vperm.slane %v2552, 0
        %2555 = vrot.lane.b32.xlu0 %v2553, 32
        %v2556 = vpop.permute.xlu0 %2555
        %v2558 = vmul.f32 %v2550, %v2556
        %v2559 = vmul.f32 %v2551, %v2556
        %v2560 = vperm.slane %v1020, 0
        %2562 = vrot.lane.b32.xlu0 %v2560, 96
        %v2563 = vpop.permute.xlu0 %2562
        %v2565 = vadd.f32 %v2558, %v2563
        %v2566 = vadd.f32 %v2559, %v2563
        %v2567 = vpack.c.bf16 %v2566, %v2565
        %v2568 = vld [vmem:[%s23] sm:$0xff]
        %v2569 = vld [vmem:[%s23 + $0x8] sm:$0xff]
        %v2570 = vld [vmem:[%s23 + $0x10] sm:$0xff]
        %v2571 = vld [vmem:[%s23 + $0x18] sm:$0xff]
        %v2572 = vld [vmem:[%s24] sm:$0x3]
        %v2574 = vperm.slane %v2572, 0
        %v2575 = vperm.slane %v2572, 1
        %v2582 = vunpack.c.l.b16 %v2568
        %v2583 = vunpack.c.h.b16 %v2568
        %v2584 = vunpack.c.l.b16 %v2569
        %v2585 = vunpack.c.h.b16 %v2569
        %v2586 = vunpack.c.l.b16 %v2570
        %v2587 = vunpack.c.h.b16 %v2570
        %v2588 = vunpack.c.l.b16 %v2571
        %v2589 = vunpack.c.h.b16 %v2571
        %v2590 = vpack.c.b16 %v2584, %v2582
        %v2591 = vpack.c.b16 %v2585, %v2583
        %v2592 = vpack.c.b16 %v2588, %v2586
        %v2593 = vpack.c.b16 %v2589, %v2587
        %v2599 = vsel %vm956, %v2567, 0
        %2601 = vmatpush.bf16.msra.mxu0 0
        %2602 = vmatpush.bf16.msra.mxu0 0
        %2603 = vmatpush.bf16.msra.mxu0 0
        %2604 = vmatpush.bf16.msra.mxu0 0
        %2605 = vmatpush.bf16.msra.mxu0 0
        %2606 = vmatpush.bf16.msra.mxu0 0
        %2607 = vmatpush.bf16.msra.mxu0 %v2592
        %2608 = vmatpush.bf16.msra.mxu0 %v2590
        %2609 = vmatmul.bf16.gmra.mxu0 %v2599
        %v2610 = vpop.f32.mrf.mxu0
        %v2611 = vadd.f32 %v2574, %v2610
        %v2612 = vpop.f32.mrf.mxu0
        %v2613 = vadd.f32 %v2574, %v2612
        %2614 = vdwg.mxu0
        %2615 = vmatpush.bf16.msra.mxu0 0
        %2616 = vmatpush.bf16.msra.mxu0 0
        %2617 = vmatpush.bf16.msra.mxu0 0
        %2618 = vmatpush.bf16.msra.mxu0 0
        %2619 = vmatpush.bf16.msra.mxu0 0
        %2620 = vmatpush.bf16.msra.mxu0 0
        %2621 = vmatpush.bf16.msra.mxu0 %v2593
        %2622 = vmatpush.bf16.msra.mxu0 %v2591
        %2623 = vmatmul.bf16.gmra.mxu0 %v2599
        %v2624 = vpop.f32.mrf.mxu0
        %v2625 = vadd.f32 %v2575, %v2624
        %v2626 = vpop.f32.mrf.mxu0
        %v2627 = vadd.f32 %v2575, %v2626
        %2628 = vdwg.mxu0
        %v2629 = vxor.u32 %v2611, 2147483648
        %v2630 = vxor.u32 %v2613, 2147483648
        %v2631 = vmul.f32 %v2629, 1.442695
        %v2632 = vpow.pop %v2631
        %v2633 = vmul.f32 %v2630, 1.442695
        %v2634 = vpow.pop %v2633
        %v2635 = vadd.f32 %v2632, 1.0
        %v2636 = vadd.f32 %v2634, 1.0
        %v2637 = vrcp.pop %v2635
        %v2638 = vmul.f32 %v2635, %v2637
        %v2639 = vsub.f32 1.0, %v2638
        %v2640 = vmul.f32 %v2637, %v2639
        %v2641 = vadd.f32 %v2637, %v2640
        %vm2642 = vweird.f32 %v2635
        %vm2643 = vweird.f32 %v2637
        %vm2644 = vmor %vm2642, %vm2643
        %v2645 = vsel %vm2644, %v2637, %v2641
        %v2646 = vand.u32 2147483647, %v2635
        %vm2647 = vcmp.eq.f32.partialorder %v2646, 8.507059e+37
        %v2648 = vand.u32 %v2635, 2147483648
        %v2649 = vor.u32 1.1754944e-38, %v2648
        %v2650 = vsel %vm2647, %v2649, %v2645
        %v2651 = vmul.f32 1.0, %v2650
        %v2652 = vrcp.pop %v2636
        %v2653 = vmul.f32 %v2636, %v2652
        %v2654 = vsub.f32 1.0, %v2653
        %v2655 = vmul.f32 %v2652, %v2654
        %v2656 = vadd.f32 %v2652, %v2655
        %vm2657 = vweird.f32 %v2636
        %vm2658 = vweird.f32 %v2652
        %vm2659 = vmor %vm2657, %vm2658
        %v2660 = vsel %vm2659, %v2652, %v2656
        %v2661 = vand.u32 2147483647, %v2636
        %vm2662 = vcmp.eq.f32.partialorder %v2661, 8.507059e+37
        %v2663 = vand.u32 %v2636, 2147483648
        %v2664 = vor.u32 1.1754944e-38, %v2663
        %v2665 = vsel %vm2662, %v2664, %v2660
        %v2666 = vmul.f32 1.0, %v2665
        %v2667 = vmul.f32 %v2611, %v2651
        %v2668 = vmul.f32 %v2613, %v2666
        %v2669 = vmul.f32 %v2667, %v2625
        %v2670 = vmul.f32 %v2668, %v2627
        %v2671 = vpack.c.bf16 %v2670, %v2669
        %v2672 = vld [vmem:[%s25] sm:$0xf]
        %v2673 = vld [vmem:[%s25 + $0x4] sm:$0xf]
        %v2674 = vld [vmem:[%s25 + $0x8] sm:$0xf]
        %v2675 = vld [vmem:[%s25 + $0xc] sm:$0xf]
        %v2676 = vld [vmem:[%s25 + $0x10] sm:$0xf]
        %v2677 = vld [vmem:[%s25 + $0x14] sm:$0xf]
        %v2678 = vld [vmem:[%s25 + $0x18] sm:$0xf]
        %v2679 = vld [vmem:[%s25 + $0x1c] sm:$0xf]
        %v2680 = vld [vmem:[%s25 + $0x20] sm:$0xf]
        %v2681 = vld [vmem:[%s25 + $0x24] sm:$0xf]
        %v2682 = vld [vmem:[%s25 + $0x28] sm:$0xf]
        %v2683 = vld [vmem:[%s25 + $0x2c] sm:$0xf]
        %v2684 = vld [vmem:[%s25 + $0x30] sm:$0xf]
        %v2685 = vld [vmem:[%s25 + $0x34] sm:$0xf]
        %v2686 = vld [vmem:[%s25 + $0x38] sm:$0xf]
        %v2687 = vld [vmem:[%s25 + $0x3c] sm:$0xf]
        %v2688 = vld [vmem:[#allocation4] sm:$0x1]
        %v2690 = vperm.slane %v2688, 0
        %v2708 = vunpack.c.l.b16 %v2672
        %v2709 = vunpack.c.l.b16 %v2673
        %v2710 = vunpack.c.l.b16 %v2674
        %v2711 = vunpack.c.l.b16 %v2675
        %v2712 = vunpack.c.l.b16 %v2676
        %v2713 = vunpack.c.l.b16 %v2677
        %v2714 = vunpack.c.l.b16 %v2678
        %v2715 = vunpack.c.l.b16 %v2679
        %v2716 = vunpack.c.l.b16 %v2680
        %v2717 = vunpack.c.l.b16 %v2681
        %v2718 = vunpack.c.l.b16 %v2682
        %v2719 = vunpack.c.l.b16 %v2683
        %v2720 = vunpack.c.l.b16 %v2684
        %v2721 = vunpack.c.l.b16 %v2685
        %v2722 = vunpack.c.l.b16 %v2686
        %v2723 = vunpack.c.l.b16 %v2687
        %v2724 = vpack.c.b16 %v2709, %v2708
        %v2725 = vpack.c.b16 %v2711, %v2710
        %v2726 = vpack.c.b16 %v2713, %v2712
        %v2727 = vpack.c.b16 %v2715, %v2714
        %v2728 = vpack.c.b16 %v2717, %v2716
        %v2729 = vpack.c.b16 %v2719, %v2718
        %v2730 = vpack.c.b16 %v2721, %v2720
        %v2731 = vpack.c.b16 %v2723, %v2722
        %2740 = vmatpush.bf16.msra.mxu0 %v2731
        %2741 = vmatpush.bf16.msra.mxu0 %v2730
        %2742 = vmatpush.bf16.msra.mxu0 %v2729
        %2743 = vmatpush.bf16.msra.mxu0 %v2728
        %2744 = vmatpush.bf16.msra.mxu0 %v2727
        %2745 = vmatpush.bf16.msra.mxu0 %v2726
        %2746 = vmatpush.bf16.msra.mxu0 %v2725
        %2747 = vmatpush.bf16.msra.mxu0 %v2724
        %2748 = vmatmul.bf16.gmra.mxu0 %v2671
        %v2749 = vpop.f32.mrf.mxu0
        %v2750 = vadd.f32 %v2690, %v2749
        %v2751 = vpop.f32.mrf.mxu0
        %v2752 = vadd.f32 %v2690, %v2751
        %2753 = vdwg.mxu0
        %v2754 = vperm.slane %v994, 0
        %2757 = vrot.lane.b32.xlu0 %v2750, 32
        %v2758 = vpop.permute.xlu0 %2757
        %2759 = vrot.lane.b32.xlu0 %v2752, 32
        %v2760 = vpop.permute.xlu0 %2759
        %v2763 = vmul.f32 %v2754, %v2758
        %v2764 = vmul.f32 %v2754, %v2760
        %2767 = vrot.lane.b32.xlu0 %v2763, 96
        %v2768 = vpop.permute.xlu0 %2767
        %2769 = vrot.lane.b32.xlu0 %v2764, 96
        %v2770 = vpop.permute.xlu0 %2769
        %v2773 = vadd.f32 %v2506, %v2768
        %v2774 = vadd.f32 %v2507, %v2770
        %2775 = vst.msk [vmem:[%s907] sm:$0xff] %vm956, %v2773
        %2776 = vst.msk [vmem:[%s907 + $0x8] sm:$0xff] %vm956, %v2774
        %p2777 = scmp.lt.s32.totalorder %s40, 1
        %s2778 = scalar_select %p2777, %s40, 1
        %s2779 = smul.addr %s2778, 2
        %s2780 = smul.addr %s2779, 8
        %s2781 = scalar_lea.vmem %s27, %s2780
        // Predicated region
        $region137: #{switti_forward.7} parent=127 // pred_check
          %p2782 = pneg %p650
        $region138: #{switti_forward.7} parent=127 // pred_check_branch
          %2784 = sbr.rel (%p2782) target = $region140
        $region139: #{switti_forward.7} parent=127 // pred_region
          _
        $region140: #{switti_forward.7} parent=127 // pred_fallthru
          _
      $region128: #{switti_forward.7} parent=5 // pred_fallthru
        _
      %p2785 = scmp.le.s32.totalorder 2, %s35
      // Predicated region
      $region141: #{switti_forward.7} parent=5 // pred_check
        %p2786 = pneg %p2785
      $region142: #{switti_forward.7} parent=5 // pred_check_branch
        %2788 = sbr.rel (%p2786) target = $region144
      $region143: #{switti_forward.7} parent=5 // pred_region
        %s2789 = ssub.s32 %s35, 2
        // Predicated region
        $region145: #{switti_forward.7} parent=143 // pred_check
          %p2790 = pneg %p656
        $region146: #{switti_forward.7} parent=143 // pred_check_branch
          %2792 = sbr.rel (%p2790) target = $region148
        $region147: #{switti_forward.7} parent=143 // pred_region
          %p2793 = scmp.lt.s32.totalorder %s41, 1
          %s2794 = scalar_select %p2793, %s41, 1
          %s2795 = smul.addr %s2794, 2
          %s2796 = smul.addr %s2795, 8
          %s2797 = scalar_lea.vmem %s27, %s2796
        $region148: #{switti_forward.7} parent=143 // pred_fallthru
          _
      $region144: #{switti_forward.7} parent=5 // pred_fallthru
        _
    $region6: #{switti_forward.7} parent=1 // loop_footer
      %s39 = sadd.s32 1, %s35
    $region7: #{switti_forward.7} parent=1 // loop_footer_branch
      %34 = sbr.rel target = $region3
    $region8: #{switti_forward.7} parent=1 // loop_exit
      _
    %2798 = vsyncpa [#allocation3], 1
    %s2799 = scalar_lea.sflag [#allocation3], 1
    %2800 = vsyncpa %s2799, 1
    %2801 = vsyncpa [#allocation5], 1

// kernel: switti_forward.9
$region0: #{switti_forward.9}
  #allocation0 [shape = 'u32[]', space=smem, size = 0x4, offset = 0x4, fixed_abs, tag = 'smem constant byte address 0x4 - core index']
  #allocation1 [shape = 'u32[72,128]{1,0:T(1,128)}', space=vmem, size = 0x9000, scoped, tag = 'internal scratch']
  %s0 = inlined_call_operand.vmem [shape: f32[2,16,32], index: 0, kind: input, shape index: {}]
  %s1 = inlined_call_operand.vmem [shape: f32[2,1,32], index: 1, kind: input, shape index: {}]
  %s2 = inlined_call_operand.vmem [shape: bf16[32,64], index: 2, kind: input, shape index: {}]
  %s3 = inlined_call_operand.hbm [shape: f32[1,64], index: 3, kind: input, shape index: {}]
  %s4 = inlined_call_operand.vmem [shape: bf16[32,128], index: 4, kind: input, shape index: {}]
  %s5 = inlined_call_operand.hbm [shape: f32[1,128], index: 5, kind: input, shape index: {}]
  %s6 = inlined_call_operand.vmem [shape: f32[2,16,128], index: 6, kind: output, shape index: {}]
  %s7 = sld [smem:[#allocation0]]
  $region65: #{switti_forward.9} parent=0
    _
  %s9 = ssub.s32 1, %s7
  %s10 = scalar_select 0, %s9, %s7
  $region1: #{switti_forward.9} parent=0
    #allocation2 [shape = 'u8[512]{0}', space=vmem, size = 0x400, scoped, tag = 'input window, operand 3, single buffered']
    #allocation3 [shape = 's32[2]{0}', space=sflag, size = 0x8, scoped, tag = 'scoped memory for switti_forward.9']
    #allocation4 [shape = 'u8[512]{0}', space=vmem, size = 0x400, scoped, tag = 'input window, operand 5, single buffered']
    #allocation5 [shape = 's32[1]{0}', space=sflag, size = 0x4, scoped, tag = 'scoped memory for switti_forward.9']
    %11 = vsyncpa [#allocation3], 0
    %12 = vsyncpa [#allocation5], 0
    loop: start=0, step=1, limit=4
    $region2: #{switti_forward.9} parent=1 // loop_pre_header
      _
    $region3: #{switti_forward.9} parent=1 // loop_header
      %s14 = sphi 0, %s18
      %p15 = scmp.ge.s32.totalorder %s14, 4
      %s24 = sphi 0, %s26
      %s27 = sphi 0, %s24
      %s28 = sphi 0, %s27
      %s44 = sphi 0, %s28
      %s50 = sphi 0, %s52
      %s53 = sphi 0, %s50
      %s54 = sphi 0, %s53
      %s70 = sphi 0, %s54
      %s74 = sphi 0, %s74
      %s76 = sphi 0, %s74
      %s77 = sphi 0, %s76
      %s91 = sphi 0, %s77
      %s95 = sphi 0, %s95
      %s97 = sphi 0, %s95
      %s98 = sphi 0, %s97
      %s112 = sphi 0, %s98
      %s116 = sphi 0, %s116
      %s118 = sphi 0, %s116
      %s119 = sphi 0, %s118
      %s133 = sphi 0, %s119
      %s137 = sphi 0, %s137
      %s139 = sphi 0, %s137
      %s140 = sphi 0, %s139
      %s154 = sphi 0, %s140
      %s160 = sphi 0, %s162
      %s163 = sphi 0, %s160
      %s164 = sphi 0, %s163
      %s180 = sphi 0, %s164
    $region4: #{switti_forward.9} parent=1 // loop_header_branch
      %17 = sbr.rel (%p15) target = $region8
    $region5: #{switti_forward.9} parent=1 // loop_body
      %s19 = ssub.s32 %s14, 1
      %s20 = ssub.s32 %s14, 2
      %s21 = sadd.s32 %s14, 1
      %s22 = ssub.s32 %s14, %s21
      %p23 = scmp.eq.s32.totalorder %s22, 0
      %s25 = sadd.s32 %s24, 1
      %s26 = scalar_select %p23, %s24, %s25
      %p29 = pneg %p23
      %p30 = scmp.eq.s32.totalorder %s14, 1
      %p31 = por %p29, %p30
      %p32 = scmp.ne.s32.totalorder %s24, %s27
      %p33 = scmp.eq.s32.totalorder %s14, 0
      %p34 = por %p32, %p33
      %p35 = scmp.ne.s32.totalorder %s24, %s27
      %p36 = scmp.eq.s32.totalorder %s19, 1
      %p37 = por %p35, %p36
      %p38 = scmp.ne.s32.totalorder %s27, %s28
      %p39 = scmp.eq.s32.totalorder %s19, 0
      %p40 = por %p38, %p39
      %p41 = scmp.ne.s32.totalorder %s27, %s28
      %p42 = scmp.eq.s32.totalorder %s20, 1
      %p43 = por %p41, %p42
      %p45 = scmp.ne.s32.totalorder %s28, %s44
      %p46 = scmp.eq.s32.totalorder %s20, 0
      %p47 = por %p45, %p46
      %s48 = ssub.s32 %s14, %s21
      %p49 = scmp.eq.s32.totalorder %s48, 0
      %s51 = sadd.s32 %s50, 1
      %s52 = scalar_select %p49, %s50, %s51
      %p55 = pneg %p49
      %p56 = scmp.eq.s32.totalorder %s14, 1
      %p57 = por %p55, %p56
      %p58 = scmp.ne.s32.totalorder %s50, %s53
      %p59 = scmp.eq.s32.totalorder %s14, 0
      %p60 = por %p58, %p59
      %p61 = scmp.ne.s32.totalorder %s50, %s53
      %p62 = scmp.eq.s32.totalorder %s19, 1
      %p63 = por %p61, %p62
      %p64 = scmp.ne.s32.totalorder %s53, %s54
      %p65 = scmp.eq.s32.totalorder %s19, 0
      %p66 = por %p64, %p65
      %p67 = scmp.ne.s32.totalorder %s53, %s54
      %p68 = scmp.eq.s32.totalorder %s20, 1
      %p69 = por %p67, %p68
      %p71 = scmp.ne.s32.totalorder %s54, %s70
      %p72 = scmp.eq.s32.totalorder %s20, 0
      %p73 = por %p71, %p72
      %s75 = sadd.s32 %s74, 1
      %p78 = scmp.eq.s32.totalorder %s14, 1
      %p79 = scmp.ne.s32.totalorder %s74, %s76
      %p80 = scmp.eq.s32.totalorder %s14, 0
      %p81 = por %p79, %p80
      %p82 = scmp.ne.s32.totalorder %s74, %s76
      %p83 = scmp.eq.s32.totalorder %s19, 1
      %p84 = por %p82, %p83
      %p85 = scmp.ne.s32.totalorder %s76, %s77
      %p86 = scmp.eq.s32.totalorder %s19, 0
      %p87 = por %p85, %p86
      %p88 = scmp.ne.s32.totalorder %s76, %s77
      %p89 = scmp.eq.s32.totalorder %s20, 1
      %p90 = por %p88, %p89
      %p92 = scmp.ne.s32.totalorder %s77, %s91
      %p93 = scmp.eq.s32.totalorder %s20, 0
      %p94 = por %p92, %p93
      %s96 = sadd.s32 %s95, 1
      %p99 = scmp.eq.s32.totalorder %s14, 1
      %p100 = scmp.ne.s32.totalorder %s95, %s97
      %p101 = scmp.eq.s32.totalorder %s14, 0
      %p102 = por %p100, %p101
      %p103 = scmp.ne.s32.totalorder %s95, %s97
      %p104 = scmp.eq.s32.totalorder %s19, 1
      %p105 = por %p103, %p104
      %p106 = scmp.ne.s32.totalorder %s97, %s98
      %p107 = scmp.eq.s32.totalorder %s19, 0
      %p108 = por %p106, %p107
      %p109 = scmp.ne.s32.totalorder %s97, %s98
      %p110 = scmp.eq.s32.totalorder %s20, 1
      %p111 = por %p109, %p110
      %p113 = scmp.ne.s32.totalorder %s98, %s112
      %p114 = scmp.eq.s32.totalorder %s20, 0
      %p115 = por %p113, %p114
      %s117 = sadd.s32 %s116, 1
      %p120 = scmp.eq.s32.totalorder %s14, 1
      %p121 = scmp.ne.s32.totalorder %s116, %s118
      %p122 = scmp.eq.s32.totalorder %s14, 0
      %p123 = por %p121, %p122
      %p124 = scmp.ne.s32.totalorder %s116, %s118
      %p125 = scmp.eq.s32.totalorder %s19, 1
      %p126 = por %p124, %p125
      %p127 = scmp.ne.s32.totalorder %s118, %s119
      %p128 = scmp.eq.s32.totalorder %s19, 0
      %p129 = por %p127, %p128
      %p130 = scmp.ne.s32.totalorder %s118, %s119
      %p131 = scmp.eq.s32.totalorder %s20, 1
      %p132 = por %p130, %p131
      %p134 = scmp.ne.s32.totalorder %s119, %s133
      %p135 = scmp.eq.s32.totalorder %s20, 0
      %p136 = por %p134, %p135
      %s138 = sadd.s32 %s137, 1
      %p141 = scmp.eq.s32.totalorder %s14, 1
      %p142 = scmp.ne.s32.totalorder %s137, %s139
      %p143 = scmp.eq.s32.totalorder %s14, 0
      %p144 = por %p142, %p143
      %p145 = scmp.ne.s32.totalorder %s137, %s139
      %p146 = scmp.eq.s32.totalorder %s19, 1
      %p147 = por %p145, %p146
      %p148 = scmp.ne.s32.totalorder %s139, %s140
      %p149 = scmp.eq.s32.totalorder %s19, 0
      %p150 = por %p148, %p149
      %p151 = scmp.ne.s32.totalorder %s139, %s140
      %p152 = scmp.eq.s32.totalorder %s20, 1
      %p153 = por %p151, %p152
      %p155 = scmp.ne.s32.totalorder %s140, %s154
      %p156 = scmp.eq.s32.totalorder %s20, 0
      %p157 = por %p155, %p156
      %s158 = ssub.s32 %s14, %s21
      %p159 = scmp.eq.s32.totalorder %s158, 0
      %s161 = sadd.s32 %s160, 1
      %s162 = scalar_select %p159, %s160, %s161
      %p165 = pneg %p159
      %p166 = scmp.eq.s32.totalorder %s14, 1
      %p167 = por %p165, %p166
      %p168 = scmp.ne.s32.totalorder %s160, %s163
      %p169 = scmp.eq.s32.totalorder %s14, 0
      %p170 = por %p168, %p169
      %p171 = scmp.ne.s32.totalorder %s160, %s163
      %p172 = scmp.eq.s32.totalorder %s19, 1
      %p173 = por %p171, %p172
      %p174 = scmp.ne.s32.totalorder %s163, %s164
      %p175 = scmp.eq.s32.totalorder %s19, 0
      %p176 = por %p174, %p175
      %p177 = scmp.ne.s32.totalorder %s163, %s164
      %p178 = scmp.eq.s32.totalorder %s20, 1
      %p179 = por %p177, %p178
      %p181 = scmp.ne.s32.totalorder %s164, %s180
      %p182 = scmp.eq.s32.totalorder %s20, 0
      %p183 = por %p181, %p182
      %p184 = scmp.le.s32.totalorder 1, %s14
      %p185 = scmp.lt.s32.totalorder %s14, 3
      %p186 = pnand %p184, %p185
      %p187 = pneg %p186
      // Predicated region
      $region9: #{switti_forward.9} parent=5 // pred_check
        _
      $region10: #{switti_forward.9} parent=5 // pred_check_branch
        %189 = sbr.rel (%p186) target = $region12
      $region11: #{switti_forward.9} parent=5 // pred_region
        %s190 = ssub.s32 %s14, 1
        // Predicated region
        $region13: #{switti_forward.9} parent=11 // pred_check
          %p191 = pneg %p87
        $region14: #{switti_forward.9} parent=11 // pred_check_branch
          %193 = sbr.rel (%p191) target = $region16
        $region15: #{switti_forward.9} parent=11 // pred_region
          _
        $region16: #{switti_forward.9} parent=11 // pred_fallthru
          _
        // Predicated region
        $region17: #{switti_forward.9} parent=11 // pred_check
          %p194 = pneg %p108
        $region18: #{switti_forward.9} parent=11 // pred_check_branch
          %196 = sbr.rel (%p194) target = $region20
        $region19: #{switti_forward.9} parent=11 // pred_region
          %198 = vsyncadd [#allocation3], 0
          %s200 = sshll.u32 %s3, 4
          %s201 = int_to_ptr.hbm [resolvable:$true] %s200
          %s202 = sshll.u32 [#allocation2], 4
          %s203 = int_to_ptr.vmem [resolvable:$true] %s202
          %205 = dma.hbm_to_vmem [thread:$0]  %s201, 16, %s203, [#allocation3]
        $region20: #{switti_forward.9} parent=11 // pred_fallthru
          _
        // Predicated region
        $region21: #{switti_forward.9} parent=11 // pred_check
          %p206 = pneg %p129
        $region22: #{switti_forward.9} parent=11 // pred_check_branch
          %208 = sbr.rel (%p206) target = $region24
        $region23: #{switti_forward.9} parent=11 // pred_region
          _
        $region24: #{switti_forward.9} parent=11 // pred_fallthru
          _
        // Predicated region
        $region25: #{switti_forward.9} parent=11 // pred_check
          %p209 = pneg %p150
        $region26: #{switti_forward.9} parent=11 // pred_check_branch
          %211 = sbr.rel (%p209) target = $region28
        $region27: #{switti_forward.9} parent=11 // pred_region
          %213 = vsyncadd [#allocation5], 0
          %s215 = sshll.u32 %s5, 4
          %s216 = int_to_ptr.hbm [resolvable:$true] %s215
          %s217 = sshll.u32 [#allocation4], 4
          %s218 = int_to_ptr.vmem [resolvable:$true] %s217
          %220 = dma.hbm_to_vmem [thread:$0]  %s216, 16, %s218, [#allocation5]
        $region28: #{switti_forward.9} parent=11 // pred_fallthru
          _
      $region12: #{switti_forward.9} parent=5 // pred_fallthru
        _
      %p221 = scmp.lt.s32.totalorder %s14, 2
      // Predicated region
      $region29: #{switti_forward.9} parent=5 // pred_check
        %p222 = pneg %p221
      $region30: #{switti_forward.9} parent=5 // pred_check_branch
        %224 = sbr.rel (%p222) target = $region32
      $region31: #{switti_forward.9} parent=5 // pred_region
        // Predicated region
        $region33: #{switti_forward.9} parent=31 // pred_check
          %p225 = pneg %p34
        $region34: #{switti_forward.9} parent=31 // pred_check_branch
          %227 = sbr.rel (%p225) target = $region36
        $region35: #{switti_forward.9} parent=31 // pred_region
          %p228 = scmp.lt.s32.totalorder %s14, 1
          %s229 = scalar_select %p228, %s14, 1
          %s230 = smul.addr %s229, 2
          %s231 = smul.addr %s230, 8
          %s232 = scalar_lea.vmem %s0, %s231
        $region36: #{switti_forward.9} parent=31 // pred_fallthru
          _
        // Predicated region
        $region37: #{switti_forward.9} parent=31 // pred_check
          %p233 = pneg %p60
        $region38: #{switti_forward.9} parent=31 // pred_check_branch
          %235 = sbr.rel (%p233) target = $region40
        $region39: #{switti_forward.9} parent=31 // pred_region
          %p236 = scmp.lt.s32.totalorder %s14, 1
          %s237 = scalar_select %p236, %s14, 1
          %s238 = scalar_lea.vmem %s1, %s237
        $region40: #{switti_forward.9} parent=31 // pred_fallthru
          _
      $region32: #{switti_forward.9} parent=5 // pred_fallthru
        _
      %p239 = scmp.le.s32.totalorder 1, %s14
      %p240 = scmp.lt.s32.totalorder %s14, 3
      %p241 = pnand %p239, %p240
      %p242 = pneg %p241
      // Predicated region
      $region41: #{switti_forward.9} parent=5 // pred_check
        _
      $region42: #{switti_forward.9} parent=5 // pred_check_branch
        %244 = sbr.rel (%p241) target = $region44
      $region43: #{switti_forward.9} parent=5 // pred_region
        %s245 = ssub.s32 %s14, 1
        // Predicated region
        $region45: #{switti_forward.9} parent=43 // pred_check
          %p246 = pneg %p108
        $region46: #{switti_forward.9} parent=43 // pred_check_branch
          %248 = sbr.rel (%p246) target = $region48
        $region47: #{switti_forward.9} parent=43 // pred_region
          %250 = dma.done [#allocation3], 16
        $region48: #{switti_forward.9} parent=43 // pred_fallthru
          _
        // Predicated region
        $region49: #{switti_forward.9} parent=43 // pred_check
          %p251 = pneg %p150
        $region50: #{switti_forward.9} parent=43 // pred_check_branch
          %253 = sbr.rel (%p251) target = $region52
        $region51: #{switti_forward.9} parent=43 // pred_region
          %255 = dma.done [#allocation5], 16
        $region52: #{switti_forward.9} parent=43 // pred_fallthru
          _
        %p256 = scmp.lt.s32.totalorder %s19, 1
        %s257 = scalar_select %p256, %s19, 1
        %s258 = smul.addr %s257, 2
        %s259 = smul.addr %s258, 8
        %s260 = scalar_lea.vmem %s0, %s259
        %p261 = pneg %p40
        %p262 = pneg %p37
        %p263 = scmp.lt.s32.totalorder %s19, 1
        %s264 = scalar_select %p263, %s19, 1
        %s265 = scalar_lea.vmem %s1, %s264
        %p266 = pneg %p66
        %p267 = pneg %p63
        %p268 = pneg %p87
        %p269 = pneg %p84
        %p270 = pneg %p108
        %p271 = pneg %p105
        %p272 = pneg %p129
        %p273 = pneg %p126
        %p274 = pneg %p150
        %p275 = pneg %p147
        %p276 = pneg %p176
        %p277 = pneg %p173
        %p278 = scmp.lt.s32.totalorder %s19, 1
        %s279 = scalar_select %p278, %s19, 1
        %s280 = smul.addr %s279, 2
        %s281 = smul.addr %s280, 8
        %s282 = scalar_lea.vmem %s6, %s281
        %p283 = scmp.lt.s32.totalorder %s19, 1
        %s284 = scalar_select %p283, %s19, 1
        %s285 = smul.addr %s284, 2
        %s286 = smul.addr %s285, 8
        %s287 = scalar_lea.vmem %s0, %s286
        %p288 = scmp.lt.s32.totalorder %s19, 1
        %s289 = scalar_select %p288, %s19, 1
        %s290 = scalar_lea.vmem %s1, %s289
        %p291 = scmp.lt.s32.totalorder %s19, 1
        %s292 = scalar_select %p291, %s19, 1
        %s293 = smul.addr %s292, 2
        %s294 = smul.addr %s293, 8
        %s295 = scalar_lea.vmem %s6, %s294
        %v297 = vld [vmem:[%s287] sm:$0xff]
        %v298 = vld [vmem:[%s287 + $0x8] sm:$0xff]
        %v299 = vld [vmem:[%s290] sm:$0x1]
        %v300 = vpack.c.bf16 %v299, %v299
        %v301 = vld [vmem:[%s2] sm:$0xf]
        %v302 = vld [vmem:[%s2 + $0x4] sm:$0xf]
        %v303 = vld [vmem:[%s2 + $0x8] sm:$0xf]
        %v304 = vld [vmem:[%s2 + $0xc] sm:$0xf]
        %v305 = vld [vmem:[#allocation2] sm:$0x1]
        %v310 = vunpack.c.l.b16 %v301
        %v311 = vunpack.c.l.b16 %v302
        %v312 = vunpack.c.l.b16 %v303
        %v313 = vunpack.c.l.b16 %v304
        %v314 = vpack.c.b16 %v311, %v310
        %v315 = vpack.c.b16 %v313, %v312
        %vm318 = vcmask 261120
        %v320 = vsel %vm318, %v300, 0
        %322 = vmatpush.bf16.msra.mxu0 0
        %323 = vmatpush.bf16.msra.mxu0 0
        %324 = vmatpush.bf16.msra.mxu0 0
        %325 = vmatpush.bf16.msra.mxu0 0
        %326 = vmatpush.bf16.msra.mxu0 0
        %327 = vmatpush.bf16.msra.mxu0 0
        %328 = vmatpush.bf16.msra.mxu0 %v315
        %329 = vmatpush.bf16.msra.mxu0 %v314
        %330 = vmatmul.bf16.gmra.mxu0 %v320
        %v331 = vpop.f32.mrf.mxu0
        %v332 = vadd.f32 %v305, %v331
        %v333 = vpop.f32.mrf.mxu0
        %334 = vdwg.mxu0
        %v335 = vsel %vm318, %v297, 0.0
        %336 = vadd.xlane.f32.xlu0 %v335
        %v337 = vpop.xlane.xlu0 %336
        %v338 = vsel %vm318, %v298, 0.0
        %339 = vadd.xlane.f32.xlu0 %v338
        %v340 = vpop.xlane.xlu0 %339
        %v341 = vrcp.pop 32.0
        %v342 = vmul.f32 32.0, %v341
        %v343 = vsub.f32 1.0, %v342
        %v344 = vmul.f32 %v341, %v343
        %v345 = vadd.f32 %v341, %v344
        %vm346 = vweird.f32 %v341
        %v347 = vsel %vm346, %v341, %v345
        %v348 = vmul.f32 %v337, %v347
        %v349 = vmul.f32 %v340, %v347
        %v350 = vsub.f32 %v297, %v348
        %v351 = vsub.f32 %v298, %v349
        %v352 = vmul.f32 %v350, %v350
        %v353 = vmul.f32 %v351, %v351
        %v354 = vsel %vm318, %v352, 0.0
        %355 = vadd.xlane.f32.xlu0 %v354
        %v356 = vpop.xlane.xlu0 %355
        %v357 = vsel %vm318, %v353, 0.0
        %358 = vadd.xlane.f32.xlu0 %v357
        %v359 = vpop.xlane.xlu0 %358
        %v360 = vmul.f32 %v356, %v347
        %v361 = vmul.f32 %v359, %v347
        %v362 = vadd.f32 %v360, 1e-06
        %v363 = vadd.f32 %v361, 1e-06
        %v364 = vrsqrt.pop %v362
        %v365 = vmul.f32 %v364, %v362
        %v366 = vmul.f32 %v365, %v364
        %v367 = vmul.f32 0.5, %v366
        %v368 = vsub.f32 1.5, %v367
        %v369 = vmul.f32 %v364, %v368
        %vm370 = vweird.f32 %v362
        %vm371 = vweird.f32 %v364
        %vm372 = vmor %vm370, %vm371
        %v373 = vsel %vm372, %v364, %v369
        %v374 = vrsqrt.pop %v363
        %v375 = vmul.f32 %v374, %v363
        %v376 = vmul.f32 %v375, %v374
        %v377 = vmul.f32 0.5, %v376
        %v378 = vsub.f32 1.5, %v377
        %v379 = vmul.f32 %v374, %v378
        %vm380 = vweird.f32 %v363
        %vm381 = vweird.f32 %v374
        %vm382 = vmor %vm380, %vm381
        %v383 = vsel %vm382, %v374, %v379
        %v384 = vmul.f32 %v350, %v373
        %v385 = vmul.f32 %v351, %v383
        %v386 = vadd.f32 %v332, 1.0
        %v387 = vperm.slane %v386, 0
        %v388 = vmul.f32 %v384, %v387
        %v389 = vmul.f32 %v385, %v387
        %v390 = vperm.slane %v332, 0
        %392 = vrot.lane.b32.xlu0 %v390, 96
        %v393 = vpop.permute.xlu0 %392
        %v395 = vadd.f32 %v388, %v393
        %v396 = vadd.f32 %v389, %v393
        %v397 = vpack.c.bf16 %v396, %v395
        %v398 = vld [vmem:[%s4] sm:$0xf]
        %v399 = vld [vmem:[%s4 + $0x4] sm:$0xf]
        %v400 = vld [vmem:[%s4 + $0x8] sm:$0xf]
        %v401 = vld [vmem:[%s4 + $0xc] sm:$0xf]
        %v402 = vld [vmem:[#allocation4] sm:$0x1]
        %v404 = vperm.slane %v402, 0
        %v410 = vunpack.c.l.b16 %v398
        %v411 = vunpack.c.l.b16 %v399
        %v412 = vunpack.c.l.b16 %v400
        %v413 = vunpack.c.l.b16 %v401
        %v414 = vpack.c.b16 %v411, %v410
        %v415 = vpack.c.b16 %v413, %v412
        %v419 = vsel %vm318, %v397, 0
        %421 = vmatpush.bf16.msra.mxu0 0
        %422 = vmatpush.bf16.msra.mxu0 0
        %423 = vmatpush.bf16.msra.mxu0 0
        %424 = vmatpush.bf16.msra.mxu0 0
        %425 = vmatpush.bf16.msra.mxu0 0
        %426 = vmatpush.bf16.msra.mxu0 0
        %427 = vmatpush.bf16.msra.mxu0 %v415
        %428 = vmatpush.bf16.msra.mxu0 %v414
        %429 = vmatmul.bf16.gmra.mxu0 %v419
        %v430 = vpop.f32.mrf.mxu0
        %v431 = vadd.f32 %v404, %v430
        %v432 = vpop.f32.mrf.mxu0
        %v433 = vadd.f32 %v404, %v432
        %434 = vdwg.mxu0
        %435 = vst [vmem:[%s295] sm:$0xff] %v431
        %436 = vst [vmem:[%s295 + $0x8] sm:$0xff] %v433
        %p437 = scmp.lt.s32.totalorder %s19, 1
        %s438 = scalar_select %p437, %s19, 1
        %s439 = smul.addr %s438, 2
        %s440 = smul.addr %s439, 8
        %s441 = scalar_lea.vmem %s6, %s440
        // Predicated region
        $region53: #{switti_forward.9} parent=43 // pred_check
          %p442 = pneg %p173
        $region54: #{switti_forward.9} parent=43 // pred_check_branch
          %444 = sbr.rel (%p442) target = $region56
        $region55: #{switti_forward.9} parent=43 // pred_region
          _
        $region56: #{switti_forward.9} parent=43 // pred_fallthru
          _
      $region44: #{switti_forward.9} parent=5 // pred_fallthru
        _
      %p445 = scmp.le.s32.totalorder 2, %s14
      // Predicated region
      $region57: #{switti_forward.9} parent=5 // pred_check
        %p446 = pneg %p445
      $region58: #{switti_forward.9} parent=5 // pred_check_branch
        %448 = sbr.rel (%p446) target = $region60
      $region59: #{switti_forward.9} parent=5 // pred_region
        %s449 = ssub.s32 %s14, 2
        // Predicated region
        $region61: #{switti_forward.9} parent=59 // pred_check
          %p450 = pneg %p179
        $region62: #{switti_forward.9} parent=59 // pred_check_branch
          %452 = sbr.rel (%p450) target = $region64
        $region63: #{switti_forward.9} parent=59 // pred_region
          %p453 = scmp.lt.s32.totalorder %s20, 1
          %s454 = scalar_select %p453, %s20, 1
          %s455 = smul.addr %s454, 2
          %s456 = smul.addr %s455, 8
          %s457 = scalar_lea.vmem %s6, %s456
        $region64: #{switti_forward.9} parent=59 // pred_fallthru
          _
      $region60: #{switti_forward.9} parent=5 // pred_fallthru
        _
    $region6: #{switti_forward.9} parent=1 // loop_footer
      %s18 = sadd.s32 1, %s14
    $region7: #{switti_forward.9} parent=1 // loop_footer_branch
      %13 = sbr.rel target = $region3
    $region8: #{switti_forward.9} parent=1 // loop_exit
      _
    %458 = vsyncpa [#allocation3], 1
    %s459 = scalar_lea.sflag [#allocation3], 1
    %460 = vsyncpa %s459, 1
    %461 = vsyncpa [#allocation5], 1

// kernel: switti_forward.8
$region0: #{switti_forward.8}
  #allocation0 [shape = 'u32[]', space=smem, size = 0x4, offset = 0x4, fixed_abs, tag = 'smem constant byte address 0x4 - core index']
  #allocation1 [shape = 'u32[72,128]{1,0:T(1,128)}', space=vmem, size = 0x9000, scoped, tag = 'internal scratch']
  %s0 = inlined_call_operand.vmem [shape: f32[2,16,32], index: 0, kind: input, shape index: {}]
  %s1 = inlined_call_operand.vmem [shape: f32[2,1,32], index: 1, kind: input, shape index: {}]
  %s2 = inlined_call_operand.vmem [shape: f32[2,1,32], index: 2, kind: input, shape index: {}]
  %s3 = inlined_call_operand.vmem [shape: f32[2,16,64], index: 3, kind: input, shape index: {}]
  %s4 = inlined_call_operand.vmem [shape: f32[2,1,8], index: 4, kind: input, shape index: {}]
  %s5 = inlined_call_operand.vmem [shape: f32[16,16], index: 5, kind: input, shape index: {}]
  %s6 = inlined_call_operand.vmem [shape: f32[16,32], index: 6, kind: input, shape index: {}]
  %s7 = inlined_call_operand.vmem [shape: f32[16,32], index: 7, kind: input, shape index: {}]
  %s8 = inlined_call_operand.vmem [shape: f32[32,32], index: 8, kind: input, shape index: {}]
  %s9 = inlined_call_operand.vmem [shape: f32[32,32], index: 9, kind: input, shape index: {}]
  %s10 = inlined_call_operand.hbm [shape: f32[1,32], index: 10, kind: input, shape index: {}]
  %s11 = inlined_call_operand.hbm [shape: f32[1,32], index: 11, kind: input, shape index: {}]
  %s12 = inlined_call_operand.vmem [shape: bf16[32,192], index: 12, kind: input, shape index: {}]
  %s13 = inlined_call_operand.vmem [shape: f32[1,192], index: 13, kind: input, shape index: {}]
  %s14 = inlined_call_operand.vmem [shape: f32[1,192], index: 14, kind: input, shape index: {}]
  %s15 = inlined_call_operand.vmem [shape: bf16[32,96], index: 15, kind: input, shape index: {}]
  %s16 = inlined_call_operand.hbm [shape: f32[1,96], index: 16, kind: input, shape index: {}]
  %s17 = inlined_call_operand.vmem [shape: bf16[32,32], index: 17, kind: input, shape index: {}]
  %s18 = inlined_call_operand.hbm [shape: f32[1,32], index: 18, kind: input, shape index: {}]
  %s19 = inlined_call_operand.vmem [shape: bf16[32,32], index: 19, kind: input, shape index: {}]
  %s20 = inlined_call_operand.hbm [shape: f32[1,32], index: 20, kind: input, shape index: {}]
  %s21 = inlined_call_operand.vmem [shape: bf16[32,32], index: 21, kind: input, shape index: {}]
  %s22 = inlined_call_operand.hbm [shape: f32[1,32], index: 22, kind: input, shape index: {}]
  %s23 = inlined_call_operand.vmem [shape: bf16[32,256], index: 23, kind: input, shape index: {}]
  %s24 = inlined_call_operand.vmem [shape: f32[1,256], index: 24, kind: input, shape index: {}]
  %s25 = inlined_call_operand.vmem [shape: bf16[128,32], index: 25, kind: input, shape index: {}]
  %s26 = inlined_call_operand.hbm [shape: f32[1,32], index: 26, kind: input, shape index: {}]
  %s27 = inlined_call_operand.vmem [shape: f32[2,16,32], index: 27, kind: output, shape index: {}]
  %s28 = sld [smem:[#allocation0]]
  $region169: #{switti_forward.8} parent=0
    _
  %s30 = ssub.s32 1, %s28
  %s31 = scalar_select 0, %s30, %s28
  $region1: #{switti_forward.8} parent=0
    #allocation2 [shape = 'u8[512]{0}', space=vmem, size = 0x400, scoped, tag = 'input window, operand 10, single buffered']
    #allocation3 [shape = 's32[2]{0}', space=sflag, size = 0x8, scoped, tag = 'scoped memory for switti_forward.8']
    #allocation4 [shape = 'u8[512]{0}', space=vmem, size = 0x400, scoped, tag = 'input window, operand 11, single buffered']
    #allocation5 [shape = 's32[1]{0}', space=sflag, size = 0x4, scoped, tag = 'scoped memory for switti_forward.8']
    #allocation6 [shape = 'u8[512]{0}', space=vmem, size = 0x400, scoped, tag = 'input window, operand 16, single buffered']
    #allocation7 [shape = 'u8[512]{0}', space=vmem, size = 0x400, scoped, tag = 'input window, operand 18, single buffered']
    #allocation8 [shape = 's32[1]{0}', space=sflag, size = 0x4, scoped, tag = 'scoped memory for switti_forward.8']
    #allocation9 [shape = 'u8[512]{0}', space=vmem, size = 0x400, scoped, tag = 'input window, operand 20, single buffered']
    #allocation10 [shape = 'u8[512]{0}', space=vmem, size = 0x400, scoped, tag = 'input window, operand 22, single buffered']
    #allocation11 [shape = 's32[1]{0}', space=sflag, size = 0x4, scoped, tag = 'scoped memory for switti_forward.8']
    #allocation12 [shape = 'u8[512]{0}', space=vmem, size = 0x400, scoped, tag = 'input window, operand 26, single buffered']
    %32 = vsyncpa [#allocation3], 0
    %33 = vsyncpa [#allocation5], 0
    %34 = vsyncpa [#allocation8], 0
    %35 = vsyncpa [#allocation11], 0
    loop: start=0, step=1, limit=4
    $region2: #{switti_forward.8} parent=1 // loop_pre_header
      _
    $region3: #{switti_forward.8} parent=1 // loop_header
      %s37 = sphi 0, %s41
      %p38 = scmp.ge.s32.totalorder %s37, 4
      %s47 = sphi 0, %s49
      %s50 = sphi 0, %s47
      %s51 = sphi 0, %s50
      %s67 = sphi 0, %s51
      %s73 = sphi 0, %s75
      %s76 = sphi 0, %s73
      %s77 = sphi 0, %s76
      %s93 = sphi 0, %s77
      %s99 = sphi 0, %s101
      %s102 = sphi 0, %s99
      %s103 = sphi 0, %s102
      %s119 = sphi 0, %s103
      %s125 = sphi 0, %s127
      %s128 = sphi 0, %s125
      %s129 = sphi 0, %s128
      %s145 = sphi 0, %s129
      %s151 = sphi 0, %s153
      %s154 = sphi 0, %s151
      %s155 = sphi 0, %s154
      %s171 = sphi 0, %s155
      %s175 = sphi 0, %s175
      %s177 = sphi 0, %s175
      %s178 = sphi 0, %s177
      %s192 = sphi 0, %s178
      %s196 = sphi 0, %s196
      %s198 = sphi 0, %s196
      %s199 = sphi 0, %s198
      %s213 = sphi 0, %s199
      %s217 = sphi 0, %s217
      %s219 = sphi 0, %s217
      %s220 = sphi 0, %s219
      %s234 = sphi 0, %s220
      %s238 = sphi 0, %s238
      %s240 = sphi 0, %s238
      %s241 = sphi 0, %s240
      %s255 = sphi 0, %s241
      %s259 = sphi 0, %s259
      %s261 = sphi 0, %s259
      %s262 = sphi 0, %s261
      %s276 = sphi 0, %s262
      %s280 = sphi 0, %s280
      %s282 = sphi 0, %s280
      %s283 = sphi 0, %s282
      %s297 = sphi 0, %s283
      %s301 = sphi 0, %s301
      %s303 = sphi 0, %s301
      %s304 = sphi 0, %s303
      %s318 = sphi 0, %s304
      %s322 = sphi 0, %s322
      %s324 = sphi 0, %s322
      %s325 = sphi 0, %s324
      %s339 = sphi 0, %s325
      %s343 = sphi 0, %s343
      %s345 = sphi 0, %s343
      %s346 = sphi 0, %s345
      %s360 = sphi 0, %s346
      %s364 = sphi 0, %s364
      %s366 = sphi 0, %s364
      %s367 = sphi 0, %s366
      %s381 = sphi 0, %s367
      %s385 = sphi 0, %s385
      %s387 = sphi 0, %s385
      %s388 = sphi 0, %s387
      %s402 = sphi 0, %s388
      %s406 = sphi 0, %s406
      %s408 = sphi 0, %s406
      %s409 = sphi 0, %s408
      %s423 = sphi 0, %s409
      %s427 = sphi 0, %s427
      %s429 = sphi 0, %s427
      %s430 = sphi 0, %s429
      %s444 = sphi 0, %s430
      %s448 = sphi 0, %s448
      %s450 = sphi 0, %s448
      %s451 = sphi 0, %s450
      %s465 = sphi 0, %s451
      %s469 = sphi 0, %s469
      %s471 = sphi 0, %s469
      %s472 = sphi 0, %s471
      %s486 = sphi 0, %s472
      %s490 = sphi 0, %s490
      %s492 = sphi 0, %s490
      %s493 = sphi 0, %s492
      %s507 = sphi 0, %s493
      %s511 = sphi 0, %s511
      %s513 = sphi 0, %s511
      %s514 = sphi 0, %s513
      %s528 = sphi 0, %s514
      %s532 = sphi 0, %s532
      %s534 = sphi 0, %s532
      %s535 = sphi 0, %s534
      %s549 = sphi 0, %s535
      %s553 = sphi 0, %s553
      %s555 = sphi 0, %s553
      %s556 = sphi 0, %s555
      %s570 = sphi 0, %s556
      %s574 = sphi 0, %s574
      %s576 = sphi 0, %s574
      %s577 = sphi 0, %s576
      %s591 = sphi 0, %s577
      %s595 = sphi 0, %s595
      %s597 = sphi 0, %s595
      %s598 = sphi 0, %s597
      %s612 = sphi 0, %s598
      %s616 = sphi 0, %s616
      %s618 = sphi 0, %s616
      %s619 = sphi 0, %s618
      %s633 = sphi 0, %s619
      %s639 = sphi 0, %s641
      %s642 = sphi 0, %s639
      %s643 = sphi 0, %s642
      %s659 = sphi 0, %s643
    $region4: #{switti_forward.8} parent=1 // loop_header_branch
      %40 = sbr.rel (%p38) target = $region8
    $region5: #{switti_forward.8} parent=1 // loop_body
      %s42 = ssub.s32 %s37, 1
      %s43 = ssub.s32 %s37, 2
      %s44 = sadd.s32 %s37, 1
      %s45 = ssub.s32 %s37, %s44
      %p46 = scmp.eq.s32.totalorder %s45, 0
      %s48 = sadd.s32 %s47, 1
      %s49 = scalar_select %p46, %s47, %s48
      %p52 = pneg %p46
      %p53 = scmp.eq.s32.totalorder %s37, 1
      %p54 = por %p52, %p53
      %p55 = scmp.ne.s32.totalorder %s47, %s50
      %p56 = scmp.eq.s32.totalorder %s37, 0
      %p57 = por %p55, %p56
      %p58 = scmp.ne.s32.totalorder %s47, %s50
      %p59 = scmp.eq.s32.totalorder %s42, 1
      %p60 = por %p58, %p59
      %p61 = scmp.ne.s32.totalorder %s50, %s51
      %p62 = scmp.eq.s32.totalorder %s42, 0
      %p63 = por %p61, %p62
      %p64 = scmp.ne.s32.totalorder %s50, %s51
      %p65 = scmp.eq.s32.totalorder %s43, 1
      %p66 = por %p64, %p65
      %p68 = scmp.ne.s32.totalorder %s51, %s67
      %p69 = scmp.eq.s32.totalorder %s43, 0
      %p70 = por %p68, %p69
      %s71 = ssub.s32 %s37, %s44
      %p72 = scmp.eq.s32.totalorder %s71, 0
      %s74 = sadd.s32 %s73, 1
      %s75 = scalar_select %p72, %s73, %s74
      %p78 = pneg %p72
      %p79 = scmp.eq.s32.totalorder %s37, 1
      %p80 = por %p78, %p79
      %p81 = scmp.ne.s32.totalorder %s73, %s76
      %p82 = scmp.eq.s32.totalorder %s37, 0
      %p83 = por %p81, %p82
      %p84 = scmp.ne.s32.totalorder %s73, %s76
      %p85 = scmp.eq.s32.totalorder %s42, 1
      %p86 = por %p84, %p85
      %p87 = scmp.ne.s32.totalorder %s76, %s77
      %p88 = scmp.eq.s32.totalorder %s42, 0
      %p89 = por %p87, %p88
      %p90 = scmp.ne.s32.totalorder %s76, %s77
      %p91 = scmp.eq.s32.totalorder %s43, 1
      %p92 = por %p90, %p91
      %p94 = scmp.ne.s32.totalorder %s77, %s93
      %p95 = scmp.eq.s32.totalorder %s43, 0
      %p96 = por %p94, %p95
      %s97 = ssub.s32 %s37, %s44
      %p98 = scmp.eq.s32.totalorder %s97, 0
      %s100 = sadd.s32 %s99, 1
      %s101 = scalar_select %p98, %s99, %s100
      %p104 = pneg %p98
      %p105 = scmp.eq.s32.totalorder %s37, 1
      %p106 = por %p104, %p105
      %p107 = scmp.ne.s32.totalorder %s99, %s102
      %p108 = scmp.eq.s32.totalorder %s37, 0
      %p109 = por %p107, %p108
      %p110 = scmp.ne.s32.totalorder %s99, %s102
      %p111 = scmp.eq.s32.totalorder %s42, 1
      %p112 = por %p110, %p111
      %p113 = scmp.ne.s32.totalorder %s102, %s103
      %p114 = scmp.eq.s32.totalorder %s42, 0
      %p115 = por %p113, %p114
      %p116 = scmp.ne.s32.totalorder %s102, %s103
      %p117 = scmp.eq.s32.totalorder %s43, 1
      %p118 = por %p116, %p117
      %p120 = scmp.ne.s32.totalorder %s103, %s119
      %p121 = scmp.eq.s32.totalorder %s43, 0
      %p122 = por %p120, %p121
      %s123 = ssub.s32 %s37, %s44
      %p124 = scmp.eq.s32.totalorder %s123, 0
      %s126 = sadd.s32 %s125, 1
      %s127 = scalar_select %p124, %s125, %s126
      %p130 = pneg %p124
      %p131 = scmp.eq.s32.totalorder %s37, 1
      %p132 = por %p130, %p131
      %p133 = scmp.ne.s32.totalorder %s125, %s128
      %p134 = scmp.eq.s32.totalorder %s37, 0
      %p135 = por %p133, %p134
      %p136 = scmp.ne.s32.totalorder %s125, %s128
      %p137 = scmp.eq.s32.totalorder %s42, 1
      %p138 = por %p136, %p137
      %p139 = scmp.ne.s32.totalorder %s128, %s129
      %p140 = scmp.eq.s32.totalorder %s42, 0
      %p141 = por %p139, %p140
      %p142 = scmp.ne.s32.totalorder %s128, %s129
      %p143 = scmp.eq.s32.totalorder %s43, 1
      %p144 = por %p142, %p143
      %p146 = scmp.ne.s32.totalorder %s129, %s145
      %p147 = scmp.eq.s32.totalorder %s43, 0
      %p148 = por %p146, %p147
      %s149 = ssub.s32 %s37, %s44
      %p150 = scmp.eq.s32.totalorder %s149, 0
      %s152 = sadd.s32 %s151, 1
      %s153 = scalar_select %p150, %s151, %s152
      %p156 = pneg %p150
      %p157 = scmp.eq.s32.totalorder %s37, 1
      %p158 = por %p156, %p157
      %p159 = scmp.ne.s32.totalorder %s151, %s154
      %p160 = scmp.eq.s32.totalorder %s37, 0
      %p161 = por %p159, %p160
      %p162 = scmp.ne.s32.totalorder %s151, %s154
      %p163 = scmp.eq.s32.totalorder %s42, 1
      %p164 = por %p162, %p163
      %p165 = scmp.ne.s32.totalorder %s154, %s155
      %p166 = scmp.eq.s32.totalorder %s42, 0
      %p167 = por %p165, %p166
      %p168 = scmp.ne.s32.totalorder %s154, %s155
      %p169 = scmp.eq.s32.totalorder %s43, 1
      %p170 = por %p168, %p169
      %p172 = scmp.ne.s32.totalorder %s155, %s171
      %p173 = scmp.eq.s32.totalorder %s43, 0
      %p174 = por %p172, %p173
      %s176 = sadd.s32 %s175, 1
      %p179 = scmp.eq.s32.totalorder %s37, 1
      %p180 = scmp.ne.s32.totalorder %s175, %s177
      %p181 = scmp.eq.s32.totalorder %s37, 0
      %p182 = por %p180, %p181
      %p183 = scmp.ne.s32.totalorder %s175, %s177
      %p184 = scmp.eq.s32.totalorder %s42, 1
      %p185 = por %p183, %p184
      %p186 = scmp.ne.s32.totalorder %s177, %s178
      %p187 = scmp.eq.s32.totalorder %s42, 0
      %p188 = por %p186, %p187
      %p189 = scmp.ne.s32.totalorder %s177, %s178
      %p190 = scmp.eq.s32.totalorder %s43, 1
      %p191 = por %p189, %p190
      %p193 = scmp.ne.s32.totalorder %s178, %s192
      %p194 = scmp.eq.s32.totalorder %s43, 0
      %p195 = por %p193, %p194
      %s197 = sadd.s32 %s196, 1
      %p200 = scmp.eq.s32.totalorder %s37, 1
      %p201 = scmp.ne.s32.totalorder %s196, %s198
      %p202 = scmp.eq.s32.totalorder %s37, 0
      %p203 = por %p201, %p202
      %p204 = scmp.ne.s32.totalorder %s196, %s198
      %p205 = scmp.eq.s32.totalorder %s42, 1
      %p206 = por %p204, %p205
      %p207 = scmp.ne.s32.totalorder %s198, %s199
      %p208 = scmp.eq.s32.totalorder %s42, 0
      %p209 = por %p207, %p208
      %p210 = scmp.ne.s32.totalorder %s198, %s199
      %p211 = scmp.eq.s32.totalorder %s43, 1
      %p212 = por %p210, %p211
      %p214 = scmp.ne.s32.totalorder %s199, %s213
      %p215 = scmp.eq.s32.totalorder %s43, 0
      %p216 = por %p214, %p215
      %s218 = sadd.s32 %s217, 1
      %p221 = scmp.eq.s32.totalorder %s37, 1
      %p222 = scmp.ne.s32.totalorder %s217, %s219
      %p223 = scmp.eq.s32.totalorder %s37, 0
      %p224 = por %p222, %p223
      %p225 = scmp.ne.s32.totalorder %s217, %s219
      %p226 = scmp.eq.s32.totalorder %s42, 1
      %p227 = por %p225, %p226
      %p228 = scmp.ne.s32.totalorder %s219, %s220
      %p229 = scmp.eq.s32.totalorder %s42, 0
      %p230 = por %p228, %p229
      %p231 = scmp.ne.s32.totalorder %s219, %s220
      %p232 = scmp.eq.s32.totalorder %s43, 1
      %p233 = por %p231, %p232
      %p235 = scmp.ne.s32.totalorder %s220, %s234
      %p236 = scmp.eq.s32.totalorder %s43, 0
      %p237 = por %p235, %p236
      %s239 = sadd.s32 %s238, 1
      %p242 = scmp.eq.s32.totalorder %s37, 1
      %p243 = scmp.ne.s32.totalorder %s238, %s240
      %p244 = scmp.eq.s32.totalorder %s37, 0
      %p245 = por %p243, %p244
      %p246 = scmp.ne.s32.totalorder %s238, %s240
      %p247 = scmp.eq.s32.totalorder %s42, 1
      %p248 = por %p246, %p247
      %p249 = scmp.ne.s32.totalorder %s240, %s241
      %p250 = scmp.eq.s32.totalorder %s42, 0
      %p251 = por %p249, %p250
      %p252 = scmp.ne.s32.totalorder %s240, %s241
      %p253 = scmp.eq.s32.totalorder %s43, 1
      %p254 = por %p252, %p253
      %p256 = scmp.ne.s32.totalorder %s241, %s255
      %p257 = scmp.eq.s32.totalorder %s43, 0
      %p258 = por %p256, %p257
      %s260 = sadd.s32 %s259, 1
      %p263 = scmp.eq.s32.totalorder %s37, 1
      %p264 = scmp.ne.s32.totalorder %s259, %s261
      %p265 = scmp.eq.s32.totalorder %s37, 0
      %p266 = por %p264, %p265
      %p267 = scmp.ne.s32.totalorder %s259, %s261
      %p268 = scmp.eq.s32.totalorder %s42, 1
      %p269 = por %p267, %p268
      %p270 = scmp.ne.s32.totalorder %s261, %s262
      %p271 = scmp.eq.s32.totalorder %s42, 0
      %p272 = por %p270, %p271
      %p273 = scmp.ne.s32.totalorder %s261, %s262
      %p274 = scmp.eq.s32.totalorder %s43, 1
      %p275 = por %p273, %p274
      %p277 = scmp.ne.s32.totalorder %s262, %s276
      %p278 = scmp.eq.s32.totalorder %s43, 0
      %p279 = por %p277, %p278
      %s281 = sadd.s32 %s280, 1
      %p284 = scmp.eq.s32.totalorder %s37, 1
      %p285 = scmp.ne.s32.totalorder %s280, %s282
      %p286 = scmp.eq.s32.totalorder %s37, 0
      %p287 = por %p285, %p286
      %p288 = scmp.ne.s32.totalorder %s280, %s282
      %p289 = scmp.eq.s32.totalorder %s42, 1
      %p290 = por %p288, %p289
      %p291 = scmp.ne.s32.totalorder %s282, %s283
      %p292 = scmp.eq.s32.totalorder %s42, 0
      %p293 = por %p291, %p292
      %p294 = scmp.ne.s32.totalorder %s282, %s283
      %p295 = scmp.eq.s32.totalorder %s43, 1
      %p296 = por %p294, %p295
      %p298 = scmp.ne.s32.totalorder %s283, %s297
      %p299 = scmp.eq.s32.totalorder %s43, 0
      %p300 = por %p298, %p299
      %s302 = sadd.s32 %s301, 1
      %p305 = scmp.eq.s32.totalorder %s37, 1
      %p306 = scmp.ne.s32.totalorder %s301, %s303
      %p307 = scmp.eq.s32.totalorder %s37, 0
      %p308 = por %p306, %p307
      %p309 = scmp.ne.s32.totalorder %s301, %s303
      %p310 = scmp.eq.s32.totalorder %s42, 1
      %p311 = por %p309, %p310
      %p312 = scmp.ne.s32.totalorder %s303, %s304
      %p313 = scmp.eq.s32.totalorder %s42, 0
      %p314 = por %p312, %p313
      %p315 = scmp.ne.s32.totalorder %s303, %s304
      %p316 = scmp.eq.s32.totalorder %s43, 1
      %p317 = por %p315, %p316
      %p319 = scmp.ne.s32.totalorder %s304, %s318
      %p320 = scmp.eq.s32.totalorder %s43, 0
      %p321 = por %p319, %p320
      %s323 = sadd.s32 %s322, 1
      %p326 = scmp.eq.s32.totalorder %s37, 1
      %p327 = scmp.ne.s32.totalorder %s322, %s324
      %p328 = scmp.eq.s32.totalorder %s37, 0
      %p329 = por %p327, %p328
      %p330 = scmp.ne.s32.totalorder %s322, %s324
      %p331 = scmp.eq.s32.totalorder %s42, 1
      %p332 = por %p330, %p331
      %p333 = scmp.ne.s32.totalorder %s324, %s325
      %p334 = scmp.eq.s32.totalorder %s42, 0
      %p335 = por %p333, %p334
      %p336 = scmp.ne.s32.totalorder %s324, %s325
      %p337 = scmp.eq.s32.totalorder %s43, 1
      %p338 = por %p336, %p337
      %p340 = scmp.ne.s32.totalorder %s325, %s339
      %p341 = scmp.eq.s32.totalorder %s43, 0
      %p342 = por %p340, %p341
      %s344 = sadd.s32 %s343, 1
      %p347 = scmp.eq.s32.totalorder %s37, 1
      %p348 = scmp.ne.s32.totalorder %s343, %s345
      %p349 = scmp.eq.s32.totalorder %s37, 0
      %p350 = por %p348, %p349
      %p351 = scmp.ne.s32.totalorder %s343, %s345
      %p352 = scmp.eq.s32.totalorder %s42, 1
      %p353 = por %p351, %p352
      %p354 = scmp.ne.s32.totalorder %s345, %s346
      %p355 = scmp.eq.s32.totalorder %s42, 0
      %p356 = por %p354, %p355
      %p357 = scmp.ne.s32.totalorder %s345, %s346
      %p358 = scmp.eq.s32.totalorder %s43, 1
      %p359 = por %p357, %p358
      %p361 = scmp.ne.s32.totalorder %s346, %s360
      %p362 = scmp.eq.s32.totalorder %s43, 0
      %p363 = por %p361, %p362
      %s365 = sadd.s32 %s364, 1
      %p368 = scmp.eq.s32.totalorder %s37, 1
      %p369 = scmp.ne.s32.totalorder %s364, %s366
      %p370 = scmp.eq.s32.totalorder %s37, 0
      %p371 = por %p369, %p370
      %p372 = scmp.ne.s32.totalorder %s364, %s366
      %p373 = scmp.eq.s32.totalorder %s42, 1
      %p374 = por %p372, %p373
      %p375 = scmp.ne.s32.totalorder %s366, %s367
      %p376 = scmp.eq.s32.totalorder %s42, 0
      %p377 = por %p375, %p376
      %p378 = scmp.ne.s32.totalorder %s366, %s367
      %p379 = scmp.eq.s32.totalorder %s43, 1
      %p380 = por %p378, %p379
      %p382 = scmp.ne.s32.totalorder %s367, %s381
      %p383 = scmp.eq.s32.totalorder %s43, 0
      %p384 = por %p382, %p383
      %s386 = sadd.s32 %s385, 1
      %p389 = scmp.eq.s32.totalorder %s37, 1
      %p390 = scmp.ne.s32.totalorder %s385, %s387
      %p391 = scmp.eq.s32.totalorder %s37, 0
      %p392 = por %p390, %p391
      %p393 = scmp.ne.s32.totalorder %s385, %s387
      %p394 = scmp.eq.s32.totalorder %s42, 1
      %p395 = por %p393, %p394
      %p396 = scmp.ne.s32.totalorder %s387, %s388
      %p397 = scmp.eq.s32.totalorder %s42, 0
      %p398 = por %p396, %p397
      %p399 = scmp.ne.s32.totalorder %s387, %s388
      %p400 = scmp.eq.s32.totalorder %s43, 1
      %p401 = por %p399, %p400
      %p403 = scmp.ne.s32.totalorder %s388, %s402
      %p404 = scmp.eq.s32.totalorder %s43, 0
      %p405 = por %p403, %p404
      %s407 = sadd.s32 %s406, 1
      %p410 = scmp.eq.s32.totalorder %s37, 1
      %p411 = scmp.ne.s32.totalorder %s406, %s408
      %p412 = scmp.eq.s32.totalorder %s37, 0
      %p413 = por %p411, %p412
      %p414 = scmp.ne.s32.totalorder %s406, %s408
      %p415 = scmp.eq.s32.totalorder %s42, 1
      %p416 = por %p414, %p415
      %p417 = scmp.ne.s32.totalorder %s408, %s409
      %p418 = scmp.eq.s32.totalorder %s42, 0
      %p419 = por %p417, %p418
      %p420 = scmp.ne.s32.totalorder %s408, %s409
      %p421 = scmp.eq.s32.totalorder %s43, 1
      %p422 = por %p420, %p421
      %p424 = scmp.ne.s32.totalorder %s409, %s423
      %p425 = scmp.eq.s32.totalorder %s43, 0
      %p426 = por %p424, %p425
      %s428 = sadd.s32 %s427, 1
      %p431 = scmp.eq.s32.totalorder %s37, 1
      %p432 = scmp.ne.s32.totalorder %s427, %s429
      %p433 = scmp.eq.s32.totalorder %s37, 0
      %p434 = por %p432, %p433
      %p435 = scmp.ne.s32.totalorder %s427, %s429
      %p436 = scmp.eq.s32.totalorder %s42, 1
      %p437 = por %p435, %p436
      %p438 = scmp.ne.s32.totalorder %s429, %s430
      %p439 = scmp.eq.s32.totalorder %s42, 0
      %p440 = por %p438, %p439
      %p441 = scmp.ne.s32.totalorder %s429, %s430
      %p442 = scmp.eq.s32.totalorder %s43, 1
      %p443 = por %p441, %p442
      %p445 = scmp.ne.s32.totalorder %s430, %s444
      %p446 = scmp.eq.s32.totalorder %s43, 0
      %p447 = por %p445, %p446
      %s449 = sadd.s32 %s448, 1
      %p452 = scmp.eq.s32.totalorder %s37, 1
      %p453 = scmp.ne.s32.totalorder %s448, %s450
      %p454 = scmp.eq.s32.totalorder %s37, 0
      %p455 = por %p453, %p454
      %p456 = scmp.ne.s32.totalorder %s448, %s450
      %p457 = scmp.eq.s32.totalorder %s42, 1
      %p458 = por %p456, %p457
      %p459 = scmp.ne.s32.totalorder %s450, %s451
      %p460 = scmp.eq.s32.totalorder %s42, 0
      %p461 = por %p459, %p460
      %p462 = scmp.ne.s32.totalorder %s450, %s451
      %p463 = scmp.eq.s32.totalorder %s43, 1
      %p464 = por %p462, %p463
      %p466 = scmp.ne.s32.totalorder %s451, %s465
      %p467 = scmp.eq.s32.totalorder %s43, 0
      %p468 = por %p466, %p467
      %s470 = sadd.s32 %s469, 1
      %p473 = scmp.eq.s32.totalorder %s37, 1
      %p474 = scmp.ne.s32.totalorder %s469, %s471
      %p475 = scmp.eq.s32.totalorder %s37, 0
      %p476 = por %p474, %p475
      %p477 = scmp.ne.s32.totalorder %s469, %s471
      %p478 = scmp.eq.s32.totalorder %s42, 1
      %p479 = por %p477, %p478
      %p480 = scmp.ne.s32.totalorder %s471, %s472
      %p481 = scmp.eq.s32.totalorder %s42, 0
      %p482 = por %p480, %p481
      %p483 = scmp.ne.s32.totalorder %s471, %s472
      %p484 = scmp.eq.s32.totalorder %s43, 1
      %p485 = por %p483, %p484
      %p487 = scmp.ne.s32.totalorder %s472, %s486
      %p488 = scmp.eq.s32.totalorder %s43, 0
      %p489 = por %p487, %p488
      %s491 = sadd.s32 %s490, 1
      %p494 = scmp.eq.s32.totalorder %s37, 1
      %p495 = scmp.ne.s32.totalorder %s490, %s492
      %p496 = scmp.eq.s32.totalorder %s37, 0
      %p497 = por %p495, %p496
      %p498 = scmp.ne.s32.totalorder %s490, %s492
      %p499 = scmp.eq.s32.totalorder %s42, 1
      %p500 = por %p498, %p499
      %p501 = scmp.ne.s32.totalorder %s492, %s493
      %p502 = scmp.eq.s32.totalorder %s42, 0
      %p503 = por %p501, %p502
      %p504 = scmp.ne.s32.totalorder %s492, %s493
      %p505 = scmp.eq.s32.totalorder %s43, 1
      %p506 = por %p504, %p505
      %p508 = scmp.ne.s32.totalorder %s493, %s507
      %p509 = scmp.eq.s32.totalorder %s43, 0
      %p510 = por %p508, %p509
      %s512 = sadd.s32 %s511, 1
      %p515 = scmp.eq.s32.totalorder %s37, 1
      %p516 = scmp.ne.s32.totalorder %s511, %s513
      %p517 = scmp.eq.s32.totalorder %s37, 0
      %p518 = por %p516, %p517
      %p519 = scmp.ne.s32.totalorder %s511, %s513
      %p520 = scmp.eq.s32.totalorder %s42, 1
      %p521 = por %p519, %p520
      %p522 = scmp.ne.s32.totalorder %s513, %s514
      %p523 = scmp.eq.s32.totalorder %s42, 0
      %p524 = por %p522, %p523
      %p525 = scmp.ne.s32.totalorder %s513, %s514
      %p526 = scmp.eq.s32.totalorder %s43, 1
      %p527 = por %p525, %p526
      %p529 = scmp.ne.s32.totalorder %s514, %s528
      %p530 = scmp.eq.s32.totalorder %s43, 0
      %p531 = por %p529, %p530
      %s533 = sadd.s32 %s532, 1
      %p536 = scmp.eq.s32.totalorder %s37, 1
      %p537 = scmp.ne.s32.totalorder %s532, %s534
      %p538 = scmp.eq.s32.totalorder %s37, 0
      %p539 = por %p537, %p538
      %p540 = scmp.ne.s32.totalorder %s532, %s534
      %p541 = scmp.eq.s32.totalorder %s42, 1
      %p542 = por %p540, %p541
      %p543 = scmp.ne.s32.totalorder %s534, %s535
      %p544 = scmp.eq.s32.totalorder %s42, 0
      %p545 = por %p543, %p544
      %p546 = scmp.ne.s32.totalorder %s534, %s535
      %p547 = scmp.eq.s32.totalorder %s43, 1
      %p548 = por %p546, %p547
      %p550 = scmp.ne.s32.totalorder %s535, %s549
      %p551 = scmp.eq.s32.totalorder %s43, 0
      %p552 = por %p550, %p551
      %s554 = sadd.s32 %s553, 1
      %p557 = scmp.eq.s32.totalorder %s37, 1
      %p558 = scmp.ne.s32.totalorder %s553, %s555
      %p559 = scmp.eq.s32.totalorder %s37, 0
      %p560 = por %p558, %p559
      %p561 = scmp.ne.s32.totalorder %s553, %s555
      %p562 = scmp.eq.s32.totalorder %s42, 1
      %p563 = por %p561, %p562
      %p564 = scmp.ne.s32.totalorder %s555, %s556
      %p565 = scmp.eq.s32.totalorder %s42, 0
      %p566 = por %p564, %p565
      %p567 = scmp.ne.s32.totalorder %s555, %s556
      %p568 = scmp.eq.s32.totalorder %s43, 1
      %p569 = por %p567, %p568
      %p571 = scmp.ne.s32.totalorder %s556, %s570
      %p572 = scmp.eq.s32.totalorder %s43, 0
      %p573 = por %p571, %p572
      %s575 = sadd.s32 %s574, 1
      %p578 = scmp.eq.s32.totalorder %s37, 1
      %p579 = scmp.ne.s32.totalorder %s574, %s576
      %p580 = scmp.eq.s32.totalorder %s37, 0
      %p581 = por %p579, %p580
      %p582 = scmp.ne.s32.totalorder %s574, %s576
      %p583 = scmp.eq.s32.totalorder %s42, 1
      %p584 = por %p582, %p583
      %p585 = scmp.ne.s32.totalorder %s576, %s577
      %p586 = scmp.eq.s32.totalorder %s42, 0
      %p587 = por %p585, %p586
      %p588 = scmp.ne.s32.totalorder %s576, %s577
      %p589 = scmp.eq.s32.totalorder %s43, 1
      %p590 = por %p588, %p589
      %p592 = scmp.ne.s32.totalorder %s577, %s591
      %p593 = scmp.eq.s32.totalorder %s43, 0
      %p594 = por %p592, %p593
      %s596 = sadd.s32 %s595, 1
      %p599 = scmp.eq.s32.totalorder %s37, 1
      %p600 = scmp.ne.s32.totalorder %s595, %s597
      %p601 = scmp.eq.s32.totalorder %s37, 0
      %p602 = por %p600, %p601
      %p603 = scmp.ne.s32.totalorder %s595, %s597
      %p604 = scmp.eq.s32.totalorder %s42, 1
      %p605 = por %p603, %p604
      %p606 = scmp.ne.s32.totalorder %s597, %s598
      %p607 = scmp.eq.s32.totalorder %s42, 0
      %p608 = por %p606, %p607
      %p609 = scmp.ne.s32.totalorder %s597, %s598
      %p610 = scmp.eq.s32.totalorder %s43, 1
      %p611 = por %p609, %p610
      %p613 = scmp.ne.s32.totalorder %s598, %s612
      %p614 = scmp.eq.s32.totalorder %s43, 0
      %p615 = por %p613, %p614
      %s617 = sadd.s32 %s616, 1
      %p620 = scmp.eq.s32.totalorder %s37, 1
      %p621 = scmp.ne.s32.totalorder %s616, %s618
      %p622 = scmp.eq.s32.totalorder %s37, 0
      %p623 = por %p621, %p622
      %p624 = scmp.ne.s32.totalorder %s616, %s618
      %p625 = scmp.eq.s32.totalorder %s42, 1
      %p626 = por %p624, %p625
      %p627 = scmp.ne.s32.totalorder %s618, %s619
      %p628 = scmp.eq.s32.totalorder %s42, 0
      %p629 = por %p627, %p628
      %p630 = scmp.ne.s32.totalorder %s618, %s619
      %p631 = scmp.eq.s32.totalorder %s43, 1
      %p632 = por %p630, %p631
      %p634 = scmp.ne.s32.totalorder %s619, %s633
      %p635 = scmp.eq.s32.totalorder %s43, 0
      %p636 = por %p634, %p635
      %s637 = ssub.s32 %s37, %s44
      %p638 = scmp.eq.s32.totalorder %s637, 0
      %s640 = sadd.s32 %s639, 1
      %s641 = scalar_select %p638, %s639, %s640
      %p644 = pneg %p638
      %p645 = scmp.eq.s32.totalorder %s37, 1
      %p646 = por %p644, %p645
      %p647 = scmp.ne.s32.totalorder %s639, %s642
      %p648 = scmp.eq.s32.totalorder %s37, 0
      %p649 = por %p647, %p648
      %p650 = scmp.ne.s32.totalorder %s639, %s642
      %p651 = scmp.eq.s32.totalorder %s42, 1
      %p652 = por %p650, %p651
      %p653 = scmp.ne.s32.totalorder %s642, %s643
      %p654 = scmp.eq.s32.totalorder %s42, 0
      %p655 = por %p653, %p654
      %p656 = scmp.ne.s32.totalorder %s642, %s643
      %p657 = scmp.eq.s32.totalorder %s43, 1
      %p658 = por %p656, %p657
      %p660 = scmp.ne.s32.totalorder %s643, %s659
      %p661 = scmp.eq.s32.totalorder %s43, 0
      %p662 = por %p660, %p661
      %p663 = scmp.le.s32.totalorder 1, %s37
      %p664 = scmp.lt.s32.totalorder %s37, 3
      %p665 = pnand %p663, %p664
      %p666 = pneg %p665
      // Predicated region
      $region9: #{switti_forward.8} parent=5 // pred_check
        _
      $region10: #{switti_forward.8} parent=5 // pred_check_branch
        %668 = sbr.rel (%p665) target = $region12
      $region11: #{switti_forward.8} parent=5 // pred_region
        %s669 = ssub.s32 %s37, 1
        // Predicated region
        $region13: #{switti_forward.8} parent=11 // pred_check
          %p670 = pneg %p188
        $region14: #{switti_forward.8} parent=11 // pred_check_branch
          %672 = sbr.rel (%p670) target = $region16
        $region15: #{switti_forward.8} parent=11 // pred_region
          _
        $region16: #{switti_forward.8} parent=11 // pred_fallthru
          _
        // Predicated region
        $region17: #{switti_forward.8} parent=11 // pred_check
          %p673 = pneg %p209
        $region18: #{switti_forward.8} parent=11 // pred_check_branch
          %675 = sbr.rel (%p673) target = $region20
        $region19: #{switti_forward.8} parent=11 // pred_region
          _
        $region20: #{switti_forward.8} parent=11 // pred_fallthru
          _
        // Predicated region
        $region21: #{switti_forward.8} parent=11 // pred_check
          %p676 = pneg %p230
        $region22: #{switti_forward.8} parent=11 // pred_check_branch
          %678 = sbr.rel (%p676) target = $region24
        $region23: #{switti_forward.8} parent=11 // pred_region
          _
        $region24: #{switti_forward.8} parent=11 // pred_fallthru
          _
        // Predicated region
        $region25: #{switti_forward.8} parent=11 // pred_check
          %p679 = pneg %p251
        $region26: #{switti_forward.8} parent=11 // pred_check_branch
          %681 = sbr.rel (%p679) target = $region28
        $region27: #{switti_forward.8} parent=11 // pred_region
          _
        $region28: #{switti_forward.8} parent=11 // pred_fallthru
          _
        // Predicated region
        $region29: #{switti_forward.8} parent=11 // pred_check
          %p682 = pneg %p272
        $region30: #{switti_forward.8} parent=11 // pred_check_branch
          %684 = sbr.rel (%p682) target = $region32
        $region31: #{switti_forward.8} parent=11 // pred_region
          _
        $region32: #{switti_forward.8} parent=11 // pred_fallthru
          _
        // Predicated region
        $region33: #{switti_forward.8} parent=11 // pred_check
          %p685 = pneg %p293
        $region34: #{switti_forward.8} parent=11 // pred_check_branch
          %687 = sbr.rel (%p685) target = $region36
        $region35: #{switti_forward.8} parent=11 // pred_region
          %689 = vsyncadd [#allocation3], 0
          %s691 = sshll.u32 %s10, 4
          %s692 = int_to_ptr.hbm [resolvable:$true] %s691
          %s693 = sshll.u32 [#allocation2], 4
          %s694 = int_to_ptr.vmem [resolvable:$true] %s693
          %696 = dma.hbm_to_vmem [thread:$0]  %s692, 16, %s694, [#allocation3]
        $region36: #{switti_forward.8} parent=11 // pred_fallthru
          _
        // Predicated region
        $region37: #{switti_forward.8} parent=11 // pred_check
          %p697 = pneg %p314
        $region38: #{switti_forward.8} parent=11 // pred_check_branch
          %699 = sbr.rel (%p697) target = $region40
        $region39: #{switti_forward.8} parent=11 // pred_region
          %701 = vsyncadd [#allocation5], 0
          %s703 = sshll.u32 %s11, 4
          %s704 = int_to_ptr.hbm [resolvable:$true] %s703
          %s705 = sshll.u32 [#allocation4], 4
          %s706 = int_to_ptr.vmem [resolvable:$true] %s705
          %708 = dma.hbm_to_vmem [thread:$0]  %s704, 16, %s706, [#allocation5]
        $region40: #{switti_forward.8} parent=11 // pred_fallthru
          _
        // Predicated region
        $region41: #{switti_forward.8} parent=11 // pred_check
          %p709 = pneg %p335
        $region42: #{switti_forward.8} parent=11 // pred_check_branch
          %711 = sbr.rel (%p709) target = $region44
        $region43: #{switti_forward.8} parent=11 // pred_region
          _
        $region44: #{switti_forward.8} parent=11 // pred_fallthru
          _
        // Predicated region
        $region45: #{switti_forward.8} parent=11 // pred_check
          %p712 = pneg %p356
        $region46: #{switti_forward.8} parent=11 // pred_check_branch
          %714 = sbr.rel (%p712) target = $region48
        $region47: #{switti_forward.8} parent=11 // pred_region
          _
        $region48: #{switti_forward.8} parent=11 // pred_fallthru
          _
        // Predicated region
        $region49: #{switti_forward.8} parent=11 // pred_check
          %p715 = pneg %p377
        $region50: #{switti_forward.8} parent=11 // pred_check_branch
          %717 = sbr.rel (%p715) target = $region52
        $region51: #{switti_forward.8} parent=11 // pred_region
          _
        $region52: #{switti_forward.8} parent=11 // pred_fallthru
          _
        // Predicated region
        $region53: #{switti_forward.8} parent=11 // pred_check
          %p718 = pneg %p398
        $region54: #{switti_forward.8} parent=11 // pred_check_branch
          %720 = sbr.rel (%p718) target = $region56
        $region55: #{switti_forward.8} parent=11 // pred_region
          _
        $region56: #{switti_forward.8} parent=11 // pred_fallthru
          _
        // Predicated region
        $region57: #{switti_forward.8} parent=11 // pred_check
          %p721 = pneg %p419
        $region58: #{switti_forward.8} parent=11 // pred_check_branch
          %723 = sbr.rel (%p721) target = $region60
        $region59: #{switti_forward.8} parent=11 // pred_region
          %725 = vsyncadd [#allocation5], 0
          %s727 = sshll.u32 %s16, 4
          %s728 = int_to_ptr.hbm [resolvable:$true] %s727
          %s729 = sshll.u32 [#allocation6], 4
          %s730 = int_to_ptr.vmem [resolvable:$true] %s729
          %732 = dma.hbm_to_vmem [thread:$0]  %s728, 16, %s730, [#allocation5]
        $region60: #{switti_forward.8} parent=11 // pred_fallthru
          _
        // Predicated region
        $region61: #{switti_forward.8} parent=11 // pred_check
          %p733 = pneg %p440
        $region62: #{switti_forward.8} parent=11 // pred_check_branch
          %735 = sbr.rel (%p733) target = $region64
        $region63: #{switti_forward.8} parent=11 // pred_region
          _
        $region64: #{switti_forward.8} parent=11 // pred_fallthru
          _
        // Predicated region
        $region65: #{switti_forward.8} parent=11 // pred_check
          %p736 = pneg %p461
        $region66: #{switti_forward.8} parent=11 // pred_check_branch
          %738 = sbr.rel (%p736) target = $region68
        $region67: #{switti_forward.8} parent=11 // pred_region
          %740 = vsyncadd [#allocation8], 0
          %s742 = sshll.u32 %s18, 4
          %s743 = int_to_ptr.hbm [resolvable:$true] %s742
          %s744 = sshll.u32 [#allocation7], 4
          %s745 = int_to_ptr.vmem [resolvable:$true] %s744
          %747 = dma.hbm_to_vmem [thread:$0]  %s743, 16, %s745, [#allocation8]
        $region68: #{switti_forward.8} parent=11 // pred_fallthru
          _
        // Predicated region
        $region69: #{switti_forward.8} parent=11 // pred_check
          %p748 = pneg %p482
        $region70: #{switti_forward.8} parent=11 // pred_check_branch
          %750 = sbr.rel (%p748) target = $region72
        $region71: #{switti_forward.8} parent=11 // pred_region
          _
        $region72: #{switti_forward.8} parent=11 // pred_fallthru
          _
        // Predicated region
        $region73: #{switti_forward.8} parent=11 // pred_check
          %p751 = pneg %p503
        $region74: #{switti_forward.8} parent=11 // pred_check_branch
          %753 = sbr.rel (%p751) target = $region76
        $region75: #{switti_forward.8} parent=11 // pred_region
          %755 = vsyncadd [#allocation8], 0
          %s757 = sshll.u32 %s20, 4
          %s758 = int_to_ptr.hbm [resolvable:$true] %s757
          %s759 = sshll.u32 [#allocation9], 4
          %s760 = int_to_ptr.vmem [resolvable:$true] %s759
          %762 = dma.hbm_to_vmem [thread:$0]  %s758, 16, %s760, [#allocation8]
        $region76: #{switti_forward.8} parent=11 // pred_fallthru
          _
        // Predicated region
        $region77: #{switti_forward.8} parent=11 // pred_check
          %p763 = pneg %p524
        $region78: #{switti_forward.8} parent=11 // pred_check_branch
          %765 = sbr.rel (%p763) target = $region80
        $region79: #{switti_forward.8} parent=11 // pred_region
          _
        $region80: #{switti_forward.8} parent=11 // pred_fallthru
          _
        // Predicated region
        $region81: #{switti_forward.8} parent=11 // pred_check
          %p766 = pneg %p545
        $region82: #{switti_forward.8} parent=11 // pred_check_branch
          %768 = sbr.rel (%p766) target = $region84
        $region83: #{switti_forward.8} parent=11 // pred_region
          %770 = vsyncadd [#allocation11], 0
          %s772 = sshll.u32 %s22, 4
          %s773 = int_to_ptr.hbm [resolvable:$true] %s772
          %s774 = sshll.u32 [#allocation10], 4
          %s775 = int_to_ptr.vmem [resolvable:$true] %s774
          %777 = dma.hbm_to_vmem [thread:$0]  %s773, 16, %s775, [#allocation11]
        $region84: #{switti_forward.8} parent=11 // pred_fallthru
          _
        // Predicated region
        $region85: #{switti_forward.8} parent=11 // pred_check
          %p778 = pneg %p566
        $region86: #{switti_forward.8} parent=11 // pred_check_branch
          %780 = sbr.rel (%p778) target = $region88
        $region87: #{switti_forward.8} parent=11 // pred_region
          _
        $region88: #{switti_forward.8} parent=11 // pred_fallthru
          _
        // Predicated region
        $region89: #{switti_forward.8} parent=11 // pred_check
          %p781 = pneg %p587
        $region90: #{switti_forward.8} parent=11 // pred_check_branch
          %783 = sbr.rel (%p781) target = $region92
        $region91: #{switti_forward.8} parent=11 // pred_region
          _
        $region92: #{switti_forward.8} parent=11 // pred_fallthru
          _
        // Predicated region
        $region93: #{switti_forward.8} parent=11 // pred_check
          %p784 = pneg %p608
        $region94: #{switti_forward.8} parent=11 // pred_check_branch
          %786 = sbr.rel (%p784) target = $region96
        $region95: #{switti_forward.8} parent=11 // pred_region
          _
        $region96: #{switti_forward.8} parent=11 // pred_fallthru
          _
        // Predicated region
        $region97: #{switti_forward.8} parent=11 // pred_check
          %p787 = pneg %p629
        $region98: #{switti_forward.8} parent=11 // pred_check_branch
          %789 = sbr.rel (%p787) target = $region100
        $region99: #{switti_forward.8} parent=11 // pred_region
          %791 = vsyncadd [#allocation11], 0
          %s793 = sshll.u32 %s26, 4
          %s794 = int_to_ptr.hbm [resolvable:$true] %s793
          %s795 = sshll.u32 [#allocation12], 4
          %s796 = int_to_ptr.vmem [resolvable:$true] %s795
          %798 = dma.hbm_to_vmem [thread:$0]  %s794, 16, %s796, [#allocation11]
        $region100: #{switti_forward.8} parent=11 // pred_fallthru
          _
      $region12: #{switti_forward.8} parent=5 // pred_fallthru
        _
      %p799 = scmp.lt.s32.totalorder %s37, 2
      // Predicated region
      $region101: #{switti_forward.8} parent=5 // pred_check
        %p800 = pneg %p799
      $region102: #{switti_forward.8} parent=5 // pred_check_branch
        %802 = sbr.rel (%p800) target = $region104
      $region103: #{switti_forward.8} parent=5 // pred_region
        // Predicated region
        $region105: #{switti_forward.8} parent=103 // pred_check
          %p803 = pneg %p57
        $region106: #{switti_forward.8} parent=103 // pred_check_branch
          %805 = sbr.rel (%p803) target = $region108
        $region107: #{switti_forward.8} parent=103 // pred_region
          %p806 = scmp.lt.s32.totalorder %s37, 1
          %s807 = scalar_select %p806, %s37, 1
          %s808 = smul.addr %s807, 2
          %s809 = smul.addr %s808, 8
          %s810 = scalar_lea.vmem %s0, %s809
        $region108: #{switti_forward.8} parent=103 // pred_fallthru
          _
        // Predicated region
        $region109: #{switti_forward.8} parent=103 // pred_check
          %p811 = pneg %p83
        $region110: #{switti_forward.8} parent=103 // pred_check_branch
          %813 = sbr.rel (%p811) target = $region112
        $region111: #{switti_forward.8} parent=103 // pred_region
          %p814 = scmp.lt.s32.totalorder %s37, 1
          %s815 = scalar_select %p814, %s37, 1
          %s816 = scalar_lea.vmem %s1, %s815
        $region112: #{switti_forward.8} parent=103 // pred_fallthru
          _
        // Predicated region
        $region113: #{switti_forward.8} parent=103 // pred_check
          %p817 = pneg %p109
        $region114: #{switti_forward.8} parent=103 // pred_check_branch
          %819 = sbr.rel (%p817) target = $region116
        $region115: #{switti_forward.8} parent=103 // pred_region
          %p820 = scmp.lt.s32.totalorder %s37, 1
          %s821 = scalar_select %p820, %s37, 1
          %s822 = scalar_lea.vmem %s2, %s821
        $region116: #{switti_forward.8} parent=103 // pred_fallthru
          _
        // Predicated region
        $region117: #{switti_forward.8} parent=103 // pred_check
          %p823 = pneg %p135
        $region118: #{switti_forward.8} parent=103 // pred_check_branch
          %825 = sbr.rel (%p823) target = $region120
        $region119: #{switti_forward.8} parent=103 // pred_region
          %p826 = scmp.lt.s32.totalorder %s37, 1
          %s827 = scalar_select %p826, %s37, 1
          %s828 = sadd.s32 %s827, 2
          %s829 = smul.addr %s828, 8
          %s830 = scalar_lea.vmem %s3, %s829
        $region120: #{switti_forward.8} parent=103 // pred_fallthru
          _
        // Predicated region
        $region121: #{switti_forward.8} parent=103 // pred_check
          %p831 = pneg %p161
        $region122: #{switti_forward.8} parent=103 // pred_check_branch
          %833 = sbr.rel (%p831) target = $region124
        $region123: #{switti_forward.8} parent=103 // pred_region
          %p834 = scmp.lt.s32.totalorder %s37, 1
          %s835 = scalar_select %p834, %s37, 1
          %s836 = scalar_lea.vmem %s4, %s835
        $region124: #{switti_forward.8} parent=103 // pred_fallthru
          _
      $region104: #{switti_forward.8} parent=5 // pred_fallthru
        _
      %p837 = scmp.le.s32.totalorder 1, %s37
      %p838 = scmp.lt.s32.totalorder %s37, 3
      %p839 = pnand %p837, %p838
      %p840 = pneg %p839
      // Predicated region
      $region125: #{switti_forward.8} parent=5 // pred_check
        _
      $region126: #{switti_forward.8} parent=5 // pred_check_branch
        %842 = sbr.rel (%p839) target = $region128
      $region127: #{switti_forward.8} parent=5 // pred_region
        %s843 = ssub.s32 %s37, 1
        // Predicated region
        $region129: #{switti_forward.8} parent=127 // pred_check
          %p844 = pneg %p293
        $region130: #{switti_forward.8} parent=127 // pred_check_branch
          %846 = sbr.rel (%p844) target = $region132
        $region131: #{switti_forward.8} parent=127 // pred_region
          %848 = dma.done [#allocation3], 16
        $region132: #{switti_forward.8} parent=127 // pred_fallthru
          _
        // Predicated region
        $region133: #{switti_forward.8} parent=127 // pred_check
          %p849 = pneg %p314
        $region134: #{switti_forward.8} parent=127 // pred_check_branch
          %851 = sbr.rel (%p849) target = $region136
        $region135: #{switti_forward.8} parent=127 // pred_region
          %853 = dma.done [#allocation5], 16
        $region136: #{switti_forward.8} parent=127 // pred_fallthru
          _
        // Predicated region
        $region137: #{switti_forward.8} parent=127 // pred_check
          %p854 = pneg %p419
        $region138: #{switti_forward.8} parent=127 // pred_check_branch
          %856 = sbr.rel (%p854) target = $region140
        $region139: #{switti_forward.8} parent=127 // pred_region
          %858 = dma.done [#allocation5], 16
        $region140: #{switti_forward.8} parent=127 // pred_fallthru
          _
        // Predicated region
        $region141: #{switti_forward.8} parent=127 // pred_check
          %p859 = pneg %p461
        $region142: #{switti_forward.8} parent=127 // pred_check_branch
          %861 = sbr.rel (%p859) target = $region144
        $region143: #{switti_forward.8} parent=127 // pred_region
          %863 = dma.done [#allocation8], 16
        $region144: #{switti_forward.8} parent=127 // pred_fallthru
          _
        // Predicated region
        $region145: #{switti_forward.8} parent=127 // pred_check
          %p864 = pneg %p503
        $region146: #{switti_forward.8} parent=127 // pred_check_branch
          %866 = sbr.rel (%p864) target = $region148
        $region147: #{switti_forward.8} parent=127 // pred_region
          %868 = dma.done [#allocation8], 16
        $region148: #{switti_forward.8} parent=127 // pred_fallthru
          _
        // Predicated region
        $region149: #{switti_forward.8} parent=127 // pred_check
          %p869 = pneg %p545
        $region150: #{switti_forward.8} parent=127 // pred_check_branch
          %871 = sbr.rel (%p869) target = $region152
        $region151: #{switti_forward.8} parent=127 // pred_region
          %873 = dma.done [#allocation11], 16
        $region152: #{switti_forward.8} parent=127 // pred_fallthru
          _
        // Predicated region
        $region153: #{switti_forward.8} parent=127 // pred_check
          %p874 = pneg %p629
        $region154: #{switti_forward.8} parent=127 // pred_check_branch
          %876 = sbr.rel (%p874) target = $region156
        $region155: #{switti_forward.8} parent=127 // pred_region
          %878 = dma.done [#allocation11], 16
        $region156: #{switti_forward.8} parent=127 // pred_fallthru
          _
        %p879 = scmp.lt.s32.totalorder %s42, 1
        %s880 = scalar_select %p879, %s42, 1
        %s881 = smul.addr %s880, 2
        %s882 = smul.addr %s881, 8
        %s883 = scalar_lea.vmem %s0, %s882
        %p884 = pneg %p63
        %p885 = pneg %p60
        %p886 = scmp.lt.s32.totalorder %s42, 1
        %s887 = scalar_select %p886, %s42, 1
        %s888 = scalar_lea.vmem %s1, %s887
        %p889 = pneg %p89
        %p890 = pneg %p86
        %p891 = scmp.lt.s32.totalorder %s42, 1
        %s892 = scalar_select %p891, %s42, 1
        %s893 = scalar_lea.vmem %s2, %s892
        %p894 = pneg %p115
        %p895 = pneg %p112
        %p896 = scmp.lt.s32.totalorder %s42, 1
        %s897 = scalar_select %p896, %s42, 1
        %s898 = sadd.s32 %s897, 2
        %s899 = smul.addr %s898, 8
        %s900 = scalar_lea.vmem %s3, %s899
        %p901 = pneg %p141
        %p902 = pneg %p138
        %p903 = scmp.lt.s32.totalorder %s42, 1
        %s904 = scalar_select %p903, %s42, 1
        %s905 = scalar_lea.vmem %s4, %s904
        %p906 = pneg %p167
        %p907 = pneg %p164
        %p908 = pneg %p188
        %p909 = pneg %p185
        %p910 = pneg %p209
        %p911 = pneg %p206
        %p912 = pneg %p230
        %p913 = pneg %p227
        %p914 = pneg %p251
        %p915 = pneg %p248
        %p916 = pneg %p272
        %p917 = pneg %p269
        %p918 = pneg %p293
        %p919 = pneg %p290
        %p920 = pneg %p314
        %p921 = pneg %p311
        %p922 = pneg %p335
        %p923 = pneg %p332
        %p924 = pneg %p356
        %p925 = pneg %p353
        %p926 = pneg %p377
        %p927 = pneg %p374
        %p928 = pneg %p398
        %p929 = pneg %p395
        %p930 = pneg %p419
        %p931 = pneg %p416
        %p932 = pneg %p440
        %p933 = pneg %p437
        %p934 = pneg %p461
        %p935 = pneg %p458
        %p936 = pneg %p482
        %p937 = pneg %p479
        %p938 = pneg %p503
        %p939 = pneg %p500
        %p940 = pneg %p524
        %p941 = pneg %p521
        %p942 = pneg %p545
        %p943 = pneg %p542
        %p944 = pneg %p566
        %p945 = pneg %p563
        %p946 = pneg %p587
        %p947 = pneg %p584
        %p948 = pneg %p608
        %p949 = pneg %p605
        %p950 = pneg %p629
        %p951 = pneg %p626
        %p952 = pneg %p655
        %p953 = pneg %p652
        %p954 = scmp.lt.s32.totalorder %s42, 1
        %s955 = scalar_select %p954, %s42, 1
        %s956 = smul.addr %s955, 2
        %s957 = smul.addr %s956, 8
        %s958 = scalar_lea.vmem %s27, %s957
        %p959 = scmp.lt.s32.totalorder %s42, 1
        %s960 = scalar_select %p959, %s42, 1
        %s961 = smul.addr %s960, 2
        %s962 = smul.addr %s961, 8
        %s963 = scalar_lea.vmem %s0, %s962
        %p964 = scmp.lt.s32.totalorder %s42, 1
        %s965 = scalar_select %p964, %s42, 1
        %s966 = scalar_lea.vmem %s1, %s965
        %p967 = scmp.lt.s32.totalorder %s42, 1
        %s968 = scalar_select %p967, %s42, 1
        %s969 = scalar_lea.vmem %s2, %s968
        %p970 = scmp.lt.s32.totalorder %s42, 1
        %s971 = scalar_select %p970, %s42, 1
        %s972 = sadd.s32 %s971, 2
        %s973 = smul.addr %s972, 8
        %s974 = scalar_lea.vmem %s3, %s973
        %p975 = scmp.lt.s32.totalorder %s42, 1
        %s976 = scalar_select %p975, %s42, 1
        %s977 = scalar_lea.vmem %s4, %s976
        %p978 = scmp.lt.s32.totalorder %s42, 1
        %s979 = scalar_select %p978, %s42, 1
        %s980 = smul.addr %s979, 2
        %s981 = smul.addr %s980, 8
        %s982 = scalar_lea.vmem %s27, %s981
        %v984 = vld [vmem:[%s963] sm:$0xff]
        %v985 = vld [vmem:[%s963 + $0x8] sm:$0xff]
        %v986 = vld [vmem:[%s966] sm:$0x1]
        %v987 = vld [vmem:[%s969] sm:$0x1]
        %v988 = vld [vmem:[%s6] sm:$0xff]
        %v989 = vld [vmem:[%s6 + $0x8] sm:$0xff]
        %v990 = vld [vmem:[%s7] sm:$0xff]
        %v991 = vld [vmem:[%s7 + $0x8] sm:$0xff]
        %v992 = vld [vmem:[%s8] sm:$0xff]
        %v993 = vld [vmem:[%s8 + $0x8] sm:$0xff]
        %v994 = vld [vmem:[%s8 + $0x10] sm:$0xff]
        %v995 = vld [vmem:[%s8 + $0x18] sm:$0xff]
        %v996 = vld [vmem:[%s9] sm:$0xff]
        %v997 = vld [vmem:[%s9 + $0x8] sm:$0xff]
        %v998 = vld [vmem:[%s9 + $0x10] sm:$0xff]
        %v999 = vld [vmem:[%s9 + $0x18] sm:$0xff]
        %v1000 = vpack.c.bf16 %v986, %v986
        %v1001 = vld [vmem:[%s12] sm:$0xff]
        %v1002 = vld [vmem:[%s12 + $0x8] sm:$0xff]
        %v1003 = vld [vmem:[%s12 + $0x10] sm:$0xff]
        %v1004 = vld [vmem:[%s12 + $0x18] sm:$0xff]
        %v1005 = vld [vmem:[%s13] sm:$0x3]
        %v1010 = vunpack.c.l.b16 %v1001
        %v1011 = vunpack.c.h.b16 %v1001
        %v1012 = vunpack.c.l.b16 %v1002
        %v1013 = vunpack.c.h.b16 %v1002
        %v1014 = vunpack.c.l.b16 %v1003
        %v1015 = vunpack.c.h.b16 %v1003
        %v1016 = vunpack.c.l.b16 %v1004
        %v1017 = vunpack.c.h.b16 %v1004
        %v1018 = vpack.c.b16 %v1012, %v1010
        %v1019 = vpack.c.b16 %v1013, %v1011
        %v1020 = vpack.c.b16 %v1016, %v1014
        %v1021 = vpack.c.b16 %v1017, %v1015
        %v1027 = vperm.slane %v1005, 0
        %v1028 = vperm.slane %v1005, 1
        %vm1031 = vcmask 261120
        %v1033 = vsel %vm1031, %v1000, 0
        %1035 = vmatpush.bf16.msra.mxu0 0
        %1036 = vmatpush.bf16.msra.mxu0 0
        %1037 = vmatpush.bf16.msra.mxu0 0
        %1038 = vmatpush.bf16.msra.mxu0 0
        %1039 = vmatpush.bf16.msra.mxu0 0
        %1040 = vmatpush.bf16.msra.mxu0 0
        %1041 = vmatpush.bf16.msra.mxu0 %v1020
        %1042 = vmatpush.bf16.msra.mxu0 %v1018
        %1043 = vmatmul.bf16.gmra.mxu0 %v1033
        %v1044 = vpop.f32.mrf.mxu0
        %v1045 = vadd.f32 %v1027, %v1044
        %v1046 = vpop.f32.mrf.mxu0
        %1047 = vdwg.mxu0
        %1048 = vmatpush.bf16.msra.mxu0 0
        %1049 = vmatpush.bf16.msra.mxu0 0
        %1050 = vmatpush.bf16.msra.mxu0 0
        %1051 = vmatpush.bf16.msra.mxu0 0
        %1052 = vmatpush.bf16.msra.mxu0 0
        %1053 = vmatpush.bf16.msra.mxu0 0
        %1054 = vmatpush.bf16.msra.mxu0 %v1021
        %1055 = vmatpush.bf16.msra.mxu0 %v1019
        %1056 = vmatmul.bf16.gmra.mxu0 %v1033
        %v1057 = vpop.f32.mrf.mxu0
        %v1058 = vadd.f32 %v1028, %v1057
        %v1059 = vpop.f32.mrf.mxu0
        %1060 = vdwg.mxu0
        %v1061 = vld [vmem:[%s14] sm:$0x3]
        %v1062 = vmul.f32 %v1061, %v987
        %v1063 = vadd.f32 %v1045, %v1062
        %1065 = vrot.lane.b32.xlu0 %v987, 32
        %v1066 = vpop.permute.xlu0 %1065
        %v1068 = vmul.f32 %v1061, %v1066
        %v1069 = vadd.f32 %v1045, %v1068
        %1070 = vrot.lane.b32.xlu0 %v987, 64
        %v1071 = vpop.permute.xlu0 %1070
        %v1073 = vmul.f32 %v1061, %v1071
        %v1074 = vadd.f32 %v1045, %v1073
        %1075 = vrot.lane.b32.xlu0 %v987, 96
        %v1076 = vpop.permute.xlu0 %1075
        %v1078 = vmul.f32 %v1061, %v1076
        %v1079 = vadd.f32 %v1045, %v1078
        %v1081 = vrot.slane %v1061, 1
        %v1083 = vmul.f32 %v1081, %v987
        %v1084 = vadd.f32 %v1058, %v1083
        %1085 = vrot.lane.b32.xlu0 %v1061, 96
        %v1086 = vpop.permute.xlu0 %1085
        %v1087 = vrot.slane %v1086, 1
        %v1089 = vmul.f32 %v1087, %v987
        %v1091 = vperm.slane %v1089, 0
        %1092 = vrot.lane.b32.xlu0 %v1091, 32
        %v1093 = vpop.permute.xlu0 %1092
        %v1095 = vadd.f32 %v1058, %v1093
        %v1096 = vsel %vm1031, %v984, 0.0
        %1097 = vadd.xlane.f32.xlu0 %v1096
        %v1098 = vpop.xlane.xlu0 %1097
        %v1099 = vsel %vm1031, %v985, 0.0
        %1100 = vadd.xlane.f32.xlu0 %v1099
        %v1101 = vpop.xlane.xlu0 %1100
        %v1102 = vrcp.pop 32.0
        %v1103 = vmul.f32 32.0, %v1102
        %v1104 = vsub.f32 1.0, %v1103
        %v1105 = vmul.f32 %v1102, %v1104
        %v1106 = vadd.f32 %v1102, %v1105
        %vm1107 = vweird.f32 %v1102
        %v1108 = vsel %vm1107, %v1102, %v1106
        %v1109 = vmul.f32 %v1098, %v1108
        %v1110 = vmul.f32 %v1101, %v1108
        %v1111 = vsub.f32 %v984, %v1109
        %v1112 = vsub.f32 %v985, %v1110
        %v1113 = vmul.f32 %v1111, %v1111
        %v1114 = vmul.f32 %v1112, %v1112
        %v1115 = vsel %vm1031, %v1113, 0.0
        %1116 = vadd.xlane.f32.xlu0 %v1115
        %v1117 = vpop.xlane.xlu0 %1116
        %v1118 = vsel %vm1031, %v1114, 0.0
        %1119 = vadd.xlane.f32.xlu0 %v1118
        %v1120 = vpop.xlane.xlu0 %1119
        %v1121 = vmul.f32 %v1117, %v1108
        %v1122 = vmul.f32 %v1120, %v1108
        %v1123 = vadd.f32 %v1121, 1e-06
        %v1124 = vadd.f32 %v1122, 1e-06
        %v1125 = vrsqrt.pop %v1123
        %v1126 = vmul.f32 %v1125, %v1123
        %v1127 = vmul.f32 %v1126, %v1125
        %v1128 = vmul.f32 0.5, %v1127
        %v1129 = vsub.f32 1.5, %v1128
        %v1130 = vmul.f32 %v1125, %v1129
        %vm1131 = vweird.f32 %v1123
        %vm1132 = vweird.f32 %v1125
        %vm1133 = vmor %vm1131, %vm1132
        %v1134 = vsel %vm1133, %v1125, %v1130
        %v1135 = vrsqrt.pop %v1124
        %v1136 = vmul.f32 %v1135, %v1124
        %v1137 = vmul.f32 %v1136, %v1135
        %v1138 = vmul.f32 0.5, %v1137
        %v1139 = vsub.f32 1.5, %v1138
        %v1140 = vmul.f32 %v1135, %v1139
        %vm1141 = vweird.f32 %v1124
        %vm1142 = vweird.f32 %v1135
        %vm1143 = vmor %vm1141, %vm1142
        %v1144 = vsel %vm1143, %v1135, %v1140
        %v1145 = vmul.f32 %v1111, %v1134
        %v1146 = vmul.f32 %v1112, %v1144
        %v1147 = vadd.f32 %v1074, 1.0
        %v1148 = vperm.slane %v1147, 0
        %1150 = vrot.lane.b32.xlu0 %v1148, 64
        %v1151 = vpop.permute.xlu0 %1150
        %v1153 = vmul.f32 %v1145, %v1151
        %v1154 = vmul.f32 %v1146, %v1151
        %v1155 = vperm.slane %v1084, 0
        %v1156 = vadd.f32 %v1153, %v1155
        %v1157 = vadd.f32 %v1154, %v1155
        %v1158 = vpack.c.bf16 %v1157, %v1156
        %v1159 = vld [vmem:[%s15] sm:$0xf]
        %v1160 = vld [vmem:[%s15 + $0x4] sm:$0xf]
        %v1161 = vld [vmem:[%s15 + $0x8] sm:$0xf]
        %v1162 = vld [vmem:[%s15 + $0xc] sm:$0xf]
        %v1163 = vld [vmem:[#allocation6] sm:$0x1]
        %v1165 = vperm.slane %v1163, 0
        %v1171 = vunpack.c.l.b16 %v1159
        %v1172 = vunpack.c.l.b16 %v1160
        %v1173 = vunpack.c.l.b16 %v1161
        %v1174 = vunpack.c.l.b16 %v1162
        %v1175 = vpack.c.b16 %v1172, %v1171
        %v1176 = vpack.c.b16 %v1174, %v1173
        %v1180 = vsel %vm1031, %v1158, 0
        %1182 = vmatpush.bf16.msra.mxu0 0
        %1183 = vmatpush.bf16.msra.mxu0 0
        %1184 = vmatpush.bf16.msra.mxu0 0
        %1185 = vmatpush.bf16.msra.mxu0 0
        %1186 = vmatpush.bf16.msra.mxu0 0
        %1187 = vmatpush.bf16.msra.mxu0 0
        %1188 = vmatpush.bf16.msra.mxu0 %v1176
        %1189 = vmatpush.bf16.msra.mxu0 %v1175
        %1190 = vmatmul.bf16.gmra.mxu0 %v1180
        %v1191 = vpop.f32.mrf.mxu0
        %v1192 = vadd.f32 %v1165, %v1191
        %v1193 = vpop.f32.mrf.mxu0
        %v1194 = vadd.f32 %v1165, %v1193
        %1195 = vdwg.mxu0
        %v1196 = vmul.f32 %v1192, %v1192
        %v1197 = vmul.f32 %v1194, %v1194
        %v1199 = vsel %vm1031, %v1196, 0
        %v1202 = vsel %vm1031, %v1197, 0
        %1204 = vmatpush.msra.mxu0 0.0
        %1205 = vmatpush.msra.mxu0 0.0
        %1206 = vmatpush.msra.mxu0 0.0
        %1207 = vmatpush.msra.mxu0 0.0
        %1208 = vmatpush.msra.mxu0 0.0
        %1209 = vmatpush.msra.mxu0 0.0
        %1210 = vmatpush.msra.mxu0 0.0
        %1211 = vmatpush.msra.mxu0 0.0
        %1212 = vmatpush.msra.mxu0 0.0
        %1213 = vmatpush.msra.mxu0 0.0
        %1214 = vmatpush.msra.mxu0 0.0
        %1215 = vmatpush.msra.mxu0 0.0
        %1216 = vmatpush.msra.mxu0 %v999
        %1217 = vmatpush.msra.mxu0 %v998
        %1218 = vmatpush.msra.mxu0 %v997
        %1219 = vmatpush.msra.mxu0 %v996
        %1220 = vmatmul.f32.gmra.mxu0 %v1199
        %v1221 = vpop.f32.mrf.mxu0
        %v1222 = vadd.f32 1e-12, %v1221
        %1223 = vmatmul.f32.gmra.mxu0 %v1202
        %v1224 = vpop.f32.mrf.mxu0
        %v1225 = vadd.f32 1e-12, %v1224
        %1226 = vdwg.mxu0
        %v1227 = vrsqrt.pop %v1222
        %v1228 = vmul.f32 %v1227, %v1222
        %v1229 = vmul.f32 %v1228, %v1227
        %v1230 = vmul.f32 0.5, %v1229
        %v1231 = vsub.f32 1.5, %v1230
        %v1232 = vmul.f32 %v1227, %v1231
        %vm1233 = vweird.f32 %v1222
        %vm1234 = vweird.f32 %v1227
        %vm1235 = vmor %vm1233, %vm1234
        %v1236 = vsel %vm1235, %v1227, %v1232
        %v1237 = vrsqrt.pop %v1225
        %v1238 = vmul.f32 %v1237, %v1225
        %v1239 = vmul.f32 %v1238, %v1237
        %v1240 = vmul.f32 0.5, %v1239
        %v1241 = vsub.f32 1.5, %v1240
        %v1242 = vmul.f32 %v1237, %v1241
        %vm1243 = vweird.f32 %v1225
        %vm1244 = vweird.f32 %v1237
        %vm1245 = vmor %vm1243, %vm1244
        %v1246 = vsel %vm1245, %v1237, %v1242
        %v1247 = vmul.f32 %v1192, %v1236
        %v1248 = vmul.f32 %v1194, %v1246
        %v1249 = vld [vmem:[#allocation2] sm:$0x1]
        %v1251 = vperm.slane %v1249, 0
        %v1253 = vmul.f32 %v1247, %v1251
        %v1254 = vmul.f32 %v1248, %v1251
        %v1255 = vmul.f32 %v1253, %v988
        %v1256 = vmul.f32 %v1254, %v989
        %v1258 = vsel %vm1031, %v1253, 0
        %v1261 = vsel %vm1031, %v1254, 0
        %1263 = vmatpush.msra.mxu0 0.0
        %1264 = vmatpush.msra.mxu0 0.0
        %1265 = vmatpush.msra.mxu0 0.0
        %1266 = vmatpush.msra.mxu0 0.0
        %1267 = vmatpush.msra.mxu0 0.0
        %1268 = vmatpush.msra.mxu0 0.0
        %1269 = vmatpush.msra.mxu0 0.0
        %1270 = vmatpush.msra.mxu0 0.0
        %1271 = vmatpush.msra.mxu0 0.0
        %1272 = vmatpush.msra.mxu0 0.0
        %1273 = vmatpush.msra.mxu0 0.0
        %1274 = vmatpush.msra.mxu0 0.0
        %1275 = vmatpush.msra.mxu0 %v995
        %1276 = vmatpush.msra.mxu0 %v994
        %1277 = vmatpush.msra.mxu0 %v993
        %1278 = vmatpush.msra.mxu0 %v992
        %1279 = vmatmul.f32.gmra.mxu0 %v1258
        %v1280 = vpop.f32.mrf.mxu0
        %v1281 = vadd.f32 0.0, %v1280
        %1282 = vmatmul.f32.gmra.mxu0 %v1261
        %v1283 = vpop.f32.mrf.mxu0
        %v1284 = vadd.f32 0.0, %v1283
        %1285 = vdwg.mxu0
        %v1286 = vmul.f32 %v1281, %v990
        %v1287 = vmul.f32 %v1284, %v991
        %v1288 = vadd.f32 %v1255, %v1286
        %v1289 = vadd.f32 %v1256, %v1287
        %1290 = vrot.lane.b32.xlu0 %v1196, 96
        %v1291 = vpop.permute.xlu0 %1290
        %1292 = vrot.lane.b32.xlu0 %v1197, 96
        %v1293 = vpop.permute.xlu0 %1292
        %v1294 = vsel %vm1031, %v1291, 0
        %v1296 = vsel %vm1031, %v1293, 0
        %1298 = vmatpush.msra.mxu0 0.0
        %1299 = vmatpush.msra.mxu0 0.0
        %1300 = vmatpush.msra.mxu0 0.0
        %1301 = vmatpush.msra.mxu0 0.0
        %1302 = vmatpush.msra.mxu0 0.0
        %1303 = vmatpush.msra.mxu0 0.0
        %1304 = vmatpush.msra.mxu0 0.0
        %1305 = vmatpush.msra.mxu0 0.0
        %1306 = vmatpush.msra.mxu0 0.0
        %1307 = vmatpush.msra.mxu0 0.0
        %1308 = vmatpush.msra.mxu0 0.0
        %1309 = vmatpush.msra.mxu0 0.0
        %1310 = vmatpush.msra.mxu0 %v999
        %1311 = vmatpush.msra.mxu0 %v998
        %1312 = vmatpush.msra.mxu0 %v997
        %1313 = vmatpush.msra.mxu0 %v996
        %1314 = vmatmul.f32.gmra.mxu0 %v1294
        %v1315 = vpop.f32.mrf.mxu0
        %v1316 = vadd.f32 1e-12, %v1315
        %1317 = vmatmul.f32.gmra.mxu0 %v1296
        %v1318 = vpop.f32.mrf.mxu0
        %v1319 = vadd.f32 1e-12, %v1318
        %1320 = vdwg.mxu0
        %v1321 = vrsqrt.pop %v1316
        %v1322 = vmul.f32 %v1321, %v1316
        %v1323 = vmul.f32 %v1322, %v1321
        %v1324 = vmul.f32 0.5, %v1323
        %v1325 = vsub.f32 1.5, %v1324
        %v1326 = vmul.f32 %v1321, %v1325
        %vm1327 = vweird.f32 %v1316
        %vm1328 = vweird.f32 %v1321
        %vm1329 = vmor %vm1327, %vm1328
        %v1330 = vsel %vm1329, %v1321, %v1326
        %v1331 = vrsqrt.pop %v1319
        %v1332 = vmul.f32 %v1331, %v1319
        %v1333 = vmul.f32 %v1332, %v1331
        %v1334 = vmul.f32 0.5, %v1333
        %v1335 = vsub.f32 1.5, %v1334
        %v1336 = vmul.f32 %v1331, %v1335
        %vm1337 = vweird.f32 %v1319
        %vm1338 = vweird.f32 %v1331
        %vm1339 = vmor %vm1337, %vm1338
        %v1340 = vsel %vm1339, %v1331, %v1336
        %1343 = vrot.lane.b32.xlu0 %v1330, 32
        %v1344 = vpop.permute.xlu0 %1343
        %1345 = vrot.lane.b32.xlu0 %v1340, 32
        %v1346 = vpop.permute.xlu0 %1345
        %v1349 = vmul.f32 %v1192, %v1344
        %v1350 = vmul.f32 %v1194, %v1346
        %1353 = vrot.lane.b32.xlu0 %v988, 32
        %v1354 = vpop.permute.xlu0 %1353
        %1355 = vrot.lane.b32.xlu0 %v989, 32
        %v1356 = vpop.permute.xlu0 %1355
        %v1359 = vmul.f32 %v1349, %v1354
        %v1360 = vmul.f32 %v1350, %v1356
        %1363 = vrot.lane.b32.xlu0 %v1349, 96
        %v1364 = vpop.permute.xlu0 %1363
        %1365 = vrot.lane.b32.xlu0 %v1350, 96
        %v1366 = vpop.permute.xlu0 %1365
        %v1367 = vsel %vm1031, %v1364, 0
        %v1369 = vsel %vm1031, %v1366, 0
        %1371 = vmatpush.msra.mxu0 0.0
        %1372 = vmatpush.msra.mxu0 0.0
        %1373 = vmatpush.msra.mxu0 0.0
        %1374 = vmatpush.msra.mxu0 0.0
        %1375 = vmatpush.msra.mxu0 0.0
        %1376 = vmatpush.msra.mxu0 0.0
        %1377 = vmatpush.msra.mxu0 0.0
        %1378 = vmatpush.msra.mxu0 0.0
        %1379 = vmatpush.msra.mxu0 0.0
        %1380 = vmatpush.msra.mxu0 0.0
        %1381 = vmatpush.msra.mxu0 0.0
        %1382 = vmatpush.msra.mxu0 0.0
        %1383 = vmatpush.msra.mxu0 %v995
        %1384 = vmatpush.msra.mxu0 %v994
        %1385 = vmatpush.msra.mxu0 %v993
        %1386 = vmatpush.msra.mxu0 %v992
        %1387 = vmatmul.f32.gmra.mxu0 %v1367
        %v1388 = vpop.f32.mrf.mxu0
        %v1389 = vadd.f32 0.0, %v1388
        %1390 = vmatmul.f32.gmra.mxu0 %v1369
        %v1391 = vpop.f32.mrf.mxu0
        %v1392 = vadd.f32 0.0, %v1391
        %1393 = vdwg.mxu0
        %v1394 = vmul.f32 %v1389, %v990
        %v1395 = vmul.f32 %v1392, %v991
        %1398 = vrot.lane.b32.xlu0 %v1394, 32
        %v1399 = vpop.permute.xlu0 %1398
        %1400 = vrot.lane.b32.xlu0 %v1395, 32
        %v1401 = vpop.permute.xlu0 %1400
        %v1404 = vadd.f32 %v1359, %v1399
        %v1405 = vadd.f32 %v1360, %v1401
        %v1406 = vld [vmem:[%s5] sm:$0xff]
        %v1407 = vld [vmem:[%s5 + $0x8] sm:$0xff]
        %v1408 = vld [vmem:[%s17] sm:$0xf]
        %v1409 = vld [vmem:[%s17 + $0x4] sm:$0xf]
        %v1410 = vld [vmem:[%s17 + $0x8] sm:$0xf]
        %v1411 = vld [vmem:[%s17 + $0xc] sm:$0xf]
        %v1412 = vld [vmem:[#allocation7] sm:$0x1]
        %v1413 = vpack.c.bf16 %v1289, %v1288
        %1416 = vrot.lane.b32.xlu0 %v1404, 96
        %v1417 = vpop.permute.xlu0 %1416
        %1418 = vrot.lane.b32.xlu0 %v1405, 96
        %v1419 = vpop.permute.xlu0 %1418
        %1422 = vxpose.xlu0.b32.start [1/16] %v1417, 128
        %1423 = vxpose.xlu0.b32.cont [2/16] %v1419, 128
        %1424 = vxpose.xlu0.b32.cont [3/16] 0.0, 128
        %1425 = vxpose.xlu0.b32.cont [4/16] 0.0, 128
        %1426 = vxpose.xlu0.b32.cont [5/16] 0.0, 128
        %1427 = vxpose.xlu0.b32.cont [6/16] 0.0, 128
        %1428 = vxpose.xlu0.b32.cont [7/16] 0.0, 128
        %1429 = vxpose.xlu0.b32.cont [8/16] 0.0, 128
        %1430 = vxpose.xlu0.b32.cont [9/16] 0.0, 128
        %1431 = vxpose.xlu0.b32.cont [10/16] 0.0, 128
        %1432 = vxpose.xlu0.b32.cont [11/16] 0.0, 128
        %1433 = vxpose.xlu0.b32.cont [12/16] 0.0, 128
        %1434 = vxpose.xlu0.b32.cont [13/16] 0.0, 128
        %1435 = vxpose.xlu0.b32.cont [14/16] 0.0, 128
        %1436 = vxpose.xlu0.b32.cont [15/16] 0.0, 128
        %1437 = vxpose.xlu0.b32.end [16/16] 0.0, 128
        %v1438 = vpop.trf.xlu0
        %v1439 = vpop.trf.xlu0
        %v1440 = vpop.trf.xlu0
        %v1441 = vpop.trf.xlu0
        %v1442 = vpop.trf.xlu0
        %v1443 = vpop.trf.xlu0
        %v1444 = vpop.trf.xlu0
        %v1445 = vpop.trf.xlu0
        %v1446 = vpop.trf.xlu0
        %v1447 = vpop.trf.xlu0
        %v1448 = vpop.trf.xlu0
        %v1449 = vpop.trf.xlu0
        %v1450 = vpop.trf.xlu0
        %v1451 = vpop.trf.xlu0
        %v1452 = vpop.trf.xlu0
        %v1453 = vpop.trf.xlu0
        %v1454 = vpack.c.bf16 %v1438, %v1438
        %vm1455 = vcmask 64512
        %v1457 = vsel %vm1455, %v1413, 0
        %vm1459 = vcmask 1043456
        %v1461 = vsel %vm1459, %v1454, 0
        %1463 = vmatpush.bf16.msra.mxu0 0
        %1464 = vmatpush.bf16.msra.mxu0 0
        %1465 = vmatpush.bf16.msra.mxu0 0
        %1466 = vmatpush.bf16.msra.mxu0 0
        %1467 = vmatpush.bf16.msra.mxu0 0
        %1468 = vmatpush.bf16.msra.mxu0 0
        %1469 = vmatpush.bf16.msra.mxu0 0
        %1470 = vmatpush.bf16.msra.mxu0 %v1461
        %1471 = vmatmul.bf16.gmra.mxu0 %v1457
        %v1472 = vpop.f32.mrf.mxu0
        %v1473 = vadd.f32 %v1406, %v1472
        %v1474 = vpop.f32.mrf.mxu0
        %v1475 = vadd.f32 %v1407, %v1474
        %1476 = vdwg.mxu0
        %vm1477 = vcmask 130048
        %v1478 = vsel %vm1477, %v1473, -inf
        %1479 = vmax.xlane.f32.xlu0 %v1478
        %v1480 = vpop.xlane.xlu0 %1479
        %v1481 = vsel %vm1477, %v1475, -inf
        %1482 = vmax.xlane.f32.xlu0 %v1481
        %v1483 = vpop.xlane.xlu0 %1482
        %v1484 = vsub.f32 %v1473, %v1480
        %v1485 = vsub.f32 %v1475, %v1483
        %v1486 = vmul.f32 %v1484, 1.442695
        %v1487 = vpow.pop %v1486
        %v1488 = vmul.f32 %v1485, 1.442695
        %v1489 = vpow.pop %v1488
        %v1490 = vsel %vm1477, %v1487, 0.0
        %1491 = vadd.xlane.f32.xlu0 %v1490
        %v1492 = vpop.xlane.xlu0 %1491
        %v1493 = vsel %vm1477, %v1489, 0.0
        %1494 = vadd.xlane.f32.xlu0 %v1493
        %v1495 = vpop.xlane.xlu0 %1494
        %v1496 = vrcp.pop %v1492
        %v1497 = vrcp.pop %v1495
        %v1498 = vmul.f32 %v1487, %v1496
        %v1499 = vmul.f32 %v1489, %v1497
        %v1500 = vpack.c.bf16 %v1499, %v1498
        %v1501 = vpack.c.bf16 %v1194, %v1192
        %1503 = vrot.lane.b32.xlu0 %v1501, 64
        %v1504 = vpop.permute.xlu0 %1503
        %v1507 = vsel %vm1477, %v1500, 0
        %1509 = vmatpush.bf16.msra.mxu0 0
        %1510 = vmatpush.bf16.msra.mxu0 0
        %1511 = vmatpush.bf16.msra.mxu0 0
        %1512 = vmatpush.bf16.msra.mxu0 0
        %1513 = vmatpush.bf16.msra.mxu0 0
        %1514 = vmatpush.bf16.msra.mxu0 0
        %1515 = vmatpush.bf16.msra.mxu0 0
        %1516 = vmatpush.bf16.msra.mxu0 %v1504
        %1517 = vmatmul.bf16.gmra.mxu0 %v1507
        %v1518 = vpop.f32.mrf.mxu0
        %v1519 = vadd.f32 0.0, %v1518
        %v1520 = vpop.f32.mrf.mxu0
        %v1521 = vadd.f32 0.0, %v1520
        %1522 = vdwg.mxu0
        %v1523 = vpack.c.bf16 %v1521, %v1519
        %1524 = vrot.lane.b32.xlu0 %v1404, 88
        %v1525 = vpop.permute.xlu0 %1524
        %1526 = vrot.lane.b32.xlu0 %v1405, 88
        %v1527 = vpop.permute.xlu0 %1526
        %1530 = vxpose.xlu0.b32.start [1/16] %v1525, 128
        %1531 = vxpose.xlu0.b32.cont [2/16] %v1527, 128
        %1532 = vxpose.xlu0.b32.cont [3/16] 0.0, 128
        %1533 = vxpose.xlu0.b32.cont [4/16] 0.0, 128
        %1534 = vxpose.xlu0.b32.cont [5/16] 0.0, 128
        %1535 = vxpose.xlu0.b32.cont [6/16] 0.0, 128
        %1536 = vxpose.xlu0.b32.cont [7/16] 0.0, 128
        %1537 = vxpose.xlu0.b32.cont [8/16] 0.0, 128
        %1538 = vxpose.xlu0.b32.cont [9/16] 0.0, 128
        %1539 = vxpose.xlu0.b32.cont [10/16] 0.0, 128
        %1540 = vxpose.xlu0.b32.cont [11/16] 0.0, 128
        %1541 = vxpose.xlu0.b32.cont [12/16] 0.0, 128
        %1542 = vxpose.xlu0.b32.cont [13/16] 0.0, 128
        %1543 = vxpose.xlu0.b32.cont [14/16] 0.0, 128
        %1544 = vxpose.xlu0.b32.cont [15/16] 0.0, 128
        %1545 = vxpose.xlu0.b32.end [16/16] 0.0, 128
        %v1546 = vpop.trf.xlu0
        %v1547 = vpop.trf.xlu0
        %v1548 = vpop.trf.xlu0
        %v1549 = vpop.trf.xlu0
        %v1550 = vpop.trf.xlu0
        %v1551 = vpop.trf.xlu0
        %v1552 = vpop.trf.xlu0
        %v1553 = vpop.trf.xlu0
        %v1554 = vpop.trf.xlu0
        %v1555 = vpop.trf.xlu0
        %v1556 = vpop.trf.xlu0
        %v1557 = vpop.trf.xlu0
        %v1558 = vpop.trf.xlu0
        %v1559 = vpop.trf.xlu0
        %v1560 = vpop.trf.xlu0
        %v1561 = vpop.trf.xlu0
        %v1562 = vpack.c.bf16 %v1546, %v1546
        %1564 = vrot.lane.b32.xlu0 %v1413, 120
        %v1565 = vpop.permute.xlu0 %1564
        %v1567 = vsel %vm1455, %v1565, 0
        %v1570 = vsel %vm1459, %v1562, 0
        %1572 = vmatpush.bf16.msra.mxu0 0
        %1573 = vmatpush.bf16.msra.mxu0 0
        %1574 = vmatpush.bf16.msra.mxu0 0
        %1575 = vmatpush.bf16.msra.mxu0 0
        %1576 = vmatpush.bf16.msra.mxu0 0
        %1577 = vmatpush.bf16.msra.mxu0 0
        %1578 = vmatpush.bf16.msra.mxu0 0
        %1579 = vmatpush.bf16.msra.mxu0 %v1570
        %1580 = vmatmul.bf16.gmra.mxu0 %v1567
        %v1581 = vpop.f32.mrf.mxu0
        %v1582 = vadd.f32 %v1406, %v1581
        %v1583 = vpop.f32.mrf.mxu0
        %v1584 = vadd.f32 %v1407, %v1583
        %1585 = vdwg.mxu0
        %v1586 = vsel %vm1477, %v1582, -inf
        %1587 = vmax.xlane.f32.xlu0 %v1586
        %v1588 = vpop.xlane.xlu0 %1587
        %v1589 = vsel %vm1477, %v1584, -inf
        %1590 = vmax.xlane.f32.xlu0 %v1589
        %v1591 = vpop.xlane.xlu0 %1590
        %v1592 = vsub.f32 %v1582, %v1588
        %v1593 = vsub.f32 %v1584, %v1591
        %v1594 = vmul.f32 %v1592, 1.442695
        %v1595 = vpow.pop %v1594
        %v1596 = vmul.f32 %v1593, 1.442695
        %v1597 = vpow.pop %v1596
        %v1598 = vsel %vm1477, %v1595, 0.0
        %1599 = vadd.xlane.f32.xlu0 %v1598
        %v1600 = vpop.xlane.xlu0 %1599
        %v1601 = vsel %vm1477, %v1597, 0.0
        %1602 = vadd.xlane.f32.xlu0 %v1601
        %v1603 = vpop.xlane.xlu0 %1602
        %v1604 = vrcp.pop %v1600
        %v1605 = vrcp.pop %v1603
        %v1606 = vmul.f32 %v1595, %v1604
        %v1607 = vmul.f32 %v1597, %v1605
        %v1608 = vpack.c.bf16 %v1607, %v1606
        %1609 = vrot.lane.b32.xlu0 %v1501, 56
        %v1610 = vpop.permute.xlu0 %1609
        %v1613 = vsel %vm1477, %v1608, 0
        %1615 = vmatpush.bf16.msra.mxu0 0
        %1616 = vmatpush.bf16.msra.mxu0 0
        %1617 = vmatpush.bf16.msra.mxu0 0
        %1618 = vmatpush.bf16.msra.mxu0 0
        %1619 = vmatpush.bf16.msra.mxu0 0
        %1620 = vmatpush.bf16.msra.mxu0 0
        %1621 = vmatpush.bf16.msra.mxu0 0
        %1622 = vmatpush.bf16.msra.mxu0 %v1610
        %1623 = vmatmul.bf16.gmra.mxu0 %v1613
        %v1624 = vpop.f32.mrf.mxu0
        %v1625 = vadd.f32 0.0, %v1624
        %v1626 = vpop.f32.mrf.mxu0
        %v1627 = vadd.f32 0.0, %v1626
        %1628 = vdwg.mxu0
        %v1629 = vpack.c.bf16 %v1627, %v1625
        %v1631 = vsel %vm1455, %v1629, 0
        %v1634 = vsel %vm1459, %v1409, 0
        %1636 = vmatpush.bf16.msra.mxu0 0
        %1637 = vmatpush.bf16.msra.mxu0 0
        %1638 = vmatpush.bf16.msra.mxu0 0
        %1639 = vmatpush.bf16.msra.mxu0 0
        %1640 = vmatpush.bf16.msra.mxu0 0
        %1641 = vmatpush.bf16.msra.mxu0 0
        %1642 = vmatpush.bf16.msra.mxu0 0
        %1643 = vmatpush.bf16.msra.mxu0 %v1634
        %1644 = vmatmul.bf16.gmra.mxu0 %v1631
        %v1645 = vpop.f32.mrf.mxu0
        %v1646 = vadd.f32 0.0, %v1645
        %v1647 = vpop.f32.mrf.mxu0
        %v1648 = vadd.f32 0.0, %v1647
        %1649 = vdwg.mxu0
        %v1651 = vsel %vm1455, %v1523, 0
        %v1654 = vsel %vm1459, %v1408, 0
        %1656 = vmatpush.bf16.msra.mxu0 0
        %1657 = vmatpush.bf16.msra.mxu0 0
        %1658 = vmatpush.bf16.msra.mxu0 0
        %1659 = vmatpush.bf16.msra.mxu0 0
        %1660 = vmatpush.bf16.msra.mxu0 0
        %1661 = vmatpush.bf16.msra.mxu0 0
        %1662 = vmatpush.bf16.msra.mxu0 0
        %1663 = vmatpush.bf16.msra.mxu0 %v1654
        %1664 = vmatmul.bf16.gmra.mxu0 %v1651
        %v1665 = vpop.f32.mrf.mxu0
        %v1666 = vadd.f32 %v1646, %v1665
        %v1667 = vpop.f32.mrf.mxu0
        %v1668 = vadd.f32 %v1648, %v1667
        %1669 = vdwg.mxu0
        %1670 = vrot.lane.b32.xlu0 %v1404, 80
        %v1671 = vpop.permute.xlu0 %1670
        %1672 = vrot.lane.b32.xlu0 %v1405, 80
        %v1673 = vpop.permute.xlu0 %1672
        %1676 = vxpose.xlu0.b32.start [1/16] %v1671, 128
        %1677 = vxpose.xlu0.b32.cont [2/16] %v1673, 128
        %1678 = vxpose.xlu0.b32.cont [3/16] 0.0, 128
        %1679 = vxpose.xlu0.b32.cont [4/16] 0.0, 128
        %1680 = vxpose.xlu0.b32.cont [5/16] 0.0, 128
        %1681 = vxpose.xlu0.b32.cont [6/16] 0.0, 128
        %1682 = vxpose.xlu0.b32.cont [7/16] 0.0, 128
        %1683 = vxpose.xlu0.b32.cont [8/16] 0.0, 128
        %1684 = vxpose.xlu0.b32.cont [9/16] 0.0, 128
        %1685 = vxpose.xlu0.b32.cont [10/16] 0.0, 128
        %1686 = vxpose.xlu0.b32.cont [11/16] 0.0, 128
        %1687 = vxpose.xlu0.b32.cont [12/16] 0.0, 128
        %1688 = vxpose.xlu0.b32.cont [13/16] 0.0, 128
        %1689 = vxpose.xlu0.b32.cont [14/16] 0.0, 128
        %1690 = vxpose.xlu0.b32.cont [15/16] 0.0, 128
        %1691 = vxpose.xlu0.b32.end [16/16] 0.0, 128
        %v1692 = vpop.trf.xlu0
        %v1693 = vpop.trf.xlu0
        %v1694 = vpop.trf.xlu0
        %v1695 = vpop.trf.xlu0
        %v1696 = vpop.trf.xlu0
        %v1697 = vpop.trf.xlu0
        %v1698 = vpop.trf.xlu0
        %v1699 = vpop.trf.xlu0
        %v1700 = vpop.trf.xlu0
        %v1701 = vpop.trf.xlu0
        %v1702 = vpop.trf.xlu0
        %v1703 = vpop.trf.xlu0
        %v1704 = vpop.trf.xlu0
        %v1705 = vpop.trf.xlu0
        %v1706 = vpop.trf.xlu0
        %v1707 = vpop.trf.xlu0
        %v1708 = vpack.c.bf16 %v1692, %v1692
        %1709 = vrot.lane.b32.xlu0 %v1413, 112
        %v1710 = vpop.permute.xlu0 %1709
        %v1712 = vsel %vm1455, %v1710, 0
        %v1715 = vsel %vm1459, %v1708, 0
        %1717 = vmatpush.bf16.msra.mxu0 0
        %1718 = vmatpush.bf16.msra.mxu0 0
        %1719 = vmatpush.bf16.msra.mxu0 0
        %1720 = vmatpush.bf16.msra.mxu0 0
        %1721 = vmatpush.bf16.msra.mxu0 0
        %1722 = vmatpush.bf16.msra.mxu0 0
        %1723 = vmatpush.bf16.msra.mxu0 0
        %1724 = vmatpush.bf16.msra.mxu0 %v1715
        %1725 = vmatmul.bf16.gmra.mxu0 %v1712
        %v1726 = vpop.f32.mrf.mxu0
        %v1727 = vadd.f32 %v1406, %v1726
        %v1728 = vpop.f32.mrf.mxu0
        %v1729 = vadd.f32 %v1407, %v1728
        %1730 = vdwg.mxu0
        %v1731 = vsel %vm1477, %v1727, -inf
        %1732 = vmax.xlane.f32.xlu0 %v1731
        %v1733 = vpop.xlane.xlu0 %1732
        %v1734 = vsel %vm1477, %v1729, -inf
        %1735 = vmax.xlane.f32.xlu0 %v1734
        %v1736 = vpop.xlane.xlu0 %1735
        %v1737 = vsub.f32 %v1727, %v1733
        %v1738 = vsub.f32 %v1729, %v1736
        %v1739 = vmul.f32 %v1737, 1.442695
        %v1740 = vpow.pop %v1739
        %v1741 = vmul.f32 %v1738, 1.442695
        %v1742 = vpow.pop %v1741
        %v1743 = vsel %vm1477, %v1740, 0.0
        %1744 = vadd.xlane.f32.xlu0 %v1743
        %v1745 = vpop.xlane.xlu0 %1744
        %v1746 = vsel %vm1477, %v1742, 0.0
        %1747 = vadd.xlane.f32.xlu0 %v1746
        %v1748 = vpop.xlane.xlu0 %1747
        %v1749 = vrcp.pop %v1745
        %v1750 = vrcp.pop %v1748
        %v1751 = vmul.f32 %v1740, %v1749
        %v1752 = vmul.f32 %v1742, %v1750
        %v1753 = vpack.c.bf16 %v1752, %v1751
        %1754 = vrot.lane.b32.xlu0 %v1501, 48
        %v1755 = vpop.permute.xlu0 %1754
        %v1758 = vsel %vm1477, %v1753, 0
        %1760 = vmatpush.bf16.msra.mxu0 0
        %1761 = vmatpush.bf16.msra.mxu0 0
        %1762 = vmatpush.bf16.msra.mxu0 0
        %1763 = vmatpush.bf16.msra.mxu0 0
        %1764 = vmatpush.bf16.msra.mxu0 0
        %1765 = vmatpush.bf16.msra.mxu0 0
        %1766 = vmatpush.bf16.msra.mxu0 0
        %1767 = vmatpush.bf16.msra.mxu0 %v1755
        %1768 = vmatmul.bf16.gmra.mxu0 %v1758
        %v1769 = vpop.f32.mrf.mxu0
        %v1770 = vadd.f32 0.0, %v1769
        %v1771 = vpop.f32.mrf.mxu0
        %v1772 = vadd.f32 0.0, %v1771
        %1773 = vdwg.mxu0
        %v1774 = vpack.c.bf16 %v1772, %v1770
        %v1776 = vsel %vm1455, %v1774, 0
        %v1779 = vsel %vm1459, %v1410, 0
        %1781 = vmatpush.bf16.msra.mxu0 0
        %1782 = vmatpush.bf16.msra.mxu0 0
        %1783 = vmatpush.bf16.msra.mxu0 0
        %1784 = vmatpush.bf16.msra.mxu0 0
        %1785 = vmatpush.bf16.msra.mxu0 0
        %1786 = vmatpush.bf16.msra.mxu0 0
        %1787 = vmatpush.bf16.msra.mxu0 0
        %1788 = vmatpush.bf16.msra.mxu0 %v1779
        %1789 = vmatmul.bf16.gmra.mxu0 %v1776
        %v1790 = vpop.f32.mrf.mxu0
        %v1791 = vadd.f32 0.0, %v1790
        %v1792 = vpop.f32.mrf.mxu0
        %v1793 = vadd.f32 0.0, %v1792
        %1794 = vdwg.mxu0
        %v1795 = vadd.f32 %v1666, %v1791
        %v1796 = vadd.f32 %v1668, %v1793
        %1797 = vrot.lane.b32.xlu0 %v1404, 72
        %v1798 = vpop.permute.xlu0 %1797
        %1799 = vrot.lane.b32.xlu0 %v1405, 72
        %v1800 = vpop.permute.xlu0 %1799
        %1803 = vxpose.xlu0.b32.start [1/16] %v1798, 128
        %1804 = vxpose.xlu0.b32.cont [2/16] %v1800, 128
        %1805 = vxpose.xlu0.b32.cont [3/16] 0.0, 128
        %1806 = vxpose.xlu0.b32.cont [4/16] 0.0, 128
        %1807 = vxpose.xlu0.b32.cont [5/16] 0.0, 128
        %1808 = vxpose.xlu0.b32.cont [6/16] 0.0, 128
        %1809 = vxpose.xlu0.b32.cont [7/16] 0.0, 128
        %1810 = vxpose.xlu0.b32.cont [8/16] 0.0, 128
        %1811 = vxpose.xlu0.b32.cont [9/16] 0.0, 128
        %1812 = vxpose.xlu0.b32.cont [10/16] 0.0, 128
        %1813 = vxpose.xlu0.b32.cont [11/16] 0.0, 128
        %1814 = vxpose.xlu0.b32.cont [12/16] 0.0, 128
        %1815 = vxpose.xlu0.b32.cont [13/16] 0.0, 128
        %1816 = vxpose.xlu0.b32.cont [14/16] 0.0, 128
        %1817 = vxpose.xlu0.b32.cont [15/16] 0.0, 128
        %1818 = vxpose.xlu0.b32.end [16/16] 0.0, 128
        %v1819 = vpop.trf.xlu0
        %v1820 = vpop.trf.xlu0
        %v1821 = vpop.trf.xlu0
        %v1822 = vpop.trf.xlu0
        %v1823 = vpop.trf.xlu0
        %v1824 = vpop.trf.xlu0
        %v1825 = vpop.trf.xlu0
        %v1826 = vpop.trf.xlu0
        %v1827 = vpop.trf.xlu0
        %v1828 = vpop.trf.xlu0
        %v1829 = vpop.trf.xlu0
        %v1830 = vpop.trf.xlu0
        %v1831 = vpop.trf.xlu0
        %v1832 = vpop.trf.xlu0
        %v1833 = vpop.trf.xlu0
        %v1834 = vpop.trf.xlu0
        %v1835 = vpack.c.bf16 %v1819, %v1819
        %1836 = vrot.lane.b32.xlu0 %v1413, 104
        %v1837 = vpop.permute.xlu0 %1836
        %v1839 = vsel %vm1455, %v1837, 0
        %v1842 = vsel %vm1459, %v1835, 0
        %1844 = vmatpush.bf16.msra.mxu0 0
        %1845 = vmatpush.bf16.msra.mxu0 0
        %1846 = vmatpush.bf16.msra.mxu0 0
        %1847 = vmatpush.bf16.msra.mxu0 0
        %1848 = vmatpush.bf16.msra.mxu0 0
        %1849 = vmatpush.bf16.msra.mxu0 0
        %1850 = vmatpush.bf16.msra.mxu0 0
        %1851 = vmatpush.bf16.msra.mxu0 %v1842
        %1852 = vmatmul.bf16.gmra.mxu0 %v1839
        %v1853 = vpop.f32.mrf.mxu0
        %v1854 = vadd.f32 %v1406, %v1853
        %v1855 = vpop.f32.mrf.mxu0
        %v1856 = vadd.f32 %v1407, %v1855
        %1857 = vdwg.mxu0
        %v1858 = vsel %vm1477, %v1854, -inf
        %1859 = vmax.xlane.f32.xlu0 %v1858
        %v1860 = vpop.xlane.xlu0 %1859
        %v1861 = vsel %vm1477, %v1856, -inf
        %1862 = vmax.xlane.f32.xlu0 %v1861
        %v1863 = vpop.xlane.xlu0 %1862
        %v1864 = vsub.f32 %v1854, %v1860
        %v1865 = vsub.f32 %v1856, %v1863
        %v1866 = vmul.f32 %v1864, 1.442695
        %v1867 = vpow.pop %v1866
        %v1868 = vmul.f32 %v1865, 1.442695
        %v1869 = vpow.pop %v1868
        %v1870 = vsel %vm1477, %v1867, 0.0
        %1871 = vadd.xlane.f32.xlu0 %v1870
        %v1872 = vpop.xlane.xlu0 %1871
        %v1873 = vsel %vm1477, %v1869, 0.0
        %1874 = vadd.xlane.f32.xlu0 %v1873
        %v1875 = vpop.xlane.xlu0 %1874
        %v1876 = vrcp.pop %v1872
        %v1877 = vrcp.pop %v1875
        %v1878 = vmul.f32 %v1867, %v1876
        %v1879 = vmul.f32 %v1869, %v1877
        %v1880 = vpack.c.bf16 %v1879, %v1878
        %1881 = vrot.lane.b32.xlu0 %v1501, 40
        %v1882 = vpop.permute.xlu0 %1881
        %v1885 = vsel %vm1477, %v1880, 0
        %1887 = vmatpush.bf16.msra.mxu0 0
        %1888 = vmatpush.bf16.msra.mxu0 0
        %1889 = vmatpush.bf16.msra.mxu0 0
        %1890 = vmatpush.bf16.msra.mxu0 0
        %1891 = vmatpush.bf16.msra.mxu0 0
        %1892 = vmatpush.bf16.msra.mxu0 0
        %1893 = vmatpush.bf16.msra.mxu0 0
        %1894 = vmatpush.bf16.msra.mxu0 %v1882
        %1895 = vmatmul.bf16.gmra.mxu0 %v1885
        %v1896 = vpop.f32.mrf.mxu0
        %v1897 = vadd.f32 0.0, %v1896
        %v1898 = vpop.f32.mrf.mxu0
        %v1899 = vadd.f32 0.0, %v1898
        %1900 = vdwg.mxu0
        %v1901 = vpack.c.bf16 %v1899, %v1897
        %v1903 = vsel %vm1455, %v1901, 0
        %v1906 = vsel %vm1459, %v1411, 0
        %1908 = vmatpush.bf16.msra.mxu0 0
        %1909 = vmatpush.bf16.msra.mxu0 0
        %1910 = vmatpush.bf16.msra.mxu0 0
        %1911 = vmatpush.bf16.msra.mxu0 0
        %1912 = vmatpush.bf16.msra.mxu0 0
        %1913 = vmatpush.bf16.msra.mxu0 0
        %1914 = vmatpush.bf16.msra.mxu0 0
        %1915 = vmatpush.bf16.msra.mxu0 %v1906
        %1916 = vmatmul.bf16.gmra.mxu0 %v1903
        %v1917 = vpop.f32.mrf.mxu0
        %v1918 = vadd.f32 0.0, %v1917
        %v1919 = vpop.f32.mrf.mxu0
        %v1920 = vadd.f32 0.0, %v1919
        %1921 = vdwg.mxu0
        %v1922 = vadd.f32 %v1795, %v1918
        %v1923 = vadd.f32 %v1796, %v1920
        %v1925 = vperm.slane %v1412, 0
        %v1927 = vadd.f32 %v1922, %v1925
        %v1928 = vadd.f32 %v1923, %v1925
        %v1929 = vperm.slane %v1063, 0
        %v1930 = vmul.f32 %v1929, %v1927
        %v1931 = vmul.f32 %v1929, %v1928
        %v1932 = vadd.f32 %v984, %v1930
        %v1933 = vadd.f32 %v985, %v1931
        %v1934 = vpack.c.bf16 %v1933, %v1932
        %v1935 = vld [vmem:[%s19] sm:$0xf]
        %v1936 = vld [vmem:[%s19 + $0x4] sm:$0xf]
        %v1937 = vld [vmem:[%s19 + $0x8] sm:$0xf]
        %v1938 = vld [vmem:[%s19 + $0xc] sm:$0xf]
        %v1939 = vld [vmem:[#allocation9] sm:$0x1]
        %v1941 = vperm.slane %v1939, 0
        %v1947 = vunpack.c.l.b16 %v1935
        %v1948 = vunpack.c.l.b16 %v1936
        %v1949 = vunpack.c.l.b16 %v1937
        %v1950 = vunpack.c.l.b16 %v1938
        %v1951 = vpack.c.b16 %v1948, %v1947
        %v1952 = vpack.c.b16 %v1950, %v1949
        %v1956 = vsel %vm1031, %v1934, 0
        %1958 = vmatpush.bf16.msra.mxu0 0
        %1959 = vmatpush.bf16.msra.mxu0 0
        %1960 = vmatpush.bf16.msra.mxu0 0
        %1961 = vmatpush.bf16.msra.mxu0 0
        %1962 = vmatpush.bf16.msra.mxu0 0
        %1963 = vmatpush.bf16.msra.mxu0 0
        %1964 = vmatpush.bf16.msra.mxu0 %v1952
        %1965 = vmatpush.bf16.msra.mxu0 %v1951
        %1966 = vmatmul.bf16.gmra.mxu0 %v1956
        %v1967 = vpop.f32.mrf.mxu0
        %v1968 = vadd.f32 %v1941, %v1967
        %v1969 = vpop.f32.mrf.mxu0
        %v1970 = vadd.f32 %v1941, %v1969
        %1971 = vdwg.mxu0
        %v1972 = vld [vmem:[%s974] sm:$0xff]
        %v1973 = vmul.f32 %v1972, %v1972
        %v1975 = vsel %vm1031, %v1973, 0
        %1977 = vmatpush.msra.mxu0 0.0
        %1978 = vmatpush.msra.mxu0 0.0
        %1979 = vmatpush.msra.mxu0 0.0
        %1980 = vmatpush.msra.mxu0 0.0
        %1981 = vmatpush.msra.mxu0 0.0
        %1982 = vmatpush.msra.mxu0 0.0
        %1983 = vmatpush.msra.mxu0 0.0
        %1984 = vmatpush.msra.mxu0 0.0
        %1985 = vmatpush.msra.mxu0 0.0
        %1986 = vmatpush.msra.mxu0 0.0
        %1987 = vmatpush.msra.mxu0 0.0
        %1988 = vmatpush.msra.mxu0 0.0
        %1989 = vmatpush.msra.mxu0 %v999
        %1990 = vmatpush.msra.mxu0 %v998
        %1991 = vmatpush.msra.mxu0 %v997
        %1992 = vmatpush.msra.mxu0 %v996
        %1993 = vmatmul.f32.gmra.mxu0 %v1975
        %v1994 = vpop.f32.mrf.mxu0
        %v1995 = vadd.f32 1e-12, %v1994
        %1996 = vdwg.mxu0
        %v1997 = vrsqrt.pop %v1995
        %v1998 = vmul.f32 %v1997, %v1995
        %v1999 = vmul.f32 %v1998, %v1997
        %v2000 = vmul.f32 0.5, %v1999
        %v2001 = vsub.f32 1.5, %v2000
        %v2002 = vmul.f32 %v1997, %v2001
        %vm2003 = vweird.f32 %v1995
        %vm2004 = vweird.f32 %v1997
        %vm2005 = vmor %vm2003, %vm2004
        %v2006 = vsel %vm2005, %v1997, %v2002
        %v2007 = vmul.f32 %v1972, %v2006
        %v2008 = vmul.f32 %v1968, %v1968
        %v2009 = vmul.f32 %v1970, %v1970
        %v2011 = vsel %vm1031, %v2008, 0
        %v2014 = vsel %vm1031, %v2009, 0
        %2016 = vmatpush.msra.mxu0 0.0
        %2017 = vmatpush.msra.mxu0 0.0
        %2018 = vmatpush.msra.mxu0 0.0
        %2019 = vmatpush.msra.mxu0 0.0
        %2020 = vmatpush.msra.mxu0 0.0
        %2021 = vmatpush.msra.mxu0 0.0
        %2022 = vmatpush.msra.mxu0 0.0
        %2023 = vmatpush.msra.mxu0 0.0
        %2024 = vmatpush.msra.mxu0 0.0
        %2025 = vmatpush.msra.mxu0 0.0
        %2026 = vmatpush.msra.mxu0 0.0
        %2027 = vmatpush.msra.mxu0 0.0
        %2028 = vmatpush.msra.mxu0 %v999
        %2029 = vmatpush.msra.mxu0 %v998
        %2030 = vmatpush.msra.mxu0 %v997
        %2031 = vmatpush.msra.mxu0 %v996
        %2032 = vmatmul.f32.gmra.mxu0 %v2011
        %v2033 = vpop.f32.mrf.mxu0
        %v2034 = vadd.f32 1e-12, %v2033
        %2035 = vmatmul.f32.gmra.mxu0 %v2014
        %v2036 = vpop.f32.mrf.mxu0
        %v2037 = vadd.f32 1e-12, %v2036
        %2038 = vdwg.mxu0
        %v2039 = vrsqrt.pop %v2034
        %v2040 = vmul.f32 %v2039, %v2034
        %v2041 = vmul.f32 %v2040, %v2039
        %v2042 = vmul.f32 0.5, %v2041
        %v2043 = vsub.f32 1.5, %v2042
        %v2044 = vmul.f32 %v2039, %v2043
        %vm2045 = vweird.f32 %v2034
        %vm2046 = vweird.f32 %v2039
        %vm2047 = vmor %vm2045, %vm2046
        %v2048 = vsel %vm2047, %v2039, %v2044
        %v2049 = vrsqrt.pop %v2037
        %v2050 = vmul.f32 %v2049, %v2037
        %v2051 = vmul.f32 %v2050, %v2049
        %v2052 = vmul.f32 0.5, %v2051
        %v2053 = vsub.f32 1.5, %v2052
        %v2054 = vmul.f32 %v2049, %v2053
        %vm2055 = vweird.f32 %v2037
        %vm2056 = vweird.f32 %v2049
        %vm2057 = vmor %vm2055, %vm2056
        %v2058 = vsel %vm2057, %v2049, %v2054
        %v2059 = vmul.f32 %v1968, %v2048
        %v2060 = vmul.f32 %v1970, %v2058
        %v2061 = vld [vmem:[#allocation4] sm:$0x1]
        %v2063 = vperm.slane %v2061, 0
        %v2065 = vmul.f32 %v2059, %v2063
        %v2066 = vmul.f32 %v2060, %v2063
        %v2067 = vld [vmem:[%s977] sm:$0x1]
        %v2068 = vld [vmem:[%s21] sm:$0xf]
        %v2069 = vld [vmem:[%s21 + $0x4] sm:$0xf]
        %v2070 = vld [vmem:[%s21 + $0x8] sm:$0xf]
        %v2071 = vld [vmem:[%s21 + $0xc] sm:$0xf]
        %v2072 = vld [vmem:[#allocation10] sm:$0x1]
        %v2073 = vpack.c.bf16 %v2066, %v2065
        %2074 = vxpose.xlu0.b32.start [1/16] %v2007, 128
        %2075 = vxpose.xlu0.b32.cont [2/16] 0.0, 128
        %2076 = vxpose.xlu0.b32.cont [3/16] 0.0, 128
        %2077 = vxpose.xlu0.b32.cont [4/16] 0.0, 128
        %2078 = vxpose.xlu0.b32.cont [5/16] 0.0, 128
        %2079 = vxpose.xlu0.b32.cont [6/16] 0.0, 128
        %2080 = vxpose.xlu0.b32.cont [7/16] 0.0, 128
        %2081 = vxpose.xlu0.b32.cont [8/16] 0.0, 128
        %2082 = vxpose.xlu0.b32.cont [9/16] 0.0, 128
        %2083 = vxpose.xlu0.b32.cont [10/16] 0.0, 128
        %2084 = vxpose.xlu0.b32.cont [11/16] 0.0, 128
        %2085 = vxpose.xlu0.b32.cont [12/16] 0.0, 128
        %2086 = vxpose.xlu0.b32.cont [13/16] 0.0, 128
        %2087 = vxpose.xlu0.b32.cont [14/16] 0.0, 128
        %2088 = vxpose.xlu0.b32.cont [15/16] 0.0, 128
        %2089 = vxpose.xlu0.b32.end [16/16] 0.0, 128
        %v2090 = vpop.trf.xlu0
        %v2091 = vpop.trf.xlu0
        %v2092 = vpop.trf.xlu0
        %v2093 = vpop.trf.xlu0
        %v2094 = vpop.trf.xlu0
        %v2095 = vpop.trf.xlu0
        %v2096 = vpop.trf.xlu0
        %v2097 = vpop.trf.xlu0
        %v2098 = vpop.trf.xlu0
        %v2099 = vpop.trf.xlu0
        %v2100 = vpop.trf.xlu0
        %v2101 = vpop.trf.xlu0
        %v2102 = vpop.trf.xlu0
        %v2103 = vpop.trf.xlu0
        %v2104 = vpop.trf.xlu0
        %v2105 = vpop.trf.xlu0
        %v2106 = vpack.c.bf16 %v2090, %v2090
        %v2108 = vperm.slane %v2067, 0
        %v2111 = vsel %vm1455, %v2073, 0
        %v2114 = vsel %vm1459, %v2106, 0
        %2116 = vmatpush.bf16.msra.mxu0 0
        %2117 = vmatpush.bf16.msra.mxu0 0
        %2118 = vmatpush.bf16.msra.mxu0 0
        %2119 = vmatpush.bf16.msra.mxu0 0
        %2120 = vmatpush.bf16.msra.mxu0 0
        %2121 = vmatpush.bf16.msra.mxu0 0
        %2122 = vmatpush.bf16.msra.mxu0 0
        %2123 = vmatpush.bf16.msra.mxu0 %v2114
        %2124 = vmatmul.bf16.gmra.mxu0 %v2111
        %v2125 = vpop.f32.mrf.mxu0
        %v2126 = vadd.f32 %v2108, %v2125
        %v2127 = vpop.f32.mrf.mxu0
        %v2128 = vadd.f32 %v2108, %v2127
        %2129 = vdwg.mxu0
        %v2130 = vsel %vm1455, %v2126, -inf
        %2131 = vmax.xlane.f32.xlu0 %v2130
        %v2132 = vpop.xlane.xlu0 %2131
        %v2133 = vsel %vm1455, %v2128, -inf
        %2134 = vmax.xlane.f32.xlu0 %v2133
        %v2135 = vpop.xlane.xlu0 %2134
        %v2136 = vsub.f32 %v2126, %v2132
        %v2137 = vsub.f32 %v2128, %v2135
        %v2138 = vmul.f32 %v2136, 1.442695
        %v2139 = vpow.pop %v2138
        %v2140 = vmul.f32 %v2137, 1.442695
        %v2141 = vpow.pop %v2140
        %v2142 = vsel %vm1455, %v2139, 0.0
        %2143 = vadd.xlane.f32.xlu0 %v2142
        %v2144 = vpop.xlane.xlu0 %2143
        %v2145 = vsel %vm1455, %v2141, 0.0
        %2146 = vadd.xlane.f32.xlu0 %v2145
        %v2147 = vpop.xlane.xlu0 %2146
        %v2148 = vrcp.pop %v2144
        %v2149 = vrcp.pop %v2147
        %v2150 = vmul.f32 %v2139, %v2148
        %v2151 = vmul.f32 %v2141, %v2149
        %v2152 = vpack.c.bf16 %v2151, %v2150
        %v2153 = vpack.c.bf16 %v1972, %v1972
        %2155 = vrot.lane.b32.xlu0 %v2153, 96
        %v2156 = vpop.permute.xlu0 %2155
        %v2158 = vsel %vm1455, %v2152, 0
        %v2161 = vsel %vm1459, %v2156, 0
        %2163 = vmatpush.bf16.msra.mxu0 0
        %2164 = vmatpush.bf16.msra.mxu0 0
        %2165 = vmatpush.bf16.msra.mxu0 0
        %2166 = vmatpush.bf16.msra.mxu0 0
        %2167 = vmatpush.bf16.msra.mxu0 0
        %2168 = vmatpush.bf16.msra.mxu0 0
        %2169 = vmatpush.bf16.msra.mxu0 0
        %2170 = vmatpush.bf16.msra.mxu0 %v2161
        %2171 = vmatmul.bf16.gmra.mxu0 %v2158
        %v2172 = vpop.f32.mrf.mxu0
        %v2173 = vadd.f32 0.0, %v2172
        %v2174 = vpop.f32.mrf.mxu0
        %v2175 = vadd.f32 0.0, %v2174
        %2176 = vdwg.mxu0
        %v2177 = vpack.c.bf16 %v2175, %v2173
        %2179 = vrot.lane.b32.xlu0 %v2007, 120
        %v2180 = vpop.permute.xlu0 %2179
        %2182 = vxpose.xlu0.b32.start [1/16] %v2180, 128
        %2183 = vxpose.xlu0.b32.cont [2/16] 0.0, 128
        %2184 = vxpose.xlu0.b32.cont [3/16] 0.0, 128
        %2185 = vxpose.xlu0.b32.cont [4/16] 0.0, 128
        %2186 = vxpose.xlu0.b32.cont [5/16] 0.0, 128
        %2187 = vxpose.xlu0.b32.cont [6/16] 0.0, 128
        %2188 = vxpose.xlu0.b32.cont [7/16] 0.0, 128
        %2189 = vxpose.xlu0.b32.cont [8/16] 0.0, 128
        %2190 = vxpose.xlu0.b32.cont [9/16] 0.0, 128
        %2191 = vxpose.xlu0.b32.cont [10/16] 0.0, 128
        %2192 = vxpose.xlu0.b32.cont [11/16] 0.0, 128
        %2193 = vxpose.xlu0.b32.cont [12/16] 0.0, 128
        %2194 = vxpose.xlu0.b32.cont [13/16] 0.0, 128
        %2195 = vxpose.xlu0.b32.cont [14/16] 0.0, 128
        %2196 = vxpose.xlu0.b32.cont [15/16] 0.0, 128
        %2197 = vxpose.xlu0.b32.end [16/16] 0.0, 128
        %v2198 = vpop.trf.xlu0
        %v2199 = vpop.trf.xlu0
        %v2200 = vpop.trf.xlu0
        %v2201 = vpop.trf.xlu0
        %v2202 = vpop.trf.xlu0
        %v2203 = vpop.trf.xlu0
        %v2204 = vpop.trf.xlu0
        %v2205 = vpop.trf.xlu0
        %v2206 = vpop.trf.xlu0
        %v2207 = vpop.trf.xlu0
        %v2208 = vpop.trf.xlu0
        %v2209 = vpop.trf.xlu0
        %v2210 = vpop.trf.xlu0
        %v2211 = vpop.trf.xlu0
        %v2212 = vpop.trf.xlu0
        %v2213 = vpop.trf.xlu0
        %v2214 = vpack.c.bf16 %v2198, %v2198
        %2216 = vrot.lane.b32.xlu0 %v2073, 120
        %v2217 = vpop.permute.xlu0 %2216
        %v2219 = vsel %vm1455, %v2217, 0
        %v2222 = vsel %vm1459, %v2214, 0
        %2224 = vmatpush.bf16.msra.mxu0 0
        %2225 = vmatpush.bf16.msra.mxu0 0
        %2226 = vmatpush.bf16.msra.mxu0 0
        %2227 = vmatpush.bf16.msra.mxu0 0
        %2228 = vmatpush.bf16.msra.mxu0 0
        %2229 = vmatpush.bf16.msra.mxu0 0
        %2230 = vmatpush.bf16.msra.mxu0 0
        %2231 = vmatpush.bf16.msra.mxu0 %v2222
        %2232 = vmatmul.bf16.gmra.mxu0 %v2219
        %v2233 = vpop.f32.mrf.mxu0
        %v2234 = vadd.f32 %v2108, %v2233
        %v2235 = vpop.f32.mrf.mxu0
        %v2236 = vadd.f32 %v2108, %v2235
        %2237 = vdwg.mxu0
        %v2238 = vsel %vm1455, %v2234, -inf
        %2239 = vmax.xlane.f32.xlu0 %v2238
        %v2240 = vpop.xlane.xlu0 %2239
        %v2241 = vsel %vm1455, %v2236, -inf
        %2242 = vmax.xlane.f32.xlu0 %v2241
        %v2243 = vpop.xlane.xlu0 %2242
        %v2244 = vsub.f32 %v2234, %v2240
        %v2245 = vsub.f32 %v2236, %v2243
        %v2246 = vmul.f32 %v2244, 1.442695
        %v2247 = vpow.pop %v2246
        %v2248 = vmul.f32 %v2245, 1.442695
        %v2249 = vpow.pop %v2248
        %v2250 = vsel %vm1455, %v2247, 0.0
        %2251 = vadd.xlane.f32.xlu0 %v2250
        %v2252 = vpop.xlane.xlu0 %2251
        %v2253 = vsel %vm1455, %v2249, 0.0
        %2254 = vadd.xlane.f32.xlu0 %v2253
        %v2255 = vpop.xlane.xlu0 %2254
        %v2256 = vrcp.pop %v2252
        %v2257 = vrcp.pop %v2255
        %v2258 = vmul.f32 %v2247, %v2256
        %v2259 = vmul.f32 %v2249, %v2257
        %v2260 = vpack.c.bf16 %v2259, %v2258
        %2261 = vrot.lane.b32.xlu0 %v2153, 88
        %v2262 = vpop.permute.xlu0 %2261
        %v2264 = vsel %vm1455, %v2260, 0
        %v2267 = vsel %vm1459, %v2262, 0
        %2269 = vmatpush.bf16.msra.mxu0 0
        %2270 = vmatpush.bf16.msra.mxu0 0
        %2271 = vmatpush.bf16.msra.mxu0 0
        %2272 = vmatpush.bf16.msra.mxu0 0
        %2273 = vmatpush.bf16.msra.mxu0 0
        %2274 = vmatpush.bf16.msra.mxu0 0
        %2275 = vmatpush.bf16.msra.mxu0 0
        %2276 = vmatpush.bf16.msra.mxu0 %v2267
        %2277 = vmatmul.bf16.gmra.mxu0 %v2264
        %v2278 = vpop.f32.mrf.mxu0
        %v2279 = vadd.f32 0.0, %v2278
        %v2280 = vpop.f32.mrf.mxu0
        %v2281 = vadd.f32 0.0, %v2280
        %2282 = vdwg.mxu0
        %v2283 = vpack.c.bf16 %v2281, %v2279
        %v2285 = vsel %vm1455, %v2283, 0
        %v2288 = vsel %vm1459, %v2069, 0
        %2290 = vmatpush.bf16.msra.mxu0 0
        %2291 = vmatpush.bf16.msra.mxu0 0
        %2292 = vmatpush.bf16.msra.mxu0 0
        %2293 = vmatpush.bf16.msra.mxu0 0
        %2294 = vmatpush.bf16.msra.mxu0 0
        %2295 = vmatpush.bf16.msra.mxu0 0
        %2296 = vmatpush.bf16.msra.mxu0 0
        %2297 = vmatpush.bf16.msra.mxu0 %v2288
        %2298 = vmatmul.bf16.gmra.mxu0 %v2285
        %v2299 = vpop.f32.mrf.mxu0
        %v2300 = vadd.f32 0.0, %v2299
        %v2301 = vpop.f32.mrf.mxu0
        %v2302 = vadd.f32 0.0, %v2301
        %2303 = vdwg.mxu0
        %v2305 = vsel %vm1455, %v2177, 0
        %v2308 = vsel %vm1459, %v2068, 0
        %2310 = vmatpush.bf16.msra.mxu0 0
        %2311 = vmatpush.bf16.msra.mxu0 0
        %2312 = vmatpush.bf16.msra.mxu0 0
        %2313 = vmatpush.bf16.msra.mxu0 0
        %2314 = vmatpush.bf16.msra.mxu0 0
        %2315 = vmatpush.bf16.msra.mxu0 0
        %2316 = vmatpush.bf16.msra.mxu0 0
        %2317 = vmatpush.bf16.msra.mxu0 %v2308
        %2318 = vmatmul.bf16.gmra.mxu0 %v2305
        %v2319 = vpop.f32.mrf.mxu0
        %v2320 = vadd.f32 %v2300, %v2319
        %v2321 = vpop.f32.mrf.mxu0
        %v2322 = vadd.f32 %v2302, %v2321
        %2323 = vdwg.mxu0
        %2324 = vrot.lane.b32.xlu0 %v2007, 112
        %v2325 = vpop.permute.xlu0 %2324
        %2327 = vxpose.xlu0.b32.start [1/16] %v2325, 128
        %2328 = vxpose.xlu0.b32.cont [2/16] 0.0, 128
        %2329 = vxpose.xlu0.b32.cont [3/16] 0.0, 128
        %2330 = vxpose.xlu0.b32.cont [4/16] 0.0, 128
        %2331 = vxpose.xlu0.b32.cont [5/16] 0.0, 128
        %2332 = vxpose.xlu0.b32.cont [6/16] 0.0, 128
        %2333 = vxpose.xlu0.b32.cont [7/16] 0.0, 128
        %2334 = vxpose.xlu0.b32.cont [8/16] 0.0, 128
        %2335 = vxpose.xlu0.b32.cont [9/16] 0.0, 128
        %2336 = vxpose.xlu0.b32.cont [10/16] 0.0, 128
        %2337 = vxpose.xlu0.b32.cont [11/16] 0.0, 128
        %2338 = vxpose.xlu0.b32.cont [12/16] 0.0, 128
        %2339 = vxpose.xlu0.b32.cont [13/16] 0.0, 128
        %2340 = vxpose.xlu0.b32.cont [14/16] 0.0, 128
        %2341 = vxpose.xlu0.b32.cont [15/16] 0.0, 128
        %2342 = vxpose.xlu0.b32.end [16/16] 0.0, 128
        %v2343 = vpop.trf.xlu0
        %v2344 = vpop.trf.xlu0
        %v2345 = vpop.trf.xlu0
        %v2346 = vpop.trf.xlu0
        %v2347 = vpop.trf.xlu0
        %v2348 = vpop.trf.xlu0
        %v2349 = vpop.trf.xlu0
        %v2350 = vpop.trf.xlu0
        %v2351 = vpop.trf.xlu0
        %v2352 = vpop.trf.xlu0
        %v2353 = vpop.trf.xlu0
        %v2354 = vpop.trf.xlu0
        %v2355 = vpop.trf.xlu0
        %v2356 = vpop.trf.xlu0
        %v2357 = vpop.trf.xlu0
        %v2358 = vpop.trf.xlu0
        %v2359 = vpack.c.bf16 %v2343, %v2343
        %2360 = vrot.lane.b32.xlu0 %v2073, 112
        %v2361 = vpop.permute.xlu0 %2360
        %v2363 = vsel %vm1455, %v2361, 0
        %v2366 = vsel %vm1459, %v2359, 0
        %2368 = vmatpush.bf16.msra.mxu0 0
        %2369 = vmatpush.bf16.msra.mxu0 0
        %2370 = vmatpush.bf16.msra.mxu0 0
        %2371 = vmatpush.bf16.msra.mxu0 0
        %2372 = vmatpush.bf16.msra.mxu0 0
        %2373 = vmatpush.bf16.msra.mxu0 0
        %2374 = vmatpush.bf16.msra.mxu0 0
        %2375 = vmatpush.bf16.msra.mxu0 %v2366
        %2376 = vmatmul.bf16.gmra.mxu0 %v2363
        %v2377 = vpop.f32.mrf.mxu0
        %v2378 = vadd.f32 %v2108, %v2377
        %v2379 = vpop.f32.mrf.mxu0
        %v2380 = vadd.f32 %v2108, %v2379
        %2381 = vdwg.mxu0
        %v2382 = vsel %vm1455, %v2378, -inf
        %2383 = vmax.xlane.f32.xlu0 %v2382
        %v2384 = vpop.xlane.xlu0 %2383
        %v2385 = vsel %vm1455, %v2380, -inf
        %2386 = vmax.xlane.f32.xlu0 %v2385
        %v2387 = vpop.xlane.xlu0 %2386
        %v2388 = vsub.f32 %v2378, %v2384
        %v2389 = vsub.f32 %v2380, %v2387
        %v2390 = vmul.f32 %v2388, 1.442695
        %v2391 = vpow.pop %v2390
        %v2392 = vmul.f32 %v2389, 1.442695
        %v2393 = vpow.pop %v2392
        %v2394 = vsel %vm1455, %v2391, 0.0
        %2395 = vadd.xlane.f32.xlu0 %v2394
        %v2396 = vpop.xlane.xlu0 %2395
        %v2397 = vsel %vm1455, %v2393, 0.0
        %2398 = vadd.xlane.f32.xlu0 %v2397
        %v2399 = vpop.xlane.xlu0 %2398
        %v2400 = vrcp.pop %v2396
        %v2401 = vrcp.pop %v2399
        %v2402 = vmul.f32 %v2391, %v2400
        %v2403 = vmul.f32 %v2393, %v2401
        %v2404 = vpack.c.bf16 %v2403, %v2402
        %2405 = vrot.lane.b32.xlu0 %v2153, 80
        %v2406 = vpop.permute.xlu0 %2405
        %v2408 = vsel %vm1455, %v2404, 0
        %v2411 = vsel %vm1459, %v2406, 0
        %2413 = vmatpush.bf16.msra.mxu0 0
        %2414 = vmatpush.bf16.msra.mxu0 0
        %2415 = vmatpush.bf16.msra.mxu0 0
        %2416 = vmatpush.bf16.msra.mxu0 0
        %2417 = vmatpush.bf16.msra.mxu0 0
        %2418 = vmatpush.bf16.msra.mxu0 0
        %2419 = vmatpush.bf16.msra.mxu0 0
        %2420 = vmatpush.bf16.msra.mxu0 %v2411
        %2421 = vmatmul.bf16.gmra.mxu0 %v2408
        %v2422 = vpop.f32.mrf.mxu0
        %v2423 = vadd.f32 0.0, %v2422
        %v2424 = vpop.f32.mrf.mxu0
        %v2425 = vadd.f32 0.0, %v2424
        %2426 = vdwg.mxu0
        %v2427 = vpack.c.bf16 %v2425, %v2423
        %v2429 = vsel %vm1455, %v2427, 0
        %v2432 = vsel %vm1459, %v2070, 0
        %2434 = vmatpush.bf16.msra.mxu0 0
        %2435 = vmatpush.bf16.msra.mxu0 0
        %2436 = vmatpush.bf16.msra.mxu0 0
        %2437 = vmatpush.bf16.msra.mxu0 0
        %2438 = vmatpush.bf16.msra.mxu0 0
        %2439 = vmatpush.bf16.msra.mxu0 0
        %2440 = vmatpush.bf16.msra.mxu0 0
        %2441 = vmatpush.bf16.msra.mxu0 %v2432
        %2442 = vmatmul.bf16.gmra.mxu0 %v2429
        %v2443 = vpop.f32.mrf.mxu0
        %v2444 = vadd.f32 0.0, %v2443
        %v2445 = vpop.f32.mrf.mxu0
        %v2446 = vadd.f32 0.0, %v2445
        %2447 = vdwg.mxu0
        %v2448 = vadd.f32 %v2320, %v2444
        %v2449 = vadd.f32 %v2322, %v2446
        %2450 = vrot.lane.b32.xlu0 %v2007, 104
        %v2451 = vpop.permute.xlu0 %2450
        %2453 = vxpose.xlu0.b32.start [1/16] %v2451, 128
        %2454 = vxpose.xlu0.b32.cont [2/16] 0.0, 128
        %2455 = vxpose.xlu0.b32.cont [3/16] 0.0, 128
        %2456 = vxpose.xlu0.b32.cont [4/16] 0.0, 128
        %2457 = vxpose.xlu0.b32.cont [5/16] 0.0, 128
        %2458 = vxpose.xlu0.b32.cont [6/16] 0.0, 128
        %2459 = vxpose.xlu0.b32.cont [7/16] 0.0, 128
        %2460 = vxpose.xlu0.b32.cont [8/16] 0.0, 128
        %2461 = vxpose.xlu0.b32.cont [9/16] 0.0, 128
        %2462 = vxpose.xlu0.b32.cont [10/16] 0.0, 128
        %2463 = vxpose.xlu0.b32.cont [11/16] 0.0, 128
        %2464 = vxpose.xlu0.b32.cont [12/16] 0.0, 128
        %2465 = vxpose.xlu0.b32.cont [13/16] 0.0, 128
        %2466 = vxpose.xlu0.b32.cont [14/16] 0.0, 128
        %2467 = vxpose.xlu0.b32.cont [15/16] 0.0, 128
        %2468 = vxpose.xlu0.b32.end [16/16] 0.0, 128
        %v2469 = vpop.trf.xlu0
        %v2470 = vpop.trf.xlu0
        %v2471 = vpop.trf.xlu0
        %v2472 = vpop.trf.xlu0
        %v2473 = vpop.trf.xlu0
        %v2474 = vpop.trf.xlu0
        %v2475 = vpop.trf.xlu0
        %v2476 = vpop.trf.xlu0
        %v2477 = vpop.trf.xlu0
        %v2478 = vpop.trf.xlu0
        %v2479 = vpop.trf.xlu0
        %v2480 = vpop.trf.xlu0
        %v2481 = vpop.trf.xlu0
        %v2482 = vpop.trf.xlu0
        %v2483 = vpop.trf.xlu0
        %v2484 = vpop.trf.xlu0
        %v2485 = vpack.c.bf16 %v2469, %v2469
        %2486 = vrot.lane.b32.xlu0 %v2073, 104
        %v2487 = vpop.permute.xlu0 %2486
        %v2489 = vsel %vm1455, %v2487, 0
        %v2492 = vsel %vm1459, %v2485, 0
        %2494 = vmatpush.bf16.msra.mxu0 0
        %2495 = vmatpush.bf16.msra.mxu0 0
        %2496 = vmatpush.bf16.msra.mxu0 0
        %2497 = vmatpush.bf16.msra.mxu0 0
        %2498 = vmatpush.bf16.msra.mxu0 0
        %2499 = vmatpush.bf16.msra.mxu0 0
        %2500 = vmatpush.bf16.msra.mxu0 0
        %2501 = vmatpush.bf16.msra.mxu0 %v2492
        %2502 = vmatmul.bf16.gmra.mxu0 %v2489
        %v2503 = vpop.f32.mrf.mxu0
        %v2504 = vadd.f32 %v2108, %v2503
        %v2505 = vpop.f32.mrf.mxu0
        %v2506 = vadd.f32 %v2108, %v2505
        %2507 = vdwg.mxu0
        %v2508 = vsel %vm1455, %v2504, -inf
        %2509 = vmax.xlane.f32.xlu0 %v2508
        %v2510 = vpop.xlane.xlu0 %2509
        %v2511 = vsel %vm1455, %v2506, -inf
        %2512 = vmax.xlane.f32.xlu0 %v2511
        %v2513 = vpop.xlane.xlu0 %2512
        %v2514 = vsub.f32 %v2504, %v2510
        %v2515 = vsub.f32 %v2506, %v2513
        %v2516 = vmul.f32 %v2514, 1.442695
        %v2517 = vpow.pop %v2516
        %v2518 = vmul.f32 %v2515, 1.442695
        %v2519 = vpow.pop %v2518
        %v2520 = vsel %vm1455, %v2517, 0.0
        %2521 = vadd.xlane.f32.xlu0 %v2520
        %v2522 = vpop.xlane.xlu0 %2521
        %v2523 = vsel %vm1455, %v2519, 0.0
        %2524 = vadd.xlane.f32.xlu0 %v2523
        %v2525 = vpop.xlane.xlu0 %2524
        %v2526 = vrcp.pop %v2522
        %v2527 = vrcp.pop %v2525
        %v2528 = vmul.f32 %v2517, %v2526
        %v2529 = vmul.f32 %v2519, %v2527
        %v2530 = vpack.c.bf16 %v2529, %v2528
        %2531 = vrot.lane.b32.xlu0 %v2153, 72
        %v2532 = vpop.permute.xlu0 %2531
        %v2534 = vsel %vm1455, %v2530, 0
        %v2537 = vsel %vm1459, %v2532, 0
        %2539 = vmatpush.bf16.msra.mxu0 0
        %2540 = vmatpush.bf16.msra.mxu0 0
        %2541 = vmatpush.bf16.msra.mxu0 0
        %2542 = vmatpush.bf16.msra.mxu0 0
        %2543 = vmatpush.bf16.msra.mxu0 0
        %2544 = vmatpush.bf16.msra.mxu0 0
        %2545 = vmatpush.bf16.msra.mxu0 0
        %2546 = vmatpush.bf16.msra.mxu0 %v2537
        %2547 = vmatmul.bf16.gmra.mxu0 %v2534
        %v2548 = vpop.f32.mrf.mxu0
        %v2549 = vadd.f32 0.0, %v2548
        %v2550 = vpop.f32.mrf.mxu0
        %v2551 = vadd.f32 0.0, %v2550
        %2552 = vdwg.mxu0
        %v2553 = vpack.c.bf16 %v2551, %v2549
        %v2555 = vsel %vm1455, %v2553, 0
        %v2558 = vsel %vm1459, %v2071, 0
        %2560 = vmatpush.bf16.msra.mxu0 0
        %2561 = vmatpush.bf16.msra.mxu0 0
        %2562 = vmatpush.bf16.msra.mxu0 0
        %2563 = vmatpush.bf16.msra.mxu0 0
        %2564 = vmatpush.bf16.msra.mxu0 0
        %2565 = vmatpush.bf16.msra.mxu0 0
        %2566 = vmatpush.bf16.msra.mxu0 0
        %2567 = vmatpush.bf16.msra.mxu0 %v2558
        %2568 = vmatmul.bf16.gmra.mxu0 %v2555
        %v2569 = vpop.f32.mrf.mxu0
        %v2570 = vadd.f32 0.0, %v2569
        %v2571 = vpop.f32.mrf.mxu0
        %v2572 = vadd.f32 0.0, %v2571
        %2573 = vdwg.mxu0
        %v2574 = vadd.f32 %v2448, %v2570
        %v2575 = vadd.f32 %v2449, %v2572
        %v2577 = vperm.slane %v2072, 0
        %v2579 = vadd.f32 %v2574, %v2577
        %v2580 = vadd.f32 %v2575, %v2577
        %v2581 = vadd.f32 %v1932, %v2579
        %v2582 = vadd.f32 %v1933, %v2580
        %v2583 = vsel %vm1031, %v2581, 0.0
        %2584 = vadd.xlane.f32.xlu0 %v2583
        %v2585 = vpop.xlane.xlu0 %2584
        %v2586 = vsel %vm1031, %v2582, 0.0
        %2587 = vadd.xlane.f32.xlu0 %v2586
        %v2588 = vpop.xlane.xlu0 %2587
        %v2589 = vmul.f32 %v2585, %v1108
        %v2590 = vmul.f32 %v2588, %v1108
        %v2591 = vsub.f32 %v2581, %v2589
        %v2592 = vsub.f32 %v2582, %v2590
        %v2593 = vmul.f32 %v2591, %v2591
        %v2594 = vmul.f32 %v2592, %v2592
        %v2595 = vsel %vm1031, %v2593, 0.0
        %2596 = vadd.xlane.f32.xlu0 %v2595
        %v2597 = vpop.xlane.xlu0 %2596
        %v2598 = vsel %vm1031, %v2594, 0.0
        %2599 = vadd.xlane.f32.xlu0 %v2598
        %v2600 = vpop.xlane.xlu0 %2599
        %v2601 = vmul.f32 %v2597, %v1108
        %v2602 = vmul.f32 %v2600, %v1108
        %v2603 = vadd.f32 %v2601, 1e-06
        %v2604 = vadd.f32 %v2602, 1e-06
        %v2605 = vrsqrt.pop %v2603
        %v2606 = vmul.f32 %v2605, %v2603
        %v2607 = vmul.f32 %v2606, %v2605
        %v2608 = vmul.f32 0.5, %v2607
        %v2609 = vsub.f32 1.5, %v2608
        %v2610 = vmul.f32 %v2605, %v2609
        %vm2611 = vweird.f32 %v2603
        %vm2612 = vweird.f32 %v2605
        %vm2613 = vmor %vm2611, %vm2612
        %v2614 = vsel %vm2613, %v2605, %v2610
        %v2615 = vrsqrt.pop %v2604
        %v2616 = vmul.f32 %v2615, %v2604
        %v2617 = vmul.f32 %v2616, %v2615
        %v2618 = vmul.f32 0.5, %v2617
        %v2619 = vsub.f32 1.5, %v2618
        %v2620 = vmul.f32 %v2615, %v2619
        %vm2621 = vweird.f32 %v2604
        %vm2622 = vweird.f32 %v2615
        %vm2623 = vmor %vm2621, %vm2622
        %v2624 = vsel %vm2623, %v2615, %v2620
        %v2625 = vmul.f32 %v2591, %v2614
        %v2626 = vmul.f32 %v2592, %v2624
        %v2627 = vadd.f32 %v1079, 1.0
        %v2628 = vperm.slane %v2627, 0
        %2630 = vrot.lane.b32.xlu0 %v2628, 32
        %v2631 = vpop.permute.xlu0 %2630
        %v2633 = vmul.f32 %v2625, %v2631
        %v2634 = vmul.f32 %v2626, %v2631
        %v2635 = vperm.slane %v1095, 0
        %2637 = vrot.lane.b32.xlu0 %v2635, 96
        %v2638 = vpop.permute.xlu0 %2637
        %v2640 = vadd.f32 %v2633, %v2638
        %v2641 = vadd.f32 %v2634, %v2638
        %v2642 = vpack.c.bf16 %v2641, %v2640
        %v2643 = vld [vmem:[%s23] sm:$0xff]
        %v2644 = vld [vmem:[%s23 + $0x8] sm:$0xff]
        %v2645 = vld [vmem:[%s23 + $0x10] sm:$0xff]
        %v2646 = vld [vmem:[%s23 + $0x18] sm:$0xff]
        %v2647 = vld [vmem:[%s24] sm:$0x3]
        %v2649 = vperm.slane %v2647, 0
        %v2650 = vperm.slane %v2647, 1
        %v2657 = vunpack.c.l.b16 %v2643
        %v2658 = vunpack.c.h.b16 %v2643
        %v2659 = vunpack.c.l.b16 %v2644
        %v2660 = vunpack.c.h.b16 %v2644
        %v2661 = vunpack.c.l.b16 %v2645
        %v2662 = vunpack.c.h.b16 %v2645
        %v2663 = vunpack.c.l.b16 %v2646
        %v2664 = vunpack.c.h.b16 %v2646
        %v2665 = vpack.c.b16 %v2659, %v2657
        %v2666 = vpack.c.b16 %v2660, %v2658
        %v2667 = vpack.c.b16 %v2663, %v2661
        %v2668 = vpack.c.b16 %v2664, %v2662
        %v2674 = vsel %vm1031, %v2642, 0
        %2676 = vmatpush.bf16.msra.mxu0 0
        %2677 = vmatpush.bf16.msra.mxu0 0
        %2678 = vmatpush.bf16.msra.mxu0 0
        %2679 = vmatpush.bf16.msra.mxu0 0
        %2680 = vmatpush.bf16.msra.mxu0 0
        %2681 = vmatpush.bf16.msra.mxu0 0
        %2682 = vmatpush.bf16.msra.mxu0 %v2667
        %2683 = vmatpush.bf16.msra.mxu0 %v2665
        %2684 = vmatmul.bf16.gmra.mxu0 %v2674
        %v2685 = vpop.f32.mrf.mxu0
        %v2686 = vadd.f32 %v2649, %v2685
        %v2687 = vpop.f32.mrf.mxu0
        %v2688 = vadd.f32 %v2649, %v2687
        %2689 = vdwg.mxu0
        %2690 = vmatpush.bf16.msra.mxu0 0
        %2691 = vmatpush.bf16.msra.mxu0 0
        %2692 = vmatpush.bf16.msra.mxu0 0
        %2693 = vmatpush.bf16.msra.mxu0 0
        %2694 = vmatpush.bf16.msra.mxu0 0
        %2695 = vmatpush.bf16.msra.mxu0 0
        %2696 = vmatpush.bf16.msra.mxu0 %v2668
        %2697 = vmatpush.bf16.msra.mxu0 %v2666
        %2698 = vmatmul.bf16.gmra.mxu0 %v2674
        %v2699 = vpop.f32.mrf.mxu0
        %v2700 = vadd.f32 %v2650, %v2699
        %v2701 = vpop.f32.mrf.mxu0
        %v2702 = vadd.f32 %v2650, %v2701
        %2703 = vdwg.mxu0
        %v2704 = vxor.u32 %v2686, 2147483648
        %v2705 = vxor.u32 %v2688, 2147483648
        %v2706 = vmul.f32 %v2704, 1.442695
        %v2707 = vpow.pop %v2706
        %v2708 = vmul.f32 %v2705, 1.442695
        %v2709 = vpow.pop %v2708
        %v2710 = vadd.f32 %v2707, 1.0
        %v2711 = vadd.f32 %v2709, 1.0
        %v2712 = vrcp.pop %v2710
        %v2713 = vmul.f32 %v2710, %v2712
        %v2714 = vsub.f32 1.0, %v2713
        %v2715 = vmul.f32 %v2712, %v2714
        %v2716 = vadd.f32 %v2712, %v2715
        %vm2717 = vweird.f32 %v2710
        %vm2718 = vweird.f32 %v2712
        %vm2719 = vmor %vm2717, %vm2718
        %v2720 = vsel %vm2719, %v2712, %v2716
        %v2721 = vand.u32 2147483647, %v2710
        %vm2722 = vcmp.eq.f32.partialorder %v2721, 8.507059e+37
        %v2723 = vand.u32 %v2710, 2147483648
        %v2724 = vor.u32 1.1754944e-38, %v2723
        %v2725 = vsel %vm2722, %v2724, %v2720
        %v2726 = vmul.f32 1.0, %v2725
        %v2727 = vrcp.pop %v2711
        %v2728 = vmul.f32 %v2711, %v2727
        %v2729 = vsub.f32 1.0, %v2728
        %v2730 = vmul.f32 %v2727, %v2729
        %v2731 = vadd.f32 %v2727, %v2730
        %vm2732 = vweird.f32 %v2711
        %vm2733 = vweird.f32 %v2727
        %vm2734 = vmor %vm2732, %vm2733
        %v2735 = vsel %vm2734, %v2727, %v2731
        %v2736 = vand.u32 2147483647, %v2711
        %vm2737 = vcmp.eq.f32.partialorder %v2736, 8.507059e+37
        %v2738 = vand.u32 %v2711, 2147483648
        %v2739 = vor.u32 1.1754944e-38, %v2738
        %v2740 = vsel %vm2737, %v2739, %v2735
        %v2741 = vmul.f32 1.0, %v2740
        %v2742 = vmul.f32 %v2686, %v2726
        %v2743 = vmul.f32 %v2688, %v2741
        %v2744 = vmul.f32 %v2742, %v2700
        %v2745 = vmul.f32 %v2743, %v2702
        %v2746 = vpack.c.bf16 %v2745, %v2744
        %v2747 = vld [vmem:[%s25] sm:$0xf]
        %v2748 = vld [vmem:[%s25 + $0x4] sm:$0xf]
        %v2749 = vld [vmem:[%s25 + $0x8] sm:$0xf]
        %v2750 = vld [vmem:[%s25 + $0xc] sm:$0xf]
        %v2751 = vld [vmem:[%s25 + $0x10] sm:$0xf]
        %v2752 = vld [vmem:[%s25 + $0x14] sm:$0xf]
        %v2753 = vld [vmem:[%s25 + $0x18] sm:$0xf]
        %v2754 = vld [vmem:[%s25 + $0x1c] sm:$0xf]
        %v2755 = vld [vmem:[%s25 + $0x20] sm:$0xf]
        %v2756 = vld [vmem:[%s25 + $0x24] sm:$0xf]
        %v2757 = vld [vmem:[%s25 + $0x28] sm:$0xf]
        %v2758 = vld [vmem:[%s25 + $0x2c] sm:$0xf]
        %v2759 = vld [vmem:[%s25 + $0x30] sm:$0xf]
        %v2760 = vld [vmem:[%s25 + $0x34] sm:$0xf]
        %v2761 = vld [vmem:[%s25 + $0x38] sm:$0xf]
        %v2762 = vld [vmem:[%s25 + $0x3c] sm:$0xf]
        %v2763 = vld [vmem:[#allocation12] sm:$0x1]
        %v2765 = vperm.slane %v2763, 0
        %v2783 = vunpack.c.l.b16 %v2747
        %v2784 = vunpack.c.l.b16 %v2748
        %v2785 = vunpack.c.l.b16 %v2749
        %v2786 = vunpack.c.l.b16 %v2750
        %v2787 = vunpack.c.l.b16 %v2751
        %v2788 = vunpack.c.l.b16 %v2752
        %v2789 = vunpack.c.l.b16 %v2753
        %v2790 = vunpack.c.l.b16 %v2754
        %v2791 = vunpack.c.l.b16 %v2755
        %v2792 = vunpack.c.l.b16 %v2756
        %v2793 = vunpack.c.l.b16 %v2757
        %v2794 = vunpack.c.l.b16 %v2758
        %v2795 = vunpack.c.l.b16 %v2759
        %v2796 = vunpack.c.l.b16 %v2760
        %v2797 = vunpack.c.l.b16 %v2761
        %v2798 = vunpack.c.l.b16 %v2762
        %v2799 = vpack.c.b16 %v2784, %v2783
        %v2800 = vpack.c.b16 %v2786, %v2785
        %v2801 = vpack.c.b16 %v2788, %v2787
        %v2802 = vpack.c.b16 %v2790, %v2789
        %v2803 = vpack.c.b16 %v2792, %v2791
        %v2804 = vpack.c.b16 %v2794, %v2793
        %v2805 = vpack.c.b16 %v2796, %v2795
        %v2806 = vpack.c.b16 %v2798, %v2797
        %2815 = vmatpush.bf16.msra.mxu0 %v2806
        %2816 = vmatpush.bf16.msra.mxu0 %v2805
        %2817 = vmatpush.bf16.msra.mxu0 %v2804
        %2818 = vmatpush.bf16.msra.mxu0 %v2803
        %2819 = vmatpush.bf16.msra.mxu0 %v2802
        %2820 = vmatpush.bf16.msra.mxu0 %v2801
        %2821 = vmatpush.bf16.msra.mxu0 %v2800
        %2822 = vmatpush.bf16.msra.mxu0 %v2799
        %2823 = vmatmul.bf16.gmra.mxu0 %v2746
        %v2824 = vpop.f32.mrf.mxu0
        %v2825 = vadd.f32 %v2765, %v2824
        %v2826 = vpop.f32.mrf.mxu0
        %v2827 = vadd.f32 %v2765, %v2826
        %2828 = vdwg.mxu0
        %v2829 = vperm.slane %v1069, 0
        %2832 = vrot.lane.b32.xlu0 %v2825, 32
        %v2833 = vpop.permute.xlu0 %2832
        %2834 = vrot.lane.b32.xlu0 %v2827, 32
        %v2835 = vpop.permute.xlu0 %2834
        %v2838 = vmul.f32 %v2829, %v2833
        %v2839 = vmul.f32 %v2829, %v2835
        %2842 = vrot.lane.b32.xlu0 %v2838, 96
        %v2843 = vpop.permute.xlu0 %2842
        %2844 = vrot.lane.b32.xlu0 %v2839, 96
        %v2845 = vpop.permute.xlu0 %2844
        %v2848 = vadd.f32 %v2581, %v2843
        %v2849 = vadd.f32 %v2582, %v2845
        %2850 = vst.msk [vmem:[%s982] sm:$0xff] %vm1031, %v2848
        %2851 = vst.msk [vmem:[%s982 + $0x8] sm:$0xff] %vm1031, %v2849
        %p2852 = scmp.lt.s32.totalorder %s42, 1
        %s2853 = scalar_select %p2852, %s42, 1
        %s2854 = smul.addr %s2853, 2
        %s2855 = smul.addr %s2854, 8
        %s2856 = scalar_lea.vmem %s27, %s2855
        // Predicated region
        $region157: #{switti_forward.8} parent=127 // pred_check
          %p2857 = pneg %p652
        $region158: #{switti_forward.8} parent=127 // pred_check_branch
          %2859 = sbr.rel (%p2857) target = $region160
        $region159: #{switti_forward.8} parent=127 // pred_region
          _
        $region160: #{switti_forward.8} parent=127 // pred_fallthru
          _
      $region128: #{switti_forward.8} parent=5 // pred_fallthru
        _
      %p2860 = scmp.le.s32.totalorder 2, %s37
      // Predicated region
      $region161: #{switti_forward.8} parent=5 // pred_check
        %p2861 = pneg %p2860
      $region162: #{switti_forward.8} parent=5 // pred_check_branch
        %2863 = sbr.rel (%p2861) target = $region164
      $region163: #{switti_forward.8} parent=5 // pred_region
        %s2864 = ssub.s32 %s37, 2
        // Predicated region
        $region165: #{switti_forward.8} parent=163 // pred_check
          %p2865 = pneg %p658
        $region166: #{switti_forward.8} parent=163 // pred_check_branch
          %2867 = sbr.rel (%p2865) target = $region168
        $region167: #{switti_forward.8} parent=163 // pred_region
          %p2868 = scmp.lt.s32.totalorder %s43, 1
          %s2869 = scalar_select %p2868, %s43, 1
          %s2870 = smul.addr %s2869, 2
          %s2871 = smul.addr %s2870, 8
          %s2872 = scalar_lea.vmem %s27, %s2871
        $region168: #{switti_forward.8} parent=163 // pred_fallthru
          _
      $region164: #{switti_forward.8} parent=5 // pred_fallthru
        _
    $region6: #{switti_forward.8} parent=1 // loop_footer
      %s41 = sadd.s32 1, %s37
    $region7: #{switti_forward.8} parent=1 // loop_footer_branch
      %36 = sbr.rel target = $region3
    $region8: #{switti_forward.8} parent=1 // loop_exit
      _
    %2873 = vsyncpa [#allocation3], 1
    %s2874 = scalar_lea.sflag [#allocation3], 1
    %2875 = vsyncpa %s2874, 1
    %2876 = vsyncpa [#allocation5], 1
    %2877 = vsyncpa [#allocation8], 1
    %2878 = vsyncpa [#allocation11], 1

</llo_original>
